<compile_context>
chip_gen: v7x
topology: tpu7x:2x2x1
jax: 0.10.0
libtpu: 0.0.40
codegen_flags: <defaults>
</compile_context>

<pallas_src>
import jax
import jax.numpy as jnp
import numpy as np
from jax.experimental import pallas as pl
from jax.experimental.pallas import tpu as pltpu

KSIZE = 5      # conv kernel size
C_OUT = 6      # conv output channels
POOL = 2       # maxpool window / stride


def conv_relu_pool_kernel(ph_ref, w_ref, b_ref, o_ref):
    """One batch block per grid step.

    ph_ref: (4, NB, PH+2, PW+2) VMEM  phase planes x[n, 2u+p, 2v+q]
                                       stacked as index 2*p + q
    w_ref : (C_OUT*K*K,)        SMEM  flat conv weights (scalar reads)
    b_ref : (C_OUT,)            SMEM  conv bias
    o_ref : (NB, C_OUT, PH, PW) VMEM  pooled output slab
    """
    phases = ph_ref[...]                       # (4, NB, PH+2, PW+2) f32
    _, nb, hp, wp = phases.shape
    ph, pw = hp - 2, wp - 2                    # pooled output extents

    # views[s][t][n, i, j] == x[n, 2i + s, 2j + t]  for s, t in [0, 6).
    # 36 contiguous (non-strided) slices, hoisted and shared by every
    # output channel and every pooling phase.
    views = [[phases[2 * (s % 2) + (t % 2), :,
                     s // 2: s // 2 + ph,
                     t // 2: t // 2 + pw]
              for t in range(KSIZE + 1)]
             for s in range(KSIZE + 1)]

    chans = []
    for c in range(C_OUT):
        base = c * KSIZE * KSIZE
        accs = []
        # Pooling phase (a, b): conv output at rows 2i+a, cols 2j+b.
        for a in range(POOL):
            for b in range(POOL):
                acc = w_ref[base] * views[a][b]
                for di in range(KSIZE):
                    for dj in range(KSIZE):
                        if di == 0 and dj == 0:
                            continue
                        acc = acc + (w_ref[base + di * KSIZE + dj]
                                     * views[a + di][b + dj])
                accs.append(acc)
        # max over the 2x2 pooling window, then bias + ReLU
        # (relu(max(b + s)) == relu(b + max(s)) since relu is monotone).
        m = jnp.maximum(jnp.maximum(accs[0], accs[1]),
                        jnp.maximum(accs[2], accs[3]))
        chans.append(jnp.maximum(m + b_ref[c], 0.0))

    o_ref[...] = jnp.stack(chans, axis=1).astype(o_ref.dtype)   # single store


def conv_relu_pool(x, w, b):
    """x: (N, 1, H, W), w: (6, 1, 5, 5), b: (6,) -> (N, 6, PH, PW)."""
    N, C, H, W = x.shape
    assert C == 1, "module is Conv2d(1, 6, 5)"
    OH, OW = H - (KSIZE - 1), W - (KSIZE - 1)
    PH, PW = OH // POOL, OW // POOL           # floor semantics (= PyTorch)

    # Rows/cols actually needed by the pooled windows (even extents).
    Hc, Wc = POOL * PH + (KSIZE - 1), POOL * PW + (KSIZE - 1)
    xs = x.reshape(N, H, W).astype(jnp.float32)[:, :Hc, :Wc]

    # Space-to-depth: 4 phase planes of shape (N, PH+2, PW+2), stacked as
    # index 2*row_parity + col_parity.  Done by XLA outside the kernel so the
    # kernel itself needs no strided access at all.
    phases = jnp.stack([xs[:, p::POOL, q::POOL]
                        for p in range(POOL) for q in range(POOL)], axis=0)

    # At most two batch blocks: one per v7x TensorCore, amortizing per-step
    # pipeline overhead across the batch.
    nb = max(1, (N + 1) // 2)
    num_blocks = (N + nb - 1) // nb
    Npad = num_blocks * nb
    if Npad != N:
        phases = jnp.pad(phases, ((0, 0), (0, Npad - N), (0, 0), (0, 0)))

    ws = w.reshape(-1).astype(jnp.float32)    # (150,) flat SMEM table
    bs = b.astype(jnp.float32)                # (6,)

    out = pl.pallas_call(
        conv_relu_pool_kernel,
        out_shape=jax.ShapeDtypeStruct((Npad, C_OUT, PH, PW), jnp.float32),
        grid=(num_blocks,),
        in_specs=[
            pl.BlockSpec((4, nb, PH + 2, PW + 2), lambda i: (0, i, 0, 0)),
            pl.BlockSpec(memory_space=pltpu.MemorySpace.SMEM),
            pl.BlockSpec(memory_space=pltpu.MemorySpace.SMEM),
        ],
        out_specs=pl.BlockSpec((nb, C_OUT, PH, PW), lambda i: (i, 0, 0, 0)),
        compiler_params=pltpu.CompilerParams(
            dimension_semantics=("parallel",)),
    )(phases, ws, bs)

    if Npad != N:
        out = out[:N]
    return out.astype(x.dtype)


def reference(x, w, b):
    """Pure-JAX reference (NCHW conv + relu + 2x2 maxpool), for validation."""
    y = jax.lax.conv_general_dilated(
        x, w, window_strides=(1, 1), padding="VALID",
        dimension_numbers=("NCHW", "OIHW", "NCHW"))
    y = jax.nn.relu(y + b.reshape(1, -1, 1, 1))
    y = jax.lax.reduce_window(
        y, -jnp.inf, jax.lax.max,
        window_dimensions=(1, 1, POOL, POOL),
        window_strides=(1, 1, POOL, POOL),
        padding="VALID")
    return y


if __name__ == "__main__":
    key = jax.random.PRNGKey(0)
    kx, kw, kb = jax.random.split(key, 3)

    # Small shapes consistent with Conv2d(1, 6, 5): N=2, C=1, H=W=16.
    x = jax.random.normal(kx, (2, 1, 16, 16), dtype=jnp.float32)

    # Deterministic parameter init (PyTorch-default-like uniform bound).
    fan_in = 1 * KSIZE * KSIZE
    bound = 1.0 / np.sqrt(fan_in)
    w = jax.random.uniform(kw, (C_OUT, 1, KSIZE, KSIZE),
                           minval=-bound, maxval=bound, dtype=jnp.float32)
    b = jax.random.uniform(kb, (C_OUT,),
                           minval=-bound, maxval=bound, dtype=jnp.float32)

    out = jax.block_until_ready(conv_relu_pool(x, w, b))
    ref = jax.block_until_ready(reference(x, w, b))

    assert out.shape == (2, 6, 6, 6), out.shape
    assert np.allclose(np.asarray(out), np.asarray(ref), atol=1e-5, rtol=1e-5)
    print("KERNEL_OK")
</pallas_src>

<mosaic_0001>
module attributes {stable_mosaic.version = 11 : i64} {
  func.func @conv_relu_pool_kernel(%arg0: i32, %arg1: memref<4x1x8x8xf32, #tpu.memory_space<vmem>>, %arg2: memref<150xf32, #tpu.memory_space<smem>>, %arg3: memref<6xf32, #tpu.memory_space<smem>>, %arg4: memref<1x6x6x6xf32, #tpu.memory_space<vmem>>) attributes {dimension_semantics = [#tpu.dimension_semantics<parallel>], iteration_bounds = array<i64: 2>, scalar_prefetch = 0 : i64, scratch_operands = 0 : i64, tpu.core_type = #tpu.core_type<tc>, window_params = [{transform_indices = @transform_0, window_bounds = array<i64: 4, 1, 8, 8>}, {transform_indices = @transform_1, window_bounds = array<i64: 150>}, {transform_indices = @transform_2, window_bounds = array<i64: 6>}, {transform_indices = @transform_3, window_bounds = array<i64: 1, 6, 6, 6>}]} {
    %c0 = arith.constant 0 : index
    %c0_0 = arith.constant 0 : index
    %c0_1 = arith.constant 0 : index
    %c0_2 = arith.constant 0 : index
    %0 = vector.load %arg1[%c0, %c0_0, %c0_1, %c0_2] : memref<4x1x8x8xf32, #tpu.memory_space<vmem>>, vector<4x1x8x8xf32>
    %1 = vector.extract_strided_slice %0 {offsets = [0, 0, 0, 0], sizes = [1, 1, 6, 6], strides = [1, 1, 1, 1]} : vector<4x1x8x8xf32> to vector<1x1x6x6xf32>
    %2 = vector.shape_cast %1 : vector<1x1x6x6xf32> to vector<1x6x6xf32>
    %3 = vector.extract_strided_slice %0 {offsets = [1, 0, 0, 0], sizes = [1, 1, 6, 6], strides = [1, 1, 1, 1]} : vector<4x1x8x8xf32> to vector<1x1x6x6xf32>
    %4 = vector.shape_cast %3 : vector<1x1x6x6xf32> to vector<1x6x6xf32>
    %5 = vector.extract_strided_slice %0 {offsets = [0, 0, 0, 1], sizes = [1, 1, 6, 6], strides = [1, 1, 1, 1]} : vector<4x1x8x8xf32> to vector<1x1x6x6xf32>
    %6 = vector.shape_cast %5 : vector<1x1x6x6xf32> to vector<1x6x6xf32>
    %7 = vector.extract_strided_slice %0 {offsets = [1, 0, 0, 1], sizes = [1, 1, 6, 6], strides = [1, 1, 1, 1]} : vector<4x1x8x8xf32> to vector<1x1x6x6xf32>
    %8 = vector.shape_cast %7 : vector<1x1x6x6xf32> to vector<1x6x6xf32>
    %9 = vector.extract_strided_slice %0 {offsets = [0, 0, 0, 2], sizes = [1, 1, 6, 6], strides = [1, 1, 1, 1]} : vector<4x1x8x8xf32> to vector<1x1x6x6xf32>
    %10 = vector.shape_cast %9 : vector<1x1x6x6xf32> to vector<1x6x6xf32>
    %11 = vector.extract_strided_slice %0 {offsets = [1, 0, 0, 2], sizes = [1, 1, 6, 6], strides = [1, 1, 1, 1]} : vector<4x1x8x8xf32> to vector<1x1x6x6xf32>
    %12 = vector.shape_cast %11 : vector<1x1x6x6xf32> to vector<1x6x6xf32>
    %13 = vector.extract_strided_slice %0 {offsets = [2, 0, 0, 0], sizes = [1, 1, 6, 6], strides = [1, 1, 1, 1]} : vector<4x1x8x8xf32> to vector<1x1x6x6xf32>
    %14 = vector.shape_cast %13 : vector<1x1x6x6xf32> to vector<1x6x6xf32>
    %15 = vector.extract_strided_slice %0 {offsets = [3, 0, 0, 0], sizes = [1, 1, 6, 6], strides = [1, 1, 1, 1]} : vector<4x1x8x8xf32> to vector<1x1x6x6xf32>
    %16 = vector.shape_cast %15 : vector<1x1x6x6xf32> to vector<1x6x6xf32>
    %17 = vector.extract_strided_slice %0 {offsets = [2, 0, 0, 1], sizes = [1, 1, 6, 6], strides = [1, 1, 1, 1]} : vector<4x1x8x8xf32> to vector<1x1x6x6xf32>
    %18 = vector.shape_cast %17 : vector<1x1x6x6xf32> to vector<1x6x6xf32>
    %19 = vector.extract_strided_slice %0 {offsets = [3, 0, 0, 1], sizes = [1, 1, 6, 6], strides = [1, 1, 1, 1]} : vector<4x1x8x8xf32> to vector<1x1x6x6xf32>
    %20 = vector.shape_cast %19 : vector<1x1x6x6xf32> to vector<1x6x6xf32>
    %21 = vector.extract_strided_slice %0 {offsets = [2, 0, 0, 2], sizes = [1, 1, 6, 6], strides = [1, 1, 1, 1]} : vector<4x1x8x8xf32> to vector<1x1x6x6xf32>
    %22 = vector.shape_cast %21 : vector<1x1x6x6xf32> to vector<1x6x6xf32>
    %23 = vector.extract_strided_slice %0 {offsets = [3, 0, 0, 2], sizes = [1, 1, 6, 6], strides = [1, 1, 1, 1]} : vector<4x1x8x8xf32> to vector<1x1x6x6xf32>
    %24 = vector.shape_cast %23 : vector<1x1x6x6xf32> to vector<1x6x6xf32>
    %25 = vector.extract_strided_slice %0 {offsets = [0, 0, 1, 0], sizes = [1, 1, 6, 6], strides = [1, 1, 1, 1]} : vector<4x1x8x8xf32> to vector<1x1x6x6xf32>
    %26 = vector.shape_cast %25 : vector<1x1x6x6xf32> to vector<1x6x6xf32>
    %27 = vector.extract_strided_slice %0 {offsets = [1, 0, 1, 0], sizes = [1, 1, 6, 6], strides = [1, 1, 1, 1]} : vector<4x1x8x8xf32> to vector<1x1x6x6xf32>
    %28 = vector.shape_cast %27 : vector<1x1x6x6xf32> to vector<1x6x6xf32>
    %29 = vector.extract_strided_slice %0 {offsets = [0, 0, 1, 1], sizes = [1, 1, 6, 6], strides = [1, 1, 1, 1]} : vector<4x1x8x8xf32> to vector<1x1x6x6xf32>
    %30 = vector.shape_cast %29 : vector<1x1x6x6xf32> to vector<1x6x6xf32>
    %31 = vector.extract_strided_slice %0 {offsets = [1, 0, 1, 1], sizes = [1, 1, 6, 6], strides = [1, 1, 1, 1]} : vector<4x1x8x8xf32> to vector<1x1x6x6xf32>
    %32 = vector.shape_cast %31 : vector<1x1x6x6xf32> to vector<1x6x6xf32>
    %33 = vector.extract_strided_slice %0 {offsets = [0, 0, 1, 2], sizes = [1, 1, 6, 6], strides = [1, 1, 1, 1]} : vector<4x1x8x8xf32> to vector<1x1x6x6xf32>
    %34 = vector.shape_cast %33 : vector<1x1x6x6xf32> to vector<1x6x6xf32>
    %35 = vector.extract_strided_slice %0 {offsets = [1, 0, 1, 2], sizes = [1, 1, 6, 6], strides = [1, 1, 1, 1]} : vector<4x1x8x8xf32> to vector<1x1x6x6xf32>
    %36 = vector.shape_cast %35 : vector<1x1x6x6xf32> to vector<1x6x6xf32>
    %37 = vector.extract_strided_slice %0 {offsets = [2, 0, 1, 0], sizes = [1, 1, 6, 6], strides = [1, 1, 1, 1]} : vector<4x1x8x8xf32> to vector<1x1x6x6xf32>
    %38 = vector.shape_cast %37 : vector<1x1x6x6xf32> to vector<1x6x6xf32>
    %39 = vector.extract_strided_slice %0 {offsets = [3, 0, 1, 0], sizes = [1, 1, 6, 6], strides = [1, 1, 1, 1]} : vector<4x1x8x8xf32> to vector<1x1x6x6xf32>
    %40 = vector.shape_cast %39 : vector<1x1x6x6xf32> to vector<1x6x6xf32>
    %41 = vector.extract_strided_slice %0 {offsets = [2, 0, 1, 1], sizes = [1, 1, 6, 6], strides = [1, 1, 1, 1]} : vector<4x1x8x8xf32> to vector<1x1x6x6xf32>
    %42 = vector.shape_cast %41 : vector<1x1x6x6xf32> to vector<1x6x6xf32>
    %43 = vector.extract_strided_slice %0 {offsets = [3, 0, 1, 1], sizes = [1, 1, 6, 6], strides = [1, 1, 1, 1]} : vector<4x1x8x8xf32> to vector<1x1x6x6xf32>
    %44 = vector.shape_cast %43 : vector<1x1x6x6xf32> to vector<1x6x6xf32>
    %45 = vector.extract_strided_slice %0 {offsets = [2, 0, 1, 2], sizes = [1, 1, 6, 6], strides = [1, 1, 1, 1]} : vector<4x1x8x8xf32> to vector<1x1x6x6xf32>
    %46 = vector.shape_cast %45 : vector<1x1x6x6xf32> to vector<1x6x6xf32>
    %47 = vector.extract_strided_slice %0 {offsets = [3, 0, 1, 2], sizes = [1, 1, 6, 6], strides = [1, 1, 1, 1]} : vector<4x1x8x8xf32> to vector<1x1x6x6xf32>
    %48 = vector.shape_cast %47 : vector<1x1x6x6xf32> to vector<1x6x6xf32>
    %49 = vector.extract_strided_slice %0 {offsets = [0, 0, 2, 0], sizes = [1, 1, 6, 6], strides = [1, 1, 1, 1]} : vector<4x1x8x8xf32> to vector<1x1x6x6xf32>
    %50 = vector.shape_cast %49 : vector<1x1x6x6xf32> to vector<1x6x6xf32>
    %51 = vector.extract_strided_slice %0 {offsets = [1, 0, 2, 0], sizes = [1, 1, 6, 6], strides = [1, 1, 1, 1]} : vector<4x1x8x8xf32> to vector<1x1x6x6xf32>
    %52 = vector.shape_cast %51 : vector<1x1x6x6xf32> to vector<1x6x6xf32>
    %53 = vector.extract_strided_slice %0 {offsets = [0, 0, 2, 1], sizes = [1, 1, 6, 6], strides = [1, 1, 1, 1]} : vector<4x1x8x8xf32> to vector<1x1x6x6xf32>
    %54 = vector.shape_cast %53 : vector<1x1x6x6xf32> to vector<1x6x6xf32>
    %55 = vector.extract_strided_slice %0 {offsets = [1, 0, 2, 1], sizes = [1, 1, 6, 6], strides = [1, 1, 1, 1]} : vector<4x1x8x8xf32> to vector<1x1x6x6xf32>
    %56 = vector.shape_cast %55 : vector<1x1x6x6xf32> to vector<1x6x6xf32>
    %57 = vector.extract_strided_slice %0 {offsets = [0, 0, 2, 2], sizes = [1, 1, 6, 6], strides = [1, 1, 1, 1]} : vector<4x1x8x8xf32> to vector<1x1x6x6xf32>
    %58 = vector.shape_cast %57 : vector<1x1x6x6xf32> to vector<1x6x6xf32>
    %59 = vector.extract_strided_slice %0 {offsets = [1, 0, 2, 2], sizes = [1, 1, 6, 6], strides = [1, 1, 1, 1]} : vector<4x1x8x8xf32> to vector<1x1x6x6xf32>
    %60 = vector.shape_cast %59 : vector<1x1x6x6xf32> to vector<1x6x6xf32>
    %61 = vector.extract_strided_slice %0 {offsets = [2, 0, 2, 0], sizes = [1, 1, 6, 6], strides = [1, 1, 1, 1]} : vector<4x1x8x8xf32> to vector<1x1x6x6xf32>
    %62 = vector.shape_cast %61 : vector<1x1x6x6xf32> to vector<1x6x6xf32>
    %63 = vector.extract_strided_slice %0 {offsets = [3, 0, 2, 0], sizes = [1, 1, 6, 6], strides = [1, 1, 1, 1]} : vector<4x1x8x8xf32> to vector<1x1x6x6xf32>
    %64 = vector.shape_cast %63 : vector<1x1x6x6xf32> to vector<1x6x6xf32>
    %65 = vector.extract_strided_slice %0 {offsets = [2, 0, 2, 1], sizes = [1, 1, 6, 6], strides = [1, 1, 1, 1]} : vector<4x1x8x8xf32> to vector<1x1x6x6xf32>
    %66 = vector.shape_cast %65 : vector<1x1x6x6xf32> to vector<1x6x6xf32>
    %67 = vector.extract_strided_slice %0 {offsets = [3, 0, 2, 1], sizes = [1, 1, 6, 6], strides = [1, 1, 1, 1]} : vector<4x1x8x8xf32> to vector<1x1x6x6xf32>
    %68 = vector.shape_cast %67 : vector<1x1x6x6xf32> to vector<1x6x6xf32>
    %69 = vector.extract_strided_slice %0 {offsets = [2, 0, 2, 2], sizes = [1, 1, 6, 6], strides = [1, 1, 1, 1]} : vector<4x1x8x8xf32> to vector<1x1x6x6xf32>
    %70 = vector.shape_cast %69 : vector<1x1x6x6xf32> to vector<1x6x6xf32>
    %71 = vector.extract_strided_slice %0 {offsets = [3, 0, 2, 2], sizes = [1, 1, 6, 6], strides = [1, 1, 1, 1]} : vector<4x1x8x8xf32> to vector<1x1x6x6xf32>
    %72 = vector.shape_cast %71 : vector<1x1x6x6xf32> to vector<1x6x6xf32>
    %c0_3 = arith.constant 0 : index
    %73 = memref.load %arg2[%c0_3] : memref<150xf32, #tpu.memory_space<smem>>
    %74 = vector.broadcast %73 : f32 to vector<1x6x6xf32>
    %75 = arith.mulf %74, %2 : vector<1x6x6xf32>
    %c1 = arith.constant 1 : index
    %76 = memref.load %arg2[%c1] : memref<150xf32, #tpu.memory_space<smem>>
    %77 = vector.broadcast %76 : f32 to vector<1x6x6xf32>
    %78 = arith.mulf %77, %4 : vector<1x6x6xf32>
    %79 = arith.addf %75, %78 : vector<1x6x6xf32>
    %c2 = arith.constant 2 : index
    %80 = memref.load %arg2[%c2] : memref<150xf32, #tpu.memory_space<smem>>
    %81 = vector.broadcast %80 : f32 to vector<1x6x6xf32>
    %82 = arith.mulf %81, %6 : vector<1x6x6xf32>
    %83 = arith.addf %79, %82 : vector<1x6x6xf32>
    %c3 = arith.constant 3 : index
    %84 = memref.load %arg2[%c3] : memref<150xf32, #tpu.memory_space<smem>>
    %85 = vector.broadcast %84 : f32 to vector<1x6x6xf32>
    %86 = arith.mulf %85, %8 : vector<1x6x6xf32>
    %87 = arith.addf %83, %86 : vector<1x6x6xf32>
    %c4 = arith.constant 4 : index
    %88 = memref.load %arg2[%c4] : memref<150xf32, #tpu.memory_space<smem>>
    %89 = vector.broadcast %88 : f32 to vector<1x6x6xf32>
    %90 = arith.mulf %89, %10 : vector<1x6x6xf32>
    %91 = arith.addf %87, %90 : vector<1x6x6xf32>
    %c5 = arith.constant 5 : index
    %92 = memref.load %arg2[%c5] : memref<150xf32, #tpu.memory_space<smem>>
    %93 = vector.broadcast %92 : f32 to vector<1x6x6xf32>
    %94 = arith.mulf %93, %14 : vector<1x6x6xf32>
    %95 = arith.addf %91, %94 : vector<1x6x6xf32>
    %c6 = arith.constant 6 : index
    %96 = memref.load %arg2[%c6] : memref<150xf32, #tpu.memory_space<smem>>
    %97 = vector.broadcast %96 : f32 to vector<1x6x6xf32>
    %98 = arith.mulf %97, %16 : vector<1x6x6xf32>
    %99 = arith.addf %95, %98 : vector<1x6x6xf32>
    %c7 = arith.constant 7 : index
    %100 = memref.load %arg2[%c7] : memref<150xf32, #tpu.memory_space<smem>>
    %101 = vector.broadcast %100 : f32 to vector<1x6x6xf32>
    %102 = arith.mulf %101, %18 : vector<1x6x6xf32>
    %103 = arith.addf %99, %102 : vector<1x6x6xf32>
    %c8 = arith.constant 8 : index
    %104 = memref.load %arg2[%c8] : memref<150xf32, #tpu.memory_space<smem>>
    %105 = vector.broadcast %104 : f32 to vector<1x6x6xf32>
    %106 = arith.mulf %105, %20 : vector<1x6x6xf32>
    %107 = arith.addf %103, %106 : vector<1x6x6xf32>
    %c9 = arith.constant 9 : index
    %108 = memref.load %arg2[%c9] : memref<150xf32, #tpu.memory_space<smem>>
    %109 = vector.broadcast %108 : f32 to vector<1x6x6xf32>
    %110 = arith.mulf %109, %22 : vector<1x6x6xf32>
    %111 = arith.addf %107, %110 : vector<1x6x6xf32>
    %c10 = arith.constant 10 : index
    %112 = memref.load %arg2[%c10] : memref<150xf32, #tpu.memory_space<smem>>
    %113 = vector.broadcast %112 : f32 to vector<1x6x6xf32>
    %114 = arith.mulf %113, %26 : vector<1x6x6xf32>
    %115 = arith.addf %111, %114 : vector<1x6x6xf32>
    %c11 = arith.constant 11 : index
    %116 = memref.load %arg2[%c11] : memref<150xf32, #tpu.memory_space<smem>>
    %117 = vector.broadcast %116 : f32 to vector<1x6x6xf32>
    %118 = arith.mulf %117, %28 : vector<1x6x6xf32>
    %119 = arith.addf %115, %118 : vector<1x6x6xf32>
    %c12 = arith.constant 12 : index
    %120 = memref.load %arg2[%c12] : memref<150xf32, #tpu.memory_space<smem>>
    %121 = vector.broadcast %120 : f32 to vector<1x6x6xf32>
    %122 = arith.mulf %121, %30 : vector<1x6x6xf32>
    %123 = arith.addf %119, %122 : vector<1x6x6xf32>
    %c13 = arith.constant 13 : index
    %124 = memref.load %arg2[%c13] : memref<150xf32, #tpu.memory_space<smem>>
    %125 = vector.broadcast %124 : f32 to vector<1x6x6xf32>
    %126 = arith.mulf %125, %32 : vector<1x6x6xf32>
    %127 = arith.addf %123, %126 : vector<1x6x6xf32>
    %c14 = arith.constant 14 : index
    %128 = memref.load %arg2[%c14] : memref<150xf32, #tpu.memory_space<smem>>
    %129 = vector.broadcast %128 : f32 to vector<1x6x6xf32>
    %130 = arith.mulf %129, %34 : vector<1x6x6xf32>
    %131 = arith.addf %127, %130 : vector<1x6x6xf32>
    %c15 = arith.constant 15 : index
    %132 = memref.load %arg2[%c15] : memref<150xf32, #tpu.memory_space<smem>>
    %133 = vector.broadcast %132 : f32 to vector<1x6x6xf32>
    %134 = arith.mulf %133, %38 : vector<1x6x6xf32>
    %135 = arith.addf %131, %134 : vector<1x6x6xf32>
    %c16 = arith.constant 16 : index
    %136 = memref.load %arg2[%c16] : memref<150xf32, #tpu.memory_space<smem>>
    %137 = vector.broadcast %136 : f32 to vector<1x6x6xf32>
    %138 = arith.mulf %137, %40 : vector<1x6x6xf32>
    %139 = arith.addf %135, %138 : vector<1x6x6xf32>
    %c17 = arith.constant 17 : index
    %140 = memref.load %arg2[%c17] : memref<150xf32, #tpu.memory_space<smem>>
    %141 = vector.broadcast %140 : f32 to vector<1x6x6xf32>
    %142 = arith.mulf %141, %42 : vector<1x6x6xf32>
    %143 = arith.addf %139, %142 : vector<1x6x6xf32>
    %c18 = arith.constant 18 : index
    %144 = memref.load %arg2[%c18] : memref<150xf32, #tpu.memory_space<smem>>
    %145 = vector.broadcast %144 : f32 to vector<1x6x6xf32>
    %146 = arith.mulf %145, %44 : vector<1x6x6xf32>
    %147 = arith.addf %143, %146 : vector<1x6x6xf32>
    %c19 = arith.constant 19 : index
    %148 = memref.load %arg2[%c19] : memref<150xf32, #tpu.memory_space<smem>>
    %149 = vector.broadcast %148 : f32 to vector<1x6x6xf32>
    %150 = arith.mulf %149, %46 : vector<1x6x6xf32>
    %151 = arith.addf %147, %150 : vector<1x6x6xf32>
    %c20 = arith.constant 20 : index
    %152 = memref.load %arg2[%c20] : memref<150xf32, #tpu.memory_space<smem>>
    %153 = vector.broadcast %152 : f32 to vector<1x6x6xf32>
    %154 = arith.mulf %153, %50 : vector<1x6x6xf32>
    %155 = arith.addf %151, %154 : vector<1x6x6xf32>
    %c21 = arith.constant 21 : index
    %156 = memref.load %arg2[%c21] : memref<150xf32, #tpu.memory_space<smem>>
    %157 = vector.broadcast %156 : f32 to vector<1x6x6xf32>
    %158 = arith.mulf %157, %52 : vector<1x6x6xf32>
    %159 = arith.addf %155, %158 : vector<1x6x6xf32>
    %c22 = arith.constant 22 : index
    %160 = memref.load %arg2[%c22] : memref<150xf32, #tpu.memory_space<smem>>
    %161 = vector.broadcast %160 : f32 to vector<1x6x6xf32>
    %162 = arith.mulf %161, %54 : vector<1x6x6xf32>
    %163 = arith.addf %159, %162 : vector<1x6x6xf32>
    %c23 = arith.constant 23 : index
    %164 = memref.load %arg2[%c23] : memref<150xf32, #tpu.memory_space<smem>>
    %165 = vector.broadcast %164 : f32 to vector<1x6x6xf32>
    %166 = arith.mulf %165, %56 : vector<1x6x6xf32>
    %167 = arith.addf %163, %166 : vector<1x6x6xf32>
    %c24 = arith.constant 24 : index
    %168 = memref.load %arg2[%c24] : memref<150xf32, #tpu.memory_space<smem>>
    %169 = vector.broadcast %168 : f32 to vector<1x6x6xf32>
    %170 = arith.mulf %169, %58 : vector<1x6x6xf32>
    %171 = arith.addf %167, %170 : vector<1x6x6xf32>
    %c0_4 = arith.constant 0 : index
    %172 = memref.load %arg2[%c0_4] : memref<150xf32, #tpu.memory_space<smem>>
    %173 = vector.broadcast %172 : f32 to vector<1x6x6xf32>
    %174 = arith.mulf %173, %4 : vector<1x6x6xf32>
    %c1_5 = arith.constant 1 : index
    %175 = memref.load %arg2[%c1_5] : memref<150xf32, #tpu.memory_space<smem>>
    %176 = vector.broadcast %175 : f32 to vector<1x6x6xf32>
    %177 = arith.mulf %176, %6 : vector<1x6x6xf32>
    %178 = arith.addf %174, %177 : vector<1x6x6xf32>
    %c2_6 = arith.constant 2 : index
    %179 = memref.load %arg2[%c2_6] : memref<150xf32, #tpu.memory_space<smem>>
    %180 = vector.broadcast %179 : f32 to vector<1x6x6xf32>
    %181 = arith.mulf %180, %8 : vector<1x6x6xf32>
    %182 = arith.addf %178, %181 : vector<1x6x6xf32>
    %c3_7 = arith.constant 3 : index
    %183 = memref.load %arg2[%c3_7] : memref<150xf32, #tpu.memory_space<smem>>
    %184 = vector.broadcast %183 : f32 to vector<1x6x6xf32>
    %185 = arith.mulf %184, %10 : vector<1x6x6xf32>
    %186 = arith.addf %182, %185 : vector<1x6x6xf32>
    %c4_8 = arith.constant 4 : index
    %187 = memref.load %arg2[%c4_8] : memref<150xf32, #tpu.memory_space<smem>>
    %188 = vector.broadcast %187 : f32 to vector<1x6x6xf32>
    %189 = arith.mulf %188, %12 : vector<1x6x6xf32>
    %190 = arith.addf %186, %189 : vector<1x6x6xf32>
    %c5_9 = arith.constant 5 : index
    %191 = memref.load %arg2[%c5_9] : memref<150xf32, #tpu.memory_space<smem>>
    %192 = vector.broadcast %191 : f32 to vector<1x6x6xf32>
    %193 = arith.mulf %192, %16 : vector<1x6x6xf32>
    %194 = arith.addf %190, %193 : vector<1x6x6xf32>
    %c6_10 = arith.constant 6 : index
    %195 = memref.load %arg2[%c6_10] : memref<150xf32, #tpu.memory_space<smem>>
    %196 = vector.broadcast %195 : f32 to vector<1x6x6xf32>
    %197 = arith.mulf %196, %18 : vector<1x6x6xf32>
    %198 = arith.addf %194, %197 : vector<1x6x6xf32>
    %c7_11 = arith.constant 7 : index
    %199 = memref.load %arg2[%c7_11] : memref<150xf32, #tpu.memory_space<smem>>
    %200 = vector.broadcast %199 : f32 to vector<1x6x6xf32>
    %201 = arith.mulf %200, %20 : vector<1x6x6xf32>
    %202 = arith.addf %198, %201 : vector<1x6x6xf32>
    %c8_12 = arith.constant 8 : index
    %203 = memref.load %arg2[%c8_12] : memref<150xf32, #tpu.memory_space<smem>>
    %204 = vector.broadcast %203 : f32 to vector<1x6x6xf32>
    %205 = arith.mulf %204, %22 : vector<1x6x6xf32>
    %206 = arith.addf %202, %205 : vector<1x6x6xf32>
    %c9_13 = arith.constant 9 : index
    %207 = memref.load %arg2[%c9_13] : memref<150xf32, #tpu.memory_space<smem>>
    %208 = vector.broadcast %207 : f32 to vector<1x6x6xf32>
    %209 = arith.mulf %208, %24 : vector<1x6x6xf32>
    %210 = arith.addf %206, %209 : vector<1x6x6xf32>
    %c10_14 = arith.constant 10 : index
    %211 = memref.load %arg2[%c10_14] : memref<150xf32, #tpu.memory_space<smem>>
    %212 = vector.broadcast %211 : f32 to vector<1x6x6xf32>
    %213 = arith.mulf %212, %28 : vector<1x6x6xf32>
    %214 = arith.addf %210, %213 : vector<1x6x6xf32>
    %c11_15 = arith.constant 11 : index
    %215 = memref.load %arg2[%c11_15] : memref<150xf32, #tpu.memory_space<smem>>
    %216 = vector.broadcast %215 : f32 to vector<1x6x6xf32>
    %217 = arith.mulf %216, %30 : vector<1x6x6xf32>
    %218 = arith.addf %214, %217 : vector<1x6x6xf32>
    %c12_16 = arith.constant 12 : index
    %219 = memref.load %arg2[%c12_16] : memref<150xf32, #tpu.memory_space<smem>>
    %220 = vector.broadcast %219 : f32 to vector<1x6x6xf32>
    %221 = arith.mulf %220, %32 : vector<1x6x6xf32>
    %222 = arith.addf %218, %221 : vector<1x6x6xf32>
    %c13_17 = arith.constant 13 : index
    %223 = memref.load %arg2[%c13_17] : memref<150xf32, #tpu.memory_space<smem>>
    %224 = vector.broadcast %223 : f32 to vector<1x6x6xf32>
    %225 = arith.mulf %224, %34 : vector<1x6x6xf32>
    %226 = arith.addf %222, %225 : vector<1x6x6xf32>
    %c14_18 = arith.constant 14 : index
    %227 = memref.load %arg2[%c14_18] : memref<150xf32, #tpu.memory_space<smem>>
    %228 = vector.broadcast %227 : f32 to vector<1x6x6xf32>
    %229 = arith.mulf %228, %36 : vector<1x6x6xf32>
    %230 = arith.addf %226, %229 : vector<1x6x6xf32>
    %c15_19 = arith.constant 15 : index
    %231 = memref.load %arg2[%c15_19] : memref<150xf32, #tpu.memory_space<smem>>
    %232 = vector.broadcast %231 : f32 to vector<1x6x6xf32>
    %233 = arith.mulf %232, %40 : vector<1x6x6xf32>
    %234 = arith.addf %230, %233 : vector<1x6x6xf32>
    %c16_20 = arith.constant 16 : index
    %235 = memref.load %arg2[%c16_20] : memref<150xf32, #tpu.memory_space<smem>>
    %236 = vector.broadcast %235 : f32 to vector<1x6x6xf32>
    %237 = arith.mulf %236, %42 : vector<1x6x6xf32>
    %238 = arith.addf %234, %237 : vector<1x6x6xf32>
    %c17_21 = arith.constant 17 : index
    %239 = memref.load %arg2[%c17_21] : memref<150xf32, #tpu.memory_space<smem>>
    %240 = vector.broadcast %239 : f32 to vector<1x6x6xf32>
    %241 = arith.mulf %240, %44 : vector<1x6x6xf32>
    %242 = arith.addf %238, %241 : vector<1x6x6xf32>
    %c18_22 = arith.constant 18 : index
    %243 = memref.load %arg2[%c18_22] : memref<150xf32, #tpu.memory_space<smem>>
    %244 = vector.broadcast %243 : f32 to vector<1x6x6xf32>
    %245 = arith.mulf %244, %46 : vector<1x6x6xf32>
    %246 = arith.addf %242, %245 : vector<1x6x6xf32>
    %c19_23 = arith.constant 19 : index
    %247 = memref.load %arg2[%c19_23] : memref<150xf32, #tpu.memory_space<smem>>
    %248 = vector.broadcast %247 : f32 to vector<1x6x6xf32>
    %249 = arith.mulf %248, %48 : vector<1x6x6xf32>
    %250 = arith.addf %246, %249 : vector<1x6x6xf32>
    %c20_24 = arith.constant 20 : index
    %251 = memref.load %arg2[%c20_24] : memref<150xf32, #tpu.memory_space<smem>>
    %252 = vector.broadcast %251 : f32 to vector<1x6x6xf32>
    %253 = arith.mulf %252, %52 : vector<1x6x6xf32>
    %254 = arith.addf %250, %253 : vector<1x6x6xf32>
    %c21_25 = arith.constant 21 : index
    %255 = memref.load %arg2[%c21_25] : memref<150xf32, #tpu.memory_space<smem>>
    %256 = vector.broadcast %255 : f32 to vector<1x6x6xf32>
    %257 = arith.mulf %256, %54 : vector<1x6x6xf32>
    %258 = arith.addf %254, %257 : vector<1x6x6xf32>
    %c22_26 = arith.constant 22 : index
    %259 = memref.load %arg2[%c22_26] : memref<150xf32, #tpu.memory_space<smem>>
    %260 = vector.broadcast %259 : f32 to vector<1x6x6xf32>
    %261 = arith.mulf %260, %56 : vector<1x6x6xf32>
    %262 = arith.addf %258, %261 : vector<1x6x6xf32>
    %c23_27 = arith.constant 23 : index
    %263 = memref.load %arg2[%c23_27] : memref<150xf32, #tpu.memory_space<smem>>
    %264 = vector.broadcast %263 : f32 to vector<1x6x6xf32>
    %265 = arith.mulf %264, %58 : vector<1x6x6xf32>
    %266 = arith.addf %262, %265 : vector<1x6x6xf32>
    %c24_28 = arith.constant 24 : index
    %267 = memref.load %arg2[%c24_28] : memref<150xf32, #tpu.memory_space<smem>>
    %268 = vector.broadcast %267 : f32 to vector<1x6x6xf32>
    %269 = arith.mulf %268, %60 : vector<1x6x6xf32>
    %270 = arith.addf %266, %269 : vector<1x6x6xf32>
    %c0_29 = arith.constant 0 : index
    %271 = memref.load %arg2[%c0_29] : memref<150xf32, #tpu.memory_space<smem>>
    %272 = vector.broadcast %271 : f32 to vector<1x6x6xf32>
    %273 = arith.mulf %272, %14 : vector<1x6x6xf32>
    %c1_30 = arith.constant 1 : index
    %274 = memref.load %arg2[%c1_30] : memref<150xf32, #tpu.memory_space<smem>>
    %275 = vector.broadcast %274 : f32 to vector<1x6x6xf32>
    %276 = arith.mulf %275, %16 : vector<1x6x6xf32>
    %277 = arith.addf %273, %276 : vector<1x6x6xf32>
    %c2_31 = arith.constant 2 : index
    %278 = memref.load %arg2[%c2_31] : memref<150xf32, #tpu.memory_space<smem>>
    %279 = vector.broadcast %278 : f32 to vector<1x6x6xf32>
    %280 = arith.mulf %279, %18 : vector<1x6x6xf32>
    %281 = arith.addf %277, %280 : vector<1x6x6xf32>
    %c3_32 = arith.constant 3 : index
    %282 = memref.load %arg2[%c3_32] : memref<150xf32, #tpu.memory_space<smem>>
    %283 = vector.broadcast %282 : f32 to vector<1x6x6xf32>
    %284 = arith.mulf %283, %20 : vector<1x6x6xf32>
    %285 = arith.addf %281, %284 : vector<1x6x6xf32>
    %c4_33 = arith.constant 4 : index
    %286 = memref.load %arg2[%c4_33] : memref<150xf32, #tpu.memory_space<smem>>
    %287 = vector.broadcast %286 : f32 to vector<1x6x6xf32>
    %288 = arith.mulf %287, %22 : vector<1x6x6xf32>
    %289 = arith.addf %285, %288 : vector<1x6x6xf32>
    %c5_34 = arith.constant 5 : index
    %290 = memref.load %arg2[%c5_34] : memref<150xf32, #tpu.memory_space<smem>>
    %291 = vector.broadcast %290 : f32 to vector<1x6x6xf32>
    %292 = arith.mulf %291, %26 : vector<1x6x6xf32>
    %293 = arith.addf %289, %292 : vector<1x6x6xf32>
    %c6_35 = arith.constant 6 : index
    %294 = memref.load %arg2[%c6_35] : memref<150xf32, #tpu.memory_space<smem>>
    %295 = vector.broadcast %294 : f32 to vector<1x6x6xf32>
    %296 = arith.mulf %295, %28 : vector<1x6x6xf32>
    %297 = arith.addf %293, %296 : vector<1x6x6xf32>
    %c7_36 = arith.constant 7 : index
    %298 = memref.load %arg2[%c7_36] : memref<150xf32, #tpu.memory_space<smem>>
    %299 = vector.broadcast %298 : f32 to vector<1x6x6xf32>
    %300 = arith.mulf %299, %30 : vector<1x6x6xf32>
    %301 = arith.addf %297, %300 : vector<1x6x6xf32>
    %c8_37 = arith.constant 8 : index
    %302 = memref.load %arg2[%c8_37] : memref<150xf32, #tpu.memory_space<smem>>
    %303 = vector.broadcast %302 : f32 to vector<1x6x6xf32>
    %304 = arith.mulf %303, %32 : vector<1x6x6xf32>
    %305 = arith.addf %301, %304 : vector<1x6x6xf32>
    %c9_38 = arith.constant 9 : index
    %306 = memref.load %arg2[%c9_38] : memref<150xf32, #tpu.memory_space<smem>>
    %307 = vector.broadcast %306 : f32 to vector<1x6x6xf32>
    %308 = arith.mulf %307, %34 : vector<1x6x6xf32>
    %309 = arith.addf %305, %308 : vector<1x6x6xf32>
    %c10_39 = arith.constant 10 : index
    %310 = memref.load %arg2[%c10_39] : memref<150xf32, #tpu.memory_space<smem>>
    %311 = vector.broadcast %310 : f32 to vector<1x6x6xf32>
    %312 = arith.mulf %311, %38 : vector<1x6x6xf32>
    %313 = arith.addf %309, %312 : vector<1x6x6xf32>
    %c11_40 = arith.constant 11 : index
    %314 = memref.load %arg2[%c11_40] : memref<150xf32, #tpu.memory_space<smem>>
    %315 = vector.broadcast %314 : f32 to vector<1x6x6xf32>
    %316 = arith.mulf %315, %40 : vector<1x6x6xf32>
    %317 = arith.addf %313, %316 : vector<1x6x6xf32>
    %c12_41 = arith.constant 12 : index
    %318 = memref.load %arg2[%c12_41] : memref<150xf32, #tpu.memory_space<smem>>
    %319 = vector.broadcast %318 : f32 to vector<1x6x6xf32>
    %320 = arith.mulf %319, %42 : vector<1x6x6xf32>
    %321 = arith.addf %317, %320 : vector<1x6x6xf32>
    %c13_42 = arith.constant 13 : index
    %322 = memref.load %arg2[%c13_42] : memref<150xf32, #tpu.memory_space<smem>>
    %323 = vector.broadcast %322 : f32 to vector<1x6x6xf32>
    %324 = arith.mulf %323, %44 : vector<1x6x6xf32>
    %325 = arith.addf %321, %324 : vector<1x6x6xf32>
    %c14_43 = arith.constant 14 : index
    %326 = memref.load %arg2[%c14_43] : memref<150xf32, #tpu.memory_space<smem>>
    %327 = vector.broadcast %326 : f32 to vector<1x6x6xf32>
    %328 = arith.mulf %327, %46 : vector<1x6x6xf32>
    %329 = arith.addf %325, %328 : vector<1x6x6xf32>
    %c15_44 = arith.constant 15 : index
    %330 = memref.load %arg2[%c15_44] : memref<150xf32, #tpu.memory_space<smem>>
    %331 = vector.broadcast %330 : f32 to vector<1x6x6xf32>
    %332 = arith.mulf %331, %50 : vector<1x6x6xf32>
    %333 = arith.addf %329, %332 : vector<1x6x6xf32>
    %c16_45 = arith.constant 16 : index
    %334 = memref.load %arg2[%c16_45] : memref<150xf32, #tpu.memory_space<smem>>
    %335 = vector.broadcast %334 : f32 to vector<1x6x6xf32>
    %336 = arith.mulf %335, %52 : vector<1x6x6xf32>
    %337 = arith.addf %333, %336 : vector<1x6x6xf32>
    %c17_46 = arith.constant 17 : index
    %338 = memref.load %arg2[%c17_46] : memref<150xf32, #tpu.memory_space<smem>>
    %339 = vector.broadcast %338 : f32 to vector<1x6x6xf32>
    %340 = arith.mulf %339, %54 : vector<1x6x6xf32>
    %341 = arith.addf %337, %340 : vector<1x6x6xf32>
    %c18_47 = arith.constant 18 : index
    %342 = memref.load %arg2[%c18_47] : memref<150xf32, #tpu.memory_space<smem>>
    %343 = vector.broadcast %342 : f32 to vector<1x6x6xf32>
    %344 = arith.mulf %343, %56 : vector<1x6x6xf32>
    %345 = arith.addf %341, %344 : vector<1x6x6xf32>
    %c19_48 = arith.constant 19 : index
    %346 = memref.load %arg2[%c19_48] : memref<150xf32, #tpu.memory_space<smem>>
    %347 = vector.broadcast %346 : f32 to vector<1x6x6xf32>
    %348 = arith.mulf %347, %58 : vector<1x6x6xf32>
    %349 = arith.addf %345, %348 : vector<1x6x6xf32>
    %c20_49 = arith.constant 20 : index
    %350 = memref.load %arg2[%c20_49] : memref<150xf32, #tpu.memory_space<smem>>
    %351 = vector.broadcast %350 : f32 to vector<1x6x6xf32>
    %352 = arith.mulf %351, %62 : vector<1x6x6xf32>
    %353 = arith.addf %349, %352 : vector<1x6x6xf32>
    %c21_50 = arith.constant 21 : index
    %354 = memref.load %arg2[%c21_50] : memref<150xf32, #tpu.memory_space<smem>>
    %355 = vector.broadcast %354 : f32 to vector<1x6x6xf32>
    %356 = arith.mulf %355, %64 : vector<1x6x6xf32>
    %357 = arith.addf %353, %356 : vector<1x6x6xf32>
    %c22_51 = arith.constant 22 : index
    %358 = memref.load %arg2[%c22_51] : memref<150xf32, #tpu.memory_space<smem>>
    %359 = vector.broadcast %358 : f32 to vector<1x6x6xf32>
    %360 = arith.mulf %359, %66 : vector<1x6x6xf32>
    %361 = arith.addf %357, %360 : vector<1x6x6xf32>
    %c23_52 = arith.constant 23 : index
    %362 = memref.load %arg2[%c23_52] : memref<150xf32, #tpu.memory_space<smem>>
    %363 = vector.broadcast %362 : f32 to vector<1x6x6xf32>
    %364 = arith.mulf %363, %68 : vector<1x6x6xf32>
    %365 = arith.addf %361, %364 : vector<1x6x6xf32>
    %c24_53 = arith.constant 24 : index
    %366 = memref.load %arg2[%c24_53] : memref<150xf32, #tpu.memory_space<smem>>
    %367 = vector.broadcast %366 : f32 to vector<1x6x6xf32>
    %368 = arith.mulf %367, %70 : vector<1x6x6xf32>
    %369 = arith.addf %365, %368 : vector<1x6x6xf32>
    %c0_54 = arith.constant 0 : index
    %370 = memref.load %arg2[%c0_54] : memref<150xf32, #tpu.memory_space<smem>>
    %371 = vector.broadcast %370 : f32 to vector<1x6x6xf32>
    %372 = arith.mulf %371, %16 : vector<1x6x6xf32>
    %c1_55 = arith.constant 1 : index
    %373 = memref.load %arg2[%c1_55] : memref<150xf32, #tpu.memory_space<smem>>
    %374 = vector.broadcast %373 : f32 to vector<1x6x6xf32>
    %375 = arith.mulf %374, %18 : vector<1x6x6xf32>
    %376 = arith.addf %372, %375 : vector<1x6x6xf32>
    %c2_56 = arith.constant 2 : index
    %377 = memref.load %arg2[%c2_56] : memref<150xf32, #tpu.memory_space<smem>>
    %378 = vector.broadcast %377 : f32 to vector<1x6x6xf32>
    %379 = arith.mulf %378, %20 : vector<1x6x6xf32>
    %380 = arith.addf %376, %379 : vector<1x6x6xf32>
    %c3_57 = arith.constant 3 : index
    %381 = memref.load %arg2[%c3_57] : memref<150xf32, #tpu.memory_space<smem>>
    %382 = vector.broadcast %381 : f32 to vector<1x6x6xf32>
    %383 = arith.mulf %382, %22 : vector<1x6x6xf32>
    %384 = arith.addf %380, %383 : vector<1x6x6xf32>
    %c4_58 = arith.constant 4 : index
    %385 = memref.load %arg2[%c4_58] : memref<150xf32, #tpu.memory_space<smem>>
    %386 = vector.broadcast %385 : f32 to vector<1x6x6xf32>
    %387 = arith.mulf %386, %24 : vector<1x6x6xf32>
    %388 = arith.addf %384, %387 : vector<1x6x6xf32>
    %c5_59 = arith.constant 5 : index
    %389 = memref.load %arg2[%c5_59] : memref<150xf32, #tpu.memory_space<smem>>
    %390 = vector.broadcast %389 : f32 to vector<1x6x6xf32>
    %391 = arith.mulf %390, %28 : vector<1x6x6xf32>
    %392 = arith.addf %388, %391 : vector<1x6x6xf32>
    %c6_60 = arith.constant 6 : index
    %393 = memref.load %arg2[%c6_60] : memref<150xf32, #tpu.memory_space<smem>>
    %394 = vector.broadcast %393 : f32 to vector<1x6x6xf32>
    %395 = arith.mulf %394, %30 : vector<1x6x6xf32>
    %396 = arith.addf %392, %395 : vector<1x6x6xf32>
    %c7_61 = arith.constant 7 : index
    %397 = memref.load %arg2[%c7_61] : memref<150xf32, #tpu.memory_space<smem>>
    %398 = vector.broadcast %397 : f32 to vector<1x6x6xf32>
    %399 = arith.mulf %398, %32 : vector<1x6x6xf32>
    %400 = arith.addf %396, %399 : vector<1x6x6xf32>
    %c8_62 = arith.constant 8 : index
    %401 = memref.load %arg2[%c8_62] : memref<150xf32, #tpu.memory_space<smem>>
    %402 = vector.broadcast %401 : f32 to vector<1x6x6xf32>
    %403 = arith.mulf %402, %34 : vector<1x6x6xf32>
    %404 = arith.addf %400, %403 : vector<1x6x6xf32>
    %c9_63 = arith.constant 9 : index
    %405 = memref.load %arg2[%c9_63] : memref<150xf32, #tpu.memory_space<smem>>
    %406 = vector.broadcast %405 : f32 to vector<1x6x6xf32>
    %407 = arith.mulf %406, %36 : vector<1x6x6xf32>
    %408 = arith.addf %404, %407 : vector<1x6x6xf32>
    %c10_64 = arith.constant 10 : index
    %409 = memref.load %arg2[%c10_64] : memref<150xf32, #tpu.memory_space<smem>>
    %410 = vector.broadcast %409 : f32 to vector<1x6x6xf32>
    %411 = arith.mulf %410, %40 : vector<1x6x6xf32>
    %412 = arith.addf %408, %411 : vector<1x6x6xf32>
    %c11_65 = arith.constant 11 : index
    %413 = memref.load %arg2[%c11_65] : memref<150xf32, #tpu.memory_space<smem>>
    %414 = vector.broadcast %413 : f32 to vector<1x6x6xf32>
    %415 = arith.mulf %414, %42 : vector<1x6x6xf32>
    %416 = arith.addf %412, %415 : vector<1x6x6xf32>
    %c12_66 = arith.constant 12 : index
    %417 = memref.load %arg2[%c12_66] : memref<150xf32, #tpu.memory_space<smem>>
    %418 = vector.broadcast %417 : f32 to vector<1x6x6xf32>
    %419 = arith.mulf %418, %44 : vector<1x6x6xf32>
    %420 = arith.addf %416, %419 : vector<1x6x6xf32>
    %c13_67 = arith.constant 13 : index
    %421 = memref.load %arg2[%c13_67] : memref<150xf32, #tpu.memory_space<smem>>
    %422 = vector.broadcast %421 : f32 to vector<1x6x6xf32>
    %423 = arith.mulf %422, %46 : vector<1x6x6xf32>
    %424 = arith.addf %420, %423 : vector<1x6x6xf32>
    %c14_68 = arith.constant 14 : index
    %425 = memref.load %arg2[%c14_68] : memref<150xf32, #tpu.memory_space<smem>>
    %426 = vector.broadcast %425 : f32 to vector<1x6x6xf32>
    %427 = arith.mulf %426, %48 : vector<1x6x6xf32>
    %428 = arith.addf %424, %427 : vector<1x6x6xf32>
    %c15_69 = arith.constant 15 : index
    %429 = memref.load %arg2[%c15_69] : memref<150xf32, #tpu.memory_space<smem>>
    %430 = vector.broadcast %429 : f32 to vector<1x6x6xf32>
    %431 = arith.mulf %430, %52 : vector<1x6x6xf32>
    %432 = arith.addf %428, %431 : vector<1x6x6xf32>
    %c16_70 = arith.constant 16 : index
    %433 = memref.load %arg2[%c16_70] : memref<150xf32, #tpu.memory_space<smem>>
    %434 = vector.broadcast %433 : f32 to vector<1x6x6xf32>
    %435 = arith.mulf %434, %54 : vector<1x6x6xf32>
    %436 = arith.addf %432, %435 : vector<1x6x6xf32>
    %c17_71 = arith.constant 17 : index
    %437 = memref.load %arg2[%c17_71] : memref<150xf32, #tpu.memory_space<smem>>
    %438 = vector.broadcast %437 : f32 to vector<1x6x6xf32>
    %439 = arith.mulf %438, %56 : vector<1x6x6xf32>
    %440 = arith.addf %436, %439 : vector<1x6x6xf32>
    %c18_72 = arith.constant 18 : index
    %441 = memref.load %arg2[%c18_72] : memref<150xf32, #tpu.memory_space<smem>>
    %442 = vector.broadcast %441 : f32 to vector<1x6x6xf32>
    %443 = arith.mulf %442, %58 : vector<1x6x6xf32>
    %444 = arith.addf %440, %443 : vector<1x6x6xf32>
    %c19_73 = arith.constant 19 : index
    %445 = memref.load %arg2[%c19_73] : memref<150xf32, #tpu.memory_space<smem>>
    %446 = vector.broadcast %445 : f32 to vector<1x6x6xf32>
    %447 = arith.mulf %446, %60 : vector<1x6x6xf32>
    %448 = arith.addf %444, %447 : vector<1x6x6xf32>
    %c20_74 = arith.constant 20 : index
    %449 = memref.load %arg2[%c20_74] : memref<150xf32, #tpu.memory_space<smem>>
    %450 = vector.broadcast %449 : f32 to vector<1x6x6xf32>
    %451 = arith.mulf %450, %64 : vector<1x6x6xf32>
    %452 = arith.addf %448, %451 : vector<1x6x6xf32>
    %c21_75 = arith.constant 21 : index
    %453 = memref.load %arg2[%c21_75] : memref<150xf32, #tpu.memory_space<smem>>
    %454 = vector.broadcast %453 : f32 to vector<1x6x6xf32>
    %455 = arith.mulf %454, %66 : vector<1x6x6xf32>
    %456 = arith.addf %452, %455 : vector<1x6x6xf32>
    %c22_76 = arith.constant 22 : index
    %457 = memref.load %arg2[%c22_76] : memref<150xf32, #tpu.memory_space<smem>>
    %458 = vector.broadcast %457 : f32 to vector<1x6x6xf32>
    %459 = arith.mulf %458, %68 : vector<1x6x6xf32>
    %460 = arith.addf %456, %459 : vector<1x6x6xf32>
    %c23_77 = arith.constant 23 : index
    %461 = memref.load %arg2[%c23_77] : memref<150xf32, #tpu.memory_space<smem>>
    %462 = vector.broadcast %461 : f32 to vector<1x6x6xf32>
    %463 = arith.mulf %462, %70 : vector<1x6x6xf32>
    %464 = arith.addf %460, %463 : vector<1x6x6xf32>
    %c24_78 = arith.constant 24 : index
    %465 = memref.load %arg2[%c24_78] : memref<150xf32, #tpu.memory_space<smem>>
    %466 = vector.broadcast %465 : f32 to vector<1x6x6xf32>
    %467 = arith.mulf %466, %72 : vector<1x6x6xf32>
    %468 = arith.addf %464, %467 : vector<1x6x6xf32>
    %469 = arith.maximumf %171, %270 : vector<1x6x6xf32>
    %470 = arith.maximumf %369, %468 : vector<1x6x6xf32>
    %471 = arith.maximumf %469, %470 : vector<1x6x6xf32>
    %c0_79 = arith.constant 0 : index
    %472 = memref.load %arg3[%c0_79] : memref<6xf32, #tpu.memory_space<smem>>
    %473 = vector.broadcast %472 : f32 to vector<1x6x6xf32>
    %474 = arith.addf %471, %473 : vector<1x6x6xf32>
    %cst = arith.constant 0.000000e+00 : f32
    %475 = vector.broadcast %cst : f32 to vector<1x6x6xf32>
    %476 = arith.maximumf %474, %475 : vector<1x6x6xf32>
    %c25 = arith.constant 25 : index
    %477 = memref.load %arg2[%c25] : memref<150xf32, #tpu.memory_space<smem>>
    %478 = vector.broadcast %477 : f32 to vector<1x6x6xf32>
    %479 = arith.mulf %478, %2 : vector<1x6x6xf32>
    %c26 = arith.constant 26 : index
    %480 = memref.load %arg2[%c26] : memref<150xf32, #tpu.memory_space<smem>>
    %481 = vector.broadcast %480 : f32 to vector<1x6x6xf32>
    %482 = arith.mulf %481, %4 : vector<1x6x6xf32>
    %483 = arith.addf %479, %482 : vector<1x6x6xf32>
    %c27 = arith.constant 27 : index
    %484 = memref.load %arg2[%c27] : memref<150xf32, #tpu.memory_space<smem>>
    %485 = vector.broadcast %484 : f32 to vector<1x6x6xf32>
    %486 = arith.mulf %485, %6 : vector<1x6x6xf32>
    %487 = arith.addf %483, %486 : vector<1x6x6xf32>
    %c28 = arith.constant 28 : index
    %488 = memref.load %arg2[%c28] : memref<150xf32, #tpu.memory_space<smem>>
    %489 = vector.broadcast %488 : f32 to vector<1x6x6xf32>
    %490 = arith.mulf %489, %8 : vector<1x6x6xf32>
    %491 = arith.addf %487, %490 : vector<1x6x6xf32>
    %c29 = arith.constant 29 : index
    %492 = memref.load %arg2[%c29] : memref<150xf32, #tpu.memory_space<smem>>
    %493 = vector.broadcast %492 : f32 to vector<1x6x6xf32>
    %494 = arith.mulf %493, %10 : vector<1x6x6xf32>
    %495 = arith.addf %491, %494 : vector<1x6x6xf32>
    %c30 = arith.constant 30 : index
    %496 = memref.load %arg2[%c30] : memref<150xf32, #tpu.memory_space<smem>>
    %497 = vector.broadcast %496 : f32 to vector<1x6x6xf32>
    %498 = arith.mulf %497, %14 : vector<1x6x6xf32>
    %499 = arith.addf %495, %498 : vector<1x6x6xf32>
    %c31 = arith.constant 31 : index
    %500 = memref.load %arg2[%c31] : memref<150xf32, #tpu.memory_space<smem>>
    %501 = vector.broadcast %500 : f32 to vector<1x6x6xf32>
    %502 = arith.mulf %501, %16 : vector<1x6x6xf32>
    %503 = arith.addf %499, %502 : vector<1x6x6xf32>
    %c32 = arith.constant 32 : index
    %504 = memref.load %arg2[%c32] : memref<150xf32, #tpu.memory_space<smem>>
    %505 = vector.broadcast %504 : f32 to vector<1x6x6xf32>
    %506 = arith.mulf %505, %18 : vector<1x6x6xf32>
    %507 = arith.addf %503, %506 : vector<1x6x6xf32>
    %c33 = arith.constant 33 : index
    %508 = memref.load %arg2[%c33] : memref<150xf32, #tpu.memory_space<smem>>
    %509 = vector.broadcast %508 : f32 to vector<1x6x6xf32>
    %510 = arith.mulf %509, %20 : vector<1x6x6xf32>
    %511 = arith.addf %507, %510 : vector<1x6x6xf32>
    %c34 = arith.constant 34 : index
    %512 = memref.load %arg2[%c34] : memref<150xf32, #tpu.memory_space<smem>>
    %513 = vector.broadcast %512 : f32 to vector<1x6x6xf32>
    %514 = arith.mulf %513, %22 : vector<1x6x6xf32>
    %515 = arith.addf %511, %514 : vector<1x6x6xf32>
    %c35 = arith.constant 35 : index
    %516 = memref.load %arg2[%c35] : memref<150xf32, #tpu.memory_space<smem>>
    %517 = vector.broadcast %516 : f32 to vector<1x6x6xf32>
    %518 = arith.mulf %517, %26 : vector<1x6x6xf32>
    %519 = arith.addf %515, %518 : vector<1x6x6xf32>
    %c36 = arith.constant 36 : index
    %520 = memref.load %arg2[%c36] : memref<150xf32, #tpu.memory_space<smem>>
    %521 = vector.broadcast %520 : f32 to vector<1x6x6xf32>
    %522 = arith.mulf %521, %28 : vector<1x6x6xf32>
    %523 = arith.addf %519, %522 : vector<1x6x6xf32>
    %c37 = arith.constant 37 : index
    %524 = memref.load %arg2[%c37] : memref<150xf32, #tpu.memory_space<smem>>
    %525 = vector.broadcast %524 : f32 to vector<1x6x6xf32>
    %526 = arith.mulf %525, %30 : vector<1x6x6xf32>
    %527 = arith.addf %523, %526 : vector<1x6x6xf32>
    %c38 = arith.constant 38 : index
    %528 = memref.load %arg2[%c38] : memref<150xf32, #tpu.memory_space<smem>>
    %529 = vector.broadcast %528 : f32 to vector<1x6x6xf32>
    %530 = arith.mulf %529, %32 : vector<1x6x6xf32>
    %531 = arith.addf %527, %530 : vector<1x6x6xf32>
    %c39 = arith.constant 39 : index
    %532 = memref.load %arg2[%c39] : memref<150xf32, #tpu.memory_space<smem>>
    %533 = vector.broadcast %532 : f32 to vector<1x6x6xf32>
    %534 = arith.mulf %533, %34 : vector<1x6x6xf32>
    %535 = arith.addf %531, %534 : vector<1x6x6xf32>
    %c40 = arith.constant 40 : index
    %536 = memref.load %arg2[%c40] : memref<150xf32, #tpu.memory_space<smem>>
    %537 = vector.broadcast %536 : f32 to vector<1x6x6xf32>
    %538 = arith.mulf %537, %38 : vector<1x6x6xf32>
    %539 = arith.addf %535, %538 : vector<1x6x6xf32>
    %c41 = arith.constant 41 : index
    %540 = memref.load %arg2[%c41] : memref<150xf32, #tpu.memory_space<smem>>
    %541 = vector.broadcast %540 : f32 to vector<1x6x6xf32>
    %542 = arith.mulf %541, %40 : vector<1x6x6xf32>
    %543 = arith.addf %539, %542 : vector<1x6x6xf32>
    %c42 = arith.constant 42 : index
    %544 = memref.load %arg2[%c42] : memref<150xf32, #tpu.memory_space<smem>>
    %545 = vector.broadcast %544 : f32 to vector<1x6x6xf32>
    %546 = arith.mulf %545, %42 : vector<1x6x6xf32>
    %547 = arith.addf %543, %546 : vector<1x6x6xf32>
    %c43 = arith.constant 43 : index
    %548 = memref.load %arg2[%c43] : memref<150xf32, #tpu.memory_space<smem>>
    %549 = vector.broadcast %548 : f32 to vector<1x6x6xf32>
    %550 = arith.mulf %549, %44 : vector<1x6x6xf32>
    %551 = arith.addf %547, %550 : vector<1x6x6xf32>
    %c44 = arith.constant 44 : index
    %552 = memref.load %arg2[%c44] : memref<150xf32, #tpu.memory_space<smem>>
    %553 = vector.broadcast %552 : f32 to vector<1x6x6xf32>
    %554 = arith.mulf %553, %46 : vector<1x6x6xf32>
    %555 = arith.addf %551, %554 : vector<1x6x6xf32>
    %c45 = arith.constant 45 : index
    %556 = memref.load %arg2[%c45] : memref<150xf32, #tpu.memory_space<smem>>
    %557 = vector.broadcast %556 : f32 to vector<1x6x6xf32>
    %558 = arith.mulf %557, %50 : vector<1x6x6xf32>
    %559 = arith.addf %555, %558 : vector<1x6x6xf32>
    %c46 = arith.constant 46 : index
    %560 = memref.load %arg2[%c46] : memref<150xf32, #tpu.memory_space<smem>>
    %561 = vector.broadcast %560 : f32 to vector<1x6x6xf32>
    %562 = arith.mulf %561, %52 : vector<1x6x6xf32>
    %563 = arith.addf %559, %562 : vector<1x6x6xf32>
    %c47 = arith.constant 47 : index
    %564 = memref.load %arg2[%c47] : memref<150xf32, #tpu.memory_space<smem>>
    %565 = vector.broadcast %564 : f32 to vector<1x6x6xf32>
    %566 = arith.mulf %565, %54 : vector<1x6x6xf32>
    %567 = arith.addf %563, %566 : vector<1x6x6xf32>
    %c48 = arith.constant 48 : index
    %568 = memref.load %arg2[%c48] : memref<150xf32, #tpu.memory_space<smem>>
    %569 = vector.broadcast %568 : f32 to vector<1x6x6xf32>
    %570 = arith.mulf %569, %56 : vector<1x6x6xf32>
    %571 = arith.addf %567, %570 : vector<1x6x6xf32>
    %c49 = arith.constant 49 : index
    %572 = memref.load %arg2[%c49] : memref<150xf32, #tpu.memory_space<smem>>
    %573 = vector.broadcast %572 : f32 to vector<1x6x6xf32>
    %574 = arith.mulf %573, %58 : vector<1x6x6xf32>
    %575 = arith.addf %571, %574 : vector<1x6x6xf32>
    %c25_80 = arith.constant 25 : index
    %576 = memref.load %arg2[%c25_80] : memref<150xf32, #tpu.memory_space<smem>>
    %577 = vector.broadcast %576 : f32 to vector<1x6x6xf32>
    %578 = arith.mulf %577, %4 : vector<1x6x6xf32>
    %c26_81 = arith.constant 26 : index
    %579 = memref.load %arg2[%c26_81] : memref<150xf32, #tpu.memory_space<smem>>
    %580 = vector.broadcast %579 : f32 to vector<1x6x6xf32>
    %581 = arith.mulf %580, %6 : vector<1x6x6xf32>
    %582 = arith.addf %578, %581 : vector<1x6x6xf32>
    %c27_82 = arith.constant 27 : index
    %583 = memref.load %arg2[%c27_82] : memref<150xf32, #tpu.memory_space<smem>>
    %584 = vector.broadcast %583 : f32 to vector<1x6x6xf32>
    %585 = arith.mulf %584, %8 : vector<1x6x6xf32>
    %586 = arith.addf %582, %585 : vector<1x6x6xf32>
    %c28_83 = arith.constant 28 : index
    %587 = memref.load %arg2[%c28_83] : memref<150xf32, #tpu.memory_space<smem>>
    %588 = vector.broadcast %587 : f32 to vector<1x6x6xf32>
    %589 = arith.mulf %588, %10 : vector<1x6x6xf32>
    %590 = arith.addf %586, %589 : vector<1x6x6xf32>
    %c29_84 = arith.constant 29 : index
    %591 = memref.load %arg2[%c29_84] : memref<150xf32, #tpu.memory_space<smem>>
    %592 = vector.broadcast %591 : f32 to vector<1x6x6xf32>
    %593 = arith.mulf %592, %12 : vector<1x6x6xf32>
    %594 = arith.addf %590, %593 : vector<1x6x6xf32>
    %c30_85 = arith.constant 30 : index
    %595 = memref.load %arg2[%c30_85] : memref<150xf32, #tpu.memory_space<smem>>
    %596 = vector.broadcast %595 : f32 to vector<1x6x6xf32>
    %597 = arith.mulf %596, %16 : vector<1x6x6xf32>
    %598 = arith.addf %594, %597 : vector<1x6x6xf32>
    %c31_86 = arith.constant 31 : index
    %599 = memref.load %arg2[%c31_86] : memref<150xf32, #tpu.memory_space<smem>>
    %600 = vector.broadcast %599 : f32 to vector<1x6x6xf32>
    %601 = arith.mulf %600, %18 : vector<1x6x6xf32>
    %602 = arith.addf %598, %601 : vector<1x6x6xf32>
    %c32_87 = arith.constant 32 : index
    %603 = memref.load %arg2[%c32_87] : memref<150xf32, #tpu.memory_space<smem>>
    %604 = vector.broadcast %603 : f32 to vector<1x6x6xf32>
    %605 = arith.mulf %604, %20 : vector<1x6x6xf32>
    %606 = arith.addf %602, %605 : vector<1x6x6xf32>
    %c33_88 = arith.constant 33 : index
    %607 = memref.load %arg2[%c33_88] : memref<150xf32, #tpu.memory_space<smem>>
    %608 = vector.broadcast %607 : f32 to vector<1x6x6xf32>
    %609 = arith.mulf %608, %22 : vector<1x6x6xf32>
    %610 = arith.addf %606, %609 : vector<1x6x6xf32>
    %c34_89 = arith.constant 34 : index
    %611 = memref.load %arg2[%c34_89] : memref<150xf32, #tpu.memory_space<smem>>
    %612 = vector.broadcast %611 : f32 to vector<1x6x6xf32>
    %613 = arith.mulf %612, %24 : vector<1x6x6xf32>
    %614 = arith.addf %610, %613 : vector<1x6x6xf32>
    %c35_90 = arith.constant 35 : index
    %615 = memref.load %arg2[%c35_90] : memref<150xf32, #tpu.memory_space<smem>>
    %616 = vector.broadcast %615 : f32 to vector<1x6x6xf32>
    %617 = arith.mulf %616, %28 : vector<1x6x6xf32>
    %618 = arith.addf %614, %617 : vector<1x6x6xf32>
    %c36_91 = arith.constant 36 : index
    %619 = memref.load %arg2[%c36_91] : memref<150xf32, #tpu.memory_space<smem>>
    %620 = vector.broadcast %619 : f32 to vector<1x6x6xf32>
    %621 = arith.mulf %620, %30 : vector<1x6x6xf32>
    %622 = arith.addf %618, %621 : vector<1x6x6xf32>
    %c37_92 = arith.constant 37 : index
    %623 = memref.load %arg2[%c37_92] : memref<150xf32, #tpu.memory_space<smem>>
    %624 = vector.broadcast %623 : f32 to vector<1x6x6xf32>
    %625 = arith.mulf %624, %32 : vector<1x6x6xf32>
    %626 = arith.addf %622, %625 : vector<1x6x6xf32>
    %c38_93 = arith.constant 38 : index
    %627 = memref.load %arg2[%c38_93] : memref<150xf32, #tpu.memory_space<smem>>
    %628 = vector.broadcast %627 : f32 to vector<1x6x6xf32>
    %629 = arith.mulf %628, %34 : vector<1x6x6xf32>
    %630 = arith.addf %626, %629 : vector<1x6x6xf32>
    %c39_94 = arith.constant 39 : index
    %631 = memref.load %arg2[%c39_94] : memref<150xf32, #tpu.memory_space<smem>>
    %632 = vector.broadcast %631 : f32 to vector<1x6x6xf32>
    %633 = arith.mulf %632, %36 : vector<1x6x6xf32>
    %634 = arith.addf %630, %633 : vector<1x6x6xf32>
    %c40_95 = arith.constant 40 : index
    %635 = memref.load %arg2[%c40_95] : memref<150xf32, #tpu.memory_space<smem>>
    %636 = vector.broadcast %635 : f32 to vector<1x6x6xf32>
    %637 = arith.mulf %636, %40 : vector<1x6x6xf32>
    %638 = arith.addf %634, %637 : vector<1x6x6xf32>
    %c41_96 = arith.constant 41 : index
    %639 = memref.load %arg2[%c41_96] : memref<150xf32, #tpu.memory_space<smem>>
    %640 = vector.broadcast %639 : f32 to vector<1x6x6xf32>
    %641 = arith.mulf %640, %42 : vector<1x6x6xf32>
    %642 = arith.addf %638, %641 : vector<1x6x6xf32>
    %c42_97 = arith.constant 42 : index
    %643 = memref.load %arg2[%c42_97] : memref<150xf32, #tpu.memory_space<smem>>
    %644 = vector.broadcast %643 : f32 to vector<1x6x6xf32>
    %645 = arith.mulf %644, %44 : vector<1x6x6xf32>
    %646 = arith.addf %642, %645 : vector<1x6x6xf32>
    %c43_98 = arith.constant 43 : index
    %647 = memref.load %arg2[%c43_98] : memref<150xf32, #tpu.memory_space<smem>>
    %648 = vector.broadcast %647 : f32 to vector<1x6x6xf32>
    %649 = arith.mulf %648, %46 : vector<1x6x6xf32>
    %650 = arith.addf %646, %649 : vector<1x6x6xf32>
    %c44_99 = arith.constant 44 : index
    %651 = memref.load %arg2[%c44_99] : memref<150xf32, #tpu.memory_space<smem>>
    %652 = vector.broadcast %651 : f32 to vector<1x6x6xf32>
    %653 = arith.mulf %652, %48 : vector<1x6x6xf32>
    %654 = arith.addf %650, %653 : vector<1x6x6xf32>
    %c45_100 = arith.constant 45 : index
    %655 = memref.load %arg2[%c45_100] : memref<150xf32, #tpu.memory_space<smem>>
    %656 = vector.broadcast %655 : f32 to vector<1x6x6xf32>
    %657 = arith.mulf %656, %52 : vector<1x6x6xf32>
    %658 = arith.addf %654, %657 : vector<1x6x6xf32>
    %c46_101 = arith.constant 46 : index
    %659 = memref.load %arg2[%c46_101] : memref<150xf32, #tpu.memory_space<smem>>
    %660 = vector.broadcast %659 : f32 to vector<1x6x6xf32>
    %661 = arith.mulf %660, %54 : vector<1x6x6xf32>
    %662 = arith.addf %658, %661 : vector<1x6x6xf32>
    %c47_102 = arith.constant 47 : index
    %663 = memref.load %arg2[%c47_102] : memref<150xf32, #tpu.memory_space<smem>>
    %664 = vector.broadcast %663 : f32 to vector<1x6x6xf32>
    %665 = arith.mulf %664, %56 : vector<1x6x6xf32>
    %666 = arith.addf %662, %665 : vector<1x6x6xf32>
    %c48_103 = arith.constant 48 : index
    %667 = memref.load %arg2[%c48_103] : memref<150xf32, #tpu.memory_space<smem>>
    %668 = vector.broadcast %667 : f32 to vector<1x6x6xf32>
    %669 = arith.mulf %668, %58 : vector<1x6x6xf32>
    %670 = arith.addf %666, %669 : vector<1x6x6xf32>
    %c49_104 = arith.constant 49 : index
    %671 = memref.load %arg2[%c49_104] : memref<150xf32, #tpu.memory_space<smem>>
    %672 = vector.broadcast %671 : f32 to vector<1x6x6xf32>
    %673 = arith.mulf %672, %60 : vector<1x6x6xf32>
    %674 = arith.addf %670, %673 : vector<1x6x6xf32>
    %c25_105 = arith.constant 25 : index
    %675 = memref.load %arg2[%c25_105] : memref<150xf32, #tpu.memory_space<smem>>
    %676 = vector.broadcast %675 : f32 to vector<1x6x6xf32>
    %677 = arith.mulf %676, %14 : vector<1x6x6xf32>
    %c26_106 = arith.constant 26 : index
    %678 = memref.load %arg2[%c26_106] : memref<150xf32, #tpu.memory_space<smem>>
    %679 = vector.broadcast %678 : f32 to vector<1x6x6xf32>
    %680 = arith.mulf %679, %16 : vector<1x6x6xf32>
    %681 = arith.addf %677, %680 : vector<1x6x6xf32>
    %c27_107 = arith.constant 27 : index
    %682 = memref.load %arg2[%c27_107] : memref<150xf32, #tpu.memory_space<smem>>
    %683 = vector.broadcast %682 : f32 to vector<1x6x6xf32>
    %684 = arith.mulf %683, %18 : vector<1x6x6xf32>
    %685 = arith.addf %681, %684 : vector<1x6x6xf32>
    %c28_108 = arith.constant 28 : index
    %686 = memref.load %arg2[%c28_108] : memref<150xf32, #tpu.memory_space<smem>>
    %687 = vector.broadcast %686 : f32 to vector<1x6x6xf32>
    %688 = arith.mulf %687, %20 : vector<1x6x6xf32>
    %689 = arith.addf %685, %688 : vector<1x6x6xf32>
    %c29_109 = arith.constant 29 : index
    %690 = memref.load %arg2[%c29_109] : memref<150xf32, #tpu.memory_space<smem>>
    %691 = vector.broadcast %690 : f32 to vector<1x6x6xf32>
    %692 = arith.mulf %691, %22 : vector<1x6x6xf32>
    %693 = arith.addf %689, %692 : vector<1x6x6xf32>
    %c30_110 = arith.constant 30 : index
    %694 = memref.load %arg2[%c30_110] : memref<150xf32, #tpu.memory_space<smem>>
    %695 = vector.broadcast %694 : f32 to vector<1x6x6xf32>
    %696 = arith.mulf %695, %26 : vector<1x6x6xf32>
    %697 = arith.addf %693, %696 : vector<1x6x6xf32>
    %c31_111 = arith.constant 31 : index
    %698 = memref.load %arg2[%c31_111] : memref<150xf32, #tpu.memory_space<smem>>
    %699 = vector.broadcast %698 : f32 to vector<1x6x6xf32>
    %700 = arith.mulf %699, %28 : vector<1x6x6xf32>
    %701 = arith.addf %697, %700 : vector<1x6x6xf32>
    %c32_112 = arith.constant 32 : index
    %702 = memref.load %arg2[%c32_112] : memref<150xf32, #tpu.memory_space<smem>>
    %703 = vector.broadcast %702 : f32 to vector<1x6x6xf32>
    %704 = arith.mulf %703, %30 : vector<1x6x6xf32>
    %705 = arith.addf %701, %704 : vector<1x6x6xf32>
    %c33_113 = arith.constant 33 : index
    %706 = memref.load %arg2[%c33_113] : memref<150xf32, #tpu.memory_space<smem>>
    %707 = vector.broadcast %706 : f32 to vector<1x6x6xf32>
    %708 = arith.mulf %707, %32 : vector<1x6x6xf32>
    %709 = arith.addf %705, %708 : vector<1x6x6xf32>
    %c34_114 = arith.constant 34 : index
    %710 = memref.load %arg2[%c34_114] : memref<150xf32, #tpu.memory_space<smem>>
    %711 = vector.broadcast %710 : f32 to vector<1x6x6xf32>
    %712 = arith.mulf %711, %34 : vector<1x6x6xf32>
    %713 = arith.addf %709, %712 : vector<1x6x6xf32>
    %c35_115 = arith.constant 35 : index
    %714 = memref.load %arg2[%c35_115] : memref<150xf32, #tpu.memory_space<smem>>
    %715 = vector.broadcast %714 : f32 to vector<1x6x6xf32>
    %716 = arith.mulf %715, %38 : vector<1x6x6xf32>
    %717 = arith.addf %713, %716 : vector<1x6x6xf32>
    %c36_116 = arith.constant 36 : index
    %718 = memref.load %arg2[%c36_116] : memref<150xf32, #tpu.memory_space<smem>>
    %719 = vector.broadcast %718 : f32 to vector<1x6x6xf32>
    %720 = arith.mulf %719, %40 : vector<1x6x6xf32>
    %721 = arith.addf %717, %720 : vector<1x6x6xf32>
    %c37_117 = arith.constant 37 : index
    %722 = memref.load %arg2[%c37_117] : memref<150xf32, #tpu.memory_space<smem>>
    %723 = vector.broadcast %722 : f32 to vector<1x6x6xf32>
    %724 = arith.mulf %723, %42 : vector<1x6x6xf32>
    %725 = arith.addf %721, %724 : vector<1x6x6xf32>
    %c38_118 = arith.constant 38 : index
    %726 = memref.load %arg2[%c38_118] : memref<150xf32, #tpu.memory_space<smem>>
    %727 = vector.broadcast %726 : f32 to vector<1x6x6xf32>
    %728 = arith.mulf %727, %44 : vector<1x6x6xf32>
    %729 = arith.addf %725, %728 : vector<1x6x6xf32>
    %c39_119 = arith.constant 39 : index
    %730 = memref.load %arg2[%c39_119] : memref<150xf32, #tpu.memory_space<smem>>
    %731 = vector.broadcast %730 : f32 to vector<1x6x6xf32>
    %732 = arith.mulf %731, %46 : vector<1x6x6xf32>
    %733 = arith.addf %729, %732 : vector<1x6x6xf32>
    %c40_120 = arith.constant 40 : index
    %734 = memref.load %arg2[%c40_120] : memref<150xf32, #tpu.memory_space<smem>>
    %735 = vector.broadcast %734 : f32 to vector<1x6x6xf32>
    %736 = arith.mulf %735, %50 : vector<1x6x6xf32>
    %737 = arith.addf %733, %736 : vector<1x6x6xf32>
    %c41_121 = arith.constant 41 : index
    %738 = memref.load %arg2[%c41_121] : memref<150xf32, #tpu.memory_space<smem>>
    %739 = vector.broadcast %738 : f32 to vector<1x6x6xf32>
    %740 = arith.mulf %739, %52 : vector<1x6x6xf32>
    %741 = arith.addf %737, %740 : vector<1x6x6xf32>
    %c42_122 = arith.constant 42 : index
    %742 = memref.load %arg2[%c42_122] : memref<150xf32, #tpu.memory_space<smem>>
    %743 = vector.broadcast %742 : f32 to vector<1x6x6xf32>
    %744 = arith.mulf %743, %54 : vector<1x6x6xf32>
    %745 = arith.addf %741, %744 : vector<1x6x6xf32>
    %c43_123 = arith.constant 43 : index
    %746 = memref.load %arg2[%c43_123] : memref<150xf32, #tpu.memory_space<smem>>
    %747 = vector.broadcast %746 : f32 to vector<1x6x6xf32>
    %748 = arith.mulf %747, %56 : vector<1x6x6xf32>
    %749 = arith.addf %745, %748 : vector<1x6x6xf32>
    %c44_124 = arith.constant 44 : index
    %750 = memref.load %arg2[%c44_124] : memref<150xf32, #tpu.memory_space<smem>>
    %751 = vector.broadcast %750 : f32 to vector<1x6x6xf32>
    %752 = arith.mulf %751, %58 : vector<1x6x6xf32>
    %753 = arith.addf %749, %752 : vector<1x6x6xf32>
    %c45_125 = arith.constant 45 : index
    %754 = memref.load %arg2[%c45_125] : memref<150xf32, #tpu.memory_space<smem>>
    %755 = vector.broadcast %754 : f32 to vector<1x6x6xf32>
    %756 = arith.mulf %755, %62 : vector<1x6x6xf32>
    %757 = arith.addf %753, %756 : vector<1x6x6xf32>
    %c46_126 = arith.constant 46 : index
    %758 = memref.load %arg2[%c46_126] : memref<150xf32, #tpu.memory_space<smem>>
    %759 = vector.broadcast %758 : f32 to vector<1x6x6xf32>
    %760 = arith.mulf %759, %64 : vector<1x6x6xf32>
    %761 = arith.addf %757, %760 : vector<1x6x6xf32>
    %c47_127 = arith.constant 47 : index
    %762 = memref.load %arg2[%c47_127] : memref<150xf32, #tpu.memory_space<smem>>
    %763 = vector.broadcast %762 : f32 to vector<1x6x6xf32>
    %764 = arith.mulf %763, %66 : vector<1x6x6xf32>
    %765 = arith.addf %761, %764 : vector<1x6x6xf32>
    %c48_128 = arith.constant 48 : index
    %766 = memref.load %arg2[%c48_128] : memref<150xf32, #tpu.memory_space<smem>>
    %767 = vector.broadcast %766 : f32 to vector<1x6x6xf32>
    %768 = arith.mulf %767, %68 : vector<1x6x6xf32>
    %769 = arith.addf %765, %768 : vector<1x6x6xf32>
    %c49_129 = arith.constant 49 : index
    %770 = memref.load %arg2[%c49_129] : memref<150xf32, #tpu.memory_space<smem>>
    %771 = vector.broadcast %770 : f32 to vector<1x6x6xf32>
    %772 = arith.mulf %771, %70 : vector<1x6x6xf32>
    %773 = arith.addf %769, %772 : vector<1x6x6xf32>
    %c25_130 = arith.constant 25 : index
    %774 = memref.load %arg2[%c25_130] : memref<150xf32, #tpu.memory_space<smem>>
    %775 = vector.broadcast %774 : f32 to vector<1x6x6xf32>
    %776 = arith.mulf %775, %16 : vector<1x6x6xf32>
    %c26_131 = arith.constant 26 : index
    %777 = memref.load %arg2[%c26_131] : memref<150xf32, #tpu.memory_space<smem>>
    %778 = vector.broadcast %777 : f32 to vector<1x6x6xf32>
    %779 = arith.mulf %778, %18 : vector<1x6x6xf32>
    %780 = arith.addf %776, %779 : vector<1x6x6xf32>
    %c27_132 = arith.constant 27 : index
    %781 = memref.load %arg2[%c27_132] : memref<150xf32, #tpu.memory_space<smem>>
    %782 = vector.broadcast %781 : f32 to vector<1x6x6xf32>
    %783 = arith.mulf %782, %20 : vector<1x6x6xf32>
    %784 = arith.addf %780, %783 : vector<1x6x6xf32>
    %c28_133 = arith.constant 28 : index
    %785 = memref.load %arg2[%c28_133] : memref<150xf32, #tpu.memory_space<smem>>
    %786 = vector.broadcast %785 : f32 to vector<1x6x6xf32>
    %787 = arith.mulf %786, %22 : vector<1x6x6xf32>
    %788 = arith.addf %784, %787 : vector<1x6x6xf32>
    %c29_134 = arith.constant 29 : index
    %789 = memref.load %arg2[%c29_134] : memref<150xf32, #tpu.memory_space<smem>>
    %790 = vector.broadcast %789 : f32 to vector<1x6x6xf32>
    %791 = arith.mulf %790, %24 : vector<1x6x6xf32>
    %792 = arith.addf %788, %791 : vector<1x6x6xf32>
    %c30_135 = arith.constant 30 : index
    %793 = memref.load %arg2[%c30_135] : memref<150xf32, #tpu.memory_space<smem>>
    %794 = vector.broadcast %793 : f32 to vector<1x6x6xf32>
    %795 = arith.mulf %794, %28 : vector<1x6x6xf32>
    %796 = arith.addf %792, %795 : vector<1x6x6xf32>
    %c31_136 = arith.constant 31 : index
    %797 = memref.load %arg2[%c31_136] : memref<150xf32, #tpu.memory_space<smem>>
    %798 = vector.broadcast %797 : f32 to vector<1x6x6xf32>
    %799 = arith.mulf %798, %30 : vector<1x6x6xf32>
    %800 = arith.addf %796, %799 : vector<1x6x6xf32>
    %c32_137 = arith.constant 32 : index
    %801 = memref.load %arg2[%c32_137] : memref<150xf32, #tpu.memory_space<smem>>
    %802 = vector.broadcast %801 : f32 to vector<1x6x6xf32>
    %803 = arith.mulf %802, %32 : vector<1x6x6xf32>
    %804 = arith.addf %800, %803 : vector<1x6x6xf32>
    %c33_138 = arith.constant 33 : index
    %805 = memref.load %arg2[%c33_138] : memref<150xf32, #tpu.memory_space<smem>>
    %806 = vector.broadcast %805 : f32 to vector<1x6x6xf32>
    %807 = arith.mulf %806, %34 : vector<1x6x6xf32>
    %808 = arith.addf %804, %807 : vector<1x6x6xf32>
    %c34_139 = arith.constant 34 : index
    %809 = memref.load %arg2[%c34_139] : memref<150xf32, #tpu.memory_space<smem>>
    %810 = vector.broadcast %809 : f32 to vector<1x6x6xf32>
    %811 = arith.mulf %810, %36 : vector<1x6x6xf32>
    %812 = arith.addf %808, %811 : vector<1x6x6xf32>
    %c35_140 = arith.constant 35 : index
    %813 = memref.load %arg2[%c35_140] : memref<150xf32, #tpu.memory_space<smem>>
    %814 = vector.broadcast %813 : f32 to vector<1x6x6xf32>
    %815 = arith.mulf %814, %40 : vector<1x6x6xf32>
    %816 = arith.addf %812, %815 : vector<1x6x6xf32>
    %c36_141 = arith.constant 36 : index
    %817 = memref.load %arg2[%c36_141] : memref<150xf32, #tpu.memory_space<smem>>
    %818 = vector.broadcast %817 : f32 to vector<1x6x6xf32>
    %819 = arith.mulf %818, %42 : vector<1x6x6xf32>
    %820 = arith.addf %816, %819 : vector<1x6x6xf32>
    %c37_142 = arith.constant 37 : index
    %821 = memref.load %arg2[%c37_142] : memref<150xf32, #tpu.memory_space<smem>>
    %822 = vector.broadcast %821 : f32 to vector<1x6x6xf32>
    %823 = arith.mulf %822, %44 : vector<1x6x6xf32>
    %824 = arith.addf %820, %823 : vector<1x6x6xf32>
    %c38_143 = arith.constant 38 : index
    %825 = memref.load %arg2[%c38_143] : memref<150xf32, #tpu.memory_space<smem>>
    %826 = vector.broadcast %825 : f32 to vector<1x6x6xf32>
    %827 = arith.mulf %826, %46 : vector<1x6x6xf32>
    %828 = arith.addf %824, %827 : vector<1x6x6xf32>
    %c39_144 = arith.constant 39 : index
    %829 = memref.load %arg2[%c39_144] : memref<150xf32, #tpu.memory_space<smem>>
    %830 = vector.broadcast %829 : f32 to vector<1x6x6xf32>
    %831 = arith.mulf %830, %48 : vector<1x6x6xf32>
    %832 = arith.addf %828, %831 : vector<1x6x6xf32>
    %c40_145 = arith.constant 40 : index
    %833 = memref.load %arg2[%c40_145] : memref<150xf32, #tpu.memory_space<smem>>
    %834 = vector.broadcast %833 : f32 to vector<1x6x6xf32>
    %835 = arith.mulf %834, %52 : vector<1x6x6xf32>
    %836 = arith.addf %832, %835 : vector<1x6x6xf32>
    %c41_146 = arith.constant 41 : index
    %837 = memref.load %arg2[%c41_146] : memref<150xf32, #tpu.memory_space<smem>>
    %838 = vector.broadcast %837 : f32 to vector<1x6x6xf32>
    %839 = arith.mulf %838, %54 : vector<1x6x6xf32>
    %840 = arith.addf %836, %839 : vector<1x6x6xf32>
    %c42_147 = arith.constant 42 : index
    %841 = memref.load %arg2[%c42_147] : memref<150xf32, #tpu.memory_space<smem>>
    %842 = vector.broadcast %841 : f32 to vector<1x6x6xf32>
    %843 = arith.mulf %842, %56 : vector<1x6x6xf32>
    %844 = arith.addf %840, %843 : vector<1x6x6xf32>
    %c43_148 = arith.constant 43 : index
    %845 = memref.load %arg2[%c43_148] : memref<150xf32, #tpu.memory_space<smem>>
    %846 = vector.broadcast %845 : f32 to vector<1x6x6xf32>
    %847 = arith.mulf %846, %58 : vector<1x6x6xf32>
    %848 = arith.addf %844, %847 : vector<1x6x6xf32>
    %c44_149 = arith.constant 44 : index
    %849 = memref.load %arg2[%c44_149] : memref<150xf32, #tpu.memory_space<smem>>
    %850 = vector.broadcast %849 : f32 to vector<1x6x6xf32>
    %851 = arith.mulf %850, %60 : vector<1x6x6xf32>
    %852 = arith.addf %848, %851 : vector<1x6x6xf32>
    %c45_150 = arith.constant 45 : index
    %853 = memref.load %arg2[%c45_150] : memref<150xf32, #tpu.memory_space<smem>>
    %854 = vector.broadcast %853 : f32 to vector<1x6x6xf32>
    %855 = arith.mulf %854, %64 : vector<1x6x6xf32>
    %856 = arith.addf %852, %855 : vector<1x6x6xf32>
    %c46_151 = arith.constant 46 : index
    %857 = memref.load %arg2[%c46_151] : memref<150xf32, #tpu.memory_space<smem>>
    %858 = vector.broadcast %857 : f32 to vector<1x6x6xf32>
    %859 = arith.mulf %858, %66 : vector<1x6x6xf32>
    %860 = arith.addf %856, %859 : vector<1x6x6xf32>
    %c47_152 = arith.constant 47 : index
    %861 = memref.load %arg2[%c47_152] : memref<150xf32, #tpu.memory_space<smem>>
    %862 = vector.broadcast %861 : f32 to vector<1x6x6xf32>
    %863 = arith.mulf %862, %68 : vector<1x6x6xf32>
    %864 = arith.addf %860, %863 : vector<1x6x6xf32>
    %c48_153 = arith.constant 48 : index
    %865 = memref.load %arg2[%c48_153] : memref<150xf32, #tpu.memory_space<smem>>
    %866 = vector.broadcast %865 : f32 to vector<1x6x6xf32>
    %867 = arith.mulf %866, %70 : vector<1x6x6xf32>
    %868 = arith.addf %864, %867 : vector<1x6x6xf32>
    %c49_154 = arith.constant 49 : index
    %869 = memref.load %arg2[%c49_154] : memref<150xf32, #tpu.memory_space<smem>>
    %870 = vector.broadcast %869 : f32 to vector<1x6x6xf32>
    %871 = arith.mulf %870, %72 : vector<1x6x6xf32>
    %872 = arith.addf %868, %871 : vector<1x6x6xf32>
    %873 = arith.maximumf %575, %674 : vector<1x6x6xf32>
    %874 = arith.maximumf %773, %872 : vector<1x6x6xf32>
    %875 = arith.maximumf %873, %874 : vector<1x6x6xf32>
    %c1_155 = arith.constant 1 : index
    %876 = memref.load %arg3[%c1_155] : memref<6xf32, #tpu.memory_space<smem>>
    %877 = vector.broadcast %876 : f32 to vector<1x6x6xf32>
    %878 = arith.addf %875, %877 : vector<1x6x6xf32>
    %cst_156 = arith.constant 0.000000e+00 : f32
    %879 = vector.broadcast %cst_156 : f32 to vector<1x6x6xf32>
    %880 = arith.maximumf %878, %879 : vector<1x6x6xf32>
    %c50 = arith.constant 50 : index
    %881 = memref.load %arg2[%c50] : memref<150xf32, #tpu.memory_space<smem>>
    %882 = vector.broadcast %881 : f32 to vector<1x6x6xf32>
    %883 = arith.mulf %882, %2 : vector<1x6x6xf32>
    %c51 = arith.constant 51 : index
    %884 = memref.load %arg2[%c51] : memref<150xf32, #tpu.memory_space<smem>>
    %885 = vector.broadcast %884 : f32 to vector<1x6x6xf32>
    %886 = arith.mulf %885, %4 : vector<1x6x6xf32>
    %887 = arith.addf %883, %886 : vector<1x6x6xf32>
    %c52 = arith.constant 52 : index
    %888 = memref.load %arg2[%c52] : memref<150xf32, #tpu.memory_space<smem>>
    %889 = vector.broadcast %888 : f32 to vector<1x6x6xf32>
    %890 = arith.mulf %889, %6 : vector<1x6x6xf32>
    %891 = arith.addf %887, %890 : vector<1x6x6xf32>
    %c53 = arith.constant 53 : index
    %892 = memref.load %arg2[%c53] : memref<150xf32, #tpu.memory_space<smem>>
    %893 = vector.broadcast %892 : f32 to vector<1x6x6xf32>
    %894 = arith.mulf %893, %8 : vector<1x6x6xf32>
    %895 = arith.addf %891, %894 : vector<1x6x6xf32>
    %c54 = arith.constant 54 : index
    %896 = memref.load %arg2[%c54] : memref<150xf32, #tpu.memory_space<smem>>
    %897 = vector.broadcast %896 : f32 to vector<1x6x6xf32>
    %898 = arith.mulf %897, %10 : vector<1x6x6xf32>
    %899 = arith.addf %895, %898 : vector<1x6x6xf32>
    %c55 = arith.constant 55 : index
    %900 = memref.load %arg2[%c55] : memref<150xf32, #tpu.memory_space<smem>>
    %901 = vector.broadcast %900 : f32 to vector<1x6x6xf32>
    %902 = arith.mulf %901, %14 : vector<1x6x6xf32>
    %903 = arith.addf %899, %902 : vector<1x6x6xf32>
    %c56 = arith.constant 56 : index
    %904 = memref.load %arg2[%c56] : memref<150xf32, #tpu.memory_space<smem>>
    %905 = vector.broadcast %904 : f32 to vector<1x6x6xf32>
    %906 = arith.mulf %905, %16 : vector<1x6x6xf32>
    %907 = arith.addf %903, %906 : vector<1x6x6xf32>
    %c57 = arith.constant 57 : index
    %908 = memref.load %arg2[%c57] : memref<150xf32, #tpu.memory_space<smem>>
    %909 = vector.broadcast %908 : f32 to vector<1x6x6xf32>
    %910 = arith.mulf %909, %18 : vector<1x6x6xf32>
    %911 = arith.addf %907, %910 : vector<1x6x6xf32>
    %c58 = arith.constant 58 : index
    %912 = memref.load %arg2[%c58] : memref<150xf32, #tpu.memory_space<smem>>
    %913 = vector.broadcast %912 : f32 to vector<1x6x6xf32>
    %914 = arith.mulf %913, %20 : vector<1x6x6xf32>
    %915 = arith.addf %911, %914 : vector<1x6x6xf32>
    %c59 = arith.constant 59 : index
    %916 = memref.load %arg2[%c59] : memref<150xf32, #tpu.memory_space<smem>>
    %917 = vector.broadcast %916 : f32 to vector<1x6x6xf32>
    %918 = arith.mulf %917, %22 : vector<1x6x6xf32>
    %919 = arith.addf %915, %918 : vector<1x6x6xf32>
    %c60 = arith.constant 60 : index
    %920 = memref.load %arg2[%c60] : memref<150xf32, #tpu.memory_space<smem>>
    %921 = vector.broadcast %920 : f32 to vector<1x6x6xf32>
    %922 = arith.mulf %921, %26 : vector<1x6x6xf32>
    %923 = arith.addf %919, %922 : vector<1x6x6xf32>
    %c61 = arith.constant 61 : index
    %924 = memref.load %arg2[%c61] : memref<150xf32, #tpu.memory_space<smem>>
    %925 = vector.broadcast %924 : f32 to vector<1x6x6xf32>
    %926 = arith.mulf %925, %28 : vector<1x6x6xf32>
    %927 = arith.addf %923, %926 : vector<1x6x6xf32>
    %c62 = arith.constant 62 : index
    %928 = memref.load %arg2[%c62] : memref<150xf32, #tpu.memory_space<smem>>
    %929 = vector.broadcast %928 : f32 to vector<1x6x6xf32>
    %930 = arith.mulf %929, %30 : vector<1x6x6xf32>
    %931 = arith.addf %927, %930 : vector<1x6x6xf32>
    %c63 = arith.constant 63 : index
    %932 = memref.load %arg2[%c63] : memref<150xf32, #tpu.memory_space<smem>>
    %933 = vector.broadcast %932 : f32 to vector<1x6x6xf32>
    %934 = arith.mulf %933, %32 : vector<1x6x6xf32>
    %935 = arith.addf %931, %934 : vector<1x6x6xf32>
    %c64 = arith.constant 64 : index
    %936 = memref.load %arg2[%c64] : memref<150xf32, #tpu.memory_space<smem>>
    %937 = vector.broadcast %936 : f32 to vector<1x6x6xf32>
    %938 = arith.mulf %937, %34 : vector<1x6x6xf32>
    %939 = arith.addf %935, %938 : vector<1x6x6xf32>
    %c65 = arith.constant 65 : index
    %940 = memref.load %arg2[%c65] : memref<150xf32, #tpu.memory_space<smem>>
    %941 = vector.broadcast %940 : f32 to vector<1x6x6xf32>
    %942 = arith.mulf %941, %38 : vector<1x6x6xf32>
    %943 = arith.addf %939, %942 : vector<1x6x6xf32>
    %c66 = arith.constant 66 : index
    %944 = memref.load %arg2[%c66] : memref<150xf32, #tpu.memory_space<smem>>
    %945 = vector.broadcast %944 : f32 to vector<1x6x6xf32>
    %946 = arith.mulf %945, %40 : vector<1x6x6xf32>
    %947 = arith.addf %943, %946 : vector<1x6x6xf32>
    %c67 = arith.constant 67 : index
    %948 = memref.load %arg2[%c67] : memref<150xf32, #tpu.memory_space<smem>>
    %949 = vector.broadcast %948 : f32 to vector<1x6x6xf32>
    %950 = arith.mulf %949, %42 : vector<1x6x6xf32>
    %951 = arith.addf %947, %950 : vector<1x6x6xf32>
    %c68 = arith.constant 68 : index
    %952 = memref.load %arg2[%c68] : memref<150xf32, #tpu.memory_space<smem>>
    %953 = vector.broadcast %952 : f32 to vector<1x6x6xf32>
    %954 = arith.mulf %953, %44 : vector<1x6x6xf32>
    %955 = arith.addf %951, %954 : vector<1x6x6xf32>
    %c69 = arith.constant 69 : index
    %956 = memref.load %arg2[%c69] : memref<150xf32, #tpu.memory_space<smem>>
    %957 = vector.broadcast %956 : f32 to vector<1x6x6xf32>
    %958 = arith.mulf %957, %46 : vector<1x6x6xf32>
    %959 = arith.addf %955, %958 : vector<1x6x6xf32>
    %c70 = arith.constant 70 : index
    %960 = memref.load %arg2[%c70] : memref<150xf32, #tpu.memory_space<smem>>
    %961 = vector.broadcast %960 : f32 to vector<1x6x6xf32>
    %962 = arith.mulf %961, %50 : vector<1x6x6xf32>
    %963 = arith.addf %959, %962 : vector<1x6x6xf32>
    %c71 = arith.constant 71 : index
    %964 = memref.load %arg2[%c71] : memref<150xf32, #tpu.memory_space<smem>>
    %965 = vector.broadcast %964 : f32 to vector<1x6x6xf32>
    %966 = arith.mulf %965, %52 : vector<1x6x6xf32>
    %967 = arith.addf %963, %966 : vector<1x6x6xf32>
    %c72 = arith.constant 72 : index
    %968 = memref.load %arg2[%c72] : memref<150xf32, #tpu.memory_space<smem>>
    %969 = vector.broadcast %968 : f32 to vector<1x6x6xf32>
    %970 = arith.mulf %969, %54 : vector<1x6x6xf32>
    %971 = arith.addf %967, %970 : vector<1x6x6xf32>
    %c73 = arith.constant 73 : index
    %972 = memref.load %arg2[%c73] : memref<150xf32, #tpu.memory_space<smem>>
    %973 = vector.broadcast %972 : f32 to vector<1x6x6xf32>
    %974 = arith.mulf %973, %56 : vector<1x6x6xf32>
    %975 = arith.addf %971, %974 : vector<1x6x6xf32>
    %c74 = arith.constant 74 : index
    %976 = memref.load %arg2[%c74] : memref<150xf32, #tpu.memory_space<smem>>
    %977 = vector.broadcast %976 : f32 to vector<1x6x6xf32>
    %978 = arith.mulf %977, %58 : vector<1x6x6xf32>
    %979 = arith.addf %975, %978 : vector<1x6x6xf32>
    %c50_157 = arith.constant 50 : index
    %980 = memref.load %arg2[%c50_157] : memref<150xf32, #tpu.memory_space<smem>>
    %981 = vector.broadcast %980 : f32 to vector<1x6x6xf32>
    %982 = arith.mulf %981, %4 : vector<1x6x6xf32>
    %c51_158 = arith.constant 51 : index
    %983 = memref.load %arg2[%c51_158] : memref<150xf32, #tpu.memory_space<smem>>
    %984 = vector.broadcast %983 : f32 to vector<1x6x6xf32>
    %985 = arith.mulf %984, %6 : vector<1x6x6xf32>
    %986 = arith.addf %982, %985 : vector<1x6x6xf32>
    %c52_159 = arith.constant 52 : index
    %987 = memref.load %arg2[%c52_159] : memref<150xf32, #tpu.memory_space<smem>>
    %988 = vector.broadcast %987 : f32 to vector<1x6x6xf32>
    %989 = arith.mulf %988, %8 : vector<1x6x6xf32>
    %990 = arith.addf %986, %989 : vector<1x6x6xf32>
    %c53_160 = arith.constant 53 : index
    %991 = memref.load %arg2[%c53_160] : memref<150xf32, #tpu.memory_space<smem>>
    %992 = vector.broadcast %991 : f32 to vector<1x6x6xf32>
    %993 = arith.mulf %992, %10 : vector<1x6x6xf32>
    %994 = arith.addf %990, %993 : vector<1x6x6xf32>
    %c54_161 = arith.constant 54 : index
    %995 = memref.load %arg2[%c54_161] : memref<150xf32, #tpu.memory_space<smem>>
    %996 = vector.broadcast %995 : f32 to vector<1x6x6xf32>
    %997 = arith.mulf %996, %12 : vector<1x6x6xf32>
    %998 = arith.addf %994, %997 : vector<1x6x6xf32>
    %c55_162 = arith.constant 55 : index
    %999 = memref.load %arg2[%c55_162] : memref<150xf32, #tpu.memory_space<smem>>
    %1000 = vector.broadcast %999 : f32 to vector<1x6x6xf32>
    %1001 = arith.mulf %1000, %16 : vector<1x6x6xf32>
    %1002 = arith.addf %998, %1001 : vector<1x6x6xf32>
    %c56_163 = arith.constant 56 : index
    %1003 = memref.load %arg2[%c56_163] : memref<150xf32, #tpu.memory_space<smem>>
    %1004 = vector.broadcast %1003 : f32 to vector<1x6x6xf32>
    %1005 = arith.mulf %1004, %18 : vector<1x6x6xf32>
    %1006 = arith.addf %1002, %1005 : vector<1x6x6xf32>
    %c57_164 = arith.constant 57 : index
    %1007 = memref.load %arg2[%c57_164] : memref<150xf32, #tpu.memory_space<smem>>
    %1008 = vector.broadcast %1007 : f32 to vector<1x6x6xf32>
    %1009 = arith.mulf %1008, %20 : vector<1x6x6xf32>
    %1010 = arith.addf %1006, %1009 : vector<1x6x6xf32>
    %c58_165 = arith.constant 58 : index
    %1011 = memref.load %arg2[%c58_165] : memref<150xf32, #tpu.memory_space<smem>>
    %1012 = vector.broadcast %1011 : f32 to vector<1x6x6xf32>
    %1013 = arith.mulf %1012, %22 : vector<1x6x6xf32>
    %1014 = arith.addf %1010, %1013 : vector<1x6x6xf32>
    %c59_166 = arith.constant 59 : index
    %1015 = memref.load %arg2[%c59_166] : memref<150xf32, #tpu.memory_space<smem>>
    %1016 = vector.broadcast %1015 : f32 to vector<1x6x6xf32>
    %1017 = arith.mulf %1016, %24 : vector<1x6x6xf32>
    %1018 = arith.addf %1014, %1017 : vector<1x6x6xf32>
    %c60_167 = arith.constant 60 : index
    %1019 = memref.load %arg2[%c60_167] : memref<150xf32, #tpu.memory_space<smem>>
    %1020 = vector.broadcast %1019 : f32 to vector<1x6x6xf32>
    %1021 = arith.mulf %1020, %28 : vector<1x6x6xf32>
    %1022 = arith.addf %1018, %1021 : vector<1x6x6xf32>
    %c61_168 = arith.constant 61 : index
    %1023 = memref.load %arg2[%c61_168] : memref<150xf32, #tpu.memory_space<smem>>
    %1024 = vector.broadcast %1023 : f32 to vector<1x6x6xf32>
    %1025 = arith.mulf %1024, %30 : vector<1x6x6xf32>
    %1026 = arith.addf %1022, %1025 : vector<1x6x6xf32>
    %c62_169 = arith.constant 62 : index
    %1027 = memref.load %arg2[%c62_169] : memref<150xf32, #tpu.memory_space<smem>>
    %1028 = vector.broadcast %1027 : f32 to vector<1x6x6xf32>
    %1029 = arith.mulf %1028, %32 : vector<1x6x6xf32>
    %1030 = arith.addf %1026, %1029 : vector<1x6x6xf32>
    %c63_170 = arith.constant 63 : index
    %1031 = memref.load %arg2[%c63_170] : memref<150xf32, #tpu.memory_space<smem>>
    %1032 = vector.broadcast %1031 : f32 to vector<1x6x6xf32>
    %1033 = arith.mulf %1032, %34 : vector<1x6x6xf32>
    %1034 = arith.addf %1030, %1033 : vector<1x6x6xf32>
    %c64_171 = arith.constant 64 : index
    %1035 = memref.load %arg2[%c64_171] : memref<150xf32, #tpu.memory_space<smem>>
    %1036 = vector.broadcast %1035 : f32 to vector<1x6x6xf32>
    %1037 = arith.mulf %1036, %36 : vector<1x6x6xf32>
    %1038 = arith.addf %1034, %1037 : vector<1x6x6xf32>
    %c65_172 = arith.constant 65 : index
    %1039 = memref.load %arg2[%c65_172] : memref<150xf32, #tpu.memory_space<smem>>
    %1040 = vector.broadcast %1039 : f32 to vector<1x6x6xf32>
    %1041 = arith.mulf %1040, %40 : vector<1x6x6xf32>
    %1042 = arith.addf %1038, %1041 : vector<1x6x6xf32>
    %c66_173 = arith.constant 66 : index
    %1043 = memref.load %arg2[%c66_173] : memref<150xf32, #tpu.memory_space<smem>>
    %1044 = vector.broadcast %1043 : f32 to vector<1x6x6xf32>
    %1045 = arith.mulf %1044, %42 : vector<1x6x6xf32>
    %1046 = arith.addf %1042, %1045 : vector<1x6x6xf32>
    %c67_174 = arith.constant 67 : index
    %1047 = memref.load %arg2[%c67_174] : memref<150xf32, #tpu.memory_space<smem>>
    %1048 = vector.broadcast %1047 : f32 to vector<1x6x6xf32>
    %1049 = arith.mulf %1048, %44 : vector<1x6x6xf32>
    %1050 = arith.addf %1046, %1049 : vector<1x6x6xf32>
    %c68_175 = arith.constant 68 : index
    %1051 = memref.load %arg2[%c68_175] : memref<150xf32, #tpu.memory_space<smem>>
    %1052 = vector.broadcast %1051 : f32 to vector<1x6x6xf32>
    %1053 = arith.mulf %1052, %46 : vector<1x6x6xf32>
    %1054 = arith.addf %1050, %1053 : vector<1x6x6xf32>
    %c69_176 = arith.constant 69 : index
    %1055 = memref.load %arg2[%c69_176] : memref<150xf32, #tpu.memory_space<smem>>
    %1056 = vector.broadcast %1055 : f32 to vector<1x6x6xf32>
    %1057 = arith.mulf %1056, %48 : vector<1x6x6xf32>
    %1058 = arith.addf %1054, %1057 : vector<1x6x6xf32>
    %c70_177 = arith.constant 70 : index
    %1059 = memref.load %arg2[%c70_177] : memref<150xf32, #tpu.memory_space<smem>>
    %1060 = vector.broadcast %1059 : f32 to vector<1x6x6xf32>
    %1061 = arith.mulf %1060, %52 : vector<1x6x6xf32>
    %1062 = arith.addf %1058, %1061 : vector<1x6x6xf32>
    %c71_178 = arith.constant 71 : index
    %1063 = memref.load %arg2[%c71_178] : memref<150xf32, #tpu.memory_space<smem>>
    %1064 = vector.broadcast %1063 : f32 to vector<1x6x6xf32>
    %1065 = arith.mulf %1064, %54 : vector<1x6x6xf32>
    %1066 = arith.addf %1062, %1065 : vector<1x6x6xf32>
    %c72_179 = arith.constant 72 : index
    %1067 = memref.load %arg2[%c72_179] : memref<150xf32, #tpu.memory_space<smem>>
    %1068 = vector.broadcast %1067 : f32 to vector<1x6x6xf32>
    %1069 = arith.mulf %1068, %56 : vector<1x6x6xf32>
    %1070 = arith.addf %1066, %1069 : vector<1x6x6xf32>
    %c73_180 = arith.constant 73 : index
    %1071 = memref.load %arg2[%c73_180] : memref<150xf32, #tpu.memory_space<smem>>
    %1072 = vector.broadcast %1071 : f32 to vector<1x6x6xf32>
    %1073 = arith.mulf %1072, %58 : vector<1x6x6xf32>
    %1074 = arith.addf %1070, %1073 : vector<1x6x6xf32>
    %c74_181 = arith.constant 74 : index
    %1075 = memref.load %arg2[%c74_181] : memref<150xf32, #tpu.memory_space<smem>>
    %1076 = vector.broadcast %1075 : f32 to vector<1x6x6xf32>
    %1077 = arith.mulf %1076, %60 : vector<1x6x6xf32>
    %1078 = arith.addf %1074, %1077 : vector<1x6x6xf32>
    %c50_182 = arith.constant 50 : index
    %1079 = memref.load %arg2[%c50_182] : memref<150xf32, #tpu.memory_space<smem>>
    %1080 = vector.broadcast %1079 : f32 to vector<1x6x6xf32>
    %1081 = arith.mulf %1080, %14 : vector<1x6x6xf32>
    %c51_183 = arith.constant 51 : index
    %1082 = memref.load %arg2[%c51_183] : memref<150xf32, #tpu.memory_space<smem>>
    %1083 = vector.broadcast %1082 : f32 to vector<1x6x6xf32>
    %1084 = arith.mulf %1083, %16 : vector<1x6x6xf32>
    %1085 = arith.addf %1081, %1084 : vector<1x6x6xf32>
    %c52_184 = arith.constant 52 : index
    %1086 = memref.load %arg2[%c52_184] : memref<150xf32, #tpu.memory_space<smem>>
    %1087 = vector.broadcast %1086 : f32 to vector<1x6x6xf32>
    %1088 = arith.mulf %1087, %18 : vector<1x6x6xf32>
    %1089 = arith.addf %1085, %1088 : vector<1x6x6xf32>
    %c53_185 = arith.constant 53 : index
    %1090 = memref.load %arg2[%c53_185] : memref<150xf32, #tpu.memory_space<smem>>
    %1091 = vector.broadcast %1090 : f32 to vector<1x6x6xf32>
    %1092 = arith.mulf %1091, %20 : vector<1x6x6xf32>
    %1093 = arith.addf %1089, %1092 : vector<1x6x6xf32>
    %c54_186 = arith.constant 54 : index
    %1094 = memref.load %arg2[%c54_186] : memref<150xf32, #tpu.memory_space<smem>>
    %1095 = vector.broadcast %1094 : f32 to vector<1x6x6xf32>
    %1096 = arith.mulf %1095, %22 : vector<1x6x6xf32>
    %1097 = arith.addf %1093, %1096 : vector<1x6x6xf32>
    %c55_187 = arith.constant 55 : index
    %1098 = memref.load %arg2[%c55_187] : memref<150xf32, #tpu.memory_space<smem>>
    %1099 = vector.broadcast %1098 : f32 to vector<1x6x6xf32>
    %1100 = arith.mulf %1099, %26 : vector<1x6x6xf32>
    %1101 = arith.addf %1097, %1100 : vector<1x6x6xf32>
    %c56_188 = arith.constant 56 : index
    %1102 = memref.load %arg2[%c56_188] : memref<150xf32, #tpu.memory_space<smem>>
    %1103 = vector.broadcast %1102 : f32 to vector<1x6x6xf32>
    %1104 = arith.mulf %1103, %28 : vector<1x6x6xf32>
    %1105 = arith.addf %1101, %1104 : vector<1x6x6xf32>
    %c57_189 = arith.constant 57 : index
    %1106 = memref.load %arg2[%c57_189] : memref<150xf32, #tpu.memory_space<smem>>
    %1107 = vector.broadcast %1106 : f32 to vector<1x6x6xf32>
    %1108 = arith.mulf %1107, %30 : vector<1x6x6xf32>
    %1109 = arith.addf %1105, %1108 : vector<1x6x6xf32>
    %c58_190 = arith.constant 58 : index
    %1110 = memref.load %arg2[%c58_190] : memref<150xf32, #tpu.memory_space<smem>>
    %1111 = vector.broadcast %1110 : f32 to vector<1x6x6xf32>
    %1112 = arith.mulf %1111, %32 : vector<1x6x6xf32>
    %1113 = arith.addf %1109, %1112 : vector<1x6x6xf32>
    %c59_191 = arith.constant 59 : index
    %1114 = memref.load %arg2[%c59_191] : memref<150xf32, #tpu.memory_space<smem>>
    %1115 = vector.broadcast %1114 : f32 to vector<1x6x6xf32>
    %1116 = arith.mulf %1115, %34 : vector<1x6x6xf32>
    %1117 = arith.addf %1113, %1116 : vector<1x6x6xf32>
    %c60_192 = arith.constant 60 : index
    %1118 = memref.load %arg2[%c60_192] : memref<150xf32, #tpu.memory_space<smem>>
    %1119 = vector.broadcast %1118 : f32 to vector<1x6x6xf32>
    %1120 = arith.mulf %1119, %38 : vector<1x6x6xf32>
    %1121 = arith.addf %1117, %1120 : vector<1x6x6xf32>
    %c61_193 = arith.constant 61 : index
    %1122 = memref.load %arg2[%c61_193] : memref<150xf32, #tpu.memory_space<smem>>
    %1123 = vector.broadcast %1122 : f32 to vector<1x6x6xf32>
    %1124 = arith.mulf %1123, %40 : vector<1x6x6xf32>
    %1125 = arith.addf %1121, %1124 : vector<1x6x6xf32>
    %c62_194 = arith.constant 62 : index
    %1126 = memref.load %arg2[%c62_194] : memref<150xf32, #tpu.memory_space<smem>>
    %1127 = vector.broadcast %1126 : f32 to vector<1x6x6xf32>
    %1128 = arith.mulf %1127, %42 : vector<1x6x6xf32>
    %1129 = arith.addf %1125, %1128 : vector<1x6x6xf32>
    %c63_195 = arith.constant 63 : index
    %1130 = memref.load %arg2[%c63_195] : memref<150xf32, #tpu.memory_space<smem>>
    %1131 = vector.broadcast %1130 : f32 to vector<1x6x6xf32>
    %1132 = arith.mulf %1131, %44 : vector<1x6x6xf32>
    %1133 = arith.addf %1129, %1132 : vector<1x6x6xf32>
    %c64_196 = arith.constant 64 : index
    %1134 = memref.load %arg2[%c64_196] : memref<150xf32, #tpu.memory_space<smem>>
    %1135 = vector.broadcast %1134 : f32 to vector<1x6x6xf32>
    %1136 = arith.mulf %1135, %46 : vector<1x6x6xf32>
    %1137 = arith.addf %1133, %1136 : vector<1x6x6xf32>
    %c65_197 = arith.constant 65 : index
    %1138 = memref.load %arg2[%c65_197] : memref<150xf32, #tpu.memory_space<smem>>
    %1139 = vector.broadcast %1138 : f32 to vector<1x6x6xf32>
    %1140 = arith.mulf %1139, %50 : vector<1x6x6xf32>
    %1141 = arith.addf %1137, %1140 : vector<1x6x6xf32>
    %c66_198 = arith.constant 66 : index
    %1142 = memref.load %arg2[%c66_198] : memref<150xf32, #tpu.memory_space<smem>>
    %1143 = vector.broadcast %1142 : f32 to vector<1x6x6xf32>
    %1144 = arith.mulf %1143, %52 : vector<1x6x6xf32>
    %1145 = arith.addf %1141, %1144 : vector<1x6x6xf32>
    %c67_199 = arith.constant 67 : index
    %1146 = memref.load %arg2[%c67_199] : memref<150xf32, #tpu.memory_space<smem>>
    %1147 = vector.broadcast %1146 : f32 to vector<1x6x6xf32>
    %1148 = arith.mulf %1147, %54 : vector<1x6x6xf32>
    %1149 = arith.addf %1145, %1148 : vector<1x6x6xf32>
    %c68_200 = arith.constant 68 : index
    %1150 = memref.load %arg2[%c68_200] : memref<150xf32, #tpu.memory_space<smem>>
    %1151 = vector.broadcast %1150 : f32 to vector<1x6x6xf32>
    %1152 = arith.mulf %1151, %56 : vector<1x6x6xf32>
    %1153 = arith.addf %1149, %1152 : vector<1x6x6xf32>
    %c69_201 = arith.constant 69 : index
    %1154 = memref.load %arg2[%c69_201] : memref<150xf32, #tpu.memory_space<smem>>
    %1155 = vector.broadcast %1154 : f32 to vector<1x6x6xf32>
    %1156 = arith.mulf %1155, %58 : vector<1x6x6xf32>
    %1157 = arith.addf %1153, %1156 : vector<1x6x6xf32>
    %c70_202 = arith.constant 70 : index
    %1158 = memref.load %arg2[%c70_202] : memref<150xf32, #tpu.memory_space<smem>>
    %1159 = vector.broadcast %1158 : f32 to vector<1x6x6xf32>
    %1160 = arith.mulf %1159, %62 : vector<1x6x6xf32>
    %1161 = arith.addf %1157, %1160 : vector<1x6x6xf32>
    %c71_203 = arith.constant 71 : index
    %1162 = memref.load %arg2[%c71_203] : memref<150xf32, #tpu.memory_space<smem>>
    %1163 = vector.broadcast %1162 : f32 to vector<1x6x6xf32>
    %1164 = arith.mulf %1163, %64 : vector<1x6x6xf32>
    %1165 = arith.addf %1161, %1164 : vector<1x6x6xf32>
    %c72_204 = arith.constant 72 : index
    %1166 = memref.load %arg2[%c72_204] : memref<150xf32, #tpu.memory_space<smem>>
    %1167 = vector.broadcast %1166 : f32 to vector<1x6x6xf32>
    %1168 = arith.mulf %1167, %66 : vector<1x6x6xf32>
    %1169 = arith.addf %1165, %1168 : vector<1x6x6xf32>
    %c73_205 = arith.constant 73 : index
    %1170 = memref.load %arg2[%c73_205] : memref<150xf32, #tpu.memory_space<smem>>
    %1171 = vector.broadcast %1170 : f32 to vector<1x6x6xf32>
    %1172 = arith.mulf %1171, %68 : vector<1x6x6xf32>
    %1173 = arith.addf %1169, %1172 : vector<1x6x6xf32>
    %c74_206 = arith.constant 74 : index
    %1174 = memref.load %arg2[%c74_206] : memref<150xf32, #tpu.memory_space<smem>>
    %1175 = vector.broadcast %1174 : f32 to vector<1x6x6xf32>
    %1176 = arith.mulf %1175, %70 : vector<1x6x6xf32>
    %1177 = arith.addf %1173, %1176 : vector<1x6x6xf32>
    %c50_207 = arith.constant 50 : index
    %1178 = memref.load %arg2[%c50_207] : memref<150xf32, #tpu.memory_space<smem>>
    %1179 = vector.broadcast %1178 : f32 to vector<1x6x6xf32>
    %1180 = arith.mulf %1179, %16 : vector<1x6x6xf32>
    %c51_208 = arith.constant 51 : index
    %1181 = memref.load %arg2[%c51_208] : memref<150xf32, #tpu.memory_space<smem>>
    %1182 = vector.broadcast %1181 : f32 to vector<1x6x6xf32>
    %1183 = arith.mulf %1182, %18 : vector<1x6x6xf32>
    %1184 = arith.addf %1180, %1183 : vector<1x6x6xf32>
    %c52_209 = arith.constant 52 : index
    %1185 = memref.load %arg2[%c52_209] : memref<150xf32, #tpu.memory_space<smem>>
    %1186 = vector.broadcast %1185 : f32 to vector<1x6x6xf32>
    %1187 = arith.mulf %1186, %20 : vector<1x6x6xf32>
    %1188 = arith.addf %1184, %1187 : vector<1x6x6xf32>
    %c53_210 = arith.constant 53 : index
    %1189 = memref.load %arg2[%c53_210] : memref<150xf32, #tpu.memory_space<smem>>
    %1190 = vector.broadcast %1189 : f32 to vector<1x6x6xf32>
    %1191 = arith.mulf %1190, %22 : vector<1x6x6xf32>
    %1192 = arith.addf %1188, %1191 : vector<1x6x6xf32>
    %c54_211 = arith.constant 54 : index
    %1193 = memref.load %arg2[%c54_211] : memref<150xf32, #tpu.memory_space<smem>>
    %1194 = vector.broadcast %1193 : f32 to vector<1x6x6xf32>
    %1195 = arith.mulf %1194, %24 : vector<1x6x6xf32>
    %1196 = arith.addf %1192, %1195 : vector<1x6x6xf32>
    %c55_212 = arith.constant 55 : index
    %1197 = memref.load %arg2[%c55_212] : memref<150xf32, #tpu.memory_space<smem>>
    %1198 = vector.broadcast %1197 : f32 to vector<1x6x6xf32>
    %1199 = arith.mulf %1198, %28 : vector<1x6x6xf32>
    %1200 = arith.addf %1196, %1199 : vector<1x6x6xf32>
    %c56_213 = arith.constant 56 : index
    %1201 = memref.load %arg2[%c56_213] : memref<150xf32, #tpu.memory_space<smem>>
    %1202 = vector.broadcast %1201 : f32 to vector<1x6x6xf32>
    %1203 = arith.mulf %1202, %30 : vector<1x6x6xf32>
    %1204 = arith.addf %1200, %1203 : vector<1x6x6xf32>
    %c57_214 = arith.constant 57 : index
    %1205 = memref.load %arg2[%c57_214] : memref<150xf32, #tpu.memory_space<smem>>
    %1206 = vector.broadcast %1205 : f32 to vector<1x6x6xf32>
    %1207 = arith.mulf %1206, %32 : vector<1x6x6xf32>
    %1208 = arith.addf %1204, %1207 : vector<1x6x6xf32>
    %c58_215 = arith.constant 58 : index
    %1209 = memref.load %arg2[%c58_215] : memref<150xf32, #tpu.memory_space<smem>>
    %1210 = vector.broadcast %1209 : f32 to vector<1x6x6xf32>
    %1211 = arith.mulf %1210, %34 : vector<1x6x6xf32>
    %1212 = arith.addf %1208, %1211 : vector<1x6x6xf32>
    %c59_216 = arith.constant 59 : index
    %1213 = memref.load %arg2[%c59_216] : memref<150xf32, #tpu.memory_space<smem>>
    %1214 = vector.broadcast %1213 : f32 to vector<1x6x6xf32>
    %1215 = arith.mulf %1214, %36 : vector<1x6x6xf32>
    %1216 = arith.addf %1212, %1215 : vector<1x6x6xf32>
    %c60_217 = arith.constant 60 : index
    %1217 = memref.load %arg2[%c60_217] : memref<150xf32, #tpu.memory_space<smem>>
    %1218 = vector.broadcast %1217 : f32 to vector<1x6x6xf32>
    %1219 = arith.mulf %1218, %40 : vector<1x6x6xf32>
    %1220 = arith.addf %1216, %1219 : vector<1x6x6xf32>
    %c61_218 = arith.constant 61 : index
    %1221 = memref.load %arg2[%c61_218] : memref<150xf32, #tpu.memory_space<smem>>
    %1222 = vector.broadcast %1221 : f32 to vector<1x6x6xf32>
    %1223 = arith.mulf %1222, %42 : vector<1x6x6xf32>
    %1224 = arith.addf %1220, %1223 : vector<1x6x6xf32>
    %c62_219 = arith.constant 62 : index
    %1225 = memref.load %arg2[%c62_219] : memref<150xf32, #tpu.memory_space<smem>>
    %1226 = vector.broadcast %1225 : f32 to vector<1x6x6xf32>
    %1227 = arith.mulf %1226, %44 : vector<1x6x6xf32>
    %1228 = arith.addf %1224, %1227 : vector<1x6x6xf32>
    %c63_220 = arith.constant 63 : index
    %1229 = memref.load %arg2[%c63_220] : memref<150xf32, #tpu.memory_space<smem>>
    %1230 = vector.broadcast %1229 : f32 to vector<1x6x6xf32>
    %1231 = arith.mulf %1230, %46 : vector<1x6x6xf32>
    %1232 = arith.addf %1228, %1231 : vector<1x6x6xf32>
    %c64_221 = arith.constant 64 : index
    %1233 = memref.load %arg2[%c64_221] : memref<150xf32, #tpu.memory_space<smem>>
    %1234 = vector.broadcast %1233 : f32 to vector<1x6x6xf32>
    %1235 = arith.mulf %1234, %48 : vector<1x6x6xf32>
    %1236 = arith.addf %1232, %1235 : vector<1x6x6xf32>
    %c65_222 = arith.constant 65 : index
    %1237 = memref.load %arg2[%c65_222] : memref<150xf32, #tpu.memory_space<smem>>
    %1238 = vector.broadcast %1237 : f32 to vector<1x6x6xf32>
    %1239 = arith.mulf %1238, %52 : vector<1x6x6xf32>
    %1240 = arith.addf %1236, %1239 : vector<1x6x6xf32>
    %c66_223 = arith.constant 66 : index
    %1241 = memref.load %arg2[%c66_223] : memref<150xf32, #tpu.memory_space<smem>>
    %1242 = vector.broadcast %1241 : f32 to vector<1x6x6xf32>
    %1243 = arith.mulf %1242, %54 : vector<1x6x6xf32>
    %1244 = arith.addf %1240, %1243 : vector<1x6x6xf32>
    %c67_224 = arith.constant 67 : index
    %1245 = memref.load %arg2[%c67_224] : memref<150xf32, #tpu.memory_space<smem>>
    %1246 = vector.broadcast %1245 : f32 to vector<1x6x6xf32>
    %1247 = arith.mulf %1246, %56 : vector<1x6x6xf32>
    %1248 = arith.addf %1244, %1247 : vector<1x6x6xf32>
    %c68_225 = arith.constant 68 : index
    %1249 = memref.load %arg2[%c68_225] : memref<150xf32, #tpu.memory_space<smem>>
    %1250 = vector.broadcast %1249 : f32 to vector<1x6x6xf32>
    %1251 = arith.mulf %1250, %58 : vector<1x6x6xf32>
    %1252 = arith.addf %1248, %1251 : vector<1x6x6xf32>
    %c69_226 = arith.constant 69 : index
    %1253 = memref.load %arg2[%c69_226] : memref<150xf32, #tpu.memory_space<smem>>
    %1254 = vector.broadcast %1253 : f32 to vector<1x6x6xf32>
    %1255 = arith.mulf %1254, %60 : vector<1x6x6xf32>
    %1256 = arith.addf %1252, %1255 : vector<1x6x6xf32>
    %c70_227 = arith.constant 70 : index
    %1257 = memref.load %arg2[%c70_227] : memref<150xf32, #tpu.memory_space<smem>>
    %1258 = vector.broadcast %1257 : f32 to vector<1x6x6xf32>
    %1259 = arith.mulf %1258, %64 : vector<1x6x6xf32>
    %1260 = arith.addf %1256, %1259 : vector<1x6x6xf32>
    %c71_228 = arith.constant 71 : index
    %1261 = memref.load %arg2[%c71_228] : memref<150xf32, #tpu.memory_space<smem>>
    %1262 = vector.broadcast %1261 : f32 to vector<1x6x6xf32>
    %1263 = arith.mulf %1262, %66 : vector<1x6x6xf32>
    %1264 = arith.addf %1260, %1263 : vector<1x6x6xf32>
    %c72_229 = arith.constant 72 : index
    %1265 = memref.load %arg2[%c72_229] : memref<150xf32, #tpu.memory_space<smem>>
    %1266 = vector.broadcast %1265 : f32 to vector<1x6x6xf32>
    %1267 = arith.mulf %1266, %68 : vector<1x6x6xf32>
    %1268 = arith.addf %1264, %1267 : vector<1x6x6xf32>
    %c73_230 = arith.constant 73 : index
    %1269 = memref.load %arg2[%c73_230] : memref<150xf32, #tpu.memory_space<smem>>
    %1270 = vector.broadcast %1269 : f32 to vector<1x6x6xf32>
    %1271 = arith.mulf %1270, %70 : vector<1x6x6xf32>
    %1272 = arith.addf %1268, %1271 : vector<1x6x6xf32>
    %c74_231 = arith.constant 74 : index
    %1273 = memref.load %arg2[%c74_231] : memref<150xf32, #tpu.memory_space<smem>>
    %1274 = vector.broadcast %1273 : f32 to vector<1x6x6xf32>
    %1275 = arith.mulf %1274, %72 : vector<1x6x6xf32>
    %1276 = arith.addf %1272, %1275 : vector<1x6x6xf32>
    %1277 = arith.maximumf %979, %1078 : vector<1x6x6xf32>
    %1278 = arith.maximumf %1177, %1276 : vector<1x6x6xf32>
    %1279 = arith.maximumf %1277, %1278 : vector<1x6x6xf32>
    %c2_232 = arith.constant 2 : index
    %1280 = memref.load %arg3[%c2_232] : memref<6xf32, #tpu.memory_space<smem>>
    %1281 = vector.broadcast %1280 : f32 to vector<1x6x6xf32>
    %1282 = arith.addf %1279, %1281 : vector<1x6x6xf32>
    %cst_233 = arith.constant 0.000000e+00 : f32
    %1283 = vector.broadcast %cst_233 : f32 to vector<1x6x6xf32>
    %1284 = arith.maximumf %1282, %1283 : vector<1x6x6xf32>
    %c75 = arith.constant 75 : index
    %1285 = memref.load %arg2[%c75] : memref<150xf32, #tpu.memory_space<smem>>
    %1286 = vector.broadcast %1285 : f32 to vector<1x6x6xf32>
    %1287 = arith.mulf %1286, %2 : vector<1x6x6xf32>
    %c76 = arith.constant 76 : index
    %1288 = memref.load %arg2[%c76] : memref<150xf32, #tpu.memory_space<smem>>
    %1289 = vector.broadcast %1288 : f32 to vector<1x6x6xf32>
    %1290 = arith.mulf %1289, %4 : vector<1x6x6xf32>
    %1291 = arith.addf %1287, %1290 : vector<1x6x6xf32>
    %c77 = arith.constant 77 : index
    %1292 = memref.load %arg2[%c77] : memref<150xf32, #tpu.memory_space<smem>>
    %1293 = vector.broadcast %1292 : f32 to vector<1x6x6xf32>
    %1294 = arith.mulf %1293, %6 : vector<1x6x6xf32>
    %1295 = arith.addf %1291, %1294 : vector<1x6x6xf32>
    %c78 = arith.constant 78 : index
    %1296 = memref.load %arg2[%c78] : memref<150xf32, #tpu.memory_space<smem>>
    %1297 = vector.broadcast %1296 : f32 to vector<1x6x6xf32>
    %1298 = arith.mulf %1297, %8 : vector<1x6x6xf32>
    %1299 = arith.addf %1295, %1298 : vector<1x6x6xf32>
    %c79 = arith.constant 79 : index
    %1300 = memref.load %arg2[%c79] : memref<150xf32, #tpu.memory_space<smem>>
    %1301 = vector.broadcast %1300 : f32 to vector<1x6x6xf32>
    %1302 = arith.mulf %1301, %10 : vector<1x6x6xf32>
    %1303 = arith.addf %1299, %1302 : vector<1x6x6xf32>
    %c80 = arith.constant 80 : index
    %1304 = memref.load %arg2[%c80] : memref<150xf32, #tpu.memory_space<smem>>
    %1305 = vector.broadcast %1304 : f32 to vector<1x6x6xf32>
    %1306 = arith.mulf %1305, %14 : vector<1x6x6xf32>
    %1307 = arith.addf %1303, %1306 : vector<1x6x6xf32>
    %c81 = arith.constant 81 : index
    %1308 = memref.load %arg2[%c81] : memref<150xf32, #tpu.memory_space<smem>>
    %1309 = vector.broadcast %1308 : f32 to vector<1x6x6xf32>
    %1310 = arith.mulf %1309, %16 : vector<1x6x6xf32>
    %1311 = arith.addf %1307, %1310 : vector<1x6x6xf32>
    %c82 = arith.constant 82 : index
    %1312 = memref.load %arg2[%c82] : memref<150xf32, #tpu.memory_space<smem>>
    %1313 = vector.broadcast %1312 : f32 to vector<1x6x6xf32>
    %1314 = arith.mulf %1313, %18 : vector<1x6x6xf32>
    %1315 = arith.addf %1311, %1314 : vector<1x6x6xf32>
    %c83 = arith.constant 83 : index
    %1316 = memref.load %arg2[%c83] : memref<150xf32, #tpu.memory_space<smem>>
    %1317 = vector.broadcast %1316 : f32 to vector<1x6x6xf32>
    %1318 = arith.mulf %1317, %20 : vector<1x6x6xf32>
    %1319 = arith.addf %1315, %1318 : vector<1x6x6xf32>
    %c84 = arith.constant 84 : index
    %1320 = memref.load %arg2[%c84] : memref<150xf32, #tpu.memory_space<smem>>
    %1321 = vector.broadcast %1320 : f32 to vector<1x6x6xf32>
    %1322 = arith.mulf %1321, %22 : vector<1x6x6xf32>
    %1323 = arith.addf %1319, %1322 : vector<1x6x6xf32>
    %c85 = arith.constant 85 : index
    %1324 = memref.load %arg2[%c85] : memref<150xf32, #tpu.memory_space<smem>>
    %1325 = vector.broadcast %1324 : f32 to vector<1x6x6xf32>
    %1326 = arith.mulf %1325, %26 : vector<1x6x6xf32>
    %1327 = arith.addf %1323, %1326 : vector<1x6x6xf32>
    %c86 = arith.constant 86 : index
    %1328 = memref.load %arg2[%c86] : memref<150xf32, #tpu.memory_space<smem>>
    %1329 = vector.broadcast %1328 : f32 to vector<1x6x6xf32>
    %1330 = arith.mulf %1329, %28 : vector<1x6x6xf32>
    %1331 = arith.addf %1327, %1330 : vector<1x6x6xf32>
    %c87 = arith.constant 87 : index
    %1332 = memref.load %arg2[%c87] : memref<150xf32, #tpu.memory_space<smem>>
    %1333 = vector.broadcast %1332 : f32 to vector<1x6x6xf32>
    %1334 = arith.mulf %1333, %30 : vector<1x6x6xf32>
    %1335 = arith.addf %1331, %1334 : vector<1x6x6xf32>
    %c88 = arith.constant 88 : index
    %1336 = memref.load %arg2[%c88] : memref<150xf32, #tpu.memory_space<smem>>
    %1337 = vector.broadcast %1336 : f32 to vector<1x6x6xf32>
    %1338 = arith.mulf %1337, %32 : vector<1x6x6xf32>
    %1339 = arith.addf %1335, %1338 : vector<1x6x6xf32>
    %c89 = arith.constant 89 : index
    %1340 = memref.load %arg2[%c89] : memref<150xf32, #tpu.memory_space<smem>>
    %1341 = vector.broadcast %1340 : f32 to vector<1x6x6xf32>
    %1342 = arith.mulf %1341, %34 : vector<1x6x6xf32>
    %1343 = arith.addf %1339, %1342 : vector<1x6x6xf32>
    %c90 = arith.constant 90 : index
    %1344 = memref.load %arg2[%c90] : memref<150xf32, #tpu.memory_space<smem>>
    %1345 = vector.broadcast %1344 : f32 to vector<1x6x6xf32>
    %1346 = arith.mulf %1345, %38 : vector<1x6x6xf32>
    %1347 = arith.addf %1343, %1346 : vector<1x6x6xf32>
    %c91 = arith.constant 91 : index
    %1348 = memref.load %arg2[%c91] : memref<150xf32, #tpu.memory_space<smem>>
    %1349 = vector.broadcast %1348 : f32 to vector<1x6x6xf32>
    %1350 = arith.mulf %1349, %40 : vector<1x6x6xf32>
    %1351 = arith.addf %1347, %1350 : vector<1x6x6xf32>
    %c92 = arith.constant 92 : index
    %1352 = memref.load %arg2[%c92] : memref<150xf32, #tpu.memory_space<smem>>
    %1353 = vector.broadcast %1352 : f32 to vector<1x6x6xf32>
    %1354 = arith.mulf %1353, %42 : vector<1x6x6xf32>
    %1355 = arith.addf %1351, %1354 : vector<1x6x6xf32>
    %c93 = arith.constant 93 : index
    %1356 = memref.load %arg2[%c93] : memref<150xf32, #tpu.memory_space<smem>>
    %1357 = vector.broadcast %1356 : f32 to vector<1x6x6xf32>
    %1358 = arith.mulf %1357, %44 : vector<1x6x6xf32>
    %1359 = arith.addf %1355, %1358 : vector<1x6x6xf32>
    %c94 = arith.constant 94 : index
    %1360 = memref.load %arg2[%c94] : memref<150xf32, #tpu.memory_space<smem>>
    %1361 = vector.broadcast %1360 : f32 to vector<1x6x6xf32>
    %1362 = arith.mulf %1361, %46 : vector<1x6x6xf32>
    %1363 = arith.addf %1359, %1362 : vector<1x6x6xf32>
    %c95 = arith.constant 95 : index
    %1364 = memref.load %arg2[%c95] : memref<150xf32, #tpu.memory_space<smem>>
    %1365 = vector.broadcast %1364 : f32 to vector<1x6x6xf32>
    %1366 = arith.mulf %1365, %50 : vector<1x6x6xf32>
    %1367 = arith.addf %1363, %1366 : vector<1x6x6xf32>
    %c96 = arith.constant 96 : index
    %1368 = memref.load %arg2[%c96] : memref<150xf32, #tpu.memory_space<smem>>
    %1369 = vector.broadcast %1368 : f32 to vector<1x6x6xf32>
    %1370 = arith.mulf %1369, %52 : vector<1x6x6xf32>
    %1371 = arith.addf %1367, %1370 : vector<1x6x6xf32>
    %c97 = arith.constant 97 : index
    %1372 = memref.load %arg2[%c97] : memref<150xf32, #tpu.memory_space<smem>>
    %1373 = vector.broadcast %1372 : f32 to vector<1x6x6xf32>
    %1374 = arith.mulf %1373, %54 : vector<1x6x6xf32>
    %1375 = arith.addf %1371, %1374 : vector<1x6x6xf32>
    %c98 = arith.constant 98 : index
    %1376 = memref.load %arg2[%c98] : memref<150xf32, #tpu.memory_space<smem>>
    %1377 = vector.broadcast %1376 : f32 to vector<1x6x6xf32>
    %1378 = arith.mulf %1377, %56 : vector<1x6x6xf32>
    %1379 = arith.addf %1375, %1378 : vector<1x6x6xf32>
    %c99 = arith.constant 99 : index
    %1380 = memref.load %arg2[%c99] : memref<150xf32, #tpu.memory_space<smem>>
    %1381 = vector.broadcast %1380 : f32 to vector<1x6x6xf32>
    %1382 = arith.mulf %1381, %58 : vector<1x6x6xf32>
    %1383 = arith.addf %1379, %1382 : vector<1x6x6xf32>
    %c75_234 = arith.constant 75 : index
    %1384 = memref.load %arg2[%c75_234] : memref<150xf32, #tpu.memory_space<smem>>
    %1385 = vector.broadcast %1384 : f32 to vector<1x6x6xf32>
    %1386 = arith.mulf %1385, %4 : vector<1x6x6xf32>
    %c76_235 = arith.constant 76 : index
    %1387 = memref.load %arg2[%c76_235] : memref<150xf32, #tpu.memory_space<smem>>
    %1388 = vector.broadcast %1387 : f32 to vector<1x6x6xf32>
    %1389 = arith.mulf %1388, %6 : vector<1x6x6xf32>
    %1390 = arith.addf %1386, %1389 : vector<1x6x6xf32>
    %c77_236 = arith.constant 77 : index
    %1391 = memref.load %arg2[%c77_236] : memref<150xf32, #tpu.memory_space<smem>>
    %1392 = vector.broadcast %1391 : f32 to vector<1x6x6xf32>
    %1393 = arith.mulf %1392, %8 : vector<1x6x6xf32>
    %1394 = arith.addf %1390, %1393 : vector<1x6x6xf32>
    %c78_237 = arith.constant 78 : index
    %1395 = memref.load %arg2[%c78_237] : memref<150xf32, #tpu.memory_space<smem>>
    %1396 = vector.broadcast %1395 : f32 to vector<1x6x6xf32>
    %1397 = arith.mulf %1396, %10 : vector<1x6x6xf32>
    %1398 = arith.addf %1394, %1397 : vector<1x6x6xf32>
    %c79_238 = arith.constant 79 : index
    %1399 = memref.load %arg2[%c79_238] : memref<150xf32, #tpu.memory_space<smem>>
    %1400 = vector.broadcast %1399 : f32 to vector<1x6x6xf32>
    %1401 = arith.mulf %1400, %12 : vector<1x6x6xf32>
    %1402 = arith.addf %1398, %1401 : vector<1x6x6xf32>
    %c80_239 = arith.constant 80 : index
    %1403 = memref.load %arg2[%c80_239] : memref<150xf32, #tpu.memory_space<smem>>
    %1404 = vector.broadcast %1403 : f32 to vector<1x6x6xf32>
    %1405 = arith.mulf %1404, %16 : vector<1x6x6xf32>
    %1406 = arith.addf %1402, %1405 : vector<1x6x6xf32>
    %c81_240 = arith.constant 81 : index
    %1407 = memref.load %arg2[%c81_240] : memref<150xf32, #tpu.memory_space<smem>>
    %1408 = vector.broadcast %1407 : f32 to vector<1x6x6xf32>
    %1409 = arith.mulf %1408, %18 : vector<1x6x6xf32>
    %1410 = arith.addf %1406, %1409 : vector<1x6x6xf32>
    %c82_241 = arith.constant 82 : index
    %1411 = memref.load %arg2[%c82_241] : memref<150xf32, #tpu.memory_space<smem>>
    %1412 = vector.broadcast %1411 : f32 to vector<1x6x6xf32>
    %1413 = arith.mulf %1412, %20 : vector<1x6x6xf32>
    %1414 = arith.addf %1410, %1413 : vector<1x6x6xf32>
    %c83_242 = arith.constant 83 : index
    %1415 = memref.load %arg2[%c83_242] : memref<150xf32, #tpu.memory_space<smem>>
    %1416 = vector.broadcast %1415 : f32 to vector<1x6x6xf32>
    %1417 = arith.mulf %1416, %22 : vector<1x6x6xf32>
    %1418 = arith.addf %1414, %1417 : vector<1x6x6xf32>
    %c84_243 = arith.constant 84 : index
    %1419 = memref.load %arg2[%c84_243] : memref<150xf32, #tpu.memory_space<smem>>
    %1420 = vector.broadcast %1419 : f32 to vector<1x6x6xf32>
    %1421 = arith.mulf %1420, %24 : vector<1x6x6xf32>
    %1422 = arith.addf %1418, %1421 : vector<1x6x6xf32>
    %c85_244 = arith.constant 85 : index
    %1423 = memref.load %arg2[%c85_244] : memref<150xf32, #tpu.memory_space<smem>>
    %1424 = vector.broadcast %1423 : f32 to vector<1x6x6xf32>
    %1425 = arith.mulf %1424, %28 : vector<1x6x6xf32>
    %1426 = arith.addf %1422, %1425 : vector<1x6x6xf32>
    %c86_245 = arith.constant 86 : index
    %1427 = memref.load %arg2[%c86_245] : memref<150xf32, #tpu.memory_space<smem>>
    %1428 = vector.broadcast %1427 : f32 to vector<1x6x6xf32>
    %1429 = arith.mulf %1428, %30 : vector<1x6x6xf32>
    %1430 = arith.addf %1426, %1429 : vector<1x6x6xf32>
    %c87_246 = arith.constant 87 : index
    %1431 = memref.load %arg2[%c87_246] : memref<150xf32, #tpu.memory_space<smem>>
    %1432 = vector.broadcast %1431 : f32 to vector<1x6x6xf32>
    %1433 = arith.mulf %1432, %32 : vector<1x6x6xf32>
    %1434 = arith.addf %1430, %1433 : vector<1x6x6xf32>
    %c88_247 = arith.constant 88 : index
    %1435 = memref.load %arg2[%c88_247] : memref<150xf32, #tpu.memory_space<smem>>
    %1436 = vector.broadcast %1435 : f32 to vector<1x6x6xf32>
    %1437 = arith.mulf %1436, %34 : vector<1x6x6xf32>
    %1438 = arith.addf %1434, %1437 : vector<1x6x6xf32>
    %c89_248 = arith.constant 89 : index
    %1439 = memref.load %arg2[%c89_248] : memref<150xf32, #tpu.memory_space<smem>>
    %1440 = vector.broadcast %1439 : f32 to vector<1x6x6xf32>
    %1441 = arith.mulf %1440, %36 : vector<1x6x6xf32>
    %1442 = arith.addf %1438, %1441 : vector<1x6x6xf32>
    %c90_249 = arith.constant 90 : index
    %1443 = memref.load %arg2[%c90_249] : memref<150xf32, #tpu.memory_space<smem>>
    %1444 = vector.broadcast %1443 : f32 to vector<1x6x6xf32>
    %1445 = arith.mulf %1444, %40 : vector<1x6x6xf32>
    %1446 = arith.addf %1442, %1445 : vector<1x6x6xf32>
    %c91_250 = arith.constant 91 : index
    %1447 = memref.load %arg2[%c91_250] : memref<150xf32, #tpu.memory_space<smem>>
    %1448 = vector.broadcast %1447 : f32 to vector<1x6x6xf32>
    %1449 = arith.mulf %1448, %42 : vector<1x6x6xf32>
    %1450 = arith.addf %1446, %1449 : vector<1x6x6xf32>
    %c92_251 = arith.constant 92 : index
    %1451 = memref.load %arg2[%c92_251] : memref<150xf32, #tpu.memory_space<smem>>
    %1452 = vector.broadcast %1451 : f32 to vector<1x6x6xf32>
    %1453 = arith.mulf %1452, %44 : vector<1x6x6xf32>
    %1454 = arith.addf %1450, %1453 : vector<1x6x6xf32>
    %c93_252 = arith.constant 93 : index
    %1455 = memref.load %arg2[%c93_252] : memref<150xf32, #tpu.memory_space<smem>>
    %1456 = vector.broadcast %1455 : f32 to vector<1x6x6xf32>
    %1457 = arith.mulf %1456, %46 : vector<1x6x6xf32>
    %1458 = arith.addf %1454, %1457 : vector<1x6x6xf32>
    %c94_253 = arith.constant 94 : index
    %1459 = memref.load %arg2[%c94_253] : memref<150xf32, #tpu.memory_space<smem>>
    %1460 = vector.broadcast %1459 : f32 to vector<1x6x6xf32>
    %1461 = arith.mulf %1460, %48 : vector<1x6x6xf32>
    %1462 = arith.addf %1458, %1461 : vector<1x6x6xf32>
    %c95_254 = arith.constant 95 : index
    %1463 = memref.load %arg2[%c95_254] : memref<150xf32, #tpu.memory_space<smem>>
    %1464 = vector.broadcast %1463 : f32 to vector<1x6x6xf32>
    %1465 = arith.mulf %1464, %52 : vector<1x6x6xf32>
    %1466 = arith.addf %1462, %1465 : vector<1x6x6xf32>
    %c96_255 = arith.constant 96 : index
    %1467 = memref.load %arg2[%c96_255] : memref<150xf32, #tpu.memory_space<smem>>
    %1468 = vector.broadcast %1467 : f32 to vector<1x6x6xf32>
    %1469 = arith.mulf %1468, %54 : vector<1x6x6xf32>
    %1470 = arith.addf %1466, %1469 : vector<1x6x6xf32>
    %c97_256 = arith.constant 97 : index
    %1471 = memref.load %arg2[%c97_256] : memref<150xf32, #tpu.memory_space<smem>>
    %1472 = vector.broadcast %1471 : f32 to vector<1x6x6xf32>
    %1473 = arith.mulf %1472, %56 : vector<1x6x6xf32>
    %1474 = arith.addf %1470, %1473 : vector<1x6x6xf32>
    %c98_257 = arith.constant 98 : index
    %1475 = memref.load %arg2[%c98_257] : memref<150xf32, #tpu.memory_space<smem>>
    %1476 = vector.broadcast %1475 : f32 to vector<1x6x6xf32>
    %1477 = arith.mulf %1476, %58 : vector<1x6x6xf32>
    %1478 = arith.addf %1474, %1477 : vector<1x6x6xf32>
    %c99_258 = arith.constant 99 : index
    %1479 = memref.load %arg2[%c99_258] : memref<150xf32, #tpu.memory_space<smem>>
    %1480 = vector.broadcast %1479 : f32 to vector<1x6x6xf32>
    %1481 = arith.mulf %1480, %60 : vector<1x6x6xf32>
    %1482 = arith.addf %1478, %1481 : vector<1x6x6xf32>
    %c75_259 = arith.constant 75 : index
    %1483 = memref.load %arg2[%c75_259] : memref<150xf32, #tpu.memory_space<smem>>
    %1484 = vector.broadcast %1483 : f32 to vector<1x6x6xf32>
    %1485 = arith.mulf %1484, %14 : vector<1x6x6xf32>
    %c76_260 = arith.constant 76 : index
    %1486 = memref.load %arg2[%c76_260] : memref<150xf32, #tpu.memory_space<smem>>
    %1487 = vector.broadcast %1486 : f32 to vector<1x6x6xf32>
    %1488 = arith.mulf %1487, %16 : vector<1x6x6xf32>
    %1489 = arith.addf %1485, %1488 : vector<1x6x6xf32>
    %c77_261 = arith.constant 77 : index
    %1490 = memref.load %arg2[%c77_261] : memref<150xf32, #tpu.memory_space<smem>>
    %1491 = vector.broadcast %1490 : f32 to vector<1x6x6xf32>
    %1492 = arith.mulf %1491, %18 : vector<1x6x6xf32>
    %1493 = arith.addf %1489, %1492 : vector<1x6x6xf32>
    %c78_262 = arith.constant 78 : index
    %1494 = memref.load %arg2[%c78_262] : memref<150xf32, #tpu.memory_space<smem>>
    %1495 = vector.broadcast %1494 : f32 to vector<1x6x6xf32>
    %1496 = arith.mulf %1495, %20 : vector<1x6x6xf32>
    %1497 = arith.addf %1493, %1496 : vector<1x6x6xf32>
    %c79_263 = arith.constant 79 : index
    %1498 = memref.load %arg2[%c79_263] : memref<150xf32, #tpu.memory_space<smem>>
    %1499 = vector.broadcast %1498 : f32 to vector<1x6x6xf32>
    %1500 = arith.mulf %1499, %22 : vector<1x6x6xf32>
    %1501 = arith.addf %1497, %1500 : vector<1x6x6xf32>
    %c80_264 = arith.constant 80 : index
    %1502 = memref.load %arg2[%c80_264] : memref<150xf32, #tpu.memory_space<smem>>
    %1503 = vector.broadcast %1502 : f32 to vector<1x6x6xf32>
    %1504 = arith.mulf %1503, %26 : vector<1x6x6xf32>
    %1505 = arith.addf %1501, %1504 : vector<1x6x6xf32>
    %c81_265 = arith.constant 81 : index
    %1506 = memref.load %arg2[%c81_265] : memref<150xf32, #tpu.memory_space<smem>>
    %1507 = vector.broadcast %1506 : f32 to vector<1x6x6xf32>
    %1508 = arith.mulf %1507, %28 : vector<1x6x6xf32>
    %1509 = arith.addf %1505, %1508 : vector<1x6x6xf32>
    %c82_266 = arith.constant 82 : index
    %1510 = memref.load %arg2[%c82_266] : memref<150xf32, #tpu.memory_space<smem>>
    %1511 = vector.broadcast %1510 : f32 to vector<1x6x6xf32>
    %1512 = arith.mulf %1511, %30 : vector<1x6x6xf32>
    %1513 = arith.addf %1509, %1512 : vector<1x6x6xf32>
    %c83_267 = arith.constant 83 : index
    %1514 = memref.load %arg2[%c83_267] : memref<150xf32, #tpu.memory_space<smem>>
    %1515 = vector.broadcast %1514 : f32 to vector<1x6x6xf32>
    %1516 = arith.mulf %1515, %32 : vector<1x6x6xf32>
    %1517 = arith.addf %1513, %1516 : vector<1x6x6xf32>
    %c84_268 = arith.constant 84 : index
    %1518 = memref.load %arg2[%c84_268] : memref<150xf32, #tpu.memory_space<smem>>
    %1519 = vector.broadcast %1518 : f32 to vector<1x6x6xf32>
    %1520 = arith.mulf %1519, %34 : vector<1x6x6xf32>
    %1521 = arith.addf %1517, %1520 : vector<1x6x6xf32>
    %c85_269 = arith.constant 85 : index
    %1522 = memref.load %arg2[%c85_269] : memref<150xf32, #tpu.memory_space<smem>>
    %1523 = vector.broadcast %1522 : f32 to vector<1x6x6xf32>
    %1524 = arith.mulf %1523, %38 : vector<1x6x6xf32>
    %1525 = arith.addf %1521, %1524 : vector<1x6x6xf32>
    %c86_270 = arith.constant 86 : index
    %1526 = memref.load %arg2[%c86_270] : memref<150xf32, #tpu.memory_space<smem>>
    %1527 = vector.broadcast %1526 : f32 to vector<1x6x6xf32>
    %1528 = arith.mulf %1527, %40 : vector<1x6x6xf32>
    %1529 = arith.addf %1525, %1528 : vector<1x6x6xf32>
    %c87_271 = arith.constant 87 : index
    %1530 = memref.load %arg2[%c87_271] : memref<150xf32, #tpu.memory_space<smem>>
    %1531 = vector.broadcast %1530 : f32 to vector<1x6x6xf32>
    %1532 = arith.mulf %1531, %42 : vector<1x6x6xf32>
    %1533 = arith.addf %1529, %1532 : vector<1x6x6xf32>
    %c88_272 = arith.constant 88 : index
    %1534 = memref.load %arg2[%c88_272] : memref<150xf32, #tpu.memory_space<smem>>
    %1535 = vector.broadcast %1534 : f32 to vector<1x6x6xf32>
    %1536 = arith.mulf %1535, %44 : vector<1x6x6xf32>
    %1537 = arith.addf %1533, %1536 : vector<1x6x6xf32>
    %c89_273 = arith.constant 89 : index
    %1538 = memref.load %arg2[%c89_273] : memref<150xf32, #tpu.memory_space<smem>>
    %1539 = vector.broadcast %1538 : f32 to vector<1x6x6xf32>
    %1540 = arith.mulf %1539, %46 : vector<1x6x6xf32>
    %1541 = arith.addf %1537, %1540 : vector<1x6x6xf32>
    %c90_274 = arith.constant 90 : index
    %1542 = memref.load %arg2[%c90_274] : memref<150xf32, #tpu.memory_space<smem>>
    %1543 = vector.broadcast %1542 : f32 to vector<1x6x6xf32>
    %1544 = arith.mulf %1543, %50 : vector<1x6x6xf32>
    %1545 = arith.addf %1541, %1544 : vector<1x6x6xf32>
    %c91_275 = arith.constant 91 : index
    %1546 = memref.load %arg2[%c91_275] : memref<150xf32, #tpu.memory_space<smem>>
    %1547 = vector.broadcast %1546 : f32 to vector<1x6x6xf32>
    %1548 = arith.mulf %1547, %52 : vector<1x6x6xf32>
    %1549 = arith.addf %1545, %1548 : vector<1x6x6xf32>
    %c92_276 = arith.constant 92 : index
    %1550 = memref.load %arg2[%c92_276] : memref<150xf32, #tpu.memory_space<smem>>
    %1551 = vector.broadcast %1550 : f32 to vector<1x6x6xf32>
    %1552 = arith.mulf %1551, %54 : vector<1x6x6xf32>
    %1553 = arith.addf %1549, %1552 : vector<1x6x6xf32>
    %c93_277 = arith.constant 93 : index
    %1554 = memref.load %arg2[%c93_277] : memref<150xf32, #tpu.memory_space<smem>>
    %1555 = vector.broadcast %1554 : f32 to vector<1x6x6xf32>
    %1556 = arith.mulf %1555, %56 : vector<1x6x6xf32>
    %1557 = arith.addf %1553, %1556 : vector<1x6x6xf32>
    %c94_278 = arith.constant 94 : index
    %1558 = memref.load %arg2[%c94_278] : memref<150xf32, #tpu.memory_space<smem>>
    %1559 = vector.broadcast %1558 : f32 to vector<1x6x6xf32>
    %1560 = arith.mulf %1559, %58 : vector<1x6x6xf32>
    %1561 = arith.addf %1557, %1560 : vector<1x6x6xf32>
    %c95_279 = arith.constant 95 : index
    %1562 = memref.load %arg2[%c95_279] : memref<150xf32, #tpu.memory_space<smem>>
    %1563 = vector.broadcast %1562 : f32 to vector<1x6x6xf32>
    %1564 = arith.mulf %1563, %62 : vector<1x6x6xf32>
    %1565 = arith.addf %1561, %1564 : vector<1x6x6xf32>
    %c96_280 = arith.constant 96 : index
    %1566 = memref.load %arg2[%c96_280] : memref<150xf32, #tpu.memory_space<smem>>
    %1567 = vector.broadcast %1566 : f32 to vector<1x6x6xf32>
    %1568 = arith.mulf %1567, %64 : vector<1x6x6xf32>
    %1569 = arith.addf %1565, %1568 : vector<1x6x6xf32>
    %c97_281 = arith.constant 97 : index
    %1570 = memref.load %arg2[%c97_281] : memref<150xf32, #tpu.memory_space<smem>>
    %1571 = vector.broadcast %1570 : f32 to vector<1x6x6xf32>
    %1572 = arith.mulf %1571, %66 : vector<1x6x6xf32>
    %1573 = arith.addf %1569, %1572 : vector<1x6x6xf32>
    %c98_282 = arith.constant 98 : index
    %1574 = memref.load %arg2[%c98_282] : memref<150xf32, #tpu.memory_space<smem>>
    %1575 = vector.broadcast %1574 : f32 to vector<1x6x6xf32>
    %1576 = arith.mulf %1575, %68 : vector<1x6x6xf32>
    %1577 = arith.addf %1573, %1576 : vector<1x6x6xf32>
    %c99_283 = arith.constant 99 : index
    %1578 = memref.load %arg2[%c99_283] : memref<150xf32, #tpu.memory_space<smem>>
    %1579 = vector.broadcast %1578 : f32 to vector<1x6x6xf32>
    %1580 = arith.mulf %1579, %70 : vector<1x6x6xf32>
    %1581 = arith.addf %1577, %1580 : vector<1x6x6xf32>
    %c75_284 = arith.constant 75 : index
    %1582 = memref.load %arg2[%c75_284] : memref<150xf32, #tpu.memory_space<smem>>
    %1583 = vector.broadcast %1582 : f32 to vector<1x6x6xf32>
    %1584 = arith.mulf %1583, %16 : vector<1x6x6xf32>
    %c76_285 = arith.constant 76 : index
    %1585 = memref.load %arg2[%c76_285] : memref<150xf32, #tpu.memory_space<smem>>
    %1586 = vector.broadcast %1585 : f32 to vector<1x6x6xf32>
    %1587 = arith.mulf %1586, %18 : vector<1x6x6xf32>
    %1588 = arith.addf %1584, %1587 : vector<1x6x6xf32>
    %c77_286 = arith.constant 77 : index
    %1589 = memref.load %arg2[%c77_286] : memref<150xf32, #tpu.memory_space<smem>>
    %1590 = vector.broadcast %1589 : f32 to vector<1x6x6xf32>
    %1591 = arith.mulf %1590, %20 : vector<1x6x6xf32>
    %1592 = arith.addf %1588, %1591 : vector<1x6x6xf32>
    %c78_287 = arith.constant 78 : index
    %1593 = memref.load %arg2[%c78_287] : memref<150xf32, #tpu.memory_space<smem>>
    %1594 = vector.broadcast %1593 : f32 to vector<1x6x6xf32>
    %1595 = arith.mulf %1594, %22 : vector<1x6x6xf32>
    %1596 = arith.addf %1592, %1595 : vector<1x6x6xf32>
    %c79_288 = arith.constant 79 : index
    %1597 = memref.load %arg2[%c79_288] : memref<150xf32, #tpu.memory_space<smem>>
    %1598 = vector.broadcast %1597 : f32 to vector<1x6x6xf32>
    %1599 = arith.mulf %1598, %24 : vector<1x6x6xf32>
    %1600 = arith.addf %1596, %1599 : vector<1x6x6xf32>
    %c80_289 = arith.constant 80 : index
    %1601 = memref.load %arg2[%c80_289] : memref<150xf32, #tpu.memory_space<smem>>
    %1602 = vector.broadcast %1601 : f32 to vector<1x6x6xf32>
    %1603 = arith.mulf %1602, %28 : vector<1x6x6xf32>
    %1604 = arith.addf %1600, %1603 : vector<1x6x6xf32>
    %c81_290 = arith.constant 81 : index
    %1605 = memref.load %arg2[%c81_290] : memref<150xf32, #tpu.memory_space<smem>>
    %1606 = vector.broadcast %1605 : f32 to vector<1x6x6xf32>
    %1607 = arith.mulf %1606, %30 : vector<1x6x6xf32>
    %1608 = arith.addf %1604, %1607 : vector<1x6x6xf32>
    %c82_291 = arith.constant 82 : index
    %1609 = memref.load %arg2[%c82_291] : memref<150xf32, #tpu.memory_space<smem>>
    %1610 = vector.broadcast %1609 : f32 to vector<1x6x6xf32>
    %1611 = arith.mulf %1610, %32 : vector<1x6x6xf32>
    %1612 = arith.addf %1608, %1611 : vector<1x6x6xf32>
    %c83_292 = arith.constant 83 : index
    %1613 = memref.load %arg2[%c83_292] : memref<150xf32, #tpu.memory_space<smem>>
    %1614 = vector.broadcast %1613 : f32 to vector<1x6x6xf32>
    %1615 = arith.mulf %1614, %34 : vector<1x6x6xf32>
    %1616 = arith.addf %1612, %1615 : vector<1x6x6xf32>
    %c84_293 = arith.constant 84 : index
    %1617 = memref.load %arg2[%c84_293] : memref<150xf32, #tpu.memory_space<smem>>
    %1618 = vector.broadcast %1617 : f32 to vector<1x6x6xf32>
    %1619 = arith.mulf %1618, %36 : vector<1x6x6xf32>
    %1620 = arith.addf %1616, %1619 : vector<1x6x6xf32>
    %c85_294 = arith.constant 85 : index
    %1621 = memref.load %arg2[%c85_294] : memref<150xf32, #tpu.memory_space<smem>>
    %1622 = vector.broadcast %1621 : f32 to vector<1x6x6xf32>
    %1623 = arith.mulf %1622, %40 : vector<1x6x6xf32>
    %1624 = arith.addf %1620, %1623 : vector<1x6x6xf32>
    %c86_295 = arith.constant 86 : index
    %1625 = memref.load %arg2[%c86_295] : memref<150xf32, #tpu.memory_space<smem>>
    %1626 = vector.broadcast %1625 : f32 to vector<1x6x6xf32>
    %1627 = arith.mulf %1626, %42 : vector<1x6x6xf32>
    %1628 = arith.addf %1624, %1627 : vector<1x6x6xf32>
    %c87_296 = arith.constant 87 : index
    %1629 = memref.load %arg2[%c87_296] : memref<150xf32, #tpu.memory_space<smem>>
    %1630 = vector.broadcast %1629 : f32 to vector<1x6x6xf32>
    %1631 = arith.mulf %1630, %44 : vector<1x6x6xf32>
    %1632 = arith.addf %1628, %1631 : vector<1x6x6xf32>
    %c88_297 = arith.constant 88 : index
    %1633 = memref.load %arg2[%c88_297] : memref<150xf32, #tpu.memory_space<smem>>
    %1634 = vector.broadcast %1633 : f32 to vector<1x6x6xf32>
    %1635 = arith.mulf %1634, %46 : vector<1x6x6xf32>
    %1636 = arith.addf %1632, %1635 : vector<1x6x6xf32>
    %c89_298 = arith.constant 89 : index
    %1637 = memref.load %arg2[%c89_298] : memref<150xf32, #tpu.memory_space<smem>>
    %1638 = vector.broadcast %1637 : f32 to vector<1x6x6xf32>
    %1639 = arith.mulf %1638, %48 : vector<1x6x6xf32>
    %1640 = arith.addf %1636, %1639 : vector<1x6x6xf32>
    %c90_299 = arith.constant 90 : index
    %1641 = memref.load %arg2[%c90_299] : memref<150xf32, #tpu.memory_space<smem>>
    %1642 = vector.broadcast %1641 : f32 to vector<1x6x6xf32>
    %1643 = arith.mulf %1642, %52 : vector<1x6x6xf32>
    %1644 = arith.addf %1640, %1643 : vector<1x6x6xf32>
    %c91_300 = arith.constant 91 : index
    %1645 = memref.load %arg2[%c91_300] : memref<150xf32, #tpu.memory_space<smem>>
    %1646 = vector.broadcast %1645 : f32 to vector<1x6x6xf32>
    %1647 = arith.mulf %1646, %54 : vector<1x6x6xf32>
    %1648 = arith.addf %1644, %1647 : vector<1x6x6xf32>
    %c92_301 = arith.constant 92 : index
    %1649 = memref.load %arg2[%c92_301] : memref<150xf32, #tpu.memory_space<smem>>
    %1650 = vector.broadcast %1649 : f32 to vector<1x6x6xf32>
    %1651 = arith.mulf %1650, %56 : vector<1x6x6xf32>
    %1652 = arith.addf %1648, %1651 : vector<1x6x6xf32>
    %c93_302 = arith.constant 93 : index
    %1653 = memref.load %arg2[%c93_302] : memref<150xf32, #tpu.memory_space<smem>>
    %1654 = vector.broadcast %1653 : f32 to vector<1x6x6xf32>
    %1655 = arith.mulf %1654, %58 : vector<1x6x6xf32>
    %1656 = arith.addf %1652, %1655 : vector<1x6x6xf32>
    %c94_303 = arith.constant 94 : index
    %1657 = memref.load %arg2[%c94_303] : memref<150xf32, #tpu.memory_space<smem>>
    %1658 = vector.broadcast %1657 : f32 to vector<1x6x6xf32>
    %1659 = arith.mulf %1658, %60 : vector<1x6x6xf32>
    %1660 = arith.addf %1656, %1659 : vector<1x6x6xf32>
    %c95_304 = arith.constant 95 : index
    %1661 = memref.load %arg2[%c95_304] : memref<150xf32, #tpu.memory_space<smem>>
    %1662 = vector.broadcast %1661 : f32 to vector<1x6x6xf32>
    %1663 = arith.mulf %1662, %64 : vector<1x6x6xf32>
    %1664 = arith.addf %1660, %1663 : vector<1x6x6xf32>
    %c96_305 = arith.constant 96 : index
    %1665 = memref.load %arg2[%c96_305] : memref<150xf32, #tpu.memory_space<smem>>
    %1666 = vector.broadcast %1665 : f32 to vector<1x6x6xf32>
    %1667 = arith.mulf %1666, %66 : vector<1x6x6xf32>
    %1668 = arith.addf %1664, %1667 : vector<1x6x6xf32>
    %c97_306 = arith.constant 97 : index
    %1669 = memref.load %arg2[%c97_306] : memref<150xf32, #tpu.memory_space<smem>>
    %1670 = vector.broadcast %1669 : f32 to vector<1x6x6xf32>
    %1671 = arith.mulf %1670, %68 : vector<1x6x6xf32>
    %1672 = arith.addf %1668, %1671 : vector<1x6x6xf32>
    %c98_307 = arith.constant 98 : index
    %1673 = memref.load %arg2[%c98_307] : memref<150xf32, #tpu.memory_space<smem>>
    %1674 = vector.broadcast %1673 : f32 to vector<1x6x6xf32>
    %1675 = arith.mulf %1674, %70 : vector<1x6x6xf32>
    %1676 = arith.addf %1672, %1675 : vector<1x6x6xf32>
    %c99_308 = arith.constant 99 : index
    %1677 = memref.load %arg2[%c99_308] : memref<150xf32, #tpu.memory_space<smem>>
    %1678 = vector.broadcast %1677 : f32 to vector<1x6x6xf32>
    %1679 = arith.mulf %1678, %72 : vector<1x6x6xf32>
    %1680 = arith.addf %1676, %1679 : vector<1x6x6xf32>
    %1681 = arith.maximumf %1383, %1482 : vector<1x6x6xf32>
    %1682 = arith.maximumf %1581, %1680 : vector<1x6x6xf32>
    %1683 = arith.maximumf %1681, %1682 : vector<1x6x6xf32>
    %c3_309 = arith.constant 3 : index
    %1684 = memref.load %arg3[%c3_309] : memref<6xf32, #tpu.memory_space<smem>>
    %1685 = vector.broadcast %1684 : f32 to vector<1x6x6xf32>
    %1686 = arith.addf %1683, %1685 : vector<1x6x6xf32>
    %cst_310 = arith.constant 0.000000e+00 : f32
    %1687 = vector.broadcast %cst_310 : f32 to vector<1x6x6xf32>
    %1688 = arith.maximumf %1686, %1687 : vector<1x6x6xf32>
    %c100 = arith.constant 100 : index
    %1689 = memref.load %arg2[%c100] : memref<150xf32, #tpu.memory_space<smem>>
    %1690 = vector.broadcast %1689 : f32 to vector<1x6x6xf32>
    %1691 = arith.mulf %1690, %2 : vector<1x6x6xf32>
    %c101 = arith.constant 101 : index
    %1692 = memref.load %arg2[%c101] : memref<150xf32, #tpu.memory_space<smem>>
    %1693 = vector.broadcast %1692 : f32 to vector<1x6x6xf32>
    %1694 = arith.mulf %1693, %4 : vector<1x6x6xf32>
    %1695 = arith.addf %1691, %1694 : vector<1x6x6xf32>
    %c102 = arith.constant 102 : index
    %1696 = memref.load %arg2[%c102] : memref<150xf32, #tpu.memory_space<smem>>
    %1697 = vector.broadcast %1696 : f32 to vector<1x6x6xf32>
    %1698 = arith.mulf %1697, %6 : vector<1x6x6xf32>
    %1699 = arith.addf %1695, %1698 : vector<1x6x6xf32>
    %c103 = arith.constant 103 : index
    %1700 = memref.load %arg2[%c103] : memref<150xf32, #tpu.memory_space<smem>>
    %1701 = vector.broadcast %1700 : f32 to vector<1x6x6xf32>
    %1702 = arith.mulf %1701, %8 : vector<1x6x6xf32>
    %1703 = arith.addf %1699, %1702 : vector<1x6x6xf32>
    %c104 = arith.constant 104 : index
    %1704 = memref.load %arg2[%c104] : memref<150xf32, #tpu.memory_space<smem>>
    %1705 = vector.broadcast %1704 : f32 to vector<1x6x6xf32>
    %1706 = arith.mulf %1705, %10 : vector<1x6x6xf32>
    %1707 = arith.addf %1703, %1706 : vector<1x6x6xf32>
    %c105 = arith.constant 105 : index
    %1708 = memref.load %arg2[%c105] : memref<150xf32, #tpu.memory_space<smem>>
    %1709 = vector.broadcast %1708 : f32 to vector<1x6x6xf32>
    %1710 = arith.mulf %1709, %14 : vector<1x6x6xf32>
    %1711 = arith.addf %1707, %1710 : vector<1x6x6xf32>
    %c106 = arith.constant 106 : index
    %1712 = memref.load %arg2[%c106] : memref<150xf32, #tpu.memory_space<smem>>
    %1713 = vector.broadcast %1712 : f32 to vector<1x6x6xf32>
    %1714 = arith.mulf %1713, %16 : vector<1x6x6xf32>
    %1715 = arith.addf %1711, %1714 : vector<1x6x6xf32>
    %c107 = arith.constant 107 : index
    %1716 = memref.load %arg2[%c107] : memref<150xf32, #tpu.memory_space<smem>>
    %1717 = vector.broadcast %1716 : f32 to vector<1x6x6xf32>
    %1718 = arith.mulf %1717, %18 : vector<1x6x6xf32>
    %1719 = arith.addf %1715, %1718 : vector<1x6x6xf32>
    %c108 = arith.constant 108 : index
    %1720 = memref.load %arg2[%c108] : memref<150xf32, #tpu.memory_space<smem>>
    %1721 = vector.broadcast %1720 : f32 to vector<1x6x6xf32>
    %1722 = arith.mulf %1721, %20 : vector<1x6x6xf32>
    %1723 = arith.addf %1719, %1722 : vector<1x6x6xf32>
    %c109 = arith.constant 109 : index
    %1724 = memref.load %arg2[%c109] : memref<150xf32, #tpu.memory_space<smem>>
    %1725 = vector.broadcast %1724 : f32 to vector<1x6x6xf32>
    %1726 = arith.mulf %1725, %22 : vector<1x6x6xf32>
    %1727 = arith.addf %1723, %1726 : vector<1x6x6xf32>
    %c110 = arith.constant 110 : index
    %1728 = memref.load %arg2[%c110] : memref<150xf32, #tpu.memory_space<smem>>
    %1729 = vector.broadcast %1728 : f32 to vector<1x6x6xf32>
    %1730 = arith.mulf %1729, %26 : vector<1x6x6xf32>
    %1731 = arith.addf %1727, %1730 : vector<1x6x6xf32>
    %c111 = arith.constant 111 : index
    %1732 = memref.load %arg2[%c111] : memref<150xf32, #tpu.memory_space<smem>>
    %1733 = vector.broadcast %1732 : f32 to vector<1x6x6xf32>
    %1734 = arith.mulf %1733, %28 : vector<1x6x6xf32>
    %1735 = arith.addf %1731, %1734 : vector<1x6x6xf32>
    %c112 = arith.constant 112 : index
    %1736 = memref.load %arg2[%c112] : memref<150xf32, #tpu.memory_space<smem>>
    %1737 = vector.broadcast %1736 : f32 to vector<1x6x6xf32>
    %1738 = arith.mulf %1737, %30 : vector<1x6x6xf32>
    %1739 = arith.addf %1735, %1738 : vector<1x6x6xf32>
    %c113 = arith.constant 113 : index
    %1740 = memref.load %arg2[%c113] : memref<150xf32, #tpu.memory_space<smem>>
    %1741 = vector.broadcast %1740 : f32 to vector<1x6x6xf32>
    %1742 = arith.mulf %1741, %32 : vector<1x6x6xf32>
    %1743 = arith.addf %1739, %1742 : vector<1x6x6xf32>
    %c114 = arith.constant 114 : index
    %1744 = memref.load %arg2[%c114] : memref<150xf32, #tpu.memory_space<smem>>
    %1745 = vector.broadcast %1744 : f32 to vector<1x6x6xf32>
    %1746 = arith.mulf %1745, %34 : vector<1x6x6xf32>
    %1747 = arith.addf %1743, %1746 : vector<1x6x6xf32>
    %c115 = arith.constant 115 : index
    %1748 = memref.load %arg2[%c115] : memref<150xf32, #tpu.memory_space<smem>>
    %1749 = vector.broadcast %1748 : f32 to vector<1x6x6xf32>
    %1750 = arith.mulf %1749, %38 : vector<1x6x6xf32>
    %1751 = arith.addf %1747, %1750 : vector<1x6x6xf32>
    %c116 = arith.constant 116 : index
    %1752 = memref.load %arg2[%c116] : memref<150xf32, #tpu.memory_space<smem>>
    %1753 = vector.broadcast %1752 : f32 to vector<1x6x6xf32>
    %1754 = arith.mulf %1753, %40 : vector<1x6x6xf32>
    %1755 = arith.addf %1751, %1754 : vector<1x6x6xf32>
    %c117 = arith.constant 117 : index
    %1756 = memref.load %arg2[%c117] : memref<150xf32, #tpu.memory_space<smem>>
    %1757 = vector.broadcast %1756 : f32 to vector<1x6x6xf32>
    %1758 = arith.mulf %1757, %42 : vector<1x6x6xf32>
    %1759 = arith.addf %1755, %1758 : vector<1x6x6xf32>
    %c118 = arith.constant 118 : index
    %1760 = memref.load %arg2[%c118] : memref<150xf32, #tpu.memory_space<smem>>
    %1761 = vector.broadcast %1760 : f32 to vector<1x6x6xf32>
    %1762 = arith.mulf %1761, %44 : vector<1x6x6xf32>
    %1763 = arith.addf %1759, %1762 : vector<1x6x6xf32>
    %c119 = arith.constant 119 : index
    %1764 = memref.load %arg2[%c119] : memref<150xf32, #tpu.memory_space<smem>>
    %1765 = vector.broadcast %1764 : f32 to vector<1x6x6xf32>
    %1766 = arith.mulf %1765, %46 : vector<1x6x6xf32>
    %1767 = arith.addf %1763, %1766 : vector<1x6x6xf32>
    %c120 = arith.constant 120 : index
    %1768 = memref.load %arg2[%c120] : memref<150xf32, #tpu.memory_space<smem>>
    %1769 = vector.broadcast %1768 : f32 to vector<1x6x6xf32>
    %1770 = arith.mulf %1769, %50 : vector<1x6x6xf32>
    %1771 = arith.addf %1767, %1770 : vector<1x6x6xf32>
    %c121 = arith.constant 121 : index
    %1772 = memref.load %arg2[%c121] : memref<150xf32, #tpu.memory_space<smem>>
    %1773 = vector.broadcast %1772 : f32 to vector<1x6x6xf32>
    %1774 = arith.mulf %1773, %52 : vector<1x6x6xf32>
    %1775 = arith.addf %1771, %1774 : vector<1x6x6xf32>
    %c122 = arith.constant 122 : index
    %1776 = memref.load %arg2[%c122] : memref<150xf32, #tpu.memory_space<smem>>
    %1777 = vector.broadcast %1776 : f32 to vector<1x6x6xf32>
    %1778 = arith.mulf %1777, %54 : vector<1x6x6xf32>
    %1779 = arith.addf %1775, %1778 : vector<1x6x6xf32>
    %c123 = arith.constant 123 : index
    %1780 = memref.load %arg2[%c123] : memref<150xf32, #tpu.memory_space<smem>>
    %1781 = vector.broadcast %1780 : f32 to vector<1x6x6xf32>
    %1782 = arith.mulf %1781, %56 : vector<1x6x6xf32>
    %1783 = arith.addf %1779, %1782 : vector<1x6x6xf32>
    %c124 = arith.constant 124 : index
    %1784 = memref.load %arg2[%c124] : memref<150xf32, #tpu.memory_space<smem>>
    %1785 = vector.broadcast %1784 : f32 to vector<1x6x6xf32>
    %1786 = arith.mulf %1785, %58 : vector<1x6x6xf32>
    %1787 = arith.addf %1783, %1786 : vector<1x6x6xf32>
    %c100_311 = arith.constant 100 : index
    %1788 = memref.load %arg2[%c100_311] : memref<150xf32, #tpu.memory_space<smem>>
    %1789 = vector.broadcast %1788 : f32 to vector<1x6x6xf32>
    %1790 = arith.mulf %1789, %4 : vector<1x6x6xf32>
    %c101_312 = arith.constant 101 : index
    %1791 = memref.load %arg2[%c101_312] : memref<150xf32, #tpu.memory_space<smem>>
    %1792 = vector.broadcast %1791 : f32 to vector<1x6x6xf32>
    %1793 = arith.mulf %1792, %6 : vector<1x6x6xf32>
    %1794 = arith.addf %1790, %1793 : vector<1x6x6xf32>
    %c102_313 = arith.constant 102 : index
    %1795 = memref.load %arg2[%c102_313] : memref<150xf32, #tpu.memory_space<smem>>
    %1796 = vector.broadcast %1795 : f32 to vector<1x6x6xf32>
    %1797 = arith.mulf %1796, %8 : vector<1x6x6xf32>
    %1798 = arith.addf %1794, %1797 : vector<1x6x6xf32>
    %c103_314 = arith.constant 103 : index
    %1799 = memref.load %arg2[%c103_314] : memref<150xf32, #tpu.memory_space<smem>>
    %1800 = vector.broadcast %1799 : f32 to vector<1x6x6xf32>
    %1801 = arith.mulf %1800, %10 : vector<1x6x6xf32>
    %1802 = arith.addf %1798, %1801 : vector<1x6x6xf32>
    %c104_315 = arith.constant 104 : index
    %1803 = memref.load %arg2[%c104_315] : memref<150xf32, #tpu.memory_space<smem>>
    %1804 = vector.broadcast %1803 : f32 to vector<1x6x6xf32>
    %1805 = arith.mulf %1804, %12 : vector<1x6x6xf32>
    %1806 = arith.addf %1802, %1805 : vector<1x6x6xf32>
    %c105_316 = arith.constant 105 : index
    %1807 = memref.load %arg2[%c105_316] : memref<150xf32, #tpu.memory_space<smem>>
    %1808 = vector.broadcast %1807 : f32 to vector<1x6x6xf32>
    %1809 = arith.mulf %1808, %16 : vector<1x6x6xf32>
    %1810 = arith.addf %1806, %1809 : vector<1x6x6xf32>
    %c106_317 = arith.constant 106 : index
    %1811 = memref.load %arg2[%c106_317] : memref<150xf32, #tpu.memory_space<smem>>
    %1812 = vector.broadcast %1811 : f32 to vector<1x6x6xf32>
    %1813 = arith.mulf %1812, %18 : vector<1x6x6xf32>
    %1814 = arith.addf %1810, %1813 : vector<1x6x6xf32>
    %c107_318 = arith.constant 107 : index
    %1815 = memref.load %arg2[%c107_318] : memref<150xf32, #tpu.memory_space<smem>>
    %1816 = vector.broadcast %1815 : f32 to vector<1x6x6xf32>
    %1817 = arith.mulf %1816, %20 : vector<1x6x6xf32>
    %1818 = arith.addf %1814, %1817 : vector<1x6x6xf32>
    %c108_319 = arith.constant 108 : index
    %1819 = memref.load %arg2[%c108_319] : memref<150xf32, #tpu.memory_space<smem>>
    %1820 = vector.broadcast %1819 : f32 to vector<1x6x6xf32>
    %1821 = arith.mulf %1820, %22 : vector<1x6x6xf32>
    %1822 = arith.addf %1818, %1821 : vector<1x6x6xf32>
    %c109_320 = arith.constant 109 : index
    %1823 = memref.load %arg2[%c109_320] : memref<150xf32, #tpu.memory_space<smem>>
    %1824 = vector.broadcast %1823 : f32 to vector<1x6x6xf32>
    %1825 = arith.mulf %1824, %24 : vector<1x6x6xf32>
    %1826 = arith.addf %1822, %1825 : vector<1x6x6xf32>
    %c110_321 = arith.constant 110 : index
    %1827 = memref.load %arg2[%c110_321] : memref<150xf32, #tpu.memory_space<smem>>
    %1828 = vector.broadcast %1827 : f32 to vector<1x6x6xf32>
    %1829 = arith.mulf %1828, %28 : vector<1x6x6xf32>
    %1830 = arith.addf %1826, %1829 : vector<1x6x6xf32>
    %c111_322 = arith.constant 111 : index
    %1831 = memref.load %arg2[%c111_322] : memref<150xf32, #tpu.memory_space<smem>>
    %1832 = vector.broadcast %1831 : f32 to vector<1x6x6xf32>
    %1833 = arith.mulf %1832, %30 : vector<1x6x6xf32>
    %1834 = arith.addf %1830, %1833 : vector<1x6x6xf32>
    %c112_323 = arith.constant 112 : index
    %1835 = memref.load %arg2[%c112_323] : memref<150xf32, #tpu.memory_space<smem>>
    %1836 = vector.broadcast %1835 : f32 to vector<1x6x6xf32>
    %1837 = arith.mulf %1836, %32 : vector<1x6x6xf32>
    %1838 = arith.addf %1834, %1837 : vector<1x6x6xf32>
    %c113_324 = arith.constant 113 : index
    %1839 = memref.load %arg2[%c113_324] : memref<150xf32, #tpu.memory_space<smem>>
    %1840 = vector.broadcast %1839 : f32 to vector<1x6x6xf32>
    %1841 = arith.mulf %1840, %34 : vector<1x6x6xf32>
    %1842 = arith.addf %1838, %1841 : vector<1x6x6xf32>
    %c114_325 = arith.constant 114 : index
    %1843 = memref.load %arg2[%c114_325] : memref<150xf32, #tpu.memory_space<smem>>
    %1844 = vector.broadcast %1843 : f32 to vector<1x6x6xf32>
    %1845 = arith.mulf %1844, %36 : vector<1x6x6xf32>
    %1846 = arith.addf %1842, %1845 : vector<1x6x6xf32>
    %c115_326 = arith.constant 115 : index
    %1847 = memref.load %arg2[%c115_326] : memref<150xf32, #tpu.memory_space<smem>>
    %1848 = vector.broadcast %1847 : f32 to vector<1x6x6xf32>
    %1849 = arith.mulf %1848, %40 : vector<1x6x6xf32>
    %1850 = arith.addf %1846, %1849 : vector<1x6x6xf32>
    %c116_327 = arith.constant 116 : index
    %1851 = memref.load %arg2[%c116_327] : memref<150xf32, #tpu.memory_space<smem>>
    %1852 = vector.broadcast %1851 : f32 to vector<1x6x6xf32>
    %1853 = arith.mulf %1852, %42 : vector<1x6x6xf32>
    %1854 = arith.addf %1850, %1853 : vector<1x6x6xf32>
    %c117_328 = arith.constant 117 : index
    %1855 = memref.load %arg2[%c117_328] : memref<150xf32, #tpu.memory_space<smem>>
    %1856 = vector.broadcast %1855 : f32 to vector<1x6x6xf32>
    %1857 = arith.mulf %1856, %44 : vector<1x6x6xf32>
    %1858 = arith.addf %1854, %1857 : vector<1x6x6xf32>
    %c118_329 = arith.constant 118 : index
    %1859 = memref.load %arg2[%c118_329] : memref<150xf32, #tpu.memory_space<smem>>
    %1860 = vector.broadcast %1859 : f32 to vector<1x6x6xf32>
    %1861 = arith.mulf %1860, %46 : vector<1x6x6xf32>
    %1862 = arith.addf %1858, %1861 : vector<1x6x6xf32>
    %c119_330 = arith.constant 119 : index
    %1863 = memref.load %arg2[%c119_330] : memref<150xf32, #tpu.memory_space<smem>>
    %1864 = vector.broadcast %1863 : f32 to vector<1x6x6xf32>
    %1865 = arith.mulf %1864, %48 : vector<1x6x6xf32>
    %1866 = arith.addf %1862, %1865 : vector<1x6x6xf32>
    %c120_331 = arith.constant 120 : index
    %1867 = memref.load %arg2[%c120_331] : memref<150xf32, #tpu.memory_space<smem>>
    %1868 = vector.broadcast %1867 : f32 to vector<1x6x6xf32>
    %1869 = arith.mulf %1868, %52 : vector<1x6x6xf32>
    %1870 = arith.addf %1866, %1869 : vector<1x6x6xf32>
    %c121_332 = arith.constant 121 : index
    %1871 = memref.load %arg2[%c121_332] : memref<150xf32, #tpu.memory_space<smem>>
    %1872 = vector.broadcast %1871 : f32 to vector<1x6x6xf32>
    %1873 = arith.mulf %1872, %54 : vector<1x6x6xf32>
    %1874 = arith.addf %1870, %1873 : vector<1x6x6xf32>
    %c122_333 = arith.constant 122 : index
    %1875 = memref.load %arg2[%c122_333] : memref<150xf32, #tpu.memory_space<smem>>
    %1876 = vector.broadcast %1875 : f32 to vector<1x6x6xf32>
    %1877 = arith.mulf %1876, %56 : vector<1x6x6xf32>
    %1878 = arith.addf %1874, %1877 : vector<1x6x6xf32>
    %c123_334 = arith.constant 123 : index
    %1879 = memref.load %arg2[%c123_334] : memref<150xf32, #tpu.memory_space<smem>>
    %1880 = vector.broadcast %1879 : f32 to vector<1x6x6xf32>
    %1881 = arith.mulf %1880, %58 : vector<1x6x6xf32>
    %1882 = arith.addf %1878, %1881 : vector<1x6x6xf32>
    %c124_335 = arith.constant 124 : index
    %1883 = memref.load %arg2[%c124_335] : memref<150xf32, #tpu.memory_space<smem>>
    %1884 = vector.broadcast %1883 : f32 to vector<1x6x6xf32>
    %1885 = arith.mulf %1884, %60 : vector<1x6x6xf32>
    %1886 = arith.addf %1882, %1885 : vector<1x6x6xf32>
    %c100_336 = arith.constant 100 : index
    %1887 = memref.load %arg2[%c100_336] : memref<150xf32, #tpu.memory_space<smem>>
    %1888 = vector.broadcast %1887 : f32 to vector<1x6x6xf32>
    %1889 = arith.mulf %1888, %14 : vector<1x6x6xf32>
    %c101_337 = arith.constant 101 : index
    %1890 = memref.load %arg2[%c101_337] : memref<150xf32, #tpu.memory_space<smem>>
    %1891 = vector.broadcast %1890 : f32 to vector<1x6x6xf32>
    %1892 = arith.mulf %1891, %16 : vector<1x6x6xf32>
    %1893 = arith.addf %1889, %1892 : vector<1x6x6xf32>
    %c102_338 = arith.constant 102 : index
    %1894 = memref.load %arg2[%c102_338] : memref<150xf32, #tpu.memory_space<smem>>
    %1895 = vector.broadcast %1894 : f32 to vector<1x6x6xf32>
    %1896 = arith.mulf %1895, %18 : vector<1x6x6xf32>
    %1897 = arith.addf %1893, %1896 : vector<1x6x6xf32>
    %c103_339 = arith.constant 103 : index
    %1898 = memref.load %arg2[%c103_339] : memref<150xf32, #tpu.memory_space<smem>>
    %1899 = vector.broadcast %1898 : f32 to vector<1x6x6xf32>
    %1900 = arith.mulf %1899, %20 : vector<1x6x6xf32>
    %1901 = arith.addf %1897, %1900 : vector<1x6x6xf32>
    %c104_340 = arith.constant 104 : index
    %1902 = memref.load %arg2[%c104_340] : memref<150xf32, #tpu.memory_space<smem>>
    %1903 = vector.broadcast %1902 : f32 to vector<1x6x6xf32>
    %1904 = arith.mulf %1903, %22 : vector<1x6x6xf32>
    %1905 = arith.addf %1901, %1904 : vector<1x6x6xf32>
    %c105_341 = arith.constant 105 : index
    %1906 = memref.load %arg2[%c105_341] : memref<150xf32, #tpu.memory_space<smem>>
    %1907 = vector.broadcast %1906 : f32 to vector<1x6x6xf32>
    %1908 = arith.mulf %1907, %26 : vector<1x6x6xf32>
    %1909 = arith.addf %1905, %1908 : vector<1x6x6xf32>
    %c106_342 = arith.constant 106 : index
    %1910 = memref.load %arg2[%c106_342] : memref<150xf32, #tpu.memory_space<smem>>
    %1911 = vector.broadcast %1910 : f32 to vector<1x6x6xf32>
    %1912 = arith.mulf %1911, %28 : vector<1x6x6xf32>
    %1913 = arith.addf %1909, %1912 : vector<1x6x6xf32>
    %c107_343 = arith.constant 107 : index
    %1914 = memref.load %arg2[%c107_343] : memref<150xf32, #tpu.memory_space<smem>>
    %1915 = vector.broadcast %1914 : f32 to vector<1x6x6xf32>
    %1916 = arith.mulf %1915, %30 : vector<1x6x6xf32>
    %1917 = arith.addf %1913, %1916 : vector<1x6x6xf32>
    %c108_344 = arith.constant 108 : index
    %1918 = memref.load %arg2[%c108_344] : memref<150xf32, #tpu.memory_space<smem>>
    %1919 = vector.broadcast %1918 : f32 to vector<1x6x6xf32>
    %1920 = arith.mulf %1919, %32 : vector<1x6x6xf32>
    %1921 = arith.addf %1917, %1920 : vector<1x6x6xf32>
    %c109_345 = arith.constant 109 : index
    %1922 = memref.load %arg2[%c109_345] : memref<150xf32, #tpu.memory_space<smem>>
    %1923 = vector.broadcast %1922 : f32 to vector<1x6x6xf32>
    %1924 = arith.mulf %1923, %34 : vector<1x6x6xf32>
    %1925 = arith.addf %1921, %1924 : vector<1x6x6xf32>
    %c110_346 = arith.constant 110 : index
    %1926 = memref.load %arg2[%c110_346] : memref<150xf32, #tpu.memory_space<smem>>
    %1927 = vector.broadcast %1926 : f32 to vector<1x6x6xf32>
    %1928 = arith.mulf %1927, %38 : vector<1x6x6xf32>
    %1929 = arith.addf %1925, %1928 : vector<1x6x6xf32>
    %c111_347 = arith.constant 111 : index
    %1930 = memref.load %arg2[%c111_347] : memref<150xf32, #tpu.memory_space<smem>>
    %1931 = vector.broadcast %1930 : f32 to vector<1x6x6xf32>
    %1932 = arith.mulf %1931, %40 : vector<1x6x6xf32>
    %1933 = arith.addf %1929, %1932 : vector<1x6x6xf32>
    %c112_348 = arith.constant 112 : index
    %1934 = memref.load %arg2[%c112_348] : memref<150xf32, #tpu.memory_space<smem>>
    %1935 = vector.broadcast %1934 : f32 to vector<1x6x6xf32>
    %1936 = arith.mulf %1935, %42 : vector<1x6x6xf32>
    %1937 = arith.addf %1933, %1936 : vector<1x6x6xf32>
    %c113_349 = arith.constant 113 : index
    %1938 = memref.load %arg2[%c113_349] : memref<150xf32, #tpu.memory_space<smem>>
    %1939 = vector.broadcast %1938 : f32 to vector<1x6x6xf32>
    %1940 = arith.mulf %1939, %44 : vector<1x6x6xf32>
    %1941 = arith.addf %1937, %1940 : vector<1x6x6xf32>
    %c114_350 = arith.constant 114 : index
    %1942 = memref.load %arg2[%c114_350] : memref<150xf32, #tpu.memory_space<smem>>
    %1943 = vector.broadcast %1942 : f32 to vector<1x6x6xf32>
    %1944 = arith.mulf %1943, %46 : vector<1x6x6xf32>
    %1945 = arith.addf %1941, %1944 : vector<1x6x6xf32>
    %c115_351 = arith.constant 115 : index
    %1946 = memref.load %arg2[%c115_351] : memref<150xf32, #tpu.memory_space<smem>>
    %1947 = vector.broadcast %1946 : f32 to vector<1x6x6xf32>
    %1948 = arith.mulf %1947, %50 : vector<1x6x6xf32>
    %1949 = arith.addf %1945, %1948 : vector<1x6x6xf32>
    %c116_352 = arith.constant 116 : index
    %1950 = memref.load %arg2[%c116_352] : memref<150xf32, #tpu.memory_space<smem>>
    %1951 = vector.broadcast %1950 : f32 to vector<1x6x6xf32>
    %1952 = arith.mulf %1951, %52 : vector<1x6x6xf32>
    %1953 = arith.addf %1949, %1952 : vector<1x6x6xf32>
    %c117_353 = arith.constant 117 : index
    %1954 = memref.load %arg2[%c117_353] : memref<150xf32, #tpu.memory_space<smem>>
    %1955 = vector.broadcast %1954 : f32 to vector<1x6x6xf32>
    %1956 = arith.mulf %1955, %54 : vector<1x6x6xf32>
    %1957 = arith.addf %1953, %1956 : vector<1x6x6xf32>
    %c118_354 = arith.constant 118 : index
    %1958 = memref.load %arg2[%c118_354] : memref<150xf32, #tpu.memory_space<smem>>
    %1959 = vector.broadcast %1958 : f32 to vector<1x6x6xf32>
    %1960 = arith.mulf %1959, %56 : vector<1x6x6xf32>
    %1961 = arith.addf %1957, %1960 : vector<1x6x6xf32>
    %c119_355 = arith.constant 119 : index
    %1962 = memref.load %arg2[%c119_355] : memref<150xf32, #tpu.memory_space<smem>>
    %1963 = vector.broadcast %1962 : f32 to vector<1x6x6xf32>
    %1964 = arith.mulf %1963, %58 : vector<1x6x6xf32>
    %1965 = arith.addf %1961, %1964 : vector<1x6x6xf32>
    %c120_356 = arith.constant 120 : index
    %1966 = memref.load %arg2[%c120_356] : memref<150xf32, #tpu.memory_space<smem>>
    %1967 = vector.broadcast %1966 : f32 to vector<1x6x6xf32>
    %1968 = arith.mulf %1967, %62 : vector<1x6x6xf32>
    %1969 = arith.addf %1965, %1968 : vector<1x6x6xf32>
    %c121_357 = arith.constant 121 : index
    %1970 = memref.load %arg2[%c121_357] : memref<150xf32, #tpu.memory_space<smem>>
    %1971 = vector.broadcast %1970 : f32 to vector<1x6x6xf32>
    %1972 = arith.mulf %1971, %64 : vector<1x6x6xf32>
    %1973 = arith.addf %1969, %1972 : vector<1x6x6xf32>
    %c122_358 = arith.constant 122 : index
    %1974 = memref.load %arg2[%c122_358] : memref<150xf32, #tpu.memory_space<smem>>
    %1975 = vector.broadcast %1974 : f32 to vector<1x6x6xf32>
    %1976 = arith.mulf %1975, %66 : vector<1x6x6xf32>
    %1977 = arith.addf %1973, %1976 : vector<1x6x6xf32>
    %c123_359 = arith.constant 123 : index
    %1978 = memref.load %arg2[%c123_359] : memref<150xf32, #tpu.memory_space<smem>>
    %1979 = vector.broadcast %1978 : f32 to vector<1x6x6xf32>
    %1980 = arith.mulf %1979, %68 : vector<1x6x6xf32>
    %1981 = arith.addf %1977, %1980 : vector<1x6x6xf32>
    %c124_360 = arith.constant 124 : index
    %1982 = memref.load %arg2[%c124_360] : memref<150xf32, #tpu.memory_space<smem>>
    %1983 = vector.broadcast %1982 : f32 to vector<1x6x6xf32>
    %1984 = arith.mulf %1983, %70 : vector<1x6x6xf32>
    %1985 = arith.addf %1981, %1984 : vector<1x6x6xf32>
    %c100_361 = arith.constant 100 : index
    %1986 = memref.load %arg2[%c100_361] : memref<150xf32, #tpu.memory_space<smem>>
    %1987 = vector.broadcast %1986 : f32 to vector<1x6x6xf32>
    %1988 = arith.mulf %1987, %16 : vector<1x6x6xf32>
    %c101_362 = arith.constant 101 : index
    %1989 = memref.load %arg2[%c101_362] : memref<150xf32, #tpu.memory_space<smem>>
    %1990 = vector.broadcast %1989 : f32 to vector<1x6x6xf32>
    %1991 = arith.mulf %1990, %18 : vector<1x6x6xf32>
    %1992 = arith.addf %1988, %1991 : vector<1x6x6xf32>
    %c102_363 = arith.constant 102 : index
    %1993 = memref.load %arg2[%c102_363] : memref<150xf32, #tpu.memory_space<smem>>
    %1994 = vector.broadcast %1993 : f32 to vector<1x6x6xf32>
    %1995 = arith.mulf %1994, %20 : vector<1x6x6xf32>
    %1996 = arith.addf %1992, %1995 : vector<1x6x6xf32>
    %c103_364 = arith.constant 103 : index
    %1997 = memref.load %arg2[%c103_364] : memref<150xf32, #tpu.memory_space<smem>>
    %1998 = vector.broadcast %1997 : f32 to vector<1x6x6xf32>
    %1999 = arith.mulf %1998, %22 : vector<1x6x6xf32>
    %2000 = arith.addf %1996, %1999 : vector<1x6x6xf32>
    %c104_365 = arith.constant 104 : index
    %2001 = memref.load %arg2[%c104_365] : memref<150xf32, #tpu.memory_space<smem>>
    %2002 = vector.broadcast %2001 : f32 to vector<1x6x6xf32>
    %2003 = arith.mulf %2002, %24 : vector<1x6x6xf32>
    %2004 = arith.addf %2000, %2003 : vector<1x6x6xf32>
    %c105_366 = arith.constant 105 : index
    %2005 = memref.load %arg2[%c105_366] : memref<150xf32, #tpu.memory_space<smem>>
    %2006 = vector.broadcast %2005 : f32 to vector<1x6x6xf32>
    %2007 = arith.mulf %2006, %28 : vector<1x6x6xf32>
    %2008 = arith.addf %2004, %2007 : vector<1x6x6xf32>
    %c106_367 = arith.constant 106 : index
    %2009 = memref.load %arg2[%c106_367] : memref<150xf32, #tpu.memory_space<smem>>
    %2010 = vector.broadcast %2009 : f32 to vector<1x6x6xf32>
    %2011 = arith.mulf %2010, %30 : vector<1x6x6xf32>
    %2012 = arith.addf %2008, %2011 : vector<1x6x6xf32>
    %c107_368 = arith.constant 107 : index
    %2013 = memref.load %arg2[%c107_368] : memref<150xf32, #tpu.memory_space<smem>>
    %2014 = vector.broadcast %2013 : f32 to vector<1x6x6xf32>
    %2015 = arith.mulf %2014, %32 : vector<1x6x6xf32>
    %2016 = arith.addf %2012, %2015 : vector<1x6x6xf32>
    %c108_369 = arith.constant 108 : index
    %2017 = memref.load %arg2[%c108_369] : memref<150xf32, #tpu.memory_space<smem>>
    %2018 = vector.broadcast %2017 : f32 to vector<1x6x6xf32>
    %2019 = arith.mulf %2018, %34 : vector<1x6x6xf32>
    %2020 = arith.addf %2016, %2019 : vector<1x6x6xf32>
    %c109_370 = arith.constant 109 : index
    %2021 = memref.load %arg2[%c109_370] : memref<150xf32, #tpu.memory_space<smem>>
    %2022 = vector.broadcast %2021 : f32 to vector<1x6x6xf32>
    %2023 = arith.mulf %2022, %36 : vector<1x6x6xf32>
    %2024 = arith.addf %2020, %2023 : vector<1x6x6xf32>
    %c110_371 = arith.constant 110 : index
    %2025 = memref.load %arg2[%c110_371] : memref<150xf32, #tpu.memory_space<smem>>
    %2026 = vector.broadcast %2025 : f32 to vector<1x6x6xf32>
    %2027 = arith.mulf %2026, %40 : vector<1x6x6xf32>
    %2028 = arith.addf %2024, %2027 : vector<1x6x6xf32>
    %c111_372 = arith.constant 111 : index
    %2029 = memref.load %arg2[%c111_372] : memref<150xf32, #tpu.memory_space<smem>>
    %2030 = vector.broadcast %2029 : f32 to vector<1x6x6xf32>
    %2031 = arith.mulf %2030, %42 : vector<1x6x6xf32>
    %2032 = arith.addf %2028, %2031 : vector<1x6x6xf32>
    %c112_373 = arith.constant 112 : index
    %2033 = memref.load %arg2[%c112_373] : memref<150xf32, #tpu.memory_space<smem>>
    %2034 = vector.broadcast %2033 : f32 to vector<1x6x6xf32>
    %2035 = arith.mulf %2034, %44 : vector<1x6x6xf32>
    %2036 = arith.addf %2032, %2035 : vector<1x6x6xf32>
    %c113_374 = arith.constant 113 : index
    %2037 = memref.load %arg2[%c113_374] : memref<150xf32, #tpu.memory_space<smem>>
    %2038 = vector.broadcast %2037 : f32 to vector<1x6x6xf32>
    %2039 = arith.mulf %2038, %46 : vector<1x6x6xf32>
    %2040 = arith.addf %2036, %2039 : vector<1x6x6xf32>
    %c114_375 = arith.constant 114 : index
    %2041 = memref.load %arg2[%c114_375] : memref<150xf32, #tpu.memory_space<smem>>
    %2042 = vector.broadcast %2041 : f32 to vector<1x6x6xf32>
    %2043 = arith.mulf %2042, %48 : vector<1x6x6xf32>
    %2044 = arith.addf %2040, %2043 : vector<1x6x6xf32>
    %c115_376 = arith.constant 115 : index
    %2045 = memref.load %arg2[%c115_376] : memref<150xf32, #tpu.memory_space<smem>>
    %2046 = vector.broadcast %2045 : f32 to vector<1x6x6xf32>
    %2047 = arith.mulf %2046, %52 : vector<1x6x6xf32>
    %2048 = arith.addf %2044, %2047 : vector<1x6x6xf32>
    %c116_377 = arith.constant 116 : index
    %2049 = memref.load %arg2[%c116_377] : memref<150xf32, #tpu.memory_space<smem>>
    %2050 = vector.broadcast %2049 : f32 to vector<1x6x6xf32>
    %2051 = arith.mulf %2050, %54 : vector<1x6x6xf32>
    %2052 = arith.addf %2048, %2051 : vector<1x6x6xf32>
    %c117_378 = arith.constant 117 : index
    %2053 = memref.load %arg2[%c117_378] : memref<150xf32, #tpu.memory_space<smem>>
    %2054 = vector.broadcast %2053 : f32 to vector<1x6x6xf32>
    %2055 = arith.mulf %2054, %56 : vector<1x6x6xf32>
    %2056 = arith.addf %2052, %2055 : vector<1x6x6xf32>
    %c118_379 = arith.constant 118 : index
    %2057 = memref.load %arg2[%c118_379] : memref<150xf32, #tpu.memory_space<smem>>
    %2058 = vector.broadcast %2057 : f32 to vector<1x6x6xf32>
    %2059 = arith.mulf %2058, %58 : vector<1x6x6xf32>
    %2060 = arith.addf %2056, %2059 : vector<1x6x6xf32>
    %c119_380 = arith.constant 119 : index
    %2061 = memref.load %arg2[%c119_380] : memref<150xf32, #tpu.memory_space<smem>>
    %2062 = vector.broadcast %2061 : f32 to vector<1x6x6xf32>
    %2063 = arith.mulf %2062, %60 : vector<1x6x6xf32>
    %2064 = arith.addf %2060, %2063 : vector<1x6x6xf32>
    %c120_381 = arith.constant 120 : index
    %2065 = memref.load %arg2[%c120_381] : memref<150xf32, #tpu.memory_space<smem>>
    %2066 = vector.broadcast %2065 : f32 to vector<1x6x6xf32>
    %2067 = arith.mulf %2066, %64 : vector<1x6x6xf32>
    %2068 = arith.addf %2064, %2067 : vector<1x6x6xf32>
    %c121_382 = arith.constant 121 : index
    %2069 = memref.load %arg2[%c121_382] : memref<150xf32, #tpu.memory_space<smem>>
    %2070 = vector.broadcast %2069 : f32 to vector<1x6x6xf32>
    %2071 = arith.mulf %2070, %66 : vector<1x6x6xf32>
    %2072 = arith.addf %2068, %2071 : vector<1x6x6xf32>
    %c122_383 = arith.constant 122 : index
    %2073 = memref.load %arg2[%c122_383] : memref<150xf32, #tpu.memory_space<smem>>
    %2074 = vector.broadcast %2073 : f32 to vector<1x6x6xf32>
    %2075 = arith.mulf %2074, %68 : vector<1x6x6xf32>
    %2076 = arith.addf %2072, %2075 : vector<1x6x6xf32>
    %c123_384 = arith.constant 123 : index
    %2077 = memref.load %arg2[%c123_384] : memref<150xf32, #tpu.memory_space<smem>>
    %2078 = vector.broadcast %2077 : f32 to vector<1x6x6xf32>
    %2079 = arith.mulf %2078, %70 : vector<1x6x6xf32>
    %2080 = arith.addf %2076, %2079 : vector<1x6x6xf32>
    %c124_385 = arith.constant 124 : index
    %2081 = memref.load %arg2[%c124_385] : memref<150xf32, #tpu.memory_space<smem>>
    %2082 = vector.broadcast %2081 : f32 to vector<1x6x6xf32>
    %2083 = arith.mulf %2082, %72 : vector<1x6x6xf32>
    %2084 = arith.addf %2080, %2083 : vector<1x6x6xf32>
    %2085 = arith.maximumf %1787, %1886 : vector<1x6x6xf32>
    %2086 = arith.maximumf %1985, %2084 : vector<1x6x6xf32>
    %2087 = arith.maximumf %2085, %2086 : vector<1x6x6xf32>
    %c4_386 = arith.constant 4 : index
    %2088 = memref.load %arg3[%c4_386] : memref<6xf32, #tpu.memory_space<smem>>
    %2089 = vector.broadcast %2088 : f32 to vector<1x6x6xf32>
    %2090 = arith.addf %2087, %2089 : vector<1x6x6xf32>
    %cst_387 = arith.constant 0.000000e+00 : f32
    %2091 = vector.broadcast %cst_387 : f32 to vector<1x6x6xf32>
    %2092 = arith.maximumf %2090, %2091 : vector<1x6x6xf32>
    %c125 = arith.constant 125 : index
    %2093 = memref.load %arg2[%c125] : memref<150xf32, #tpu.memory_space<smem>>
    %2094 = vector.broadcast %2093 : f32 to vector<1x6x6xf32>
    %2095 = arith.mulf %2094, %2 : vector<1x6x6xf32>
    %c126 = arith.constant 126 : index
    %2096 = memref.load %arg2[%c126] : memref<150xf32, #tpu.memory_space<smem>>
    %2097 = vector.broadcast %2096 : f32 to vector<1x6x6xf32>
    %2098 = arith.mulf %2097, %4 : vector<1x6x6xf32>
    %2099 = arith.addf %2095, %2098 : vector<1x6x6xf32>
    %c127 = arith.constant 127 : index
    %2100 = memref.load %arg2[%c127] : memref<150xf32, #tpu.memory_space<smem>>
    %2101 = vector.broadcast %2100 : f32 to vector<1x6x6xf32>
    %2102 = arith.mulf %2101, %6 : vector<1x6x6xf32>
    %2103 = arith.addf %2099, %2102 : vector<1x6x6xf32>
    %c128 = arith.constant 128 : index
    %2104 = memref.load %arg2[%c128] : memref<150xf32, #tpu.memory_space<smem>>
    %2105 = vector.broadcast %2104 : f32 to vector<1x6x6xf32>
    %2106 = arith.mulf %2105, %8 : vector<1x6x6xf32>
    %2107 = arith.addf %2103, %2106 : vector<1x6x6xf32>
    %c129 = arith.constant 129 : index
    %2108 = memref.load %arg2[%c129] : memref<150xf32, #tpu.memory_space<smem>>
    %2109 = vector.broadcast %2108 : f32 to vector<1x6x6xf32>
    %2110 = arith.mulf %2109, %10 : vector<1x6x6xf32>
    %2111 = arith.addf %2107, %2110 : vector<1x6x6xf32>
    %c130 = arith.constant 130 : index
    %2112 = memref.load %arg2[%c130] : memref<150xf32, #tpu.memory_space<smem>>
    %2113 = vector.broadcast %2112 : f32 to vector<1x6x6xf32>
    %2114 = arith.mulf %2113, %14 : vector<1x6x6xf32>
    %2115 = arith.addf %2111, %2114 : vector<1x6x6xf32>
    %c131 = arith.constant 131 : index
    %2116 = memref.load %arg2[%c131] : memref<150xf32, #tpu.memory_space<smem>>
    %2117 = vector.broadcast %2116 : f32 to vector<1x6x6xf32>
    %2118 = arith.mulf %2117, %16 : vector<1x6x6xf32>
    %2119 = arith.addf %2115, %2118 : vector<1x6x6xf32>
    %c132 = arith.constant 132 : index
    %2120 = memref.load %arg2[%c132] : memref<150xf32, #tpu.memory_space<smem>>
    %2121 = vector.broadcast %2120 : f32 to vector<1x6x6xf32>
    %2122 = arith.mulf %2121, %18 : vector<1x6x6xf32>
    %2123 = arith.addf %2119, %2122 : vector<1x6x6xf32>
    %c133 = arith.constant 133 : index
    %2124 = memref.load %arg2[%c133] : memref<150xf32, #tpu.memory_space<smem>>
    %2125 = vector.broadcast %2124 : f32 to vector<1x6x6xf32>
    %2126 = arith.mulf %2125, %20 : vector<1x6x6xf32>
    %2127 = arith.addf %2123, %2126 : vector<1x6x6xf32>
    %c134 = arith.constant 134 : index
    %2128 = memref.load %arg2[%c134] : memref<150xf32, #tpu.memory_space<smem>>
    %2129 = vector.broadcast %2128 : f32 to vector<1x6x6xf32>
    %2130 = arith.mulf %2129, %22 : vector<1x6x6xf32>
    %2131 = arith.addf %2127, %2130 : vector<1x6x6xf32>
    %c135 = arith.constant 135 : index
    %2132 = memref.load %arg2[%c135] : memref<150xf32, #tpu.memory_space<smem>>
    %2133 = vector.broadcast %2132 : f32 to vector<1x6x6xf32>
    %2134 = arith.mulf %2133, %26 : vector<1x6x6xf32>
    %2135 = arith.addf %2131, %2134 : vector<1x6x6xf32>
    %c136 = arith.constant 136 : index
    %2136 = memref.load %arg2[%c136] : memref<150xf32, #tpu.memory_space<smem>>
    %2137 = vector.broadcast %2136 : f32 to vector<1x6x6xf32>
    %2138 = arith.mulf %2137, %28 : vector<1x6x6xf32>
    %2139 = arith.addf %2135, %2138 : vector<1x6x6xf32>
    %c137 = arith.constant 137 : index
    %2140 = memref.load %arg2[%c137] : memref<150xf32, #tpu.memory_space<smem>>
    %2141 = vector.broadcast %2140 : f32 to vector<1x6x6xf32>
    %2142 = arith.mulf %2141, %30 : vector<1x6x6xf32>
    %2143 = arith.addf %2139, %2142 : vector<1x6x6xf32>
    %c138 = arith.constant 138 : index
    %2144 = memref.load %arg2[%c138] : memref<150xf32, #tpu.memory_space<smem>>
    %2145 = vector.broadcast %2144 : f32 to vector<1x6x6xf32>
    %2146 = arith.mulf %2145, %32 : vector<1x6x6xf32>
    %2147 = arith.addf %2143, %2146 : vector<1x6x6xf32>
    %c139 = arith.constant 139 : index
    %2148 = memref.load %arg2[%c139] : memref<150xf32, #tpu.memory_space<smem>>
    %2149 = vector.broadcast %2148 : f32 to vector<1x6x6xf32>
    %2150 = arith.mulf %2149, %34 : vector<1x6x6xf32>
    %2151 = arith.addf %2147, %2150 : vector<1x6x6xf32>
    %c140 = arith.constant 140 : index
    %2152 = memref.load %arg2[%c140] : memref<150xf32, #tpu.memory_space<smem>>
    %2153 = vector.broadcast %2152 : f32 to vector<1x6x6xf32>
    %2154 = arith.mulf %2153, %38 : vector<1x6x6xf32>
    %2155 = arith.addf %2151, %2154 : vector<1x6x6xf32>
    %c141 = arith.constant 141 : index
    %2156 = memref.load %arg2[%c141] : memref<150xf32, #tpu.memory_space<smem>>
    %2157 = vector.broadcast %2156 : f32 to vector<1x6x6xf32>
    %2158 = arith.mulf %2157, %40 : vector<1x6x6xf32>
    %2159 = arith.addf %2155, %2158 : vector<1x6x6xf32>
    %c142 = arith.constant 142 : index
    %2160 = memref.load %arg2[%c142] : memref<150xf32, #tpu.memory_space<smem>>
    %2161 = vector.broadcast %2160 : f32 to vector<1x6x6xf32>
    %2162 = arith.mulf %2161, %42 : vector<1x6x6xf32>
    %2163 = arith.addf %2159, %2162 : vector<1x6x6xf32>
    %c143 = arith.constant 143 : index
    %2164 = memref.load %arg2[%c143] : memref<150xf32, #tpu.memory_space<smem>>
    %2165 = vector.broadcast %2164 : f32 to vector<1x6x6xf32>
    %2166 = arith.mulf %2165, %44 : vector<1x6x6xf32>
    %2167 = arith.addf %2163, %2166 : vector<1x6x6xf32>
    %c144 = arith.constant 144 : index
    %2168 = memref.load %arg2[%c144] : memref<150xf32, #tpu.memory_space<smem>>
    %2169 = vector.broadcast %2168 : f32 to vector<1x6x6xf32>
    %2170 = arith.mulf %2169, %46 : vector<1x6x6xf32>
    %2171 = arith.addf %2167, %2170 : vector<1x6x6xf32>
    %c145 = arith.constant 145 : index
    %2172 = memref.load %arg2[%c145] : memref<150xf32, #tpu.memory_space<smem>>
    %2173 = vector.broadcast %2172 : f32 to vector<1x6x6xf32>
    %2174 = arith.mulf %2173, %50 : vector<1x6x6xf32>
    %2175 = arith.addf %2171, %2174 : vector<1x6x6xf32>
    %c146 = arith.constant 146 : index
    %2176 = memref.load %arg2[%c146] : memref<150xf32, #tpu.memory_space<smem>>
    %2177 = vector.broadcast %2176 : f32 to vector<1x6x6xf32>
    %2178 = arith.mulf %2177, %52 : vector<1x6x6xf32>
    %2179 = arith.addf %2175, %2178 : vector<1x6x6xf32>
    %c147 = arith.constant 147 : index
    %2180 = memref.load %arg2[%c147] : memref<150xf32, #tpu.memory_space<smem>>
    %2181 = vector.broadcast %2180 : f32 to vector<1x6x6xf32>
    %2182 = arith.mulf %2181, %54 : vector<1x6x6xf32>
    %2183 = arith.addf %2179, %2182 : vector<1x6x6xf32>
    %c148 = arith.constant 148 : index
    %2184 = memref.load %arg2[%c148] : memref<150xf32, #tpu.memory_space<smem>>
    %2185 = vector.broadcast %2184 : f32 to vector<1x6x6xf32>
    %2186 = arith.mulf %2185, %56 : vector<1x6x6xf32>
    %2187 = arith.addf %2183, %2186 : vector<1x6x6xf32>
    %c149 = arith.constant 149 : index
    %2188 = memref.load %arg2[%c149] : memref<150xf32, #tpu.memory_space<smem>>
    %2189 = vector.broadcast %2188 : f32 to vector<1x6x6xf32>
    %2190 = arith.mulf %2189, %58 : vector<1x6x6xf32>
    %2191 = arith.addf %2187, %2190 : vector<1x6x6xf32>
    %c125_388 = arith.constant 125 : index
    %2192 = memref.load %arg2[%c125_388] : memref<150xf32, #tpu.memory_space<smem>>
    %2193 = vector.broadcast %2192 : f32 to vector<1x6x6xf32>
    %2194 = arith.mulf %2193, %4 : vector<1x6x6xf32>
    %c126_389 = arith.constant 126 : index
    %2195 = memref.load %arg2[%c126_389] : memref<150xf32, #tpu.memory_space<smem>>
    %2196 = vector.broadcast %2195 : f32 to vector<1x6x6xf32>
    %2197 = arith.mulf %2196, %6 : vector<1x6x6xf32>
    %2198 = arith.addf %2194, %2197 : vector<1x6x6xf32>
    %c127_390 = arith.constant 127 : index
    %2199 = memref.load %arg2[%c127_390] : memref<150xf32, #tpu.memory_space<smem>>
    %2200 = vector.broadcast %2199 : f32 to vector<1x6x6xf32>
    %2201 = arith.mulf %2200, %8 : vector<1x6x6xf32>
    %2202 = arith.addf %2198, %2201 : vector<1x6x6xf32>
    %c128_391 = arith.constant 128 : index
    %2203 = memref.load %arg2[%c128_391] : memref<150xf32, #tpu.memory_space<smem>>
    %2204 = vector.broadcast %2203 : f32 to vector<1x6x6xf32>
    %2205 = arith.mulf %2204, %10 : vector<1x6x6xf32>
    %2206 = arith.addf %2202, %2205 : vector<1x6x6xf32>
    %c129_392 = arith.constant 129 : index
    %2207 = memref.load %arg2[%c129_392] : memref<150xf32, #tpu.memory_space<smem>>
    %2208 = vector.broadcast %2207 : f32 to vector<1x6x6xf32>
    %2209 = arith.mulf %2208, %12 : vector<1x6x6xf32>
    %2210 = arith.addf %2206, %2209 : vector<1x6x6xf32>
    %c130_393 = arith.constant 130 : index
    %2211 = memref.load %arg2[%c130_393] : memref<150xf32, #tpu.memory_space<smem>>
    %2212 = vector.broadcast %2211 : f32 to vector<1x6x6xf32>
    %2213 = arith.mulf %2212, %16 : vector<1x6x6xf32>
    %2214 = arith.addf %2210, %2213 : vector<1x6x6xf32>
    %c131_394 = arith.constant 131 : index
    %2215 = memref.load %arg2[%c131_394] : memref<150xf32, #tpu.memory_space<smem>>
    %2216 = vector.broadcast %2215 : f32 to vector<1x6x6xf32>
    %2217 = arith.mulf %2216, %18 : vector<1x6x6xf32>
    %2218 = arith.addf %2214, %2217 : vector<1x6x6xf32>
    %c132_395 = arith.constant 132 : index
    %2219 = memref.load %arg2[%c132_395] : memref<150xf32, #tpu.memory_space<smem>>
    %2220 = vector.broadcast %2219 : f32 to vector<1x6x6xf32>
    %2221 = arith.mulf %2220, %20 : vector<1x6x6xf32>
    %2222 = arith.addf %2218, %2221 : vector<1x6x6xf32>
    %c133_396 = arith.constant 133 : index
    %2223 = memref.load %arg2[%c133_396] : memref<150xf32, #tpu.memory_space<smem>>
    %2224 = vector.broadcast %2223 : f32 to vector<1x6x6xf32>
    %2225 = arith.mulf %2224, %22 : vector<1x6x6xf32>
    %2226 = arith.addf %2222, %2225 : vector<1x6x6xf32>
    %c134_397 = arith.constant 134 : index
    %2227 = memref.load %arg2[%c134_397] : memref<150xf32, #tpu.memory_space<smem>>
    %2228 = vector.broadcast %2227 : f32 to vector<1x6x6xf32>
    %2229 = arith.mulf %2228, %24 : vector<1x6x6xf32>
    %2230 = arith.addf %2226, %2229 : vector<1x6x6xf32>
    %c135_398 = arith.constant 135 : index
    %2231 = memref.load %arg2[%c135_398] : memref<150xf32, #tpu.memory_space<smem>>
    %2232 = vector.broadcast %2231 : f32 to vector<1x6x6xf32>
    %2233 = arith.mulf %2232, %28 : vector<1x6x6xf32>
    %2234 = arith.addf %2230, %2233 : vector<1x6x6xf32>
    %c136_399 = arith.constant 136 : index
    %2235 = memref.load %arg2[%c136_399] : memref<150xf32, #tpu.memory_space<smem>>
    %2236 = vector.broadcast %2235 : f32 to vector<1x6x6xf32>
    %2237 = arith.mulf %2236, %30 : vector<1x6x6xf32>
    %2238 = arith.addf %2234, %2237 : vector<1x6x6xf32>
    %c137_400 = arith.constant 137 : index
    %2239 = memref.load %arg2[%c137_400] : memref<150xf32, #tpu.memory_space<smem>>
    %2240 = vector.broadcast %2239 : f32 to vector<1x6x6xf32>
    %2241 = arith.mulf %2240, %32 : vector<1x6x6xf32>
    %2242 = arith.addf %2238, %2241 : vector<1x6x6xf32>
    %c138_401 = arith.constant 138 : index
    %2243 = memref.load %arg2[%c138_401] : memref<150xf32, #tpu.memory_space<smem>>
    %2244 = vector.broadcast %2243 : f32 to vector<1x6x6xf32>
    %2245 = arith.mulf %2244, %34 : vector<1x6x6xf32>
    %2246 = arith.addf %2242, %2245 : vector<1x6x6xf32>
    %c139_402 = arith.constant 139 : index
    %2247 = memref.load %arg2[%c139_402] : memref<150xf32, #tpu.memory_space<smem>>
    %2248 = vector.broadcast %2247 : f32 to vector<1x6x6xf32>
    %2249 = arith.mulf %2248, %36 : vector<1x6x6xf32>
    %2250 = arith.addf %2246, %2249 : vector<1x6x6xf32>
    %c140_403 = arith.constant 140 : index
    %2251 = memref.load %arg2[%c140_403] : memref<150xf32, #tpu.memory_space<smem>>
    %2252 = vector.broadcast %2251 : f32 to vector<1x6x6xf32>
    %2253 = arith.mulf %2252, %40 : vector<1x6x6xf32>
    %2254 = arith.addf %2250, %2253 : vector<1x6x6xf32>
    %c141_404 = arith.constant 141 : index
    %2255 = memref.load %arg2[%c141_404] : memref<150xf32, #tpu.memory_space<smem>>
    %2256 = vector.broadcast %2255 : f32 to vector<1x6x6xf32>
    %2257 = arith.mulf %2256, %42 : vector<1x6x6xf32>
    %2258 = arith.addf %2254, %2257 : vector<1x6x6xf32>
    %c142_405 = arith.constant 142 : index
    %2259 = memref.load %arg2[%c142_405] : memref<150xf32, #tpu.memory_space<smem>>
    %2260 = vector.broadcast %2259 : f32 to vector<1x6x6xf32>
    %2261 = arith.mulf %2260, %44 : vector<1x6x6xf32>
    %2262 = arith.addf %2258, %2261 : vector<1x6x6xf32>
    %c143_406 = arith.constant 143 : index
    %2263 = memref.load %arg2[%c143_406] : memref<150xf32, #tpu.memory_space<smem>>
    %2264 = vector.broadcast %2263 : f32 to vector<1x6x6xf32>
    %2265 = arith.mulf %2264, %46 : vector<1x6x6xf32>
    %2266 = arith.addf %2262, %2265 : vector<1x6x6xf32>
    %c144_407 = arith.constant 144 : index
    %2267 = memref.load %arg2[%c144_407] : memref<150xf32, #tpu.memory_space<smem>>
    %2268 = vector.broadcast %2267 : f32 to vector<1x6x6xf32>
    %2269 = arith.mulf %2268, %48 : vector<1x6x6xf32>
    %2270 = arith.addf %2266, %2269 : vector<1x6x6xf32>
    %c145_408 = arith.constant 145 : index
    %2271 = memref.load %arg2[%c145_408] : memref<150xf32, #tpu.memory_space<smem>>
    %2272 = vector.broadcast %2271 : f32 to vector<1x6x6xf32>
    %2273 = arith.mulf %2272, %52 : vector<1x6x6xf32>
    %2274 = arith.addf %2270, %2273 : vector<1x6x6xf32>
    %c146_409 = arith.constant 146 : index
    %2275 = memref.load %arg2[%c146_409] : memref<150xf32, #tpu.memory_space<smem>>
    %2276 = vector.broadcast %2275 : f32 to vector<1x6x6xf32>
    %2277 = arith.mulf %2276, %54 : vector<1x6x6xf32>
    %2278 = arith.addf %2274, %2277 : vector<1x6x6xf32>
    %c147_410 = arith.constant 147 : index
    %2279 = memref.load %arg2[%c147_410] : memref<150xf32, #tpu.memory_space<smem>>
    %2280 = vector.broadcast %2279 : f32 to vector<1x6x6xf32>
    %2281 = arith.mulf %2280, %56 : vector<1x6x6xf32>
    %2282 = arith.addf %2278, %2281 : vector<1x6x6xf32>
    %c148_411 = arith.constant 148 : index
    %2283 = memref.load %arg2[%c148_411] : memref<150xf32, #tpu.memory_space<smem>>
    %2284 = vector.broadcast %2283 : f32 to vector<1x6x6xf32>
    %2285 = arith.mulf %2284, %58 : vector<1x6x6xf32>
    %2286 = arith.addf %2282, %2285 : vector<1x6x6xf32>
    %c149_412 = arith.constant 149 : index
    %2287 = memref.load %arg2[%c149_412] : memref<150xf32, #tpu.memory_space<smem>>
    %2288 = vector.broadcast %2287 : f32 to vector<1x6x6xf32>
    %2289 = arith.mulf %2288, %60 : vector<1x6x6xf32>
    %2290 = arith.addf %2286, %2289 : vector<1x6x6xf32>
    %c125_413 = arith.constant 125 : index
    %2291 = memref.load %arg2[%c125_413] : memref<150xf32, #tpu.memory_space<smem>>
    %2292 = vector.broadcast %2291 : f32 to vector<1x6x6xf32>
    %2293 = arith.mulf %2292, %14 : vector<1x6x6xf32>
    %c126_414 = arith.constant 126 : index
    %2294 = memref.load %arg2[%c126_414] : memref<150xf32, #tpu.memory_space<smem>>
    %2295 = vector.broadcast %2294 : f32 to vector<1x6x6xf32>
    %2296 = arith.mulf %2295, %16 : vector<1x6x6xf32>
    %2297 = arith.addf %2293, %2296 : vector<1x6x6xf32>
    %c127_415 = arith.constant 127 : index
    %2298 = memref.load %arg2[%c127_415] : memref<150xf32, #tpu.memory_space<smem>>
    %2299 = vector.broadcast %2298 : f32 to vector<1x6x6xf32>
    %2300 = arith.mulf %2299, %18 : vector<1x6x6xf32>
    %2301 = arith.addf %2297, %2300 : vector<1x6x6xf32>
    %c128_416 = arith.constant 128 : index
    %2302 = memref.load %arg2[%c128_416] : memref<150xf32, #tpu.memory_space<smem>>
    %2303 = vector.broadcast %2302 : f32 to vector<1x6x6xf32>
    %2304 = arith.mulf %2303, %20 : vector<1x6x6xf32>
    %2305 = arith.addf %2301, %2304 : vector<1x6x6xf32>
    %c129_417 = arith.constant 129 : index
    %2306 = memref.load %arg2[%c129_417] : memref<150xf32, #tpu.memory_space<smem>>
    %2307 = vector.broadcast %2306 : f32 to vector<1x6x6xf32>
    %2308 = arith.mulf %2307, %22 : vector<1x6x6xf32>
    %2309 = arith.addf %2305, %2308 : vector<1x6x6xf32>
    %c130_418 = arith.constant 130 : index
    %2310 = memref.load %arg2[%c130_418] : memref<150xf32, #tpu.memory_space<smem>>
    %2311 = vector.broadcast %2310 : f32 to vector<1x6x6xf32>
    %2312 = arith.mulf %2311, %26 : vector<1x6x6xf32>
    %2313 = arith.addf %2309, %2312 : vector<1x6x6xf32>
    %c131_419 = arith.constant 131 : index
    %2314 = memref.load %arg2[%c131_419] : memref<150xf32, #tpu.memory_space<smem>>
    %2315 = vector.broadcast %2314 : f32 to vector<1x6x6xf32>
    %2316 = arith.mulf %2315, %28 : vector<1x6x6xf32>
    %2317 = arith.addf %2313, %2316 : vector<1x6x6xf32>
    %c132_420 = arith.constant 132 : index
    %2318 = memref.load %arg2[%c132_420] : memref<150xf32, #tpu.memory_space<smem>>
    %2319 = vector.broadcast %2318 : f32 to vector<1x6x6xf32>
    %2320 = arith.mulf %2319, %30 : vector<1x6x6xf32>
    %2321 = arith.addf %2317, %2320 : vector<1x6x6xf32>
    %c133_421 = arith.constant 133 : index
    %2322 = memref.load %arg2[%c133_421] : memref<150xf32, #tpu.memory_space<smem>>
    %2323 = vector.broadcast %2322 : f32 to vector<1x6x6xf32>
    %2324 = arith.mulf %2323, %32 : vector<1x6x6xf32>
    %2325 = arith.addf %2321, %2324 : vector<1x6x6xf32>
    %c134_422 = arith.constant 134 : index
    %2326 = memref.load %arg2[%c134_422] : memref<150xf32, #tpu.memory_space<smem>>
    %2327 = vector.broadcast %2326 : f32 to vector<1x6x6xf32>
    %2328 = arith.mulf %2327, %34 : vector<1x6x6xf32>
    %2329 = arith.addf %2325, %2328 : vector<1x6x6xf32>
    %c135_423 = arith.constant 135 : index
    %2330 = memref.load %arg2[%c135_423] : memref<150xf32, #tpu.memory_space<smem>>
    %2331 = vector.broadcast %2330 : f32 to vector<1x6x6xf32>
    %2332 = arith.mulf %2331, %38 : vector<1x6x6xf32>
    %2333 = arith.addf %2329, %2332 : vector<1x6x6xf32>
    %c136_424 = arith.constant 136 : index
    %2334 = memref.load %arg2[%c136_424] : memref<150xf32, #tpu.memory_space<smem>>
    %2335 = vector.broadcast %2334 : f32 to vector<1x6x6xf32>
    %2336 = arith.mulf %2335, %40 : vector<1x6x6xf32>
    %2337 = arith.addf %2333, %2336 : vector<1x6x6xf32>
    %c137_425 = arith.constant 137 : index
    %2338 = memref.load %arg2[%c137_425] : memref<150xf32, #tpu.memory_space<smem>>
    %2339 = vector.broadcast %2338 : f32 to vector<1x6x6xf32>
    %2340 = arith.mulf %2339, %42 : vector<1x6x6xf32>
    %2341 = arith.addf %2337, %2340 : vector<1x6x6xf32>
    %c138_426 = arith.constant 138 : index
    %2342 = memref.load %arg2[%c138_426] : memref<150xf32, #tpu.memory_space<smem>>
    %2343 = vector.broadcast %2342 : f32 to vector<1x6x6xf32>
    %2344 = arith.mulf %2343, %44 : vector<1x6x6xf32>
    %2345 = arith.addf %2341, %2344 : vector<1x6x6xf32>
    %c139_427 = arith.constant 139 : index
    %2346 = memref.load %arg2[%c139_427] : memref<150xf32, #tpu.memory_space<smem>>
    %2347 = vector.broadcast %2346 : f32 to vector<1x6x6xf32>
    %2348 = arith.mulf %2347, %46 : vector<1x6x6xf32>
    %2349 = arith.addf %2345, %2348 : vector<1x6x6xf32>
    %c140_428 = arith.constant 140 : index
    %2350 = memref.load %arg2[%c140_428] : memref<150xf32, #tpu.memory_space<smem>>
    %2351 = vector.broadcast %2350 : f32 to vector<1x6x6xf32>
    %2352 = arith.mulf %2351, %50 : vector<1x6x6xf32>
    %2353 = arith.addf %2349, %2352 : vector<1x6x6xf32>
    %c141_429 = arith.constant 141 : index
    %2354 = memref.load %arg2[%c141_429] : memref<150xf32, #tpu.memory_space<smem>>
    %2355 = vector.broadcast %2354 : f32 to vector<1x6x6xf32>
    %2356 = arith.mulf %2355, %52 : vector<1x6x6xf32>
    %2357 = arith.addf %2353, %2356 : vector<1x6x6xf32>
    %c142_430 = arith.constant 142 : index
    %2358 = memref.load %arg2[%c142_430] : memref<150xf32, #tpu.memory_space<smem>>
    %2359 = vector.broadcast %2358 : f32 to vector<1x6x6xf32>
    %2360 = arith.mulf %2359, %54 : vector<1x6x6xf32>
    %2361 = arith.addf %2357, %2360 : vector<1x6x6xf32>
    %c143_431 = arith.constant 143 : index
    %2362 = memref.load %arg2[%c143_431] : memref<150xf32, #tpu.memory_space<smem>>
    %2363 = vector.broadcast %2362 : f32 to vector<1x6x6xf32>
    %2364 = arith.mulf %2363, %56 : vector<1x6x6xf32>
    %2365 = arith.addf %2361, %2364 : vector<1x6x6xf32>
    %c144_432 = arith.constant 144 : index
    %2366 = memref.load %arg2[%c144_432] : memref<150xf32, #tpu.memory_space<smem>>
    %2367 = vector.broadcast %2366 : f32 to vector<1x6x6xf32>
    %2368 = arith.mulf %2367, %58 : vector<1x6x6xf32>
    %2369 = arith.addf %2365, %2368 : vector<1x6x6xf32>
    %c145_433 = arith.constant 145 : index
    %2370 = memref.load %arg2[%c145_433] : memref<150xf32, #tpu.memory_space<smem>>
    %2371 = vector.broadcast %2370 : f32 to vector<1x6x6xf32>
    %2372 = arith.mulf %2371, %62 : vector<1x6x6xf32>
    %2373 = arith.addf %2369, %2372 : vector<1x6x6xf32>
    %c146_434 = arith.constant 146 : index
    %2374 = memref.load %arg2[%c146_434] : memref<150xf32, #tpu.memory_space<smem>>
    %2375 = vector.broadcast %2374 : f32 to vector<1x6x6xf32>
    %2376 = arith.mulf %2375, %64 : vector<1x6x6xf32>
    %2377 = arith.addf %2373, %2376 : vector<1x6x6xf32>
    %c147_435 = arith.constant 147 : index
    %2378 = memref.load %arg2[%c147_435] : memref<150xf32, #tpu.memory_space<smem>>
    %2379 = vector.broadcast %2378 : f32 to vector<1x6x6xf32>
    %2380 = arith.mulf %2379, %66 : vector<1x6x6xf32>
    %2381 = arith.addf %2377, %2380 : vector<1x6x6xf32>
    %c148_436 = arith.constant 148 : index
    %2382 = memref.load %arg2[%c148_436] : memref<150xf32, #tpu.memory_space<smem>>
    %2383 = vector.broadcast %2382 : f32 to vector<1x6x6xf32>
    %2384 = arith.mulf %2383, %68 : vector<1x6x6xf32>
    %2385 = arith.addf %2381, %2384 : vector<1x6x6xf32>
    %c149_437 = arith.constant 149 : index
    %2386 = memref.load %arg2[%c149_437] : memref<150xf32, #tpu.memory_space<smem>>
    %2387 = vector.broadcast %2386 : f32 to vector<1x6x6xf32>
    %2388 = arith.mulf %2387, %70 : vector<1x6x6xf32>
    %2389 = arith.addf %2385, %2388 : vector<1x6x6xf32>
    %c125_438 = arith.constant 125 : index
    %2390 = memref.load %arg2[%c125_438] : memref<150xf32, #tpu.memory_space<smem>>
    %2391 = vector.broadcast %2390 : f32 to vector<1x6x6xf32>
    %2392 = arith.mulf %2391, %16 : vector<1x6x6xf32>
    %c126_439 = arith.constant 126 : index
    %2393 = memref.load %arg2[%c126_439] : memref<150xf32, #tpu.memory_space<smem>>
    %2394 = vector.broadcast %2393 : f32 to vector<1x6x6xf32>
    %2395 = arith.mulf %2394, %18 : vector<1x6x6xf32>
    %2396 = arith.addf %2392, %2395 : vector<1x6x6xf32>
    %c127_440 = arith.constant 127 : index
    %2397 = memref.load %arg2[%c127_440] : memref<150xf32, #tpu.memory_space<smem>>
    %2398 = vector.broadcast %2397 : f32 to vector<1x6x6xf32>
    %2399 = arith.mulf %2398, %20 : vector<1x6x6xf32>
    %2400 = arith.addf %2396, %2399 : vector<1x6x6xf32>
    %c128_441 = arith.constant 128 : index
    %2401 = memref.load %arg2[%c128_441] : memref<150xf32, #tpu.memory_space<smem>>
    %2402 = vector.broadcast %2401 : f32 to vector<1x6x6xf32>
    %2403 = arith.mulf %2402, %22 : vector<1x6x6xf32>
    %2404 = arith.addf %2400, %2403 : vector<1x6x6xf32>
    %c129_442 = arith.constant 129 : index
    %2405 = memref.load %arg2[%c129_442] : memref<150xf32, #tpu.memory_space<smem>>
    %2406 = vector.broadcast %2405 : f32 to vector<1x6x6xf32>
    %2407 = arith.mulf %2406, %24 : vector<1x6x6xf32>
    %2408 = arith.addf %2404, %2407 : vector<1x6x6xf32>
    %c130_443 = arith.constant 130 : index
    %2409 = memref.load %arg2[%c130_443] : memref<150xf32, #tpu.memory_space<smem>>
    %2410 = vector.broadcast %2409 : f32 to vector<1x6x6xf32>
    %2411 = arith.mulf %2410, %28 : vector<1x6x6xf32>
    %2412 = arith.addf %2408, %2411 : vector<1x6x6xf32>
    %c131_444 = arith.constant 131 : index
    %2413 = memref.load %arg2[%c131_444] : memref<150xf32, #tpu.memory_space<smem>>
    %2414 = vector.broadcast %2413 : f32 to vector<1x6x6xf32>
    %2415 = arith.mulf %2414, %30 : vector<1x6x6xf32>
    %2416 = arith.addf %2412, %2415 : vector<1x6x6xf32>
    %c132_445 = arith.constant 132 : index
    %2417 = memref.load %arg2[%c132_445] : memref<150xf32, #tpu.memory_space<smem>>
    %2418 = vector.broadcast %2417 : f32 to vector<1x6x6xf32>
    %2419 = arith.mulf %2418, %32 : vector<1x6x6xf32>
    %2420 = arith.addf %2416, %2419 : vector<1x6x6xf32>
    %c133_446 = arith.constant 133 : index
    %2421 = memref.load %arg2[%c133_446] : memref<150xf32, #tpu.memory_space<smem>>
    %2422 = vector.broadcast %2421 : f32 to vector<1x6x6xf32>
    %2423 = arith.mulf %2422, %34 : vector<1x6x6xf32>
    %2424 = arith.addf %2420, %2423 : vector<1x6x6xf32>
    %c134_447 = arith.constant 134 : index
    %2425 = memref.load %arg2[%c134_447] : memref<150xf32, #tpu.memory_space<smem>>
    %2426 = vector.broadcast %2425 : f32 to vector<1x6x6xf32>
    %2427 = arith.mulf %2426, %36 : vector<1x6x6xf32>
    %2428 = arith.addf %2424, %2427 : vector<1x6x6xf32>
    %c135_448 = arith.constant 135 : index
    %2429 = memref.load %arg2[%c135_448] : memref<150xf32, #tpu.memory_space<smem>>
    %2430 = vector.broadcast %2429 : f32 to vector<1x6x6xf32>
    %2431 = arith.mulf %2430, %40 : vector<1x6x6xf32>
    %2432 = arith.addf %2428, %2431 : vector<1x6x6xf32>
    %c136_449 = arith.constant 136 : index
    %2433 = memref.load %arg2[%c136_449] : memref<150xf32, #tpu.memory_space<smem>>
    %2434 = vector.broadcast %2433 : f32 to vector<1x6x6xf32>
    %2435 = arith.mulf %2434, %42 : vector<1x6x6xf32>
    %2436 = arith.addf %2432, %2435 : vector<1x6x6xf32>
    %c137_450 = arith.constant 137 : index
    %2437 = memref.load %arg2[%c137_450] : memref<150xf32, #tpu.memory_space<smem>>
    %2438 = vector.broadcast %2437 : f32 to vector<1x6x6xf32>
    %2439 = arith.mulf %2438, %44 : vector<1x6x6xf32>
    %2440 = arith.addf %2436, %2439 : vector<1x6x6xf32>
    %c138_451 = arith.constant 138 : index
    %2441 = memref.load %arg2[%c138_451] : memref<150xf32, #tpu.memory_space<smem>>
    %2442 = vector.broadcast %2441 : f32 to vector<1x6x6xf32>
    %2443 = arith.mulf %2442, %46 : vector<1x6x6xf32>
    %2444 = arith.addf %2440, %2443 : vector<1x6x6xf32>
    %c139_452 = arith.constant 139 : index
    %2445 = memref.load %arg2[%c139_452] : memref<150xf32, #tpu.memory_space<smem>>
    %2446 = vector.broadcast %2445 : f32 to vector<1x6x6xf32>
    %2447 = arith.mulf %2446, %48 : vector<1x6x6xf32>
    %2448 = arith.addf %2444, %2447 : vector<1x6x6xf32>
    %c140_453 = arith.constant 140 : index
    %2449 = memref.load %arg2[%c140_453] : memref<150xf32, #tpu.memory_space<smem>>
    %2450 = vector.broadcast %2449 : f32 to vector<1x6x6xf32>
    %2451 = arith.mulf %2450, %52 : vector<1x6x6xf32>
    %2452 = arith.addf %2448, %2451 : vector<1x6x6xf32>
    %c141_454 = arith.constant 141 : index
    %2453 = memref.load %arg2[%c141_454] : memref<150xf32, #tpu.memory_space<smem>>
    %2454 = vector.broadcast %2453 : f32 to vector<1x6x6xf32>
    %2455 = arith.mulf %2454, %54 : vector<1x6x6xf32>
    %2456 = arith.addf %2452, %2455 : vector<1x6x6xf32>
    %c142_455 = arith.constant 142 : index
    %2457 = memref.load %arg2[%c142_455] : memref<150xf32, #tpu.memory_space<smem>>
    %2458 = vector.broadcast %2457 : f32 to vector<1x6x6xf32>
    %2459 = arith.mulf %2458, %56 : vector<1x6x6xf32>
    %2460 = arith.addf %2456, %2459 : vector<1x6x6xf32>
    %c143_456 = arith.constant 143 : index
    %2461 = memref.load %arg2[%c143_456] : memref<150xf32, #tpu.memory_space<smem>>
    %2462 = vector.broadcast %2461 : f32 to vector<1x6x6xf32>
    %2463 = arith.mulf %2462, %58 : vector<1x6x6xf32>
    %2464 = arith.addf %2460, %2463 : vector<1x6x6xf32>
    %c144_457 = arith.constant 144 : index
    %2465 = memref.load %arg2[%c144_457] : memref<150xf32, #tpu.memory_space<smem>>
    %2466 = vector.broadcast %2465 : f32 to vector<1x6x6xf32>
    %2467 = arith.mulf %2466, %60 : vector<1x6x6xf32>
    %2468 = arith.addf %2464, %2467 : vector<1x6x6xf32>
    %c145_458 = arith.constant 145 : index
    %2469 = memref.load %arg2[%c145_458] : memref<150xf32, #tpu.memory_space<smem>>
    %2470 = vector.broadcast %2469 : f32 to vector<1x6x6xf32>
    %2471 = arith.mulf %2470, %64 : vector<1x6x6xf32>
    %2472 = arith.addf %2468, %2471 : vector<1x6x6xf32>
    %c146_459 = arith.constant 146 : index
    %2473 = memref.load %arg2[%c146_459] : memref<150xf32, #tpu.memory_space<smem>>
    %2474 = vector.broadcast %2473 : f32 to vector<1x6x6xf32>
    %2475 = arith.mulf %2474, %66 : vector<1x6x6xf32>
    %2476 = arith.addf %2472, %2475 : vector<1x6x6xf32>
    %c147_460 = arith.constant 147 : index
    %2477 = memref.load %arg2[%c147_460] : memref<150xf32, #tpu.memory_space<smem>>
    %2478 = vector.broadcast %2477 : f32 to vector<1x6x6xf32>
    %2479 = arith.mulf %2478, %68 : vector<1x6x6xf32>
    %2480 = arith.addf %2476, %2479 : vector<1x6x6xf32>
    %c148_461 = arith.constant 148 : index
    %2481 = memref.load %arg2[%c148_461] : memref<150xf32, #tpu.memory_space<smem>>
    %2482 = vector.broadcast %2481 : f32 to vector<1x6x6xf32>
    %2483 = arith.mulf %2482, %70 : vector<1x6x6xf32>
    %2484 = arith.addf %2480, %2483 : vector<1x6x6xf32>
    %c149_462 = arith.constant 149 : index
    %2485 = memref.load %arg2[%c149_462] : memref<150xf32, #tpu.memory_space<smem>>
    %2486 = vector.broadcast %2485 : f32 to vector<1x6x6xf32>
    %2487 = arith.mulf %2486, %72 : vector<1x6x6xf32>
    %2488 = arith.addf %2484, %2487 : vector<1x6x6xf32>
    %2489 = arith.maximumf %2191, %2290 : vector<1x6x6xf32>
    %2490 = arith.maximumf %2389, %2488 : vector<1x6x6xf32>
    %2491 = arith.maximumf %2489, %2490 : vector<1x6x6xf32>
    %c5_463 = arith.constant 5 : index
    %2492 = memref.load %arg3[%c5_463] : memref<6xf32, #tpu.memory_space<smem>>
    %2493 = vector.broadcast %2492 : f32 to vector<1x6x6xf32>
    %2494 = arith.addf %2491, %2493 : vector<1x6x6xf32>
    %cst_464 = arith.constant 0.000000e+00 : f32
    %2495 = vector.broadcast %cst_464 : f32 to vector<1x6x6xf32>
    %2496 = arith.maximumf %2494, %2495 : vector<1x6x6xf32>
    %2497 = vector.shape_cast %476 : vector<1x6x6xf32> to vector<1x1x6x6xf32>
    %2498 = vector.shape_cast %880 : vector<1x6x6xf32> to vector<1x1x6x6xf32>
    %2499 = vector.shape_cast %1284 : vector<1x6x6xf32> to vector<1x1x6x6xf32>
    %2500 = vector.shape_cast %1688 : vector<1x6x6xf32> to vector<1x1x6x6xf32>
    %2501 = vector.shape_cast %2092 : vector<1x6x6xf32> to vector<1x1x6x6xf32>
    %2502 = vector.shape_cast %2496 : vector<1x6x6xf32> to vector<1x1x6x6xf32>
    %2503 = tpu.concatenate %2497, %2498, %2499, %2500, %2501, %2502 in 1 : vector<1x1x6x6xf32>, vector<1x1x6x6xf32>, vector<1x1x6x6xf32>, vector<1x1x6x6xf32>, vector<1x1x6x6xf32>, vector<1x1x6x6xf32> -> vector<1x6x6x6xf32>
    %c0_465 = arith.constant 0 : index
    %c0_466 = arith.constant 0 : index
    %c0_467 = arith.constant 0 : index
    %c0_468 = arith.constant 0 : index
    %2504 = vector.load %arg4[%c0_465, %c0_466, %c0_467, %c0_468] : memref<1x6x6x6xf32, #tpu.memory_space<vmem>>, vector<1x6x6x6xf32>
    tpu.vector_store %arg4[%c0_465, %c0_466, %c0_467, %c0_468], %2503 {strides = array<i32>} : memref<1x6x6x6xf32, #tpu.memory_space<vmem>>, vector<1x6x6x6xf32>,
    return
  }
  func.func @transform_0(%arg0: i32) -> (i32, i32, i32, i32) {
    %c0_i32 = arith.constant 0 : i32
    %c0_i32_0 = arith.constant 0 : i32
    %c0_i32_1 = arith.constant 0 : i32
    %c0_i32_2 = arith.constant 0 : i32
    return %c0_i32, %arg0, %c0_i32_0, %c0_i32_1 : i32, i32, i32, i32
  }
  func.func @transform_1(%arg0: i32) -> i32 {
    %c0_i32 = arith.constant 0 : i32
    %c0_i32_0 = arith.constant 0 : i32
    return %c0_i32 : i32
  }
  func.func @transform_2(%arg0: i32) -> i32 {
    %c0_i32 = arith.constant 0 : i32
    %c0_i32_0 = arith.constant 0 : i32
    return %c0_i32 : i32
  }
  func.func @transform_3(%arg0: i32) -> (i32, i32, i32, i32) {
    %c0_i32 = arith.constant 0 : i32
    %c0_i32_0 = arith.constant 0 : i32
    %c0_i32_1 = arith.constant 0 : i32
    %c0_i32_2 = arith.constant 0 : i32
    return %arg0, %c0_i32, %c0_i32_0, %c0_i32_1 : i32, i32, i32, i32
  }
}

</mosaic_0001>

<llo_original>
// kernel: tpu_custom_call.1
$region0: #{tpu_custom_call.1}
  #allocation0 [shape = 'u32[]', space=smem, size = 0x4, offset = 0x4, fixed_abs, tag = 'smem constant byte address 0x4 - core index']
  #allocation1 [shape = 'u32[144,128]{1,0:T(1,128)}', space=vmem, size = 0x12000, scoped, tag = 'internal scratch']
  %s0 = inlined_call_operand.hbm [shape: f32[4,2,8,8], index: 0, kind: input, shape index: {}]
  %s1 = inlined_call_operand.vmem [shape: f32[150], index: 1, kind: input, shape index: {}]
  %s2 = inlined_call_operand.vmem [shape: f32[6], index: 2, kind: input, shape index: {}]
  %s3 = inlined_call_operand.vmem [shape: f32[2,6,6,6], index: 3, kind: output, shape index: {}]
  %s4 = sld [smem:[#allocation0]]
  $region57: #{tpu_custom_call.1} parent=0
    _
  %s6 = ssub.s32 1, %s4
  %s7 = scalar_select 0, %s6, %s4
  $region1: #{tpu_custom_call.1} parent=0
    #allocation2 [shape = 'u8[32768]{0}', space=vmem, size = 0x8000, scoped, tag = 'input window, operand 0']
    #allocation3 [shape = 's32[2]{0}', space=sflag, size = 0x8, scoped, tag = 'scoped memory for tpu_custom_call.1']
    #allocation4 [shape = 's32[2]{0}', space=sflag, size = 0x8, scoped, tag = 'scoped memory for tpu_custom_call.1']
    #allocation5 [shape = 'u8[1024]{0}', space=smem, size = 0x400, scoped, tag = 'input window, operand 1, single buffered']
    #allocation6 [shape = 'u8[512]{0}', space=smem, size = 0x200, scoped, tag = 'input window, operand 2, single buffered']
    #allocation7 [shape = 's32[1]{0}', space=sflag, size = 0x4, scoped, tag = 'scoped memory for tpu_custom_call.1']
    %8 = vsyncpa [#allocation3], 0
    %s9 = scalar_lea.sflag [#allocation3], 1
    %10 = vsyncpa %s9, 0
    %11 = vsyncpa [#allocation4], 0
    %12 = vsyncpa [#allocation7], 0
    loop: start=0, step=1, limit=4
    $region2: #{tpu_custom_call.1} parent=1 // loop_pre_header
      _
    $region3: #{tpu_custom_call.1} parent=1 // loop_header
      %s14 = sphi 0, %s18
      %p15 = scmp.ge.s32.totalorder %s14, 4
      %s24 = sphi 0, %s26
      %s27 = sphi 0, %s24
      %s28 = sphi 0, %s27
      %s44 = sphi 0, %s28
      %s48 = sphi 0, %s48
      %s50 = sphi 0, %s48
      %s51 = sphi 0, %s50
      %s65 = sphi 0, %s51
      %s69 = sphi 0, %s69
      %s71 = sphi 0, %s69
      %s72 = sphi 0, %s71
      %s86 = sphi 0, %s72
      %s92 = sphi 0, %s94
      %s95 = sphi 0, %s92
      %s96 = sphi 0, %s95
      %s112 = sphi 0, %s96
    $region4: #{tpu_custom_call.1} parent=1 // loop_header_branch
      %17 = sbr.rel (%p15) target = $region8
    $region5: #{tpu_custom_call.1} parent=1 // loop_body
      %s19 = ssub.s32 %s14, 1
      %s20 = ssub.s32 %s14, 2
      %s21 = sadd.s32 %s14, 1
      %s22 = ssub.s32 %s14, %s21
      %p23 = scmp.eq.s32.totalorder %s22, 0
      %s25 = sadd.s32 %s24, 1
      %s26 = scalar_select %p23, %s24, %s25
      %p29 = pneg %p23
      %p30 = scmp.eq.s32.totalorder %s14, 1
      %p31 = por %p29, %p30
      %p32 = scmp.ne.s32.totalorder %s24, %s27
      %p33 = scmp.eq.s32.totalorder %s14, 0
      %p34 = por %p32, %p33
      %p35 = scmp.ne.s32.totalorder %s24, %s27
      %p36 = scmp.eq.s32.totalorder %s19, 1
      %p37 = por %p35, %p36
      %p38 = scmp.ne.s32.totalorder %s27, %s28
      %p39 = scmp.eq.s32.totalorder %s19, 0
      %p40 = por %p38, %p39
      %p41 = scmp.ne.s32.totalorder %s27, %s28
      %p42 = scmp.eq.s32.totalorder %s20, 1
      %p43 = por %p41, %p42
      %p45 = scmp.ne.s32.totalorder %s28, %s44
      %p46 = scmp.eq.s32.totalorder %s20, 0
      %p47 = por %p45, %p46
      %s49 = sadd.s32 %s48, 1
      %p52 = scmp.eq.s32.totalorder %s14, 1
      %p53 = scmp.ne.s32.totalorder %s48, %s50
      %p54 = scmp.eq.s32.totalorder %s14, 0
      %p55 = por %p53, %p54
      %p56 = scmp.ne.s32.totalorder %s48, %s50
      %p57 = scmp.eq.s32.totalorder %s19, 1
      %p58 = por %p56, %p57
      %p59 = scmp.ne.s32.totalorder %s50, %s51
      %p60 = scmp.eq.s32.totalorder %s19, 0
      %p61 = por %p59, %p60
      %p62 = scmp.ne.s32.totalorder %s50, %s51
      %p63 = scmp.eq.s32.totalorder %s20, 1
      %p64 = por %p62, %p63
      %p66 = scmp.ne.s32.totalorder %s51, %s65
      %p67 = scmp.eq.s32.totalorder %s20, 0
      %p68 = por %p66, %p67
      %s70 = sadd.s32 %s69, 1
      %p73 = scmp.eq.s32.totalorder %s14, 1
      %p74 = scmp.ne.s32.totalorder %s69, %s71
      %p75 = scmp.eq.s32.totalorder %s14, 0
      %p76 = por %p74, %p75
      %p77 = scmp.ne.s32.totalorder %s69, %s71
      %p78 = scmp.eq.s32.totalorder %s19, 1
      %p79 = por %p77, %p78
      %p80 = scmp.ne.s32.totalorder %s71, %s72
      %p81 = scmp.eq.s32.totalorder %s19, 0
      %p82 = por %p80, %p81
      %p83 = scmp.ne.s32.totalorder %s71, %s72
      %p84 = scmp.eq.s32.totalorder %s20, 1
      %p85 = por %p83, %p84
      %p87 = scmp.ne.s32.totalorder %s72, %s86
      %p88 = scmp.eq.s32.totalorder %s20, 0
      %p89 = por %p87, %p88
      %s90 = ssub.s32 %s14, %s21
      %p91 = scmp.eq.s32.totalorder %s90, 0
      %s93 = sadd.s32 %s92, 1
      %s94 = scalar_select %p91, %s92, %s93
      %p97 = pneg %p91
      %p98 = scmp.eq.s32.totalorder %s14, 1
      %p99 = por %p97, %p98
      %p100 = scmp.ne.s32.totalorder %s92, %s95
      %p101 = scmp.eq.s32.totalorder %s14, 0
      %p102 = por %p100, %p101
      %p103 = scmp.ne.s32.totalorder %s92, %s95
      %p104 = scmp.eq.s32.totalorder %s19, 1
      %p105 = por %p103, %p104
      %p106 = scmp.ne.s32.totalorder %s95, %s96
      %p107 = scmp.eq.s32.totalorder %s19, 0
      %p108 = por %p106, %p107
      %p109 = scmp.ne.s32.totalorder %s95, %s96
      %p110 = scmp.eq.s32.totalorder %s20, 1
      %p111 = por %p109, %p110
      %p113 = scmp.ne.s32.totalorder %s96, %s112
      %p114 = scmp.eq.s32.totalorder %s20, 0
      %p115 = por %p113, %p114
      %p116 = scmp.le.s32.totalorder 1, %s14
      %p117 = scmp.lt.s32.totalorder %s14, 3
      %p118 = pnand %p116, %p117
      %p119 = pneg %p118
      // Predicated region
      $region9: #{tpu_custom_call.1} parent=5 // pred_check
        _
      $region10: #{tpu_custom_call.1} parent=5 // pred_check_branch
        %121 = sbr.rel (%p118) target = $region12
      $region11: #{tpu_custom_call.1} parent=5 // pred_region
        %s122 = ssub.s32 %s14, 1
        // Predicated region
        $region13: #{tpu_custom_call.1} parent=11 // pred_check
          %p123 = pneg %p61
        $region14: #{tpu_custom_call.1} parent=11 // pred_check_branch
          %125 = sbr.rel (%p123) target = $region16
        $region15: #{tpu_custom_call.1} parent=11 // pred_region
          %s127 = ssub.s32 32, 32
          %128 = vsyncadd [#allocation4], %s127
          %s130 = sshll.u32 %s1, 4
          %s131 = int_to_ptr.vmem [resolvable:$true] %s130
          %133 = dma.vmem_to_smem %s131, 32, [#allocation5], [#allocation4]
        $region16: #{tpu_custom_call.1} parent=11 // pred_fallthru
          _
        // Predicated region
        $region17: #{tpu_custom_call.1} parent=11 // pred_check
          %p134 = pneg %p82
        $region18: #{tpu_custom_call.1} parent=11 // pred_check_branch
          %136 = sbr.rel (%p134) target = $region20
        $region19: #{tpu_custom_call.1} parent=11 // pred_region
          %s138 = ssub.s32 16, 16
          %139 = vsyncadd [#allocation7], %s138
          %s141 = sshll.u32 %s2, 4
          %s142 = int_to_ptr.vmem [resolvable:$true] %s141
          %144 = dma.vmem_to_smem %s142, 16, [#allocation6], [#allocation7]
        $region20: #{tpu_custom_call.1} parent=11 // pred_fallthru
          _
      $region12: #{tpu_custom_call.1} parent=5 // pred_fallthru
        _
      %p145 = scmp.lt.s32.totalorder %s14, 2
      // Predicated region
      $region21: #{tpu_custom_call.1} parent=5 // pred_check
        %p146 = pneg %p145
      $region22: #{tpu_custom_call.1} parent=5 // pred_check_branch
        %148 = sbr.rel (%p146) target = $region24
      $region23: #{tpu_custom_call.1} parent=5 // pred_region
        // Predicated region
        $region25: #{tpu_custom_call.1} parent=23 // pred_check
          %p149 = pneg %p34
        $region26: #{tpu_custom_call.1} parent=23 // pred_check_branch
          %151 = sbr.rel (%p149) target = $region28
        $region27: #{tpu_custom_call.1} parent=23 // pred_region
          %s152 = sand.u32 %s24, 1
          %s153 = scalar_lea.sflag [#allocation3], %s152
          %s154 = sand.u32 %s24, 1
          %s155 = smul.addr %s154, 32
          %s156 = scalar_lea.vmem [#allocation2], %s155
          %s158 = ssub.s32 512, 512
          %159 = vsyncadd %s153, %s158
          %s160 = smul.addr %s14, 128
          %s161 = scalar_lea.hbm %s0, %s160
          %s162 = sshll.u32 %s156, 4
          %s163 = int_to_ptr.vmem [resolvable:$true] %s162
          %168 = dma.hbm_to_vmem [thread:$0]  %s161, 512, %s163, %s153, 256, 128, 8
        $region28: #{tpu_custom_call.1} parent=23 // pred_fallthru
          _
      $region24: #{tpu_custom_call.1} parent=5 // pred_fallthru
        _
      %p169 = scmp.le.s32.totalorder 1, %s14
      %p170 = scmp.lt.s32.totalorder %s14, 3
      %p171 = pnand %p169, %p170
      %p172 = pneg %p171
      // Predicated region
      $region29: #{tpu_custom_call.1} parent=5 // pred_check
        _
      $region30: #{tpu_custom_call.1} parent=5 // pred_check_branch
        %174 = sbr.rel (%p171) target = $region32
      $region31: #{tpu_custom_call.1} parent=5 // pred_region
        %s175 = ssub.s32 %s14, 1
        %s176 = sand.u32 %s27, 1
        %s177 = scalar_lea.sflag [#allocation3], %s176
        %s178 = sand.u32 %s27, 1
        %s179 = smul.addr %s178, 32
        %s180 = scalar_lea.vmem [#allocation2], %s179
        // Predicated region
        $region33: #{tpu_custom_call.1} parent=31 // pred_check
          %p181 = pneg %p40
        $region34: #{tpu_custom_call.1} parent=31 // pred_check_branch
          %183 = sbr.rel (%p181) target = $region36
        $region35: #{tpu_custom_call.1} parent=31 // pred_region
          %184 = dma.done %s177, 512
        $region36: #{tpu_custom_call.1} parent=31 // pred_fallthru
          _
        // Predicated region
        $region37: #{tpu_custom_call.1} parent=31 // pred_check
          %p185 = pneg %p61
        $region38: #{tpu_custom_call.1} parent=31 // pred_check_branch
          %187 = sbr.rel (%p185) target = $region40
        $region39: #{tpu_custom_call.1} parent=31 // pred_region
          %188 = dma.done [#allocation4], 32
        $region40: #{tpu_custom_call.1} parent=31 // pred_fallthru
          _
        // Predicated region
        $region41: #{tpu_custom_call.1} parent=31 // pred_check
          %p189 = pneg %p82
        $region42: #{tpu_custom_call.1} parent=31 // pred_check_branch
          %191 = sbr.rel (%p189) target = $region44
        $region43: #{tpu_custom_call.1} parent=31 // pred_region
          %192 = dma.done [#allocation7], 16
        $region44: #{tpu_custom_call.1} parent=31 // pred_fallthru
          _
        %193 = sfence
        %s194 = sand.u32 %s27, 1
        %s195 = scalar_lea.sflag [#allocation3], %s194
        %s196 = sand.u32 %s27, 1
        %s197 = smul.addr %s196, 32
        %s198 = scalar_lea.vmem [#allocation2], %s197
        %p199 = pneg %p40
        %p200 = pneg %p37
        %p201 = pneg %p61
        %p202 = pneg %p58
        %p203 = pneg %p82
        %p204 = pneg %p79
        %p205 = pneg %p108
        %p206 = pneg %p105
        %p207 = scmp.lt.s32.totalorder %s19, 1
        %s208 = scalar_select %p207, %s19, 1
        %s209 = smul.addr %s208, 6
        %s210 = smul.addr %s209, 8
        %s211 = scalar_lea.vmem %s3, %s210
        %p212 = scmp.lt.s32.totalorder %s19, 1
        %s213 = scalar_select %p212, %s19, 1
        %s214 = smul.addr %s213, 6
        %s215 = smul.addr %s214, 8
        %s216 = scalar_lea.vmem %s3, %s215
        %v217 = vld [vmem:[%s180] sm:$0xff]
        %v218 = vld [vmem:[%s180 + $0x8] sm:$0xff]
        %v219 = vld [vmem:[%s180 + $0x10] sm:$0xff]
        %v220 = vld [vmem:[%s180 + $0x18] sm:$0xff]
        %s221 = sld [smem:[#allocation5]]
        %v222 = vstv %s221
        %v223 = vmul.f32 %v222, %v217
        %s224 = sld [smem:[#allocation5 + $0x1]]
        %v225 = vstv %s224
        %v226 = vmul.f32 %v225, %v218
        %v227 = vadd.f32 %v223, %v226
        %s228 = sld [smem:[#allocation5 + $0x2]]
        %v229 = vstv %s228
        %v230 = vmul.f32 %v229, %v217
        %232 = vrot.lane.b32.xlu0 %v230, 127
        %v233 = vpop.permute.xlu0 %232
        %v235 = vadd.f32 %v227, %v233
        %s236 = sld [smem:[#allocation5 + $0x3]]
        %v237 = vstv %s236
        %v238 = vmul.f32 %v237, %v218
        %240 = vrot.lane.b32.xlu0 %v238, 127
        %v241 = vpop.permute.xlu0 %240
        %v243 = vadd.f32 %v235, %v241
        %s244 = sld [smem:[#allocation5 + $0x4]]
        %v245 = vstv %s244
        %v246 = vmul.f32 %v245, %v217
        %248 = vrot.lane.b32.xlu0 %v246, 126
        %v249 = vpop.permute.xlu0 %248
        %v251 = vadd.f32 %v243, %v249
        %s252 = sld [smem:[#allocation5 + $0x5]]
        %v253 = vstv %s252
        %v254 = vmul.f32 %v253, %v219
        %v255 = vadd.f32 %v251, %v254
        %s256 = sld [smem:[#allocation5 + $0x6]]
        %v257 = vstv %s256
        %v258 = vmul.f32 %v257, %v220
        %v259 = vadd.f32 %v255, %v258
        %s260 = sld [smem:[#allocation5 + $0x7]]
        %v261 = vstv %s260
        %v262 = vmul.f32 %v261, %v219
        %264 = vrot.lane.b32.xlu0 %v262, 127
        %v265 = vpop.permute.xlu0 %264
        %v267 = vadd.f32 %v259, %v265
        %s268 = sld [smem:[#allocation5 + $0x8]]
        %v269 = vstv %s268
        %v270 = vmul.f32 %v269, %v220
        %272 = vrot.lane.b32.xlu0 %v270, 127
        %v273 = vpop.permute.xlu0 %272
        %v275 = vadd.f32 %v267, %v273
        %s276 = sld [smem:[#allocation5 + $0x9]]
        %v277 = vstv %s276
        %v278 = vmul.f32 %v277, %v219
        %280 = vrot.lane.b32.xlu0 %v278, 126
        %v281 = vpop.permute.xlu0 %280
        %v283 = vadd.f32 %v275, %v281
        %s284 = sld [smem:[#allocation5 + $0xa]]
        %v285 = vstv %s284
        %v286 = vmul.f32 %v285, %v217
        %v288 = vrot.slane %v286, 1
        %v290 = vadd.f32 %v283, %v288
        %s291 = sld [smem:[#allocation5 + $0xb]]
        %v292 = vstv %s291
        %v293 = vmul.f32 %v292, %v218
        %v295 = vrot.slane %v293, 1
        %v297 = vadd.f32 %v290, %v295
        %s298 = sld [smem:[#allocation5 + $0xc]]
        %v299 = vstv %s298
        %v300 = vmul.f32 %v299, %v217
        %v302 = vrot.slane %v300, 1
        %303 = vrot.lane.b32.xlu0 %v302, 127
        %v304 = vpop.permute.xlu0 %303
        %v306 = vadd.f32 %v297, %v304
        %s307 = sld [smem:[#allocation5 + $0xd]]
        %v308 = vstv %s307
        %v309 = vmul.f32 %v308, %v218
        %v311 = vrot.slane %v309, 1
        %312 = vrot.lane.b32.xlu0 %v311, 127
        %v313 = vpop.permute.xlu0 %312
        %v315 = vadd.f32 %v306, %v313
        %s316 = sld [smem:[#allocation5 + $0xe]]
        %v317 = vstv %s316
        %v318 = vmul.f32 %v317, %v217
        %v320 = vrot.slane %v318, 1
        %321 = vrot.lane.b32.xlu0 %v320, 126
        %v322 = vpop.permute.xlu0 %321
        %v324 = vadd.f32 %v315, %v322
        %s325 = sld [smem:[#allocation5 + $0xf]]
        %v326 = vstv %s325
        %v327 = vmul.f32 %v326, %v219
        %v329 = vrot.slane %v327, 1
        %v331 = vadd.f32 %v324, %v329
        %s332 = sld [smem:[#allocation5 + $0x10]]
        %v333 = vstv %s332
        %v334 = vmul.f32 %v333, %v220
        %v336 = vrot.slane %v334, 1
        %v338 = vadd.f32 %v331, %v336
        %s339 = sld [smem:[#allocation5 + $0x11]]
        %v340 = vstv %s339
        %v341 = vmul.f32 %v340, %v219
        %v343 = vrot.slane %v341, 1
        %344 = vrot.lane.b32.xlu0 %v343, 127
        %v345 = vpop.permute.xlu0 %344
        %v347 = vadd.f32 %v338, %v345
        %s348 = sld [smem:[#allocation5 + $0x12]]
        %v349 = vstv %s348
        %v350 = vmul.f32 %v349, %v220
        %v352 = vrot.slane %v350, 1
        %353 = vrot.lane.b32.xlu0 %v352, 127
        %v354 = vpop.permute.xlu0 %353
        %v356 = vadd.f32 %v347, %v354
        %s357 = sld [smem:[#allocation5 + $0x13]]
        %v358 = vstv %s357
        %v359 = vmul.f32 %v358, %v219
        %v361 = vrot.slane %v359, 1
        %362 = vrot.lane.b32.xlu0 %v361, 126
        %v363 = vpop.permute.xlu0 %362
        %v365 = vadd.f32 %v356, %v363
        %s366 = sld [smem:[#allocation5 + $0x14]]
        %v367 = vstv %s366
        %v368 = vmul.f32 %v367, %v217
        %v370 = vrot.slane %v368, 2
        %v372 = vadd.f32 %v365, %v370
        %s373 = sld [smem:[#allocation5 + $0x15]]
        %v374 = vstv %s373
        %v375 = vmul.f32 %v374, %v218
        %v377 = vrot.slane %v375, 2
        %v379 = vadd.f32 %v372, %v377
        %s380 = sld [smem:[#allocation5 + $0x16]]
        %v381 = vstv %s380
        %v382 = vmul.f32 %v381, %v217
        %v384 = vrot.slane %v382, 2
        %385 = vrot.lane.b32.xlu0 %v384, 127
        %v386 = vpop.permute.xlu0 %385
        %v388 = vadd.f32 %v379, %v386
        %s389 = sld [smem:[#allocation5 + $0x17]]
        %v390 = vstv %s389
        %v391 = vmul.f32 %v390, %v218
        %v393 = vrot.slane %v391, 2
        %394 = vrot.lane.b32.xlu0 %v393, 127
        %v395 = vpop.permute.xlu0 %394
        %v397 = vadd.f32 %v388, %v395
        %s398 = sld [smem:[#allocation5 + $0x18]]
        %v399 = vstv %s398
        %v400 = vmul.f32 %v399, %v217
        %v402 = vrot.slane %v400, 2
        %403 = vrot.lane.b32.xlu0 %v402, 126
        %v404 = vpop.permute.xlu0 %403
        %v406 = vadd.f32 %v397, %v404
        %v407 = vmul.f32 %v222, %v218
        %v408 = vmul.f32 %v225, %v217
        %410 = vrot.lane.b32.xlu0 %v408, 127
        %v411 = vpop.permute.xlu0 %410
        %v413 = vadd.f32 %v407, %v411
        %v414 = vmul.f32 %v229, %v218
        %416 = vrot.lane.b32.xlu0 %v414, 127
        %v417 = vpop.permute.xlu0 %416
        %v419 = vadd.f32 %v413, %v417
        %v420 = vmul.f32 %v237, %v217
        %422 = vrot.lane.b32.xlu0 %v420, 126
        %v423 = vpop.permute.xlu0 %422
        %v425 = vadd.f32 %v419, %v423
        %v426 = vmul.f32 %v245, %v218
        %428 = vrot.lane.b32.xlu0 %v426, 126
        %v429 = vpop.permute.xlu0 %428
        %v431 = vadd.f32 %v425, %v429
        %v432 = vmul.f32 %v253, %v220
        %v433 = vadd.f32 %v431, %v432
        %v434 = vmul.f32 %v257, %v219
        %436 = vrot.lane.b32.xlu0 %v434, 127
        %v437 = vpop.permute.xlu0 %436
        %v439 = vadd.f32 %v433, %v437
        %v440 = vmul.f32 %v261, %v220
        %442 = vrot.lane.b32.xlu0 %v440, 127
        %v443 = vpop.permute.xlu0 %442
        %v445 = vadd.f32 %v439, %v443
        %v446 = vmul.f32 %v269, %v219
        %448 = vrot.lane.b32.xlu0 %v446, 126
        %v449 = vpop.permute.xlu0 %448
        %v451 = vadd.f32 %v445, %v449
        %v452 = vmul.f32 %v277, %v220
        %454 = vrot.lane.b32.xlu0 %v452, 126
        %v455 = vpop.permute.xlu0 %454
        %v457 = vadd.f32 %v451, %v455
        %v458 = vmul.f32 %v285, %v218
        %v460 = vrot.slane %v458, 1
        %v462 = vadd.f32 %v457, %v460
        %v463 = vmul.f32 %v292, %v217
        %v465 = vrot.slane %v463, 1
        %466 = vrot.lane.b32.xlu0 %v465, 127
        %v467 = vpop.permute.xlu0 %466
        %v469 = vadd.f32 %v462, %v467
        %v470 = vmul.f32 %v299, %v218
        %v472 = vrot.slane %v470, 1
        %473 = vrot.lane.b32.xlu0 %v472, 127
        %v474 = vpop.permute.xlu0 %473
        %v476 = vadd.f32 %v469, %v474
        %v477 = vmul.f32 %v308, %v217
        %v479 = vrot.slane %v477, 1
        %480 = vrot.lane.b32.xlu0 %v479, 126
        %v481 = vpop.permute.xlu0 %480
        %v483 = vadd.f32 %v476, %v481
        %v484 = vmul.f32 %v317, %v218
        %v486 = vrot.slane %v484, 1
        %487 = vrot.lane.b32.xlu0 %v486, 126
        %v488 = vpop.permute.xlu0 %487
        %v490 = vadd.f32 %v483, %v488
        %v491 = vmul.f32 %v326, %v220
        %v493 = vrot.slane %v491, 1
        %v495 = vadd.f32 %v490, %v493
        %v496 = vmul.f32 %v333, %v219
        %v498 = vrot.slane %v496, 1
        %499 = vrot.lane.b32.xlu0 %v498, 127
        %v500 = vpop.permute.xlu0 %499
        %v502 = vadd.f32 %v495, %v500
        %v503 = vmul.f32 %v340, %v220
        %v505 = vrot.slane %v503, 1
        %506 = vrot.lane.b32.xlu0 %v505, 127
        %v507 = vpop.permute.xlu0 %506
        %v509 = vadd.f32 %v502, %v507
        %v510 = vmul.f32 %v349, %v219
        %v512 = vrot.slane %v510, 1
        %513 = vrot.lane.b32.xlu0 %v512, 126
        %v514 = vpop.permute.xlu0 %513
        %v516 = vadd.f32 %v509, %v514
        %v517 = vmul.f32 %v358, %v220
        %v519 = vrot.slane %v517, 1
        %520 = vrot.lane.b32.xlu0 %v519, 126
        %v521 = vpop.permute.xlu0 %520
        %v523 = vadd.f32 %v516, %v521
        %v524 = vmul.f32 %v367, %v218
        %v526 = vrot.slane %v524, 2
        %v528 = vadd.f32 %v523, %v526
        %v529 = vmul.f32 %v374, %v217
        %v531 = vrot.slane %v529, 2
        %532 = vrot.lane.b32.xlu0 %v531, 127
        %v533 = vpop.permute.xlu0 %532
        %v535 = vadd.f32 %v528, %v533
        %v536 = vmul.f32 %v381, %v218
        %v538 = vrot.slane %v536, 2
        %539 = vrot.lane.b32.xlu0 %v538, 127
        %v540 = vpop.permute.xlu0 %539
        %v542 = vadd.f32 %v535, %v540
        %v543 = vmul.f32 %v390, %v217
        %v545 = vrot.slane %v543, 2
        %546 = vrot.lane.b32.xlu0 %v545, 126
        %v547 = vpop.permute.xlu0 %546
        %v549 = vadd.f32 %v542, %v547
        %v550 = vmul.f32 %v399, %v218
        %v552 = vrot.slane %v550, 2
        %553 = vrot.lane.b32.xlu0 %v552, 126
        %v554 = vpop.permute.xlu0 %553
        %v556 = vadd.f32 %v549, %v554
        %v557 = vmul.f32 %v222, %v219
        %v558 = vmul.f32 %v225, %v220
        %v559 = vadd.f32 %v557, %v558
        %v560 = vmul.f32 %v229, %v219
        %562 = vrot.lane.b32.xlu0 %v560, 127
        %v563 = vpop.permute.xlu0 %562
        %v565 = vadd.f32 %v559, %v563
        %v566 = vmul.f32 %v237, %v220
        %568 = vrot.lane.b32.xlu0 %v566, 127
        %v569 = vpop.permute.xlu0 %568
        %v571 = vadd.f32 %v565, %v569
        %v572 = vmul.f32 %v245, %v219
        %574 = vrot.lane.b32.xlu0 %v572, 126
        %v575 = vpop.permute.xlu0 %574
        %v577 = vadd.f32 %v571, %v575
        %v578 = vmul.f32 %v253, %v217
        %v580 = vrot.slane %v578, 1
        %v582 = vadd.f32 %v577, %v580
        %v583 = vmul.f32 %v257, %v218
        %v585 = vrot.slane %v583, 1
        %v587 = vadd.f32 %v582, %v585
        %v588 = vmul.f32 %v261, %v217
        %v590 = vrot.slane %v588, 1
        %591 = vrot.lane.b32.xlu0 %v590, 127
        %v592 = vpop.permute.xlu0 %591
        %v594 = vadd.f32 %v587, %v592
        %v595 = vmul.f32 %v269, %v218
        %v597 = vrot.slane %v595, 1
        %598 = vrot.lane.b32.xlu0 %v597, 127
        %v599 = vpop.permute.xlu0 %598
        %v601 = vadd.f32 %v594, %v599
        %v602 = vmul.f32 %v277, %v217
        %v604 = vrot.slane %v602, 1
        %605 = vrot.lane.b32.xlu0 %v604, 126
        %v606 = vpop.permute.xlu0 %605
        %v608 = vadd.f32 %v601, %v606
        %v609 = vmul.f32 %v285, %v219
        %v611 = vrot.slane %v609, 1
        %v613 = vadd.f32 %v608, %v611
        %v614 = vmul.f32 %v292, %v220
        %v616 = vrot.slane %v614, 1
        %v618 = vadd.f32 %v613, %v616
        %v619 = vmul.f32 %v299, %v219
        %v621 = vrot.slane %v619, 1
        %622 = vrot.lane.b32.xlu0 %v621, 127
        %v623 = vpop.permute.xlu0 %622
        %v625 = vadd.f32 %v618, %v623
        %v626 = vmul.f32 %v308, %v220
        %v628 = vrot.slane %v626, 1
        %629 = vrot.lane.b32.xlu0 %v628, 127
        %v630 = vpop.permute.xlu0 %629
        %v632 = vadd.f32 %v625, %v630
        %v633 = vmul.f32 %v317, %v219
        %v635 = vrot.slane %v633, 1
        %636 = vrot.lane.b32.xlu0 %v635, 126
        %v637 = vpop.permute.xlu0 %636
        %v639 = vadd.f32 %v632, %v637
        %v640 = vmul.f32 %v326, %v217
        %v642 = vrot.slane %v640, 2
        %v644 = vadd.f32 %v639, %v642
        %v645 = vmul.f32 %v333, %v218
        %v647 = vrot.slane %v645, 2
        %v649 = vadd.f32 %v644, %v647
        %v650 = vmul.f32 %v340, %v217
        %v652 = vrot.slane %v650, 2
        %653 = vrot.lane.b32.xlu0 %v652, 127
        %v654 = vpop.permute.xlu0 %653
        %v656 = vadd.f32 %v649, %v654
        %v657 = vmul.f32 %v349, %v218
        %v659 = vrot.slane %v657, 2
        %660 = vrot.lane.b32.xlu0 %v659, 127
        %v661 = vpop.permute.xlu0 %660
        %v663 = vadd.f32 %v656, %v661
        %v664 = vmul.f32 %v358, %v217
        %v666 = vrot.slane %v664, 2
        %667 = vrot.lane.b32.xlu0 %v666, 126
        %v668 = vpop.permute.xlu0 %667
        %v670 = vadd.f32 %v663, %v668
        %v671 = vmul.f32 %v367, %v219
        %v673 = vrot.slane %v671, 2
        %v675 = vadd.f32 %v670, %v673
        %v676 = vmul.f32 %v374, %v220
        %v678 = vrot.slane %v676, 2
        %v680 = vadd.f32 %v675, %v678
        %v681 = vmul.f32 %v381, %v219
        %v683 = vrot.slane %v681, 2
        %684 = vrot.lane.b32.xlu0 %v683, 127
        %v685 = vpop.permute.xlu0 %684
        %v687 = vadd.f32 %v680, %v685
        %v688 = vmul.f32 %v390, %v220
        %v690 = vrot.slane %v688, 2
        %691 = vrot.lane.b32.xlu0 %v690, 127
        %v692 = vpop.permute.xlu0 %691
        %v694 = vadd.f32 %v687, %v692
        %v695 = vmul.f32 %v399, %v219
        %v697 = vrot.slane %v695, 2
        %698 = vrot.lane.b32.xlu0 %v697, 126
        %v699 = vpop.permute.xlu0 %698
        %v701 = vadd.f32 %v694, %v699
        %v702 = vmul.f32 %v222, %v220
        %v703 = vmul.f32 %v225, %v219
        %705 = vrot.lane.b32.xlu0 %v703, 127
        %v706 = vpop.permute.xlu0 %705
        %v708 = vadd.f32 %v702, %v706
        %v709 = vmul.f32 %v229, %v220
        %711 = vrot.lane.b32.xlu0 %v709, 127
        %v712 = vpop.permute.xlu0 %711
        %v714 = vadd.f32 %v708, %v712
        %v715 = vmul.f32 %v237, %v219
        %717 = vrot.lane.b32.xlu0 %v715, 126
        %v718 = vpop.permute.xlu0 %717
        %v720 = vadd.f32 %v714, %v718
        %v721 = vmul.f32 %v245, %v220
        %723 = vrot.lane.b32.xlu0 %v721, 126
        %v724 = vpop.permute.xlu0 %723
        %v726 = vadd.f32 %v720, %v724
        %v727 = vmul.f32 %v253, %v218
        %v729 = vrot.slane %v727, 1
        %v731 = vadd.f32 %v726, %v729
        %v732 = vmul.f32 %v257, %v217
        %v734 = vrot.slane %v732, 1
        %735 = vrot.lane.b32.xlu0 %v734, 127
        %v736 = vpop.permute.xlu0 %735
        %v738 = vadd.f32 %v731, %v736
        %v739 = vmul.f32 %v261, %v218
        %v741 = vrot.slane %v739, 1
        %742 = vrot.lane.b32.xlu0 %v741, 127
        %v743 = vpop.permute.xlu0 %742
        %v745 = vadd.f32 %v738, %v743
        %v746 = vmul.f32 %v269, %v217
        %v748 = vrot.slane %v746, 1
        %749 = vrot.lane.b32.xlu0 %v748, 126
        %v750 = vpop.permute.xlu0 %749
        %v752 = vadd.f32 %v745, %v750
        %v753 = vmul.f32 %v277, %v218
        %v755 = vrot.slane %v753, 1
        %756 = vrot.lane.b32.xlu0 %v755, 126
        %v757 = vpop.permute.xlu0 %756
        %v759 = vadd.f32 %v752, %v757
        %v760 = vmul.f32 %v285, %v220
        %v762 = vrot.slane %v760, 1
        %v764 = vadd.f32 %v759, %v762
        %v765 = vmul.f32 %v292, %v219
        %v767 = vrot.slane %v765, 1
        %768 = vrot.lane.b32.xlu0 %v767, 127
        %v769 = vpop.permute.xlu0 %768
        %v771 = vadd.f32 %v764, %v769
        %v772 = vmul.f32 %v299, %v220
        %v774 = vrot.slane %v772, 1
        %775 = vrot.lane.b32.xlu0 %v774, 127
        %v776 = vpop.permute.xlu0 %775
        %v778 = vadd.f32 %v771, %v776
        %v779 = vmul.f32 %v308, %v219
        %v781 = vrot.slane %v779, 1
        %782 = vrot.lane.b32.xlu0 %v781, 126
        %v783 = vpop.permute.xlu0 %782
        %v785 = vadd.f32 %v778, %v783
        %v786 = vmul.f32 %v317, %v220
        %v788 = vrot.slane %v786, 1
        %789 = vrot.lane.b32.xlu0 %v788, 126
        %v790 = vpop.permute.xlu0 %789
        %v792 = vadd.f32 %v785, %v790
        %v793 = vmul.f32 %v326, %v218
        %v795 = vrot.slane %v793, 2
        %v797 = vadd.f32 %v792, %v795
        %v798 = vmul.f32 %v333, %v217
        %v800 = vrot.slane %v798, 2
        %801 = vrot.lane.b32.xlu0 %v800, 127
        %v802 = vpop.permute.xlu0 %801
        %v804 = vadd.f32 %v797, %v802
        %v805 = vmul.f32 %v340, %v218
        %v807 = vrot.slane %v805, 2
        %808 = vrot.lane.b32.xlu0 %v807, 127
        %v809 = vpop.permute.xlu0 %808
        %v811 = vadd.f32 %v804, %v809
        %v812 = vmul.f32 %v349, %v217
        %v814 = vrot.slane %v812, 2
        %815 = vrot.lane.b32.xlu0 %v814, 126
        %v816 = vpop.permute.xlu0 %815
        %v818 = vadd.f32 %v811, %v816
        %v819 = vmul.f32 %v358, %v218
        %v821 = vrot.slane %v819, 2
        %822 = vrot.lane.b32.xlu0 %v821, 126
        %v823 = vpop.permute.xlu0 %822
        %v825 = vadd.f32 %v818, %v823
        %v826 = vmul.f32 %v367, %v220
        %v828 = vrot.slane %v826, 2
        %v830 = vadd.f32 %v825, %v828
        %v831 = vmul.f32 %v374, %v219
        %v833 = vrot.slane %v831, 2
        %834 = vrot.lane.b32.xlu0 %v833, 127
        %v835 = vpop.permute.xlu0 %834
        %v837 = vadd.f32 %v830, %v835
        %v838 = vmul.f32 %v381, %v220
        %v840 = vrot.slane %v838, 2
        %841 = vrot.lane.b32.xlu0 %v840, 127
        %v842 = vpop.permute.xlu0 %841
        %v844 = vadd.f32 %v837, %v842
        %v845 = vmul.f32 %v390, %v219
        %v847 = vrot.slane %v845, 2
        %848 = vrot.lane.b32.xlu0 %v847, 126
        %v849 = vpop.permute.xlu0 %848
        %v851 = vadd.f32 %v844, %v849
        %v852 = vmul.f32 %v399, %v220
        %v854 = vrot.slane %v852, 2
        %855 = vrot.lane.b32.xlu0 %v854, 126
        %v856 = vpop.permute.xlu0 %855
        %v858 = vadd.f32 %v851, %v856
        %v859 = vmax.f32 %v406, %v556
        %v860 = vmax.f32 %v701, %v858
        %v861 = vmax.f32 %v859, %v860
        %s862 = sld [smem:[#allocation6]]
        %v863 = vstv %s862
        %v864 = vadd.f32 %v861, %v863
        %v865 = vmax.f32 %v864, 0.0
        %s866 = sld [smem:[#allocation5 + $0x19]]
        %v867 = vstv %s866
        %v868 = vmul.f32 %v867, %v217
        %s869 = sld [smem:[#allocation5 + $0x1a]]
        %v870 = vstv %s869
        %v871 = vmul.f32 %v870, %v218
        %v872 = vadd.f32 %v868, %v871
        %s873 = sld [smem:[#allocation5 + $0x1b]]
        %v874 = vstv %s873
        %v875 = vmul.f32 %v874, %v217
        %877 = vrot.lane.b32.xlu0 %v875, 127
        %v878 = vpop.permute.xlu0 %877
        %v880 = vadd.f32 %v872, %v878
        %s881 = sld [smem:[#allocation5 + $0x1c]]
        %v882 = vstv %s881
        %v883 = vmul.f32 %v882, %v218
        %885 = vrot.lane.b32.xlu0 %v883, 127
        %v886 = vpop.permute.xlu0 %885
        %v888 = vadd.f32 %v880, %v886
        %s889 = sld [smem:[#allocation5 + $0x1d]]
        %v890 = vstv %s889
        %v891 = vmul.f32 %v890, %v217
        %893 = vrot.lane.b32.xlu0 %v891, 126
        %v894 = vpop.permute.xlu0 %893
        %v896 = vadd.f32 %v888, %v894
        %s897 = sld [smem:[#allocation5 + $0x1e]]
        %v898 = vstv %s897
        %v899 = vmul.f32 %v898, %v219
        %v900 = vadd.f32 %v896, %v899
        %s901 = sld [smem:[#allocation5 + $0x1f]]
        %v902 = vstv %s901
        %v903 = vmul.f32 %v902, %v220
        %v904 = vadd.f32 %v900, %v903
        %s905 = sld [smem:[#allocation5 + $0x20]]
        %v906 = vstv %s905
        %v907 = vmul.f32 %v906, %v219
        %909 = vrot.lane.b32.xlu0 %v907, 127
        %v910 = vpop.permute.xlu0 %909
        %v912 = vadd.f32 %v904, %v910
        %s913 = sld [smem:[#allocation5 + $0x21]]
        %v914 = vstv %s913
        %v915 = vmul.f32 %v914, %v220
        %917 = vrot.lane.b32.xlu0 %v915, 127
        %v918 = vpop.permute.xlu0 %917
        %v920 = vadd.f32 %v912, %v918
        %s921 = sld [smem:[#allocation5 + $0x22]]
        %v922 = vstv %s921
        %v923 = vmul.f32 %v922, %v219
        %925 = vrot.lane.b32.xlu0 %v923, 126
        %v926 = vpop.permute.xlu0 %925
        %v928 = vadd.f32 %v920, %v926
        %s929 = sld [smem:[#allocation5 + $0x23]]
        %v930 = vstv %s929
        %v931 = vmul.f32 %v930, %v217
        %v933 = vrot.slane %v931, 1
        %v935 = vadd.f32 %v928, %v933
        %s936 = sld [smem:[#allocation5 + $0x24]]
        %v937 = vstv %s936
        %v938 = vmul.f32 %v937, %v218
        %v940 = vrot.slane %v938, 1
        %v942 = vadd.f32 %v935, %v940
        %s943 = sld [smem:[#allocation5 + $0x25]]
        %v944 = vstv %s943
        %v945 = vmul.f32 %v944, %v217
        %v947 = vrot.slane %v945, 1
        %948 = vrot.lane.b32.xlu0 %v947, 127
        %v949 = vpop.permute.xlu0 %948
        %v951 = vadd.f32 %v942, %v949
        %s952 = sld [smem:[#allocation5 + $0x26]]
        %v953 = vstv %s952
        %v954 = vmul.f32 %v953, %v218
        %v956 = vrot.slane %v954, 1
        %957 = vrot.lane.b32.xlu0 %v956, 127
        %v958 = vpop.permute.xlu0 %957
        %v960 = vadd.f32 %v951, %v958
        %s961 = sld [smem:[#allocation5 + $0x27]]
        %v962 = vstv %s961
        %v963 = vmul.f32 %v962, %v217
        %v965 = vrot.slane %v963, 1
        %966 = vrot.lane.b32.xlu0 %v965, 126
        %v967 = vpop.permute.xlu0 %966
        %v969 = vadd.f32 %v960, %v967
        %s970 = sld [smem:[#allocation5 + $0x28]]
        %v971 = vstv %s970
        %v972 = vmul.f32 %v971, %v219
        %v974 = vrot.slane %v972, 1
        %v976 = vadd.f32 %v969, %v974
        %s977 = sld [smem:[#allocation5 + $0x29]]
        %v978 = vstv %s977
        %v979 = vmul.f32 %v978, %v220
        %v981 = vrot.slane %v979, 1
        %v983 = vadd.f32 %v976, %v981
        %s984 = sld [smem:[#allocation5 + $0x2a]]
        %v985 = vstv %s984
        %v986 = vmul.f32 %v985, %v219
        %v988 = vrot.slane %v986, 1
        %989 = vrot.lane.b32.xlu0 %v988, 127
        %v990 = vpop.permute.xlu0 %989
        %v992 = vadd.f32 %v983, %v990
        %s993 = sld [smem:[#allocation5 + $0x2b]]
        %v994 = vstv %s993
        %v995 = vmul.f32 %v994, %v220
        %v997 = vrot.slane %v995, 1
        %998 = vrot.lane.b32.xlu0 %v997, 127
        %v999 = vpop.permute.xlu0 %998
        %v1001 = vadd.f32 %v992, %v999
        %s1002 = sld [smem:[#allocation5 + $0x2c]]
        %v1003 = vstv %s1002
        %v1004 = vmul.f32 %v1003, %v219
        %v1006 = vrot.slane %v1004, 1
        %1007 = vrot.lane.b32.xlu0 %v1006, 126
        %v1008 = vpop.permute.xlu0 %1007
        %v1010 = vadd.f32 %v1001, %v1008
        %s1011 = sld [smem:[#allocation5 + $0x2d]]
        %v1012 = vstv %s1011
        %v1013 = vmul.f32 %v1012, %v217
        %v1015 = vrot.slane %v1013, 2
        %v1017 = vadd.f32 %v1010, %v1015
        %s1018 = sld [smem:[#allocation5 + $0x2e]]
        %v1019 = vstv %s1018
        %v1020 = vmul.f32 %v1019, %v218
        %v1022 = vrot.slane %v1020, 2
        %v1024 = vadd.f32 %v1017, %v1022
        %s1025 = sld [smem:[#allocation5 + $0x2f]]
        %v1026 = vstv %s1025
        %v1027 = vmul.f32 %v1026, %v217
        %v1029 = vrot.slane %v1027, 2
        %1030 = vrot.lane.b32.xlu0 %v1029, 127
        %v1031 = vpop.permute.xlu0 %1030
        %v1033 = vadd.f32 %v1024, %v1031
        %s1034 = sld [smem:[#allocation5 + $0x30]]
        %v1035 = vstv %s1034
        %v1036 = vmul.f32 %v1035, %v218
        %v1038 = vrot.slane %v1036, 2
        %1039 = vrot.lane.b32.xlu0 %v1038, 127
        %v1040 = vpop.permute.xlu0 %1039
        %v1042 = vadd.f32 %v1033, %v1040
        %s1043 = sld [smem:[#allocation5 + $0x31]]
        %v1044 = vstv %s1043
        %v1045 = vmul.f32 %v1044, %v217
        %v1047 = vrot.slane %v1045, 2
        %1048 = vrot.lane.b32.xlu0 %v1047, 126
        %v1049 = vpop.permute.xlu0 %1048
        %v1051 = vadd.f32 %v1042, %v1049
        %v1052 = vmul.f32 %v867, %v218
        %v1053 = vmul.f32 %v870, %v217
        %1055 = vrot.lane.b32.xlu0 %v1053, 127
        %v1056 = vpop.permute.xlu0 %1055
        %v1058 = vadd.f32 %v1052, %v1056
        %v1059 = vmul.f32 %v874, %v218
        %1061 = vrot.lane.b32.xlu0 %v1059, 127
        %v1062 = vpop.permute.xlu0 %1061
        %v1064 = vadd.f32 %v1058, %v1062
        %v1065 = vmul.f32 %v882, %v217
        %1067 = vrot.lane.b32.xlu0 %v1065, 126
        %v1068 = vpop.permute.xlu0 %1067
        %v1070 = vadd.f32 %v1064, %v1068
        %v1071 = vmul.f32 %v890, %v218
        %1073 = vrot.lane.b32.xlu0 %v1071, 126
        %v1074 = vpop.permute.xlu0 %1073
        %v1076 = vadd.f32 %v1070, %v1074
        %v1077 = vmul.f32 %v898, %v220
        %v1078 = vadd.f32 %v1076, %v1077
        %v1079 = vmul.f32 %v902, %v219
        %1081 = vrot.lane.b32.xlu0 %v1079, 127
        %v1082 = vpop.permute.xlu0 %1081
        %v1084 = vadd.f32 %v1078, %v1082
        %v1085 = vmul.f32 %v906, %v220
        %1087 = vrot.lane.b32.xlu0 %v1085, 127
        %v1088 = vpop.permute.xlu0 %1087
        %v1090 = vadd.f32 %v1084, %v1088
        %v1091 = vmul.f32 %v914, %v219
        %1093 = vrot.lane.b32.xlu0 %v1091, 126
        %v1094 = vpop.permute.xlu0 %1093
        %v1096 = vadd.f32 %v1090, %v1094
        %v1097 = vmul.f32 %v922, %v220
        %1099 = vrot.lane.b32.xlu0 %v1097, 126
        %v1100 = vpop.permute.xlu0 %1099
        %v1102 = vadd.f32 %v1096, %v1100
        %v1103 = vmul.f32 %v930, %v218
        %v1105 = vrot.slane %v1103, 1
        %v1107 = vadd.f32 %v1102, %v1105
        %v1108 = vmul.f32 %v937, %v217
        %v1110 = vrot.slane %v1108, 1
        %1111 = vrot.lane.b32.xlu0 %v1110, 127
        %v1112 = vpop.permute.xlu0 %1111
        %v1114 = vadd.f32 %v1107, %v1112
        %v1115 = vmul.f32 %v944, %v218
        %v1117 = vrot.slane %v1115, 1
        %1118 = vrot.lane.b32.xlu0 %v1117, 127
        %v1119 = vpop.permute.xlu0 %1118
        %v1121 = vadd.f32 %v1114, %v1119
        %v1122 = vmul.f32 %v953, %v217
        %v1124 = vrot.slane %v1122, 1
        %1125 = vrot.lane.b32.xlu0 %v1124, 126
        %v1126 = vpop.permute.xlu0 %1125
        %v1128 = vadd.f32 %v1121, %v1126
        %v1129 = vmul.f32 %v962, %v218
        %v1131 = vrot.slane %v1129, 1
        %1132 = vrot.lane.b32.xlu0 %v1131, 126
        %v1133 = vpop.permute.xlu0 %1132
        %v1135 = vadd.f32 %v1128, %v1133
        %v1136 = vmul.f32 %v971, %v220
        %v1138 = vrot.slane %v1136, 1
        %v1140 = vadd.f32 %v1135, %v1138
        %v1141 = vmul.f32 %v978, %v219
        %v1143 = vrot.slane %v1141, 1
        %1144 = vrot.lane.b32.xlu0 %v1143, 127
        %v1145 = vpop.permute.xlu0 %1144
        %v1147 = vadd.f32 %v1140, %v1145
        %v1148 = vmul.f32 %v985, %v220
        %v1150 = vrot.slane %v1148, 1
        %1151 = vrot.lane.b32.xlu0 %v1150, 127
        %v1152 = vpop.permute.xlu0 %1151
        %v1154 = vadd.f32 %v1147, %v1152
        %v1155 = vmul.f32 %v994, %v219
        %v1157 = vrot.slane %v1155, 1
        %1158 = vrot.lane.b32.xlu0 %v1157, 126
        %v1159 = vpop.permute.xlu0 %1158
        %v1161 = vadd.f32 %v1154, %v1159
        %v1162 = vmul.f32 %v1003, %v220
        %v1164 = vrot.slane %v1162, 1
        %1165 = vrot.lane.b32.xlu0 %v1164, 126
        %v1166 = vpop.permute.xlu0 %1165
        %v1168 = vadd.f32 %v1161, %v1166
        %v1169 = vmul.f32 %v1012, %v218
        %v1171 = vrot.slane %v1169, 2
        %v1173 = vadd.f32 %v1168, %v1171
        %v1174 = vmul.f32 %v1019, %v217
        %v1176 = vrot.slane %v1174, 2
        %1177 = vrot.lane.b32.xlu0 %v1176, 127
        %v1178 = vpop.permute.xlu0 %1177
        %v1180 = vadd.f32 %v1173, %v1178
        %v1181 = vmul.f32 %v1026, %v218
        %v1183 = vrot.slane %v1181, 2
        %1184 = vrot.lane.b32.xlu0 %v1183, 127
        %v1185 = vpop.permute.xlu0 %1184
        %v1187 = vadd.f32 %v1180, %v1185
        %v1188 = vmul.f32 %v1035, %v217
        %v1190 = vrot.slane %v1188, 2
        %1191 = vrot.lane.b32.xlu0 %v1190, 126
        %v1192 = vpop.permute.xlu0 %1191
        %v1194 = vadd.f32 %v1187, %v1192
        %v1195 = vmul.f32 %v1044, %v218
        %v1197 = vrot.slane %v1195, 2
        %1198 = vrot.lane.b32.xlu0 %v1197, 126
        %v1199 = vpop.permute.xlu0 %1198
        %v1201 = vadd.f32 %v1194, %v1199
        %v1202 = vmul.f32 %v867, %v219
        %v1203 = vmul.f32 %v870, %v220
        %v1204 = vadd.f32 %v1202, %v1203
        %v1205 = vmul.f32 %v874, %v219
        %1207 = vrot.lane.b32.xlu0 %v1205, 127
        %v1208 = vpop.permute.xlu0 %1207
        %v1210 = vadd.f32 %v1204, %v1208
        %v1211 = vmul.f32 %v882, %v220
        %1213 = vrot.lane.b32.xlu0 %v1211, 127
        %v1214 = vpop.permute.xlu0 %1213
        %v1216 = vadd.f32 %v1210, %v1214
        %v1217 = vmul.f32 %v890, %v219
        %1219 = vrot.lane.b32.xlu0 %v1217, 126
        %v1220 = vpop.permute.xlu0 %1219
        %v1222 = vadd.f32 %v1216, %v1220
        %v1223 = vmul.f32 %v898, %v217
        %v1225 = vrot.slane %v1223, 1
        %v1227 = vadd.f32 %v1222, %v1225
        %v1228 = vmul.f32 %v902, %v218
        %v1230 = vrot.slane %v1228, 1
        %v1232 = vadd.f32 %v1227, %v1230
        %v1233 = vmul.f32 %v906, %v217
        %v1235 = vrot.slane %v1233, 1
        %1236 = vrot.lane.b32.xlu0 %v1235, 127
        %v1237 = vpop.permute.xlu0 %1236
        %v1239 = vadd.f32 %v1232, %v1237
        %v1240 = vmul.f32 %v914, %v218
        %v1242 = vrot.slane %v1240, 1
        %1243 = vrot.lane.b32.xlu0 %v1242, 127
        %v1244 = vpop.permute.xlu0 %1243
        %v1246 = vadd.f32 %v1239, %v1244
        %v1247 = vmul.f32 %v922, %v217
        %v1249 = vrot.slane %v1247, 1
        %1250 = vrot.lane.b32.xlu0 %v1249, 126
        %v1251 = vpop.permute.xlu0 %1250
        %v1253 = vadd.f32 %v1246, %v1251
        %v1254 = vmul.f32 %v930, %v219
        %v1256 = vrot.slane %v1254, 1
        %v1258 = vadd.f32 %v1253, %v1256
        %v1259 = vmul.f32 %v937, %v220
        %v1261 = vrot.slane %v1259, 1
        %v1263 = vadd.f32 %v1258, %v1261
        %v1264 = vmul.f32 %v944, %v219
        %v1266 = vrot.slane %v1264, 1
        %1267 = vrot.lane.b32.xlu0 %v1266, 127
        %v1268 = vpop.permute.xlu0 %1267
        %v1270 = vadd.f32 %v1263, %v1268
        %v1271 = vmul.f32 %v953, %v220
        %v1273 = vrot.slane %v1271, 1
        %1274 = vrot.lane.b32.xlu0 %v1273, 127
        %v1275 = vpop.permute.xlu0 %1274
        %v1277 = vadd.f32 %v1270, %v1275
        %v1278 = vmul.f32 %v962, %v219
        %v1280 = vrot.slane %v1278, 1
        %1281 = vrot.lane.b32.xlu0 %v1280, 126
        %v1282 = vpop.permute.xlu0 %1281
        %v1284 = vadd.f32 %v1277, %v1282
        %v1285 = vmul.f32 %v971, %v217
        %v1287 = vrot.slane %v1285, 2
        %v1289 = vadd.f32 %v1284, %v1287
        %v1290 = vmul.f32 %v978, %v218
        %v1292 = vrot.slane %v1290, 2
        %v1294 = vadd.f32 %v1289, %v1292
        %v1295 = vmul.f32 %v985, %v217
        %v1297 = vrot.slane %v1295, 2
        %1298 = vrot.lane.b32.xlu0 %v1297, 127
        %v1299 = vpop.permute.xlu0 %1298
        %v1301 = vadd.f32 %v1294, %v1299
        %v1302 = vmul.f32 %v994, %v218
        %v1304 = vrot.slane %v1302, 2
        %1305 = vrot.lane.b32.xlu0 %v1304, 127
        %v1306 = vpop.permute.xlu0 %1305
        %v1308 = vadd.f32 %v1301, %v1306
        %v1309 = vmul.f32 %v1003, %v217
        %v1311 = vrot.slane %v1309, 2
        %1312 = vrot.lane.b32.xlu0 %v1311, 126
        %v1313 = vpop.permute.xlu0 %1312
        %v1315 = vadd.f32 %v1308, %v1313
        %v1316 = vmul.f32 %v1012, %v219
        %v1318 = vrot.slane %v1316, 2
        %v1320 = vadd.f32 %v1315, %v1318
        %v1321 = vmul.f32 %v1019, %v220
        %v1323 = vrot.slane %v1321, 2
        %v1325 = vadd.f32 %v1320, %v1323
        %v1326 = vmul.f32 %v1026, %v219
        %v1328 = vrot.slane %v1326, 2
        %1329 = vrot.lane.b32.xlu0 %v1328, 127
        %v1330 = vpop.permute.xlu0 %1329
        %v1332 = vadd.f32 %v1325, %v1330
        %v1333 = vmul.f32 %v1035, %v220
        %v1335 = vrot.slane %v1333, 2
        %1336 = vrot.lane.b32.xlu0 %v1335, 127
        %v1337 = vpop.permute.xlu0 %1336
        %v1339 = vadd.f32 %v1332, %v1337
        %v1340 = vmul.f32 %v1044, %v219
        %v1342 = vrot.slane %v1340, 2
        %1343 = vrot.lane.b32.xlu0 %v1342, 126
        %v1344 = vpop.permute.xlu0 %1343
        %v1346 = vadd.f32 %v1339, %v1344
        %v1347 = vmul.f32 %v867, %v220
        %v1348 = vmul.f32 %v870, %v219
        %1350 = vrot.lane.b32.xlu0 %v1348, 127
        %v1351 = vpop.permute.xlu0 %1350
        %v1353 = vadd.f32 %v1347, %v1351
        %v1354 = vmul.f32 %v874, %v220
        %1356 = vrot.lane.b32.xlu0 %v1354, 127
        %v1357 = vpop.permute.xlu0 %1356
        %v1359 = vadd.f32 %v1353, %v1357
        %v1360 = vmul.f32 %v882, %v219
        %1362 = vrot.lane.b32.xlu0 %v1360, 126
        %v1363 = vpop.permute.xlu0 %1362
        %v1365 = vadd.f32 %v1359, %v1363
        %v1366 = vmul.f32 %v890, %v220
        %1368 = vrot.lane.b32.xlu0 %v1366, 126
        %v1369 = vpop.permute.xlu0 %1368
        %v1371 = vadd.f32 %v1365, %v1369
        %v1372 = vmul.f32 %v898, %v218
        %v1374 = vrot.slane %v1372, 1
        %v1376 = vadd.f32 %v1371, %v1374
        %v1377 = vmul.f32 %v902, %v217
        %v1379 = vrot.slane %v1377, 1
        %1380 = vrot.lane.b32.xlu0 %v1379, 127
        %v1381 = vpop.permute.xlu0 %1380
        %v1383 = vadd.f32 %v1376, %v1381
        %v1384 = vmul.f32 %v906, %v218
        %v1386 = vrot.slane %v1384, 1
        %1387 = vrot.lane.b32.xlu0 %v1386, 127
        %v1388 = vpop.permute.xlu0 %1387
        %v1390 = vadd.f32 %v1383, %v1388
        %v1391 = vmul.f32 %v914, %v217
        %v1393 = vrot.slane %v1391, 1
        %1394 = vrot.lane.b32.xlu0 %v1393, 126
        %v1395 = vpop.permute.xlu0 %1394
        %v1397 = vadd.f32 %v1390, %v1395
        %v1398 = vmul.f32 %v922, %v218
        %v1400 = vrot.slane %v1398, 1
        %1401 = vrot.lane.b32.xlu0 %v1400, 126
        %v1402 = vpop.permute.xlu0 %1401
        %v1404 = vadd.f32 %v1397, %v1402
        %v1405 = vmul.f32 %v930, %v220
        %v1407 = vrot.slane %v1405, 1
        %v1409 = vadd.f32 %v1404, %v1407
        %v1410 = vmul.f32 %v937, %v219
        %v1412 = vrot.slane %v1410, 1
        %1413 = vrot.lane.b32.xlu0 %v1412, 127
        %v1414 = vpop.permute.xlu0 %1413
        %v1416 = vadd.f32 %v1409, %v1414
        %v1417 = vmul.f32 %v944, %v220
        %v1419 = vrot.slane %v1417, 1
        %1420 = vrot.lane.b32.xlu0 %v1419, 127
        %v1421 = vpop.permute.xlu0 %1420
        %v1423 = vadd.f32 %v1416, %v1421
        %v1424 = vmul.f32 %v953, %v219
        %v1426 = vrot.slane %v1424, 1
        %1427 = vrot.lane.b32.xlu0 %v1426, 126
        %v1428 = vpop.permute.xlu0 %1427
        %v1430 = vadd.f32 %v1423, %v1428
        %v1431 = vmul.f32 %v962, %v220
        %v1433 = vrot.slane %v1431, 1
        %1434 = vrot.lane.b32.xlu0 %v1433, 126
        %v1435 = vpop.permute.xlu0 %1434
        %v1437 = vadd.f32 %v1430, %v1435
        %v1438 = vmul.f32 %v971, %v218
        %v1440 = vrot.slane %v1438, 2
        %v1442 = vadd.f32 %v1437, %v1440
        %v1443 = vmul.f32 %v978, %v217
        %v1445 = vrot.slane %v1443, 2
        %1446 = vrot.lane.b32.xlu0 %v1445, 127
        %v1447 = vpop.permute.xlu0 %1446
        %v1449 = vadd.f32 %v1442, %v1447
        %v1450 = vmul.f32 %v985, %v218
        %v1452 = vrot.slane %v1450, 2
        %1453 = vrot.lane.b32.xlu0 %v1452, 127
        %v1454 = vpop.permute.xlu0 %1453
        %v1456 = vadd.f32 %v1449, %v1454
        %v1457 = vmul.f32 %v994, %v217
        %v1459 = vrot.slane %v1457, 2
        %1460 = vrot.lane.b32.xlu0 %v1459, 126
        %v1461 = vpop.permute.xlu0 %1460
        %v1463 = vadd.f32 %v1456, %v1461
        %v1464 = vmul.f32 %v1003, %v218
        %v1466 = vrot.slane %v1464, 2
        %1467 = vrot.lane.b32.xlu0 %v1466, 126
        %v1468 = vpop.permute.xlu0 %1467
        %v1470 = vadd.f32 %v1463, %v1468
        %v1471 = vmul.f32 %v1012, %v220
        %v1473 = vrot.slane %v1471, 2
        %v1475 = vadd.f32 %v1470, %v1473
        %v1476 = vmul.f32 %v1019, %v219
        %v1478 = vrot.slane %v1476, 2
        %1479 = vrot.lane.b32.xlu0 %v1478, 127
        %v1480 = vpop.permute.xlu0 %1479
        %v1482 = vadd.f32 %v1475, %v1480
        %v1483 = vmul.f32 %v1026, %v220
        %v1485 = vrot.slane %v1483, 2
        %1486 = vrot.lane.b32.xlu0 %v1485, 127
        %v1487 = vpop.permute.xlu0 %1486
        %v1489 = vadd.f32 %v1482, %v1487
        %v1490 = vmul.f32 %v1035, %v219
        %v1492 = vrot.slane %v1490, 2
        %1493 = vrot.lane.b32.xlu0 %v1492, 126
        %v1494 = vpop.permute.xlu0 %1493
        %v1496 = vadd.f32 %v1489, %v1494
        %v1497 = vmul.f32 %v1044, %v220
        %v1499 = vrot.slane %v1497, 2
        %1500 = vrot.lane.b32.xlu0 %v1499, 126
        %v1501 = vpop.permute.xlu0 %1500
        %v1503 = vadd.f32 %v1496, %v1501
        %v1504 = vmax.f32 %v1051, %v1201
        %v1505 = vmax.f32 %v1346, %v1503
        %v1506 = vmax.f32 %v1504, %v1505
        %s1507 = sld [smem:[#allocation6 + $0x1]]
        %v1508 = vstv %s1507
        %v1509 = vadd.f32 %v1506, %v1508
        %v1510 = vmax.f32 %v1509, 0.0
        %s1511 = sld [smem:[#allocation5 + $0x32]]
        %v1512 = vstv %s1511
        %v1513 = vmul.f32 %v1512, %v217
        %s1514 = sld [smem:[#allocation5 + $0x33]]
        %v1515 = vstv %s1514
        %v1516 = vmul.f32 %v1515, %v218
        %v1517 = vadd.f32 %v1513, %v1516
        %s1518 = sld [smem:[#allocation5 + $0x34]]
        %v1519 = vstv %s1518
        %v1520 = vmul.f32 %v1519, %v217
        %1522 = vrot.lane.b32.xlu0 %v1520, 127
        %v1523 = vpop.permute.xlu0 %1522
        %v1525 = vadd.f32 %v1517, %v1523
        %s1526 = sld [smem:[#allocation5 + $0x35]]
        %v1527 = vstv %s1526
        %v1528 = vmul.f32 %v1527, %v218
        %1530 = vrot.lane.b32.xlu0 %v1528, 127
        %v1531 = vpop.permute.xlu0 %1530
        %v1533 = vadd.f32 %v1525, %v1531
        %s1534 = sld [smem:[#allocation5 + $0x36]]
        %v1535 = vstv %s1534
        %v1536 = vmul.f32 %v1535, %v217
        %1538 = vrot.lane.b32.xlu0 %v1536, 126
        %v1539 = vpop.permute.xlu0 %1538
        %v1541 = vadd.f32 %v1533, %v1539
        %s1542 = sld [smem:[#allocation5 + $0x37]]
        %v1543 = vstv %s1542
        %v1544 = vmul.f32 %v1543, %v219
        %v1545 = vadd.f32 %v1541, %v1544
        %s1546 = sld [smem:[#allocation5 + $0x38]]
        %v1547 = vstv %s1546
        %v1548 = vmul.f32 %v1547, %v220
        %v1549 = vadd.f32 %v1545, %v1548
        %s1550 = sld [smem:[#allocation5 + $0x39]]
        %v1551 = vstv %s1550
        %v1552 = vmul.f32 %v1551, %v219
        %1554 = vrot.lane.b32.xlu0 %v1552, 127
        %v1555 = vpop.permute.xlu0 %1554
        %v1557 = vadd.f32 %v1549, %v1555
        %s1558 = sld [smem:[#allocation5 + $0x3a]]
        %v1559 = vstv %s1558
        %v1560 = vmul.f32 %v1559, %v220
        %1562 = vrot.lane.b32.xlu0 %v1560, 127
        %v1563 = vpop.permute.xlu0 %1562
        %v1565 = vadd.f32 %v1557, %v1563
        %s1566 = sld [smem:[#allocation5 + $0x3b]]
        %v1567 = vstv %s1566
        %v1568 = vmul.f32 %v1567, %v219
        %1570 = vrot.lane.b32.xlu0 %v1568, 126
        %v1571 = vpop.permute.xlu0 %1570
        %v1573 = vadd.f32 %v1565, %v1571
        %s1574 = sld [smem:[#allocation5 + $0x3c]]
        %v1575 = vstv %s1574
        %v1576 = vmul.f32 %v1575, %v217
        %v1578 = vrot.slane %v1576, 1
        %v1580 = vadd.f32 %v1573, %v1578
        %s1581 = sld [smem:[#allocation5 + $0x3d]]
        %v1582 = vstv %s1581
        %v1583 = vmul.f32 %v1582, %v218
        %v1585 = vrot.slane %v1583, 1
        %v1587 = vadd.f32 %v1580, %v1585
        %s1588 = sld [smem:[#allocation5 + $0x3e]]
        %v1589 = vstv %s1588
        %v1590 = vmul.f32 %v1589, %v217
        %v1592 = vrot.slane %v1590, 1
        %1593 = vrot.lane.b32.xlu0 %v1592, 127
        %v1594 = vpop.permute.xlu0 %1593
        %v1596 = vadd.f32 %v1587, %v1594
        %s1597 = sld [smem:[#allocation5 + $0x3f]]
        %v1598 = vstv %s1597
        %v1599 = vmul.f32 %v1598, %v218
        %v1601 = vrot.slane %v1599, 1
        %1602 = vrot.lane.b32.xlu0 %v1601, 127
        %v1603 = vpop.permute.xlu0 %1602
        %v1605 = vadd.f32 %v1596, %v1603
        %s1606 = sld [smem:[#allocation5 + $0x40]]
        %v1607 = vstv %s1606
        %v1608 = vmul.f32 %v1607, %v217
        %v1610 = vrot.slane %v1608, 1
        %1611 = vrot.lane.b32.xlu0 %v1610, 126
        %v1612 = vpop.permute.xlu0 %1611
        %v1614 = vadd.f32 %v1605, %v1612
        %s1615 = sld [smem:[#allocation5 + $0x41]]
        %v1616 = vstv %s1615
        %v1617 = vmul.f32 %v1616, %v219
        %v1619 = vrot.slane %v1617, 1
        %v1621 = vadd.f32 %v1614, %v1619
        %s1622 = sld [smem:[#allocation5 + $0x42]]
        %v1623 = vstv %s1622
        %v1624 = vmul.f32 %v1623, %v220
        %v1626 = vrot.slane %v1624, 1
        %v1628 = vadd.f32 %v1621, %v1626
        %s1629 = sld [smem:[#allocation5 + $0x43]]
        %v1630 = vstv %s1629
        %v1631 = vmul.f32 %v1630, %v219
        %v1633 = vrot.slane %v1631, 1
        %1634 = vrot.lane.b32.xlu0 %v1633, 127
        %v1635 = vpop.permute.xlu0 %1634
        %v1637 = vadd.f32 %v1628, %v1635
        %s1638 = sld [smem:[#allocation5 + $0x44]]
        %v1639 = vstv %s1638
        %v1640 = vmul.f32 %v1639, %v220
        %v1642 = vrot.slane %v1640, 1
        %1643 = vrot.lane.b32.xlu0 %v1642, 127
        %v1644 = vpop.permute.xlu0 %1643
        %v1646 = vadd.f32 %v1637, %v1644
        %s1647 = sld [smem:[#allocation5 + $0x45]]
        %v1648 = vstv %s1647
        %v1649 = vmul.f32 %v1648, %v219
        %v1651 = vrot.slane %v1649, 1
        %1652 = vrot.lane.b32.xlu0 %v1651, 126
        %v1653 = vpop.permute.xlu0 %1652
        %v1655 = vadd.f32 %v1646, %v1653
        %s1656 = sld [smem:[#allocation5 + $0x46]]
        %v1657 = vstv %s1656
        %v1658 = vmul.f32 %v1657, %v217
        %v1660 = vrot.slane %v1658, 2
        %v1662 = vadd.f32 %v1655, %v1660
        %s1663 = sld [smem:[#allocation5 + $0x47]]
        %v1664 = vstv %s1663
        %v1665 = vmul.f32 %v1664, %v218
        %v1667 = vrot.slane %v1665, 2
        %v1669 = vadd.f32 %v1662, %v1667
        %s1670 = sld [smem:[#allocation5 + $0x48]]
        %v1671 = vstv %s1670
        %v1672 = vmul.f32 %v1671, %v217
        %v1674 = vrot.slane %v1672, 2
        %1675 = vrot.lane.b32.xlu0 %v1674, 127
        %v1676 = vpop.permute.xlu0 %1675
        %v1678 = vadd.f32 %v1669, %v1676
        %s1679 = sld [smem:[#allocation5 + $0x49]]
        %v1680 = vstv %s1679
        %v1681 = vmul.f32 %v1680, %v218
        %v1683 = vrot.slane %v1681, 2
        %1684 = vrot.lane.b32.xlu0 %v1683, 127
        %v1685 = vpop.permute.xlu0 %1684
        %v1687 = vadd.f32 %v1678, %v1685
        %s1688 = sld [smem:[#allocation5 + $0x4a]]
        %v1689 = vstv %s1688
        %v1690 = vmul.f32 %v1689, %v217
        %v1692 = vrot.slane %v1690, 2
        %1693 = vrot.lane.b32.xlu0 %v1692, 126
        %v1694 = vpop.permute.xlu0 %1693
        %v1696 = vadd.f32 %v1687, %v1694
        %v1697 = vmul.f32 %v1512, %v218
        %v1698 = vmul.f32 %v1515, %v217
        %1700 = vrot.lane.b32.xlu0 %v1698, 127
        %v1701 = vpop.permute.xlu0 %1700
        %v1703 = vadd.f32 %v1697, %v1701
        %v1704 = vmul.f32 %v1519, %v218
        %1706 = vrot.lane.b32.xlu0 %v1704, 127
        %v1707 = vpop.permute.xlu0 %1706
        %v1709 = vadd.f32 %v1703, %v1707
        %v1710 = vmul.f32 %v1527, %v217
        %1712 = vrot.lane.b32.xlu0 %v1710, 126
        %v1713 = vpop.permute.xlu0 %1712
        %v1715 = vadd.f32 %v1709, %v1713
        %v1716 = vmul.f32 %v1535, %v218
        %1718 = vrot.lane.b32.xlu0 %v1716, 126
        %v1719 = vpop.permute.xlu0 %1718
        %v1721 = vadd.f32 %v1715, %v1719
        %v1722 = vmul.f32 %v1543, %v220
        %v1723 = vadd.f32 %v1721, %v1722
        %v1724 = vmul.f32 %v1547, %v219
        %1726 = vrot.lane.b32.xlu0 %v1724, 127
        %v1727 = vpop.permute.xlu0 %1726
        %v1729 = vadd.f32 %v1723, %v1727
        %v1730 = vmul.f32 %v1551, %v220
        %1732 = vrot.lane.b32.xlu0 %v1730, 127
        %v1733 = vpop.permute.xlu0 %1732
        %v1735 = vadd.f32 %v1729, %v1733
        %v1736 = vmul.f32 %v1559, %v219
        %1738 = vrot.lane.b32.xlu0 %v1736, 126
        %v1739 = vpop.permute.xlu0 %1738
        %v1741 = vadd.f32 %v1735, %v1739
        %v1742 = vmul.f32 %v1567, %v220
        %1744 = vrot.lane.b32.xlu0 %v1742, 126
        %v1745 = vpop.permute.xlu0 %1744
        %v1747 = vadd.f32 %v1741, %v1745
        %v1748 = vmul.f32 %v1575, %v218
        %v1750 = vrot.slane %v1748, 1
        %v1752 = vadd.f32 %v1747, %v1750
        %v1753 = vmul.f32 %v1582, %v217
        %v1755 = vrot.slane %v1753, 1
        %1756 = vrot.lane.b32.xlu0 %v1755, 127
        %v1757 = vpop.permute.xlu0 %1756
        %v1759 = vadd.f32 %v1752, %v1757
        %v1760 = vmul.f32 %v1589, %v218
        %v1762 = vrot.slane %v1760, 1
        %1763 = vrot.lane.b32.xlu0 %v1762, 127
        %v1764 = vpop.permute.xlu0 %1763
        %v1766 = vadd.f32 %v1759, %v1764
        %v1767 = vmul.f32 %v1598, %v217
        %v1769 = vrot.slane %v1767, 1
        %1770 = vrot.lane.b32.xlu0 %v1769, 126
        %v1771 = vpop.permute.xlu0 %1770
        %v1773 = vadd.f32 %v1766, %v1771
        %v1774 = vmul.f32 %v1607, %v218
        %v1776 = vrot.slane %v1774, 1
        %1777 = vrot.lane.b32.xlu0 %v1776, 126
        %v1778 = vpop.permute.xlu0 %1777
        %v1780 = vadd.f32 %v1773, %v1778
        %v1781 = vmul.f32 %v1616, %v220
        %v1783 = vrot.slane %v1781, 1
        %v1785 = vadd.f32 %v1780, %v1783
        %v1786 = vmul.f32 %v1623, %v219
        %v1788 = vrot.slane %v1786, 1
        %1789 = vrot.lane.b32.xlu0 %v1788, 127
        %v1790 = vpop.permute.xlu0 %1789
        %v1792 = vadd.f32 %v1785, %v1790
        %v1793 = vmul.f32 %v1630, %v220
        %v1795 = vrot.slane %v1793, 1
        %1796 = vrot.lane.b32.xlu0 %v1795, 127
        %v1797 = vpop.permute.xlu0 %1796
        %v1799 = vadd.f32 %v1792, %v1797
        %v1800 = vmul.f32 %v1639, %v219
        %v1802 = vrot.slane %v1800, 1
        %1803 = vrot.lane.b32.xlu0 %v1802, 126
        %v1804 = vpop.permute.xlu0 %1803
        %v1806 = vadd.f32 %v1799, %v1804
        %v1807 = vmul.f32 %v1648, %v220
        %v1809 = vrot.slane %v1807, 1
        %1810 = vrot.lane.b32.xlu0 %v1809, 126
        %v1811 = vpop.permute.xlu0 %1810
        %v1813 = vadd.f32 %v1806, %v1811
        %v1814 = vmul.f32 %v1657, %v218
        %v1816 = vrot.slane %v1814, 2
        %v1818 = vadd.f32 %v1813, %v1816
        %v1819 = vmul.f32 %v1664, %v217
        %v1821 = vrot.slane %v1819, 2
        %1822 = vrot.lane.b32.xlu0 %v1821, 127
        %v1823 = vpop.permute.xlu0 %1822
        %v1825 = vadd.f32 %v1818, %v1823
        %v1826 = vmul.f32 %v1671, %v218
        %v1828 = vrot.slane %v1826, 2
        %1829 = vrot.lane.b32.xlu0 %v1828, 127
        %v1830 = vpop.permute.xlu0 %1829
        %v1832 = vadd.f32 %v1825, %v1830
        %v1833 = vmul.f32 %v1680, %v217
        %v1835 = vrot.slane %v1833, 2
        %1836 = vrot.lane.b32.xlu0 %v1835, 126
        %v1837 = vpop.permute.xlu0 %1836
        %v1839 = vadd.f32 %v1832, %v1837
        %v1840 = vmul.f32 %v1689, %v218
        %v1842 = vrot.slane %v1840, 2
        %1843 = vrot.lane.b32.xlu0 %v1842, 126
        %v1844 = vpop.permute.xlu0 %1843
        %v1846 = vadd.f32 %v1839, %v1844
        %v1847 = vmul.f32 %v1512, %v219
        %v1848 = vmul.f32 %v1515, %v220
        %v1849 = vadd.f32 %v1847, %v1848
        %v1850 = vmul.f32 %v1519, %v219
        %1852 = vrot.lane.b32.xlu0 %v1850, 127
        %v1853 = vpop.permute.xlu0 %1852
        %v1855 = vadd.f32 %v1849, %v1853
        %v1856 = vmul.f32 %v1527, %v220
        %1858 = vrot.lane.b32.xlu0 %v1856, 127
        %v1859 = vpop.permute.xlu0 %1858
        %v1861 = vadd.f32 %v1855, %v1859
        %v1862 = vmul.f32 %v1535, %v219
        %1864 = vrot.lane.b32.xlu0 %v1862, 126
        %v1865 = vpop.permute.xlu0 %1864
        %v1867 = vadd.f32 %v1861, %v1865
        %v1868 = vmul.f32 %v1543, %v217
        %v1870 = vrot.slane %v1868, 1
        %v1872 = vadd.f32 %v1867, %v1870
        %v1873 = vmul.f32 %v1547, %v218
        %v1875 = vrot.slane %v1873, 1
        %v1877 = vadd.f32 %v1872, %v1875
        %v1878 = vmul.f32 %v1551, %v217
        %v1880 = vrot.slane %v1878, 1
        %1881 = vrot.lane.b32.xlu0 %v1880, 127
        %v1882 = vpop.permute.xlu0 %1881
        %v1884 = vadd.f32 %v1877, %v1882
        %v1885 = vmul.f32 %v1559, %v218
        %v1887 = vrot.slane %v1885, 1
        %1888 = vrot.lane.b32.xlu0 %v1887, 127
        %v1889 = vpop.permute.xlu0 %1888
        %v1891 = vadd.f32 %v1884, %v1889
        %v1892 = vmul.f32 %v1567, %v217
        %v1894 = vrot.slane %v1892, 1
        %1895 = vrot.lane.b32.xlu0 %v1894, 126
        %v1896 = vpop.permute.xlu0 %1895
        %v1898 = vadd.f32 %v1891, %v1896
        %v1899 = vmul.f32 %v1575, %v219
        %v1901 = vrot.slane %v1899, 1
        %v1903 = vadd.f32 %v1898, %v1901
        %v1904 = vmul.f32 %v1582, %v220
        %v1906 = vrot.slane %v1904, 1
        %v1908 = vadd.f32 %v1903, %v1906
        %v1909 = vmul.f32 %v1589, %v219
        %v1911 = vrot.slane %v1909, 1
        %1912 = vrot.lane.b32.xlu0 %v1911, 127
        %v1913 = vpop.permute.xlu0 %1912
        %v1915 = vadd.f32 %v1908, %v1913
        %v1916 = vmul.f32 %v1598, %v220
        %v1918 = vrot.slane %v1916, 1
        %1919 = vrot.lane.b32.xlu0 %v1918, 127
        %v1920 = vpop.permute.xlu0 %1919
        %v1922 = vadd.f32 %v1915, %v1920
        %v1923 = vmul.f32 %v1607, %v219
        %v1925 = vrot.slane %v1923, 1
        %1926 = vrot.lane.b32.xlu0 %v1925, 126
        %v1927 = vpop.permute.xlu0 %1926
        %v1929 = vadd.f32 %v1922, %v1927
        %v1930 = vmul.f32 %v1616, %v217
        %v1932 = vrot.slane %v1930, 2
        %v1934 = vadd.f32 %v1929, %v1932
        %v1935 = vmul.f32 %v1623, %v218
        %v1937 = vrot.slane %v1935, 2
        %v1939 = vadd.f32 %v1934, %v1937
        %v1940 = vmul.f32 %v1630, %v217
        %v1942 = vrot.slane %v1940, 2
        %1943 = vrot.lane.b32.xlu0 %v1942, 127
        %v1944 = vpop.permute.xlu0 %1943
        %v1946 = vadd.f32 %v1939, %v1944
        %v1947 = vmul.f32 %v1639, %v218
        %v1949 = vrot.slane %v1947, 2
        %1950 = vrot.lane.b32.xlu0 %v1949, 127
        %v1951 = vpop.permute.xlu0 %1950
        %v1953 = vadd.f32 %v1946, %v1951
        %v1954 = vmul.f32 %v1648, %v217
        %v1956 = vrot.slane %v1954, 2
        %1957 = vrot.lane.b32.xlu0 %v1956, 126
        %v1958 = vpop.permute.xlu0 %1957
        %v1960 = vadd.f32 %v1953, %v1958
        %v1961 = vmul.f32 %v1657, %v219
        %v1963 = vrot.slane %v1961, 2
        %v1965 = vadd.f32 %v1960, %v1963
        %v1966 = vmul.f32 %v1664, %v220
        %v1968 = vrot.slane %v1966, 2
        %v1970 = vadd.f32 %v1965, %v1968
        %v1971 = vmul.f32 %v1671, %v219
        %v1973 = vrot.slane %v1971, 2
        %1974 = vrot.lane.b32.xlu0 %v1973, 127
        %v1975 = vpop.permute.xlu0 %1974
        %v1977 = vadd.f32 %v1970, %v1975
        %v1978 = vmul.f32 %v1680, %v220
        %v1980 = vrot.slane %v1978, 2
        %1981 = vrot.lane.b32.xlu0 %v1980, 127
        %v1982 = vpop.permute.xlu0 %1981
        %v1984 = vadd.f32 %v1977, %v1982
        %v1985 = vmul.f32 %v1689, %v219
        %v1987 = vrot.slane %v1985, 2
        %1988 = vrot.lane.b32.xlu0 %v1987, 126
        %v1989 = vpop.permute.xlu0 %1988
        %v1991 = vadd.f32 %v1984, %v1989
        %v1992 = vmul.f32 %v1512, %v220
        %v1993 = vmul.f32 %v1515, %v219
        %1995 = vrot.lane.b32.xlu0 %v1993, 127
        %v1996 = vpop.permute.xlu0 %1995
        %v1998 = vadd.f32 %v1992, %v1996
        %v1999 = vmul.f32 %v1519, %v220
        %2001 = vrot.lane.b32.xlu0 %v1999, 127
        %v2002 = vpop.permute.xlu0 %2001
        %v2004 = vadd.f32 %v1998, %v2002
        %v2005 = vmul.f32 %v1527, %v219
        %2007 = vrot.lane.b32.xlu0 %v2005, 126
        %v2008 = vpop.permute.xlu0 %2007
        %v2010 = vadd.f32 %v2004, %v2008
        %v2011 = vmul.f32 %v1535, %v220
        %2013 = vrot.lane.b32.xlu0 %v2011, 126
        %v2014 = vpop.permute.xlu0 %2013
        %v2016 = vadd.f32 %v2010, %v2014
        %v2017 = vmul.f32 %v1543, %v218
        %v2019 = vrot.slane %v2017, 1
        %v2021 = vadd.f32 %v2016, %v2019
        %v2022 = vmul.f32 %v1547, %v217
        %v2024 = vrot.slane %v2022, 1
        %2025 = vrot.lane.b32.xlu0 %v2024, 127
        %v2026 = vpop.permute.xlu0 %2025
        %v2028 = vadd.f32 %v2021, %v2026
        %v2029 = vmul.f32 %v1551, %v218
        %v2031 = vrot.slane %v2029, 1
        %2032 = vrot.lane.b32.xlu0 %v2031, 127
        %v2033 = vpop.permute.xlu0 %2032
        %v2035 = vadd.f32 %v2028, %v2033
        %v2036 = vmul.f32 %v1559, %v217
        %v2038 = vrot.slane %v2036, 1
        %2039 = vrot.lane.b32.xlu0 %v2038, 126
        %v2040 = vpop.permute.xlu0 %2039
        %v2042 = vadd.f32 %v2035, %v2040
        %v2043 = vmul.f32 %v1567, %v218
        %v2045 = vrot.slane %v2043, 1
        %2046 = vrot.lane.b32.xlu0 %v2045, 126
        %v2047 = vpop.permute.xlu0 %2046
        %v2049 = vadd.f32 %v2042, %v2047
        %v2050 = vmul.f32 %v1575, %v220
        %v2052 = vrot.slane %v2050, 1
        %v2054 = vadd.f32 %v2049, %v2052
        %v2055 = vmul.f32 %v1582, %v219
        %v2057 = vrot.slane %v2055, 1
        %2058 = vrot.lane.b32.xlu0 %v2057, 127
        %v2059 = vpop.permute.xlu0 %2058
        %v2061 = vadd.f32 %v2054, %v2059
        %v2062 = vmul.f32 %v1589, %v220
        %v2064 = vrot.slane %v2062, 1
        %2065 = vrot.lane.b32.xlu0 %v2064, 127
        %v2066 = vpop.permute.xlu0 %2065
        %v2068 = vadd.f32 %v2061, %v2066
        %v2069 = vmul.f32 %v1598, %v219
        %v2071 = vrot.slane %v2069, 1
        %2072 = vrot.lane.b32.xlu0 %v2071, 126
        %v2073 = vpop.permute.xlu0 %2072
        %v2075 = vadd.f32 %v2068, %v2073
        %v2076 = vmul.f32 %v1607, %v220
        %v2078 = vrot.slane %v2076, 1
        %2079 = vrot.lane.b32.xlu0 %v2078, 126
        %v2080 = vpop.permute.xlu0 %2079
        %v2082 = vadd.f32 %v2075, %v2080
        %v2083 = vmul.f32 %v1616, %v218
        %v2085 = vrot.slane %v2083, 2
        %v2087 = vadd.f32 %v2082, %v2085
        %v2088 = vmul.f32 %v1623, %v217
        %v2090 = vrot.slane %v2088, 2
        %2091 = vrot.lane.b32.xlu0 %v2090, 127
        %v2092 = vpop.permute.xlu0 %2091
        %v2094 = vadd.f32 %v2087, %v2092
        %v2095 = vmul.f32 %v1630, %v218
        %v2097 = vrot.slane %v2095, 2
        %2098 = vrot.lane.b32.xlu0 %v2097, 127
        %v2099 = vpop.permute.xlu0 %2098
        %v2101 = vadd.f32 %v2094, %v2099
        %v2102 = vmul.f32 %v1639, %v217
        %v2104 = vrot.slane %v2102, 2
        %2105 = vrot.lane.b32.xlu0 %v2104, 126
        %v2106 = vpop.permute.xlu0 %2105
        %v2108 = vadd.f32 %v2101, %v2106
        %v2109 = vmul.f32 %v1648, %v218
        %v2111 = vrot.slane %v2109, 2
        %2112 = vrot.lane.b32.xlu0 %v2111, 126
        %v2113 = vpop.permute.xlu0 %2112
        %v2115 = vadd.f32 %v2108, %v2113
        %v2116 = vmul.f32 %v1657, %v220
        %v2118 = vrot.slane %v2116, 2
        %v2120 = vadd.f32 %v2115, %v2118
        %v2121 = vmul.f32 %v1664, %v219
        %v2123 = vrot.slane %v2121, 2
        %2124 = vrot.lane.b32.xlu0 %v2123, 127
        %v2125 = vpop.permute.xlu0 %2124
        %v2127 = vadd.f32 %v2120, %v2125
        %v2128 = vmul.f32 %v1671, %v220
        %v2130 = vrot.slane %v2128, 2
        %2131 = vrot.lane.b32.xlu0 %v2130, 127
        %v2132 = vpop.permute.xlu0 %2131
        %v2134 = vadd.f32 %v2127, %v2132
        %v2135 = vmul.f32 %v1680, %v219
        %v2137 = vrot.slane %v2135, 2
        %2138 = vrot.lane.b32.xlu0 %v2137, 126
        %v2139 = vpop.permute.xlu0 %2138
        %v2141 = vadd.f32 %v2134, %v2139
        %v2142 = vmul.f32 %v1689, %v220
        %v2144 = vrot.slane %v2142, 2
        %2145 = vrot.lane.b32.xlu0 %v2144, 126
        %v2146 = vpop.permute.xlu0 %2145
        %v2148 = vadd.f32 %v2141, %v2146
        %v2149 = vmax.f32 %v1696, %v1846
        %v2150 = vmax.f32 %v1991, %v2148
        %v2151 = vmax.f32 %v2149, %v2150
        %s2152 = sld [smem:[#allocation6 + $0x2]]
        %v2153 = vstv %s2152
        %v2154 = vadd.f32 %v2151, %v2153
        %v2155 = vmax.f32 %v2154, 0.0
        %s2156 = sld [smem:[#allocation5 + $0x4b]]
        %v2157 = vstv %s2156
        %v2158 = vmul.f32 %v2157, %v217
        %s2159 = sld [smem:[#allocation5 + $0x4c]]
        %v2160 = vstv %s2159
        %v2161 = vmul.f32 %v2160, %v218
        %v2162 = vadd.f32 %v2158, %v2161
        %s2163 = sld [smem:[#allocation5 + $0x4d]]
        %v2164 = vstv %s2163
        %v2165 = vmul.f32 %v2164, %v217
        %2167 = vrot.lane.b32.xlu0 %v2165, 127
        %v2168 = vpop.permute.xlu0 %2167
        %v2170 = vadd.f32 %v2162, %v2168
        %s2171 = sld [smem:[#allocation5 + $0x4e]]
        %v2172 = vstv %s2171
        %v2173 = vmul.f32 %v2172, %v218
        %2175 = vrot.lane.b32.xlu0 %v2173, 127
        %v2176 = vpop.permute.xlu0 %2175
        %v2178 = vadd.f32 %v2170, %v2176
        %s2179 = sld [smem:[#allocation5 + $0x4f]]
        %v2180 = vstv %s2179
        %v2181 = vmul.f32 %v2180, %v217
        %2183 = vrot.lane.b32.xlu0 %v2181, 126
        %v2184 = vpop.permute.xlu0 %2183
        %v2186 = vadd.f32 %v2178, %v2184
        %s2187 = sld [smem:[#allocation5 + $0x50]]
        %v2188 = vstv %s2187
        %v2189 = vmul.f32 %v2188, %v219
        %v2190 = vadd.f32 %v2186, %v2189
        %s2191 = sld [smem:[#allocation5 + $0x51]]
        %v2192 = vstv %s2191
        %v2193 = vmul.f32 %v2192, %v220
        %v2194 = vadd.f32 %v2190, %v2193
        %s2195 = sld [smem:[#allocation5 + $0x52]]
        %v2196 = vstv %s2195
        %v2197 = vmul.f32 %v2196, %v219
        %2199 = vrot.lane.b32.xlu0 %v2197, 127
        %v2200 = vpop.permute.xlu0 %2199
        %v2202 = vadd.f32 %v2194, %v2200
        %s2203 = sld [smem:[#allocation5 + $0x53]]
        %v2204 = vstv %s2203
        %v2205 = vmul.f32 %v2204, %v220
        %2207 = vrot.lane.b32.xlu0 %v2205, 127
        %v2208 = vpop.permute.xlu0 %2207
        %v2210 = vadd.f32 %v2202, %v2208
        %s2211 = sld [smem:[#allocation5 + $0x54]]
        %v2212 = vstv %s2211
        %v2213 = vmul.f32 %v2212, %v219
        %2215 = vrot.lane.b32.xlu0 %v2213, 126
        %v2216 = vpop.permute.xlu0 %2215
        %v2218 = vadd.f32 %v2210, %v2216
        %s2219 = sld [smem:[#allocation5 + $0x55]]
        %v2220 = vstv %s2219
        %v2221 = vmul.f32 %v2220, %v217
        %v2223 = vrot.slane %v2221, 1
        %v2225 = vadd.f32 %v2218, %v2223
        %s2226 = sld [smem:[#allocation5 + $0x56]]
        %v2227 = vstv %s2226
        %v2228 = vmul.f32 %v2227, %v218
        %v2230 = vrot.slane %v2228, 1
        %v2232 = vadd.f32 %v2225, %v2230
        %s2233 = sld [smem:[#allocation5 + $0x57]]
        %v2234 = vstv %s2233
        %v2235 = vmul.f32 %v2234, %v217
        %v2237 = vrot.slane %v2235, 1
        %2238 = vrot.lane.b32.xlu0 %v2237, 127
        %v2239 = vpop.permute.xlu0 %2238
        %v2241 = vadd.f32 %v2232, %v2239
        %s2242 = sld [smem:[#allocation5 + $0x58]]
        %v2243 = vstv %s2242
        %v2244 = vmul.f32 %v2243, %v218
        %v2246 = vrot.slane %v2244, 1
        %2247 = vrot.lane.b32.xlu0 %v2246, 127
        %v2248 = vpop.permute.xlu0 %2247
        %v2250 = vadd.f32 %v2241, %v2248
        %s2251 = sld [smem:[#allocation5 + $0x59]]
        %v2252 = vstv %s2251
        %v2253 = vmul.f32 %v2252, %v217
        %v2255 = vrot.slane %v2253, 1
        %2256 = vrot.lane.b32.xlu0 %v2255, 126
        %v2257 = vpop.permute.xlu0 %2256
        %v2259 = vadd.f32 %v2250, %v2257
        %s2260 = sld [smem:[#allocation5 + $0x5a]]
        %v2261 = vstv %s2260
        %v2262 = vmul.f32 %v2261, %v219
        %v2264 = vrot.slane %v2262, 1
        %v2266 = vadd.f32 %v2259, %v2264
        %s2267 = sld [smem:[#allocation5 + $0x5b]]
        %v2268 = vstv %s2267
        %v2269 = vmul.f32 %v2268, %v220
        %v2271 = vrot.slane %v2269, 1
        %v2273 = vadd.f32 %v2266, %v2271
        %s2274 = sld [smem:[#allocation5 + $0x5c]]
        %v2275 = vstv %s2274
        %v2276 = vmul.f32 %v2275, %v219
        %v2278 = vrot.slane %v2276, 1
        %2279 = vrot.lane.b32.xlu0 %v2278, 127
        %v2280 = vpop.permute.xlu0 %2279
        %v2282 = vadd.f32 %v2273, %v2280
        %s2283 = sld [smem:[#allocation5 + $0x5d]]
        %v2284 = vstv %s2283
        %v2285 = vmul.f32 %v2284, %v220
        %v2287 = vrot.slane %v2285, 1
        %2288 = vrot.lane.b32.xlu0 %v2287, 127
        %v2289 = vpop.permute.xlu0 %2288
        %v2291 = vadd.f32 %v2282, %v2289
        %s2292 = sld [smem:[#allocation5 + $0x5e]]
        %v2293 = vstv %s2292
        %v2294 = vmul.f32 %v2293, %v219
        %v2296 = vrot.slane %v2294, 1
        %2297 = vrot.lane.b32.xlu0 %v2296, 126
        %v2298 = vpop.permute.xlu0 %2297
        %v2300 = vadd.f32 %v2291, %v2298
        %s2301 = sld [smem:[#allocation5 + $0x5f]]
        %v2302 = vstv %s2301
        %v2303 = vmul.f32 %v2302, %v217
        %v2305 = vrot.slane %v2303, 2
        %v2307 = vadd.f32 %v2300, %v2305
        %s2308 = sld [smem:[#allocation5 + $0x60]]
        %v2309 = vstv %s2308
        %v2310 = vmul.f32 %v2309, %v218
        %v2312 = vrot.slane %v2310, 2
        %v2314 = vadd.f32 %v2307, %v2312
        %s2315 = sld [smem:[#allocation5 + $0x61]]
        %v2316 = vstv %s2315
        %v2317 = vmul.f32 %v2316, %v217
        %v2319 = vrot.slane %v2317, 2
        %2320 = vrot.lane.b32.xlu0 %v2319, 127
        %v2321 = vpop.permute.xlu0 %2320
        %v2323 = vadd.f32 %v2314, %v2321
        %s2324 = sld [smem:[#allocation5 + $0x62]]
        %v2325 = vstv %s2324
        %v2326 = vmul.f32 %v2325, %v218
        %v2328 = vrot.slane %v2326, 2
        %2329 = vrot.lane.b32.xlu0 %v2328, 127
        %v2330 = vpop.permute.xlu0 %2329
        %v2332 = vadd.f32 %v2323, %v2330
        %s2333 = sld [smem:[#allocation5 + $0x63]]
        %v2334 = vstv %s2333
        %v2335 = vmul.f32 %v2334, %v217
        %v2337 = vrot.slane %v2335, 2
        %2338 = vrot.lane.b32.xlu0 %v2337, 126
        %v2339 = vpop.permute.xlu0 %2338
        %v2341 = vadd.f32 %v2332, %v2339
        %v2342 = vmul.f32 %v2157, %v218
        %v2343 = vmul.f32 %v2160, %v217
        %2345 = vrot.lane.b32.xlu0 %v2343, 127
        %v2346 = vpop.permute.xlu0 %2345
        %v2348 = vadd.f32 %v2342, %v2346
        %v2349 = vmul.f32 %v2164, %v218
        %2351 = vrot.lane.b32.xlu0 %v2349, 127
        %v2352 = vpop.permute.xlu0 %2351
        %v2354 = vadd.f32 %v2348, %v2352
        %v2355 = vmul.f32 %v2172, %v217
        %2357 = vrot.lane.b32.xlu0 %v2355, 126
        %v2358 = vpop.permute.xlu0 %2357
        %v2360 = vadd.f32 %v2354, %v2358
        %v2361 = vmul.f32 %v2180, %v218
        %2363 = vrot.lane.b32.xlu0 %v2361, 126
        %v2364 = vpop.permute.xlu0 %2363
        %v2366 = vadd.f32 %v2360, %v2364
        %v2367 = vmul.f32 %v2188, %v220
        %v2368 = vadd.f32 %v2366, %v2367
        %v2369 = vmul.f32 %v2192, %v219
        %2371 = vrot.lane.b32.xlu0 %v2369, 127
        %v2372 = vpop.permute.xlu0 %2371
        %v2374 = vadd.f32 %v2368, %v2372
        %v2375 = vmul.f32 %v2196, %v220
        %2377 = vrot.lane.b32.xlu0 %v2375, 127
        %v2378 = vpop.permute.xlu0 %2377
        %v2380 = vadd.f32 %v2374, %v2378
        %v2381 = vmul.f32 %v2204, %v219
        %2383 = vrot.lane.b32.xlu0 %v2381, 126
        %v2384 = vpop.permute.xlu0 %2383
        %v2386 = vadd.f32 %v2380, %v2384
        %v2387 = vmul.f32 %v2212, %v220
        %2389 = vrot.lane.b32.xlu0 %v2387, 126
        %v2390 = vpop.permute.xlu0 %2389
        %v2392 = vadd.f32 %v2386, %v2390
        %v2393 = vmul.f32 %v2220, %v218
        %v2395 = vrot.slane %v2393, 1
        %v2397 = vadd.f32 %v2392, %v2395
        %v2398 = vmul.f32 %v2227, %v217
        %v2400 = vrot.slane %v2398, 1
        %2401 = vrot.lane.b32.xlu0 %v2400, 127
        %v2402 = vpop.permute.xlu0 %2401
        %v2404 = vadd.f32 %v2397, %v2402
        %v2405 = vmul.f32 %v2234, %v218
        %v2407 = vrot.slane %v2405, 1
        %2408 = vrot.lane.b32.xlu0 %v2407, 127
        %v2409 = vpop.permute.xlu0 %2408
        %v2411 = vadd.f32 %v2404, %v2409
        %v2412 = vmul.f32 %v2243, %v217
        %v2414 = vrot.slane %v2412, 1
        %2415 = vrot.lane.b32.xlu0 %v2414, 126
        %v2416 = vpop.permute.xlu0 %2415
        %v2418 = vadd.f32 %v2411, %v2416
        %v2419 = vmul.f32 %v2252, %v218
        %v2421 = vrot.slane %v2419, 1
        %2422 = vrot.lane.b32.xlu0 %v2421, 126
        %v2423 = vpop.permute.xlu0 %2422
        %v2425 = vadd.f32 %v2418, %v2423
        %v2426 = vmul.f32 %v2261, %v220
        %v2428 = vrot.slane %v2426, 1
        %v2430 = vadd.f32 %v2425, %v2428
        %v2431 = vmul.f32 %v2268, %v219
        %v2433 = vrot.slane %v2431, 1
        %2434 = vrot.lane.b32.xlu0 %v2433, 127
        %v2435 = vpop.permute.xlu0 %2434
        %v2437 = vadd.f32 %v2430, %v2435
        %v2438 = vmul.f32 %v2275, %v220
        %v2440 = vrot.slane %v2438, 1
        %2441 = vrot.lane.b32.xlu0 %v2440, 127
        %v2442 = vpop.permute.xlu0 %2441
        %v2444 = vadd.f32 %v2437, %v2442
        %v2445 = vmul.f32 %v2284, %v219
        %v2447 = vrot.slane %v2445, 1
        %2448 = vrot.lane.b32.xlu0 %v2447, 126
        %v2449 = vpop.permute.xlu0 %2448
        %v2451 = vadd.f32 %v2444, %v2449
        %v2452 = vmul.f32 %v2293, %v220
        %v2454 = vrot.slane %v2452, 1
        %2455 = vrot.lane.b32.xlu0 %v2454, 126
        %v2456 = vpop.permute.xlu0 %2455
        %v2458 = vadd.f32 %v2451, %v2456
        %v2459 = vmul.f32 %v2302, %v218
        %v2461 = vrot.slane %v2459, 2
        %v2463 = vadd.f32 %v2458, %v2461
        %v2464 = vmul.f32 %v2309, %v217
        %v2466 = vrot.slane %v2464, 2
        %2467 = vrot.lane.b32.xlu0 %v2466, 127
        %v2468 = vpop.permute.xlu0 %2467
        %v2470 = vadd.f32 %v2463, %v2468
        %v2471 = vmul.f32 %v2316, %v218
        %v2473 = vrot.slane %v2471, 2
        %2474 = vrot.lane.b32.xlu0 %v2473, 127
        %v2475 = vpop.permute.xlu0 %2474
        %v2477 = vadd.f32 %v2470, %v2475
        %v2478 = vmul.f32 %v2325, %v217
        %v2480 = vrot.slane %v2478, 2
        %2481 = vrot.lane.b32.xlu0 %v2480, 126
        %v2482 = vpop.permute.xlu0 %2481
        %v2484 = vadd.f32 %v2477, %v2482
        %v2485 = vmul.f32 %v2334, %v218
        %v2487 = vrot.slane %v2485, 2
        %2488 = vrot.lane.b32.xlu0 %v2487, 126
        %v2489 = vpop.permute.xlu0 %2488
        %v2491 = vadd.f32 %v2484, %v2489
        %v2492 = vmul.f32 %v2157, %v219
        %v2493 = vmul.f32 %v2160, %v220
        %v2494 = vadd.f32 %v2492, %v2493
        %v2495 = vmul.f32 %v2164, %v219
        %2497 = vrot.lane.b32.xlu0 %v2495, 127
        %v2498 = vpop.permute.xlu0 %2497
        %v2500 = vadd.f32 %v2494, %v2498
        %v2501 = vmul.f32 %v2172, %v220
        %2503 = vrot.lane.b32.xlu0 %v2501, 127
        %v2504 = vpop.permute.xlu0 %2503
        %v2506 = vadd.f32 %v2500, %v2504
        %v2507 = vmul.f32 %v2180, %v219
        %2509 = vrot.lane.b32.xlu0 %v2507, 126
        %v2510 = vpop.permute.xlu0 %2509
        %v2512 = vadd.f32 %v2506, %v2510
        %v2513 = vmul.f32 %v2188, %v217
        %v2515 = vrot.slane %v2513, 1
        %v2517 = vadd.f32 %v2512, %v2515
        %v2518 = vmul.f32 %v2192, %v218
        %v2520 = vrot.slane %v2518, 1
        %v2522 = vadd.f32 %v2517, %v2520
        %v2523 = vmul.f32 %v2196, %v217
        %v2525 = vrot.slane %v2523, 1
        %2526 = vrot.lane.b32.xlu0 %v2525, 127
        %v2527 = vpop.permute.xlu0 %2526
        %v2529 = vadd.f32 %v2522, %v2527
        %v2530 = vmul.f32 %v2204, %v218
        %v2532 = vrot.slane %v2530, 1
        %2533 = vrot.lane.b32.xlu0 %v2532, 127
        %v2534 = vpop.permute.xlu0 %2533
        %v2536 = vadd.f32 %v2529, %v2534
        %v2537 = vmul.f32 %v2212, %v217
        %v2539 = vrot.slane %v2537, 1
        %2540 = vrot.lane.b32.xlu0 %v2539, 126
        %v2541 = vpop.permute.xlu0 %2540
        %v2543 = vadd.f32 %v2536, %v2541
        %v2544 = vmul.f32 %v2220, %v219
        %v2546 = vrot.slane %v2544, 1
        %v2548 = vadd.f32 %v2543, %v2546
        %v2549 = vmul.f32 %v2227, %v220
        %v2551 = vrot.slane %v2549, 1
        %v2553 = vadd.f32 %v2548, %v2551
        %v2554 = vmul.f32 %v2234, %v219
        %v2556 = vrot.slane %v2554, 1
        %2557 = vrot.lane.b32.xlu0 %v2556, 127
        %v2558 = vpop.permute.xlu0 %2557
        %v2560 = vadd.f32 %v2553, %v2558
        %v2561 = vmul.f32 %v2243, %v220
        %v2563 = vrot.slane %v2561, 1
        %2564 = vrot.lane.b32.xlu0 %v2563, 127
        %v2565 = vpop.permute.xlu0 %2564
        %v2567 = vadd.f32 %v2560, %v2565
        %v2568 = vmul.f32 %v2252, %v219
        %v2570 = vrot.slane %v2568, 1
        %2571 = vrot.lane.b32.xlu0 %v2570, 126
        %v2572 = vpop.permute.xlu0 %2571
        %v2574 = vadd.f32 %v2567, %v2572
        %v2575 = vmul.f32 %v2261, %v217
        %v2577 = vrot.slane %v2575, 2
        %v2579 = vadd.f32 %v2574, %v2577
        %v2580 = vmul.f32 %v2268, %v218
        %v2582 = vrot.slane %v2580, 2
        %v2584 = vadd.f32 %v2579, %v2582
        %v2585 = vmul.f32 %v2275, %v217
        %v2587 = vrot.slane %v2585, 2
        %2588 = vrot.lane.b32.xlu0 %v2587, 127
        %v2589 = vpop.permute.xlu0 %2588
        %v2591 = vadd.f32 %v2584, %v2589
        %v2592 = vmul.f32 %v2284, %v218
        %v2594 = vrot.slane %v2592, 2
        %2595 = vrot.lane.b32.xlu0 %v2594, 127
        %v2596 = vpop.permute.xlu0 %2595
        %v2598 = vadd.f32 %v2591, %v2596
        %v2599 = vmul.f32 %v2293, %v217
        %v2601 = vrot.slane %v2599, 2
        %2602 = vrot.lane.b32.xlu0 %v2601, 126
        %v2603 = vpop.permute.xlu0 %2602
        %v2605 = vadd.f32 %v2598, %v2603
        %v2606 = vmul.f32 %v2302, %v219
        %v2608 = vrot.slane %v2606, 2
        %v2610 = vadd.f32 %v2605, %v2608
        %v2611 = vmul.f32 %v2309, %v220
        %v2613 = vrot.slane %v2611, 2
        %v2615 = vadd.f32 %v2610, %v2613
        %v2616 = vmul.f32 %v2316, %v219
        %v2618 = vrot.slane %v2616, 2
        %2619 = vrot.lane.b32.xlu0 %v2618, 127
        %v2620 = vpop.permute.xlu0 %2619
        %v2622 = vadd.f32 %v2615, %v2620
        %v2623 = vmul.f32 %v2325, %v220
        %v2625 = vrot.slane %v2623, 2
        %2626 = vrot.lane.b32.xlu0 %v2625, 127
        %v2627 = vpop.permute.xlu0 %2626
        %v2629 = vadd.f32 %v2622, %v2627
        %v2630 = vmul.f32 %v2334, %v219
        %v2632 = vrot.slane %v2630, 2
        %2633 = vrot.lane.b32.xlu0 %v2632, 126
        %v2634 = vpop.permute.xlu0 %2633
        %v2636 = vadd.f32 %v2629, %v2634
        %v2637 = vmul.f32 %v2157, %v220
        %v2638 = vmul.f32 %v2160, %v219
        %2640 = vrot.lane.b32.xlu0 %v2638, 127
        %v2641 = vpop.permute.xlu0 %2640
        %v2643 = vadd.f32 %v2637, %v2641
        %v2644 = vmul.f32 %v2164, %v220
        %2646 = vrot.lane.b32.xlu0 %v2644, 127
        %v2647 = vpop.permute.xlu0 %2646
        %v2649 = vadd.f32 %v2643, %v2647
        %v2650 = vmul.f32 %v2172, %v219
        %2652 = vrot.lane.b32.xlu0 %v2650, 126
        %v2653 = vpop.permute.xlu0 %2652
        %v2655 = vadd.f32 %v2649, %v2653
        %v2656 = vmul.f32 %v2180, %v220
        %2658 = vrot.lane.b32.xlu0 %v2656, 126
        %v2659 = vpop.permute.xlu0 %2658
        %v2661 = vadd.f32 %v2655, %v2659
        %v2662 = vmul.f32 %v2188, %v218
        %v2664 = vrot.slane %v2662, 1
        %v2666 = vadd.f32 %v2661, %v2664
        %v2667 = vmul.f32 %v2192, %v217
        %v2669 = vrot.slane %v2667, 1
        %2670 = vrot.lane.b32.xlu0 %v2669, 127
        %v2671 = vpop.permute.xlu0 %2670
        %v2673 = vadd.f32 %v2666, %v2671
        %v2674 = vmul.f32 %v2196, %v218
        %v2676 = vrot.slane %v2674, 1
        %2677 = vrot.lane.b32.xlu0 %v2676, 127
        %v2678 = vpop.permute.xlu0 %2677
        %v2680 = vadd.f32 %v2673, %v2678
        %v2681 = vmul.f32 %v2204, %v217
        %v2683 = vrot.slane %v2681, 1
        %2684 = vrot.lane.b32.xlu0 %v2683, 126
        %v2685 = vpop.permute.xlu0 %2684
        %v2687 = vadd.f32 %v2680, %v2685
        %v2688 = vmul.f32 %v2212, %v218
        %v2690 = vrot.slane %v2688, 1
        %2691 = vrot.lane.b32.xlu0 %v2690, 126
        %v2692 = vpop.permute.xlu0 %2691
        %v2694 = vadd.f32 %v2687, %v2692
        %v2695 = vmul.f32 %v2220, %v220
        %v2697 = vrot.slane %v2695, 1
        %v2699 = vadd.f32 %v2694, %v2697
        %v2700 = vmul.f32 %v2227, %v219
        %v2702 = vrot.slane %v2700, 1
        %2703 = vrot.lane.b32.xlu0 %v2702, 127
        %v2704 = vpop.permute.xlu0 %2703
        %v2706 = vadd.f32 %v2699, %v2704
        %v2707 = vmul.f32 %v2234, %v220
        %v2709 = vrot.slane %v2707, 1
        %2710 = vrot.lane.b32.xlu0 %v2709, 127
        %v2711 = vpop.permute.xlu0 %2710
        %v2713 = vadd.f32 %v2706, %v2711
        %v2714 = vmul.f32 %v2243, %v219
        %v2716 = vrot.slane %v2714, 1
        %2717 = vrot.lane.b32.xlu0 %v2716, 126
        %v2718 = vpop.permute.xlu0 %2717
        %v2720 = vadd.f32 %v2713, %v2718
        %v2721 = vmul.f32 %v2252, %v220
        %v2723 = vrot.slane %v2721, 1
        %2724 = vrot.lane.b32.xlu0 %v2723, 126
        %v2725 = vpop.permute.xlu0 %2724
        %v2727 = vadd.f32 %v2720, %v2725
        %v2728 = vmul.f32 %v2261, %v218
        %v2730 = vrot.slane %v2728, 2
        %v2732 = vadd.f32 %v2727, %v2730
        %v2733 = vmul.f32 %v2268, %v217
        %v2735 = vrot.slane %v2733, 2
        %2736 = vrot.lane.b32.xlu0 %v2735, 127
        %v2737 = vpop.permute.xlu0 %2736
        %v2739 = vadd.f32 %v2732, %v2737
        %v2740 = vmul.f32 %v2275, %v218
        %v2742 = vrot.slane %v2740, 2
        %2743 = vrot.lane.b32.xlu0 %v2742, 127
        %v2744 = vpop.permute.xlu0 %2743
        %v2746 = vadd.f32 %v2739, %v2744
        %v2747 = vmul.f32 %v2284, %v217
        %v2749 = vrot.slane %v2747, 2
        %2750 = vrot.lane.b32.xlu0 %v2749, 126
        %v2751 = vpop.permute.xlu0 %2750
        %v2753 = vadd.f32 %v2746, %v2751
        %v2754 = vmul.f32 %v2293, %v218
        %v2756 = vrot.slane %v2754, 2
        %2757 = vrot.lane.b32.xlu0 %v2756, 126
        %v2758 = vpop.permute.xlu0 %2757
        %v2760 = vadd.f32 %v2753, %v2758
        %v2761 = vmul.f32 %v2302, %v220
        %v2763 = vrot.slane %v2761, 2
        %v2765 = vadd.f32 %v2760, %v2763
        %v2766 = vmul.f32 %v2309, %v219
        %v2768 = vrot.slane %v2766, 2
        %2769 = vrot.lane.b32.xlu0 %v2768, 127
        %v2770 = vpop.permute.xlu0 %2769
        %v2772 = vadd.f32 %v2765, %v2770
        %v2773 = vmul.f32 %v2316, %v220
        %v2775 = vrot.slane %v2773, 2
        %2776 = vrot.lane.b32.xlu0 %v2775, 127
        %v2777 = vpop.permute.xlu0 %2776
        %v2779 = vadd.f32 %v2772, %v2777
        %v2780 = vmul.f32 %v2325, %v219
        %v2782 = vrot.slane %v2780, 2
        %2783 = vrot.lane.b32.xlu0 %v2782, 126
        %v2784 = vpop.permute.xlu0 %2783
        %v2786 = vadd.f32 %v2779, %v2784
        %v2787 = vmul.f32 %v2334, %v220
        %v2789 = vrot.slane %v2787, 2
        %2790 = vrot.lane.b32.xlu0 %v2789, 126
        %v2791 = vpop.permute.xlu0 %2790
        %v2793 = vadd.f32 %v2786, %v2791
        %v2794 = vmax.f32 %v2341, %v2491
        %v2795 = vmax.f32 %v2636, %v2793
        %v2796 = vmax.f32 %v2794, %v2795
        %s2797 = sld [smem:[#allocation6 + $0x3]]
        %v2798 = vstv %s2797
        %v2799 = vadd.f32 %v2796, %v2798
        %v2800 = vmax.f32 %v2799, 0.0
        %s2801 = sld [smem:[#allocation5 + $0x64]]
        %v2802 = vstv %s2801
        %v2803 = vmul.f32 %v2802, %v217
        %s2804 = sld [smem:[#allocation5 + $0x65]]
        %v2805 = vstv %s2804
        %v2806 = vmul.f32 %v2805, %v218
        %v2807 = vadd.f32 %v2803, %v2806
        %s2808 = sld [smem:[#allocation5 + $0x66]]
        %v2809 = vstv %s2808
        %v2810 = vmul.f32 %v2809, %v217
        %2812 = vrot.lane.b32.xlu0 %v2810, 127
        %v2813 = vpop.permute.xlu0 %2812
        %v2815 = vadd.f32 %v2807, %v2813
        %s2816 = sld [smem:[#allocation5 + $0x67]]
        %v2817 = vstv %s2816
        %v2818 = vmul.f32 %v2817, %v218
        %2820 = vrot.lane.b32.xlu0 %v2818, 127
        %v2821 = vpop.permute.xlu0 %2820
        %v2823 = vadd.f32 %v2815, %v2821
        %s2824 = sld [smem:[#allocation5 + $0x68]]
        %v2825 = vstv %s2824
        %v2826 = vmul.f32 %v2825, %v217
        %2828 = vrot.lane.b32.xlu0 %v2826, 126
        %v2829 = vpop.permute.xlu0 %2828
        %v2831 = vadd.f32 %v2823, %v2829
        %s2832 = sld [smem:[#allocation5 + $0x69]]
        %v2833 = vstv %s2832
        %v2834 = vmul.f32 %v2833, %v219
        %v2835 = vadd.f32 %v2831, %v2834
        %s2836 = sld [smem:[#allocation5 + $0x6a]]
        %v2837 = vstv %s2836
        %v2838 = vmul.f32 %v2837, %v220
        %v2839 = vadd.f32 %v2835, %v2838
        %s2840 = sld [smem:[#allocation5 + $0x6b]]
        %v2841 = vstv %s2840
        %v2842 = vmul.f32 %v2841, %v219
        %2844 = vrot.lane.b32.xlu0 %v2842, 127
        %v2845 = vpop.permute.xlu0 %2844
        %v2847 = vadd.f32 %v2839, %v2845
        %s2848 = sld [smem:[#allocation5 + $0x6c]]
        %v2849 = vstv %s2848
        %v2850 = vmul.f32 %v2849, %v220
        %2852 = vrot.lane.b32.xlu0 %v2850, 127
        %v2853 = vpop.permute.xlu0 %2852
        %v2855 = vadd.f32 %v2847, %v2853
        %s2856 = sld [smem:[#allocation5 + $0x6d]]
        %v2857 = vstv %s2856
        %v2858 = vmul.f32 %v2857, %v219
        %2860 = vrot.lane.b32.xlu0 %v2858, 126
        %v2861 = vpop.permute.xlu0 %2860
        %v2863 = vadd.f32 %v2855, %v2861
        %s2864 = sld [smem:[#allocation5 + $0x6e]]
        %v2865 = vstv %s2864
        %v2866 = vmul.f32 %v2865, %v217
        %v2868 = vrot.slane %v2866, 1
        %v2870 = vadd.f32 %v2863, %v2868
        %s2871 = sld [smem:[#allocation5 + $0x6f]]
        %v2872 = vstv %s2871
        %v2873 = vmul.f32 %v2872, %v218
        %v2875 = vrot.slane %v2873, 1
        %v2877 = vadd.f32 %v2870, %v2875
        %s2878 = sld [smem:[#allocation5 + $0x70]]
        %v2879 = vstv %s2878
        %v2880 = vmul.f32 %v2879, %v217
        %v2882 = vrot.slane %v2880, 1
        %2883 = vrot.lane.b32.xlu0 %v2882, 127
        %v2884 = vpop.permute.xlu0 %2883
        %v2886 = vadd.f32 %v2877, %v2884
        %s2887 = sld [smem:[#allocation5 + $0x71]]
        %v2888 = vstv %s2887
        %v2889 = vmul.f32 %v2888, %v218
        %v2891 = vrot.slane %v2889, 1
        %2892 = vrot.lane.b32.xlu0 %v2891, 127
        %v2893 = vpop.permute.xlu0 %2892
        %v2895 = vadd.f32 %v2886, %v2893
        %s2896 = sld [smem:[#allocation5 + $0x72]]
        %v2897 = vstv %s2896
        %v2898 = vmul.f32 %v2897, %v217
        %v2900 = vrot.slane %v2898, 1
        %2901 = vrot.lane.b32.xlu0 %v2900, 126
        %v2902 = vpop.permute.xlu0 %2901
        %v2904 = vadd.f32 %v2895, %v2902
        %s2905 = sld [smem:[#allocation5 + $0x73]]
        %v2906 = vstv %s2905
        %v2907 = vmul.f32 %v2906, %v219
        %v2909 = vrot.slane %v2907, 1
        %v2911 = vadd.f32 %v2904, %v2909
        %s2912 = sld [smem:[#allocation5 + $0x74]]
        %v2913 = vstv %s2912
        %v2914 = vmul.f32 %v2913, %v220
        %v2916 = vrot.slane %v2914, 1
        %v2918 = vadd.f32 %v2911, %v2916
        %s2919 = sld [smem:[#allocation5 + $0x75]]
        %v2920 = vstv %s2919
        %v2921 = vmul.f32 %v2920, %v219
        %v2923 = vrot.slane %v2921, 1
        %2924 = vrot.lane.b32.xlu0 %v2923, 127
        %v2925 = vpop.permute.xlu0 %2924
        %v2927 = vadd.f32 %v2918, %v2925
        %s2928 = sld [smem:[#allocation5 + $0x76]]
        %v2929 = vstv %s2928
        %v2930 = vmul.f32 %v2929, %v220
        %v2932 = vrot.slane %v2930, 1
        %2933 = vrot.lane.b32.xlu0 %v2932, 127
        %v2934 = vpop.permute.xlu0 %2933
        %v2936 = vadd.f32 %v2927, %v2934
        %s2937 = sld [smem:[#allocation5 + $0x77]]
        %v2938 = vstv %s2937
        %v2939 = vmul.f32 %v2938, %v219
        %v2941 = vrot.slane %v2939, 1
        %2942 = vrot.lane.b32.xlu0 %v2941, 126
        %v2943 = vpop.permute.xlu0 %2942
        %v2945 = vadd.f32 %v2936, %v2943
        %s2946 = sld [smem:[#allocation5 + $0x78]]
        %v2947 = vstv %s2946
        %v2948 = vmul.f32 %v2947, %v217
        %v2950 = vrot.slane %v2948, 2
        %v2952 = vadd.f32 %v2945, %v2950
        %s2953 = sld [smem:[#allocation5 + $0x79]]
        %v2954 = vstv %s2953
        %v2955 = vmul.f32 %v2954, %v218
        %v2957 = vrot.slane %v2955, 2
        %v2959 = vadd.f32 %v2952, %v2957
        %s2960 = sld [smem:[#allocation5 + $0x7a]]
        %v2961 = vstv %s2960
        %v2962 = vmul.f32 %v2961, %v217
        %v2964 = vrot.slane %v2962, 2
        %2965 = vrot.lane.b32.xlu0 %v2964, 127
        %v2966 = vpop.permute.xlu0 %2965
        %v2968 = vadd.f32 %v2959, %v2966
        %s2969 = sld [smem:[#allocation5 + $0x7b]]
        %v2970 = vstv %s2969
        %v2971 = vmul.f32 %v2970, %v218
        %v2973 = vrot.slane %v2971, 2
        %2974 = vrot.lane.b32.xlu0 %v2973, 127
        %v2975 = vpop.permute.xlu0 %2974
        %v2977 = vadd.f32 %v2968, %v2975
        %s2978 = sld [smem:[#allocation5 + $0x7c]]
        %v2979 = vstv %s2978
        %v2980 = vmul.f32 %v2979, %v217
        %v2982 = vrot.slane %v2980, 2
        %2983 = vrot.lane.b32.xlu0 %v2982, 126
        %v2984 = vpop.permute.xlu0 %2983
        %v2986 = vadd.f32 %v2977, %v2984
        %v2987 = vmul.f32 %v2802, %v218
        %v2988 = vmul.f32 %v2805, %v217
        %2990 = vrot.lane.b32.xlu0 %v2988, 127
        %v2991 = vpop.permute.xlu0 %2990
        %v2993 = vadd.f32 %v2987, %v2991
        %v2994 = vmul.f32 %v2809, %v218
        %2996 = vrot.lane.b32.xlu0 %v2994, 127
        %v2997 = vpop.permute.xlu0 %2996
        %v2999 = vadd.f32 %v2993, %v2997
        %v3000 = vmul.f32 %v2817, %v217
        %3002 = vrot.lane.b32.xlu0 %v3000, 126
        %v3003 = vpop.permute.xlu0 %3002
        %v3005 = vadd.f32 %v2999, %v3003
        %v3006 = vmul.f32 %v2825, %v218
        %3008 = vrot.lane.b32.xlu0 %v3006, 126
        %v3009 = vpop.permute.xlu0 %3008
        %v3011 = vadd.f32 %v3005, %v3009
        %v3012 = vmul.f32 %v2833, %v220
        %v3013 = vadd.f32 %v3011, %v3012
        %v3014 = vmul.f32 %v2837, %v219
        %3016 = vrot.lane.b32.xlu0 %v3014, 127
        %v3017 = vpop.permute.xlu0 %3016
        %v3019 = vadd.f32 %v3013, %v3017
        %v3020 = vmul.f32 %v2841, %v220
        %3022 = vrot.lane.b32.xlu0 %v3020, 127
        %v3023 = vpop.permute.xlu0 %3022
        %v3025 = vadd.f32 %v3019, %v3023
        %v3026 = vmul.f32 %v2849, %v219
        %3028 = vrot.lane.b32.xlu0 %v3026, 126
        %v3029 = vpop.permute.xlu0 %3028
        %v3031 = vadd.f32 %v3025, %v3029
        %v3032 = vmul.f32 %v2857, %v220
        %3034 = vrot.lane.b32.xlu0 %v3032, 126
        %v3035 = vpop.permute.xlu0 %3034
        %v3037 = vadd.f32 %v3031, %v3035
        %v3038 = vmul.f32 %v2865, %v218
        %v3040 = vrot.slane %v3038, 1
        %v3042 = vadd.f32 %v3037, %v3040
        %v3043 = vmul.f32 %v2872, %v217
        %v3045 = vrot.slane %v3043, 1
        %3046 = vrot.lane.b32.xlu0 %v3045, 127
        %v3047 = vpop.permute.xlu0 %3046
        %v3049 = vadd.f32 %v3042, %v3047
        %v3050 = vmul.f32 %v2879, %v218
        %v3052 = vrot.slane %v3050, 1
        %3053 = vrot.lane.b32.xlu0 %v3052, 127
        %v3054 = vpop.permute.xlu0 %3053
        %v3056 = vadd.f32 %v3049, %v3054
        %v3057 = vmul.f32 %v2888, %v217
        %v3059 = vrot.slane %v3057, 1
        %3060 = vrot.lane.b32.xlu0 %v3059, 126
        %v3061 = vpop.permute.xlu0 %3060
        %v3063 = vadd.f32 %v3056, %v3061
        %v3064 = vmul.f32 %v2897, %v218
        %v3066 = vrot.slane %v3064, 1
        %3067 = vrot.lane.b32.xlu0 %v3066, 126
        %v3068 = vpop.permute.xlu0 %3067
        %v3070 = vadd.f32 %v3063, %v3068
        %v3071 = vmul.f32 %v2906, %v220
        %v3073 = vrot.slane %v3071, 1
        %v3075 = vadd.f32 %v3070, %v3073
        %v3076 = vmul.f32 %v2913, %v219
        %v3078 = vrot.slane %v3076, 1
        %3079 = vrot.lane.b32.xlu0 %v3078, 127
        %v3080 = vpop.permute.xlu0 %3079
        %v3082 = vadd.f32 %v3075, %v3080
        %v3083 = vmul.f32 %v2920, %v220
        %v3085 = vrot.slane %v3083, 1
        %3086 = vrot.lane.b32.xlu0 %v3085, 127
        %v3087 = vpop.permute.xlu0 %3086
        %v3089 = vadd.f32 %v3082, %v3087
        %v3090 = vmul.f32 %v2929, %v219
        %v3092 = vrot.slane %v3090, 1
        %3093 = vrot.lane.b32.xlu0 %v3092, 126
        %v3094 = vpop.permute.xlu0 %3093
        %v3096 = vadd.f32 %v3089, %v3094
        %v3097 = vmul.f32 %v2938, %v220
        %v3099 = vrot.slane %v3097, 1
        %3100 = vrot.lane.b32.xlu0 %v3099, 126
        %v3101 = vpop.permute.xlu0 %3100
        %v3103 = vadd.f32 %v3096, %v3101
        %v3104 = vmul.f32 %v2947, %v218
        %v3106 = vrot.slane %v3104, 2
        %v3108 = vadd.f32 %v3103, %v3106
        %v3109 = vmul.f32 %v2954, %v217
        %v3111 = vrot.slane %v3109, 2
        %3112 = vrot.lane.b32.xlu0 %v3111, 127
        %v3113 = vpop.permute.xlu0 %3112
        %v3115 = vadd.f32 %v3108, %v3113
        %v3116 = vmul.f32 %v2961, %v218
        %v3118 = vrot.slane %v3116, 2
        %3119 = vrot.lane.b32.xlu0 %v3118, 127
        %v3120 = vpop.permute.xlu0 %3119
        %v3122 = vadd.f32 %v3115, %v3120
        %v3123 = vmul.f32 %v2970, %v217
        %v3125 = vrot.slane %v3123, 2
        %3126 = vrot.lane.b32.xlu0 %v3125, 126
        %v3127 = vpop.permute.xlu0 %3126
        %v3129 = vadd.f32 %v3122, %v3127
        %v3130 = vmul.f32 %v2979, %v218
        %v3132 = vrot.slane %v3130, 2
        %3133 = vrot.lane.b32.xlu0 %v3132, 126
        %v3134 = vpop.permute.xlu0 %3133
        %v3136 = vadd.f32 %v3129, %v3134
        %v3137 = vmul.f32 %v2802, %v219
        %v3138 = vmul.f32 %v2805, %v220
        %v3139 = vadd.f32 %v3137, %v3138
        %v3140 = vmul.f32 %v2809, %v219
        %3142 = vrot.lane.b32.xlu0 %v3140, 127
        %v3143 = vpop.permute.xlu0 %3142
        %v3145 = vadd.f32 %v3139, %v3143
        %v3146 = vmul.f32 %v2817, %v220
        %3148 = vrot.lane.b32.xlu0 %v3146, 127
        %v3149 = vpop.permute.xlu0 %3148
        %v3151 = vadd.f32 %v3145, %v3149
        %v3152 = vmul.f32 %v2825, %v219
        %3154 = vrot.lane.b32.xlu0 %v3152, 126
        %v3155 = vpop.permute.xlu0 %3154
        %v3157 = vadd.f32 %v3151, %v3155
        %v3158 = vmul.f32 %v2833, %v217
        %v3160 = vrot.slane %v3158, 1
        %v3162 = vadd.f32 %v3157, %v3160
        %v3163 = vmul.f32 %v2837, %v218
        %v3165 = vrot.slane %v3163, 1
        %v3167 = vadd.f32 %v3162, %v3165
        %v3168 = vmul.f32 %v2841, %v217
        %v3170 = vrot.slane %v3168, 1
        %3171 = vrot.lane.b32.xlu0 %v3170, 127
        %v3172 = vpop.permute.xlu0 %3171
        %v3174 = vadd.f32 %v3167, %v3172
        %v3175 = vmul.f32 %v2849, %v218
        %v3177 = vrot.slane %v3175, 1
        %3178 = vrot.lane.b32.xlu0 %v3177, 127
        %v3179 = vpop.permute.xlu0 %3178
        %v3181 = vadd.f32 %v3174, %v3179
        %v3182 = vmul.f32 %v2857, %v217
        %v3184 = vrot.slane %v3182, 1
        %3185 = vrot.lane.b32.xlu0 %v3184, 126
        %v3186 = vpop.permute.xlu0 %3185
        %v3188 = vadd.f32 %v3181, %v3186
        %v3189 = vmul.f32 %v2865, %v219
        %v3191 = vrot.slane %v3189, 1
        %v3193 = vadd.f32 %v3188, %v3191
        %v3194 = vmul.f32 %v2872, %v220
        %v3196 = vrot.slane %v3194, 1
        %v3198 = vadd.f32 %v3193, %v3196
        %v3199 = vmul.f32 %v2879, %v219
        %v3201 = vrot.slane %v3199, 1
        %3202 = vrot.lane.b32.xlu0 %v3201, 127
        %v3203 = vpop.permute.xlu0 %3202
        %v3205 = vadd.f32 %v3198, %v3203
        %v3206 = vmul.f32 %v2888, %v220
        %v3208 = vrot.slane %v3206, 1
        %3209 = vrot.lane.b32.xlu0 %v3208, 127
        %v3210 = vpop.permute.xlu0 %3209
        %v3212 = vadd.f32 %v3205, %v3210
        %v3213 = vmul.f32 %v2897, %v219
        %v3215 = vrot.slane %v3213, 1
        %3216 = vrot.lane.b32.xlu0 %v3215, 126
        %v3217 = vpop.permute.xlu0 %3216
        %v3219 = vadd.f32 %v3212, %v3217
        %v3220 = vmul.f32 %v2906, %v217
        %v3222 = vrot.slane %v3220, 2
        %v3224 = vadd.f32 %v3219, %v3222
        %v3225 = vmul.f32 %v2913, %v218
        %v3227 = vrot.slane %v3225, 2
        %v3229 = vadd.f32 %v3224, %v3227
        %v3230 = vmul.f32 %v2920, %v217
        %v3232 = vrot.slane %v3230, 2
        %3233 = vrot.lane.b32.xlu0 %v3232, 127
        %v3234 = vpop.permute.xlu0 %3233
        %v3236 = vadd.f32 %v3229, %v3234
        %v3237 = vmul.f32 %v2929, %v218
        %v3239 = vrot.slane %v3237, 2
        %3240 = vrot.lane.b32.xlu0 %v3239, 127
        %v3241 = vpop.permute.xlu0 %3240
        %v3243 = vadd.f32 %v3236, %v3241
        %v3244 = vmul.f32 %v2938, %v217
        %v3246 = vrot.slane %v3244, 2
        %3247 = vrot.lane.b32.xlu0 %v3246, 126
        %v3248 = vpop.permute.xlu0 %3247
        %v3250 = vadd.f32 %v3243, %v3248
        %v3251 = vmul.f32 %v2947, %v219
        %v3253 = vrot.slane %v3251, 2
        %v3255 = vadd.f32 %v3250, %v3253
        %v3256 = vmul.f32 %v2954, %v220
        %v3258 = vrot.slane %v3256, 2
        %v3260 = vadd.f32 %v3255, %v3258
        %v3261 = vmul.f32 %v2961, %v219
        %v3263 = vrot.slane %v3261, 2
        %3264 = vrot.lane.b32.xlu0 %v3263, 127
        %v3265 = vpop.permute.xlu0 %3264
        %v3267 = vadd.f32 %v3260, %v3265
        %v3268 = vmul.f32 %v2970, %v220
        %v3270 = vrot.slane %v3268, 2
        %3271 = vrot.lane.b32.xlu0 %v3270, 127
        %v3272 = vpop.permute.xlu0 %3271
        %v3274 = vadd.f32 %v3267, %v3272
        %v3275 = vmul.f32 %v2979, %v219
        %v3277 = vrot.slane %v3275, 2
        %3278 = vrot.lane.b32.xlu0 %v3277, 126
        %v3279 = vpop.permute.xlu0 %3278
        %v3281 = vadd.f32 %v3274, %v3279
        %v3282 = vmul.f32 %v2802, %v220
        %v3283 = vmul.f32 %v2805, %v219
        %3285 = vrot.lane.b32.xlu0 %v3283, 127
        %v3286 = vpop.permute.xlu0 %3285
        %v3288 = vadd.f32 %v3282, %v3286
        %v3289 = vmul.f32 %v2809, %v220
        %3291 = vrot.lane.b32.xlu0 %v3289, 127
        %v3292 = vpop.permute.xlu0 %3291
        %v3294 = vadd.f32 %v3288, %v3292
        %v3295 = vmul.f32 %v2817, %v219
        %3297 = vrot.lane.b32.xlu0 %v3295, 126
        %v3298 = vpop.permute.xlu0 %3297
        %v3300 = vadd.f32 %v3294, %v3298
        %v3301 = vmul.f32 %v2825, %v220
        %3303 = vrot.lane.b32.xlu0 %v3301, 126
        %v3304 = vpop.permute.xlu0 %3303
        %v3306 = vadd.f32 %v3300, %v3304
        %v3307 = vmul.f32 %v2833, %v218
        %v3309 = vrot.slane %v3307, 1
        %v3311 = vadd.f32 %v3306, %v3309
        %v3312 = vmul.f32 %v2837, %v217
        %v3314 = vrot.slane %v3312, 1
        %3315 = vrot.lane.b32.xlu0 %v3314, 127
        %v3316 = vpop.permute.xlu0 %3315
        %v3318 = vadd.f32 %v3311, %v3316
        %v3319 = vmul.f32 %v2841, %v218
        %v3321 = vrot.slane %v3319, 1
        %3322 = vrot.lane.b32.xlu0 %v3321, 127
        %v3323 = vpop.permute.xlu0 %3322
        %v3325 = vadd.f32 %v3318, %v3323
        %v3326 = vmul.f32 %v2849, %v217
        %v3328 = vrot.slane %v3326, 1
        %3329 = vrot.lane.b32.xlu0 %v3328, 126
        %v3330 = vpop.permute.xlu0 %3329
        %v3332 = vadd.f32 %v3325, %v3330
        %v3333 = vmul.f32 %v2857, %v218
        %v3335 = vrot.slane %v3333, 1
        %3336 = vrot.lane.b32.xlu0 %v3335, 126
        %v3337 = vpop.permute.xlu0 %3336
        %v3339 = vadd.f32 %v3332, %v3337
        %v3340 = vmul.f32 %v2865, %v220
        %v3342 = vrot.slane %v3340, 1
        %v3344 = vadd.f32 %v3339, %v3342
        %v3345 = vmul.f32 %v2872, %v219
        %v3347 = vrot.slane %v3345, 1
        %3348 = vrot.lane.b32.xlu0 %v3347, 127
        %v3349 = vpop.permute.xlu0 %3348
        %v3351 = vadd.f32 %v3344, %v3349
        %v3352 = vmul.f32 %v2879, %v220
        %v3354 = vrot.slane %v3352, 1
        %3355 = vrot.lane.b32.xlu0 %v3354, 127
        %v3356 = vpop.permute.xlu0 %3355
        %v3358 = vadd.f32 %v3351, %v3356
        %v3359 = vmul.f32 %v2888, %v219
        %v3361 = vrot.slane %v3359, 1
        %3362 = vrot.lane.b32.xlu0 %v3361, 126
        %v3363 = vpop.permute.xlu0 %3362
        %v3365 = vadd.f32 %v3358, %v3363
        %v3366 = vmul.f32 %v2897, %v220
        %v3368 = vrot.slane %v3366, 1
        %3369 = vrot.lane.b32.xlu0 %v3368, 126
        %v3370 = vpop.permute.xlu0 %3369
        %v3372 = vadd.f32 %v3365, %v3370
        %v3373 = vmul.f32 %v2906, %v218
        %v3375 = vrot.slane %v3373, 2
        %v3377 = vadd.f32 %v3372, %v3375
        %v3378 = vmul.f32 %v2913, %v217
        %v3380 = vrot.slane %v3378, 2
        %3381 = vrot.lane.b32.xlu0 %v3380, 127
        %v3382 = vpop.permute.xlu0 %3381
        %v3384 = vadd.f32 %v3377, %v3382
        %v3385 = vmul.f32 %v2920, %v218
        %v3387 = vrot.slane %v3385, 2
        %3388 = vrot.lane.b32.xlu0 %v3387, 127
        %v3389 = vpop.permute.xlu0 %3388
        %v3391 = vadd.f32 %v3384, %v3389
        %v3392 = vmul.f32 %v2929, %v217
        %v3394 = vrot.slane %v3392, 2
        %3395 = vrot.lane.b32.xlu0 %v3394, 126
        %v3396 = vpop.permute.xlu0 %3395
        %v3398 = vadd.f32 %v3391, %v3396
        %v3399 = vmul.f32 %v2938, %v218
        %v3401 = vrot.slane %v3399, 2
        %3402 = vrot.lane.b32.xlu0 %v3401, 126
        %v3403 = vpop.permute.xlu0 %3402
        %v3405 = vadd.f32 %v3398, %v3403
        %v3406 = vmul.f32 %v2947, %v220
        %v3408 = vrot.slane %v3406, 2
        %v3410 = vadd.f32 %v3405, %v3408
        %v3411 = vmul.f32 %v2954, %v219
        %v3413 = vrot.slane %v3411, 2
        %3414 = vrot.lane.b32.xlu0 %v3413, 127
        %v3415 = vpop.permute.xlu0 %3414
        %v3417 = vadd.f32 %v3410, %v3415
        %v3418 = vmul.f32 %v2961, %v220
        %v3420 = vrot.slane %v3418, 2
        %3421 = vrot.lane.b32.xlu0 %v3420, 127
        %v3422 = vpop.permute.xlu0 %3421
        %v3424 = vadd.f32 %v3417, %v3422
        %v3425 = vmul.f32 %v2970, %v219
        %v3427 = vrot.slane %v3425, 2
        %3428 = vrot.lane.b32.xlu0 %v3427, 126
        %v3429 = vpop.permute.xlu0 %3428
        %v3431 = vadd.f32 %v3424, %v3429
        %v3432 = vmul.f32 %v2979, %v220
        %v3434 = vrot.slane %v3432, 2
        %3435 = vrot.lane.b32.xlu0 %v3434, 126
        %v3436 = vpop.permute.xlu0 %3435
        %v3438 = vadd.f32 %v3431, %v3436
        %v3439 = vmax.f32 %v2986, %v3136
        %v3440 = vmax.f32 %v3281, %v3438
        %v3441 = vmax.f32 %v3439, %v3440
        %s3442 = sld [smem:[#allocation6 + $0x4]]
        %v3443 = vstv %s3442
        %v3444 = vadd.f32 %v3441, %v3443
        %v3445 = vmax.f32 %v3444, 0.0
        %s3446 = sld [smem:[#allocation5 + $0x7d]]
        %v3447 = vstv %s3446
        %v3448 = vmul.f32 %v3447, %v217
        %s3449 = sld [smem:[#allocation5 + $0x7e]]
        %v3450 = vstv %s3449
        %v3451 = vmul.f32 %v3450, %v218
        %v3452 = vadd.f32 %v3448, %v3451
        %s3453 = sld [smem:[#allocation5 + $0x7f]]
        %v3454 = vstv %s3453
        %v3455 = vmul.f32 %v3454, %v217
        %3457 = vrot.lane.b32.xlu0 %v3455, 127
        %v3458 = vpop.permute.xlu0 %3457
        %v3460 = vadd.f32 %v3452, %v3458
        %s3461 = sld [smem:[#allocation5 + $0x80]]
        %v3462 = vstv %s3461
        %v3463 = vmul.f32 %v3462, %v218
        %3465 = vrot.lane.b32.xlu0 %v3463, 127
        %v3466 = vpop.permute.xlu0 %3465
        %v3468 = vadd.f32 %v3460, %v3466
        %s3469 = sld [smem:[#allocation5 + $0x81]]
        %v3470 = vstv %s3469
        %v3471 = vmul.f32 %v3470, %v217
        %3473 = vrot.lane.b32.xlu0 %v3471, 126
        %v3474 = vpop.permute.xlu0 %3473
        %v3476 = vadd.f32 %v3468, %v3474
        %s3477 = sld [smem:[#allocation5 + $0x82]]
        %v3478 = vstv %s3477
        %v3479 = vmul.f32 %v3478, %v219
        %v3480 = vadd.f32 %v3476, %v3479
        %s3481 = sld [smem:[#allocation5 + $0x83]]
        %v3482 = vstv %s3481
        %v3483 = vmul.f32 %v3482, %v220
        %v3484 = vadd.f32 %v3480, %v3483
        %s3485 = sld [smem:[#allocation5 + $0x84]]
        %v3486 = vstv %s3485
        %v3487 = vmul.f32 %v3486, %v219
        %3489 = vrot.lane.b32.xlu0 %v3487, 127
        %v3490 = vpop.permute.xlu0 %3489
        %v3492 = vadd.f32 %v3484, %v3490
        %s3493 = sld [smem:[#allocation5 + $0x85]]
        %v3494 = vstv %s3493
        %v3495 = vmul.f32 %v3494, %v220
        %3497 = vrot.lane.b32.xlu0 %v3495, 127
        %v3498 = vpop.permute.xlu0 %3497
        %v3500 = vadd.f32 %v3492, %v3498
        %s3501 = sld [smem:[#allocation5 + $0x86]]
        %v3502 = vstv %s3501
        %v3503 = vmul.f32 %v3502, %v219
        %3505 = vrot.lane.b32.xlu0 %v3503, 126
        %v3506 = vpop.permute.xlu0 %3505
        %v3508 = vadd.f32 %v3500, %v3506
        %s3509 = sld [smem:[#allocation5 + $0x87]]
        %v3510 = vstv %s3509
        %v3511 = vmul.f32 %v3510, %v217
        %v3513 = vrot.slane %v3511, 1
        %v3515 = vadd.f32 %v3508, %v3513
        %s3516 = sld [smem:[#allocation5 + $0x88]]
        %v3517 = vstv %s3516
        %v3518 = vmul.f32 %v3517, %v218
        %v3520 = vrot.slane %v3518, 1
        %v3522 = vadd.f32 %v3515, %v3520
        %s3523 = sld [smem:[#allocation5 + $0x89]]
        %v3524 = vstv %s3523
        %v3525 = vmul.f32 %v3524, %v217
        %v3527 = vrot.slane %v3525, 1
        %3528 = vrot.lane.b32.xlu0 %v3527, 127
        %v3529 = vpop.permute.xlu0 %3528
        %v3531 = vadd.f32 %v3522, %v3529
        %s3532 = sld [smem:[#allocation5 + $0x8a]]
        %v3533 = vstv %s3532
        %v3534 = vmul.f32 %v3533, %v218
        %v3536 = vrot.slane %v3534, 1
        %3537 = vrot.lane.b32.xlu0 %v3536, 127
        %v3538 = vpop.permute.xlu0 %3537
        %v3540 = vadd.f32 %v3531, %v3538
        %s3541 = sld [smem:[#allocation5 + $0x8b]]
        %v3542 = vstv %s3541
        %v3543 = vmul.f32 %v3542, %v217
        %v3545 = vrot.slane %v3543, 1
        %3546 = vrot.lane.b32.xlu0 %v3545, 126
        %v3547 = vpop.permute.xlu0 %3546
        %v3549 = vadd.f32 %v3540, %v3547
        %s3550 = sld [smem:[#allocation5 + $0x8c]]
        %v3551 = vstv %s3550
        %v3552 = vmul.f32 %v3551, %v219
        %v3554 = vrot.slane %v3552, 1
        %v3556 = vadd.f32 %v3549, %v3554
        %s3557 = sld [smem:[#allocation5 + $0x8d]]
        %v3558 = vstv %s3557
        %v3559 = vmul.f32 %v3558, %v220
        %v3561 = vrot.slane %v3559, 1
        %v3563 = vadd.f32 %v3556, %v3561
        %s3564 = sld [smem:[#allocation5 + $0x8e]]
        %v3565 = vstv %s3564
        %v3566 = vmul.f32 %v3565, %v219
        %v3568 = vrot.slane %v3566, 1
        %3569 = vrot.lane.b32.xlu0 %v3568, 127
        %v3570 = vpop.permute.xlu0 %3569
        %v3572 = vadd.f32 %v3563, %v3570
        %s3573 = sld [smem:[#allocation5 + $0x8f]]
        %v3574 = vstv %s3573
        %v3575 = vmul.f32 %v3574, %v220
        %v3577 = vrot.slane %v3575, 1
        %3578 = vrot.lane.b32.xlu0 %v3577, 127
        %v3579 = vpop.permute.xlu0 %3578
        %v3581 = vadd.f32 %v3572, %v3579
        %s3582 = sld [smem:[#allocation5 + $0x90]]
        %v3583 = vstv %s3582
        %v3584 = vmul.f32 %v3583, %v219
        %v3586 = vrot.slane %v3584, 1
        %3587 = vrot.lane.b32.xlu0 %v3586, 126
        %v3588 = vpop.permute.xlu0 %3587
        %v3590 = vadd.f32 %v3581, %v3588
        %s3591 = sld [smem:[#allocation5 + $0x91]]
        %v3592 = vstv %s3591
        %v3593 = vmul.f32 %v3592, %v217
        %v3595 = vrot.slane %v3593, 2
        %v3597 = vadd.f32 %v3590, %v3595
        %s3598 = sld [smem:[#allocation5 + $0x92]]
        %v3599 = vstv %s3598
        %v3600 = vmul.f32 %v3599, %v218
        %v3602 = vrot.slane %v3600, 2
        %v3604 = vadd.f32 %v3597, %v3602
        %s3605 = sld [smem:[#allocation5 + $0x93]]
        %v3606 = vstv %s3605
        %v3607 = vmul.f32 %v3606, %v217
        %v3609 = vrot.slane %v3607, 2
        %3610 = vrot.lane.b32.xlu0 %v3609, 127
        %v3611 = vpop.permute.xlu0 %3610
        %v3613 = vadd.f32 %v3604, %v3611
        %s3614 = sld [smem:[#allocation5 + $0x94]]
        %v3615 = vstv %s3614
        %v3616 = vmul.f32 %v3615, %v218
        %v3618 = vrot.slane %v3616, 2
        %3619 = vrot.lane.b32.xlu0 %v3618, 127
        %v3620 = vpop.permute.xlu0 %3619
        %v3622 = vadd.f32 %v3613, %v3620
        %s3623 = sld [smem:[#allocation5 + $0x95]]
        %v3624 = vstv %s3623
        %v3625 = vmul.f32 %v3624, %v217
        %v3627 = vrot.slane %v3625, 2
        %3628 = vrot.lane.b32.xlu0 %v3627, 126
        %v3629 = vpop.permute.xlu0 %3628
        %v3631 = vadd.f32 %v3622, %v3629
        %v3632 = vmul.f32 %v3447, %v218
        %v3633 = vmul.f32 %v3450, %v217
        %3635 = vrot.lane.b32.xlu0 %v3633, 127
        %v3636 = vpop.permute.xlu0 %3635
        %v3638 = vadd.f32 %v3632, %v3636
        %v3639 = vmul.f32 %v3454, %v218
        %3641 = vrot.lane.b32.xlu0 %v3639, 127
        %v3642 = vpop.permute.xlu0 %3641
        %v3644 = vadd.f32 %v3638, %v3642
        %v3645 = vmul.f32 %v3462, %v217
        %3647 = vrot.lane.b32.xlu0 %v3645, 126
        %v3648 = vpop.permute.xlu0 %3647
        %v3650 = vadd.f32 %v3644, %v3648
        %v3651 = vmul.f32 %v3470, %v218
        %3653 = vrot.lane.b32.xlu0 %v3651, 126
        %v3654 = vpop.permute.xlu0 %3653
        %v3656 = vadd.f32 %v3650, %v3654
        %v3657 = vmul.f32 %v3478, %v220
        %v3658 = vadd.f32 %v3656, %v3657
        %v3659 = vmul.f32 %v3482, %v219
        %3661 = vrot.lane.b32.xlu0 %v3659, 127
        %v3662 = vpop.permute.xlu0 %3661
        %v3664 = vadd.f32 %v3658, %v3662
        %v3665 = vmul.f32 %v3486, %v220
        %3667 = vrot.lane.b32.xlu0 %v3665, 127
        %v3668 = vpop.permute.xlu0 %3667
        %v3670 = vadd.f32 %v3664, %v3668
        %v3671 = vmul.f32 %v3494, %v219
        %3673 = vrot.lane.b32.xlu0 %v3671, 126
        %v3674 = vpop.permute.xlu0 %3673
        %v3676 = vadd.f32 %v3670, %v3674
        %v3677 = vmul.f32 %v3502, %v220
        %3679 = vrot.lane.b32.xlu0 %v3677, 126
        %v3680 = vpop.permute.xlu0 %3679
        %v3682 = vadd.f32 %v3676, %v3680
        %v3683 = vmul.f32 %v3510, %v218
        %v3685 = vrot.slane %v3683, 1
        %v3687 = vadd.f32 %v3682, %v3685
        %v3688 = vmul.f32 %v3517, %v217
        %v3690 = vrot.slane %v3688, 1
        %3691 = vrot.lane.b32.xlu0 %v3690, 127
        %v3692 = vpop.permute.xlu0 %3691
        %v3694 = vadd.f32 %v3687, %v3692
        %v3695 = vmul.f32 %v3524, %v218
        %v3697 = vrot.slane %v3695, 1
        %3698 = vrot.lane.b32.xlu0 %v3697, 127
        %v3699 = vpop.permute.xlu0 %3698
        %v3701 = vadd.f32 %v3694, %v3699
        %v3702 = vmul.f32 %v3533, %v217
        %v3704 = vrot.slane %v3702, 1
        %3705 = vrot.lane.b32.xlu0 %v3704, 126
        %v3706 = vpop.permute.xlu0 %3705
        %v3708 = vadd.f32 %v3701, %v3706
        %v3709 = vmul.f32 %v3542, %v218
        %v3711 = vrot.slane %v3709, 1
        %3712 = vrot.lane.b32.xlu0 %v3711, 126
        %v3713 = vpop.permute.xlu0 %3712
        %v3715 = vadd.f32 %v3708, %v3713
        %v3716 = vmul.f32 %v3551, %v220
        %v3718 = vrot.slane %v3716, 1
        %v3720 = vadd.f32 %v3715, %v3718
        %v3721 = vmul.f32 %v3558, %v219
        %v3723 = vrot.slane %v3721, 1
        %3724 = vrot.lane.b32.xlu0 %v3723, 127
        %v3725 = vpop.permute.xlu0 %3724
        %v3727 = vadd.f32 %v3720, %v3725
        %v3728 = vmul.f32 %v3565, %v220
        %v3730 = vrot.slane %v3728, 1
        %3731 = vrot.lane.b32.xlu0 %v3730, 127
        %v3732 = vpop.permute.xlu0 %3731
        %v3734 = vadd.f32 %v3727, %v3732
        %v3735 = vmul.f32 %v3574, %v219
        %v3737 = vrot.slane %v3735, 1
        %3738 = vrot.lane.b32.xlu0 %v3737, 126
        %v3739 = vpop.permute.xlu0 %3738
        %v3741 = vadd.f32 %v3734, %v3739
        %v3742 = vmul.f32 %v3583, %v220
        %v3744 = vrot.slane %v3742, 1
        %3745 = vrot.lane.b32.xlu0 %v3744, 126
        %v3746 = vpop.permute.xlu0 %3745
        %v3748 = vadd.f32 %v3741, %v3746
        %v3749 = vmul.f32 %v3592, %v218
        %v3751 = vrot.slane %v3749, 2
        %v3753 = vadd.f32 %v3748, %v3751
        %v3754 = vmul.f32 %v3599, %v217
        %v3756 = vrot.slane %v3754, 2
        %3757 = vrot.lane.b32.xlu0 %v3756, 127
        %v3758 = vpop.permute.xlu0 %3757
        %v3760 = vadd.f32 %v3753, %v3758
        %v3761 = vmul.f32 %v3606, %v218
        %v3763 = vrot.slane %v3761, 2
        %3764 = vrot.lane.b32.xlu0 %v3763, 127
        %v3765 = vpop.permute.xlu0 %3764
        %v3767 = vadd.f32 %v3760, %v3765
        %v3768 = vmul.f32 %v3615, %v217
        %v3770 = vrot.slane %v3768, 2
        %3771 = vrot.lane.b32.xlu0 %v3770, 126
        %v3772 = vpop.permute.xlu0 %3771
        %v3774 = vadd.f32 %v3767, %v3772
        %v3775 = vmul.f32 %v3624, %v218
        %v3777 = vrot.slane %v3775, 2
        %3778 = vrot.lane.b32.xlu0 %v3777, 126
        %v3779 = vpop.permute.xlu0 %3778
        %v3781 = vadd.f32 %v3774, %v3779
        %v3782 = vmul.f32 %v3447, %v219
        %v3783 = vmul.f32 %v3450, %v220
        %v3784 = vadd.f32 %v3782, %v3783
        %v3785 = vmul.f32 %v3454, %v219
        %3787 = vrot.lane.b32.xlu0 %v3785, 127
        %v3788 = vpop.permute.xlu0 %3787
        %v3790 = vadd.f32 %v3784, %v3788
        %v3791 = vmul.f32 %v3462, %v220
        %3793 = vrot.lane.b32.xlu0 %v3791, 127
        %v3794 = vpop.permute.xlu0 %3793
        %v3796 = vadd.f32 %v3790, %v3794
        %v3797 = vmul.f32 %v3470, %v219
        %3799 = vrot.lane.b32.xlu0 %v3797, 126
        %v3800 = vpop.permute.xlu0 %3799
        %v3802 = vadd.f32 %v3796, %v3800
        %v3803 = vmul.f32 %v3478, %v217
        %v3805 = vrot.slane %v3803, 1
        %v3807 = vadd.f32 %v3802, %v3805
        %v3808 = vmul.f32 %v3482, %v218
        %v3810 = vrot.slane %v3808, 1
        %v3812 = vadd.f32 %v3807, %v3810
        %v3813 = vmul.f32 %v3486, %v217
        %v3815 = vrot.slane %v3813, 1
        %3816 = vrot.lane.b32.xlu0 %v3815, 127
        %v3817 = vpop.permute.xlu0 %3816
        %v3819 = vadd.f32 %v3812, %v3817
        %v3820 = vmul.f32 %v3494, %v218
        %v3822 = vrot.slane %v3820, 1
        %3823 = vrot.lane.b32.xlu0 %v3822, 127
        %v3824 = vpop.permute.xlu0 %3823
        %v3826 = vadd.f32 %v3819, %v3824
        %v3827 = vmul.f32 %v3502, %v217
        %v3829 = vrot.slane %v3827, 1
        %3830 = vrot.lane.b32.xlu0 %v3829, 126
        %v3831 = vpop.permute.xlu0 %3830
        %v3833 = vadd.f32 %v3826, %v3831
        %v3834 = vmul.f32 %v3510, %v219
        %v3836 = vrot.slane %v3834, 1
        %v3838 = vadd.f32 %v3833, %v3836
        %v3839 = vmul.f32 %v3517, %v220
        %v3841 = vrot.slane %v3839, 1
        %v3843 = vadd.f32 %v3838, %v3841
        %v3844 = vmul.f32 %v3524, %v219
        %v3846 = vrot.slane %v3844, 1
        %3847 = vrot.lane.b32.xlu0 %v3846, 127
        %v3848 = vpop.permute.xlu0 %3847
        %v3850 = vadd.f32 %v3843, %v3848
        %v3851 = vmul.f32 %v3533, %v220
        %v3853 = vrot.slane %v3851, 1
        %3854 = vrot.lane.b32.xlu0 %v3853, 127
        %v3855 = vpop.permute.xlu0 %3854
        %v3857 = vadd.f32 %v3850, %v3855
        %v3858 = vmul.f32 %v3542, %v219
        %v3860 = vrot.slane %v3858, 1
        %3861 = vrot.lane.b32.xlu0 %v3860, 126
        %v3862 = vpop.permute.xlu0 %3861
        %v3864 = vadd.f32 %v3857, %v3862
        %v3865 = vmul.f32 %v3551, %v217
        %v3867 = vrot.slane %v3865, 2
        %v3869 = vadd.f32 %v3864, %v3867
        %v3870 = vmul.f32 %v3558, %v218
        %v3872 = vrot.slane %v3870, 2
        %v3874 = vadd.f32 %v3869, %v3872
        %v3875 = vmul.f32 %v3565, %v217
        %v3877 = vrot.slane %v3875, 2
        %3878 = vrot.lane.b32.xlu0 %v3877, 127
        %v3879 = vpop.permute.xlu0 %3878
        %v3881 = vadd.f32 %v3874, %v3879
        %v3882 = vmul.f32 %v3574, %v218
        %v3884 = vrot.slane %v3882, 2
        %3885 = vrot.lane.b32.xlu0 %v3884, 127
        %v3886 = vpop.permute.xlu0 %3885
        %v3888 = vadd.f32 %v3881, %v3886
        %v3889 = vmul.f32 %v3583, %v217
        %v3891 = vrot.slane %v3889, 2
        %3892 = vrot.lane.b32.xlu0 %v3891, 126
        %v3893 = vpop.permute.xlu0 %3892
        %v3895 = vadd.f32 %v3888, %v3893
        %v3896 = vmul.f32 %v3592, %v219
        %v3898 = vrot.slane %v3896, 2
        %v3900 = vadd.f32 %v3895, %v3898
        %v3901 = vmul.f32 %v3599, %v220
        %v3903 = vrot.slane %v3901, 2
        %v3905 = vadd.f32 %v3900, %v3903
        %v3906 = vmul.f32 %v3606, %v219
        %v3908 = vrot.slane %v3906, 2
        %3909 = vrot.lane.b32.xlu0 %v3908, 127
        %v3910 = vpop.permute.xlu0 %3909
        %v3912 = vadd.f32 %v3905, %v3910
        %v3913 = vmul.f32 %v3615, %v220
        %v3915 = vrot.slane %v3913, 2
        %3916 = vrot.lane.b32.xlu0 %v3915, 127
        %v3917 = vpop.permute.xlu0 %3916
        %v3919 = vadd.f32 %v3912, %v3917
        %v3920 = vmul.f32 %v3624, %v219
        %v3922 = vrot.slane %v3920, 2
        %3923 = vrot.lane.b32.xlu0 %v3922, 126
        %v3924 = vpop.permute.xlu0 %3923
        %v3926 = vadd.f32 %v3919, %v3924
        %v3927 = vmul.f32 %v3447, %v220
        %v3928 = vmul.f32 %v3450, %v219
        %3930 = vrot.lane.b32.xlu0 %v3928, 127
        %v3931 = vpop.permute.xlu0 %3930
        %v3933 = vadd.f32 %v3927, %v3931
        %v3934 = vmul.f32 %v3454, %v220
        %3936 = vrot.lane.b32.xlu0 %v3934, 127
        %v3937 = vpop.permute.xlu0 %3936
        %v3939 = vadd.f32 %v3933, %v3937
        %v3940 = vmul.f32 %v3462, %v219
        %3942 = vrot.lane.b32.xlu0 %v3940, 126
        %v3943 = vpop.permute.xlu0 %3942
        %v3945 = vadd.f32 %v3939, %v3943
        %v3946 = vmul.f32 %v3470, %v220
        %3948 = vrot.lane.b32.xlu0 %v3946, 126
        %v3949 = vpop.permute.xlu0 %3948
        %v3951 = vadd.f32 %v3945, %v3949
        %v3952 = vmul.f32 %v3478, %v218
        %v3954 = vrot.slane %v3952, 1
        %v3956 = vadd.f32 %v3951, %v3954
        %v3957 = vmul.f32 %v3482, %v217
        %v3959 = vrot.slane %v3957, 1
        %3960 = vrot.lane.b32.xlu0 %v3959, 127
        %v3961 = vpop.permute.xlu0 %3960
        %v3963 = vadd.f32 %v3956, %v3961
        %v3964 = vmul.f32 %v3486, %v218
        %v3966 = vrot.slane %v3964, 1
        %3967 = vrot.lane.b32.xlu0 %v3966, 127
        %v3968 = vpop.permute.xlu0 %3967
        %v3970 = vadd.f32 %v3963, %v3968
        %v3971 = vmul.f32 %v3494, %v217
        %v3973 = vrot.slane %v3971, 1
        %3974 = vrot.lane.b32.xlu0 %v3973, 126
        %v3975 = vpop.permute.xlu0 %3974
        %v3977 = vadd.f32 %v3970, %v3975
        %v3978 = vmul.f32 %v3502, %v218
        %v3980 = vrot.slane %v3978, 1
        %3981 = vrot.lane.b32.xlu0 %v3980, 126
        %v3982 = vpop.permute.xlu0 %3981
        %v3984 = vadd.f32 %v3977, %v3982
        %v3985 = vmul.f32 %v3510, %v220
        %v3987 = vrot.slane %v3985, 1
        %v3989 = vadd.f32 %v3984, %v3987
        %v3990 = vmul.f32 %v3517, %v219
        %v3992 = vrot.slane %v3990, 1
        %3993 = vrot.lane.b32.xlu0 %v3992, 127
        %v3994 = vpop.permute.xlu0 %3993
        %v3996 = vadd.f32 %v3989, %v3994
        %v3997 = vmul.f32 %v3524, %v220
        %v3999 = vrot.slane %v3997, 1
        %4000 = vrot.lane.b32.xlu0 %v3999, 127
        %v4001 = vpop.permute.xlu0 %4000
        %v4003 = vadd.f32 %v3996, %v4001
        %v4004 = vmul.f32 %v3533, %v219
        %v4006 = vrot.slane %v4004, 1
        %4007 = vrot.lane.b32.xlu0 %v4006, 126
        %v4008 = vpop.permute.xlu0 %4007
        %v4010 = vadd.f32 %v4003, %v4008
        %v4011 = vmul.f32 %v3542, %v220
        %v4013 = vrot.slane %v4011, 1
        %4014 = vrot.lane.b32.xlu0 %v4013, 126
        %v4015 = vpop.permute.xlu0 %4014
        %v4017 = vadd.f32 %v4010, %v4015
        %v4018 = vmul.f32 %v3551, %v218
        %v4020 = vrot.slane %v4018, 2
        %v4022 = vadd.f32 %v4017, %v4020
        %v4023 = vmul.f32 %v3558, %v217
        %v4025 = vrot.slane %v4023, 2
        %4026 = vrot.lane.b32.xlu0 %v4025, 127
        %v4027 = vpop.permute.xlu0 %4026
        %v4029 = vadd.f32 %v4022, %v4027
        %v4030 = vmul.f32 %v3565, %v218
        %v4032 = vrot.slane %v4030, 2
        %4033 = vrot.lane.b32.xlu0 %v4032, 127
        %v4034 = vpop.permute.xlu0 %4033
        %v4036 = vadd.f32 %v4029, %v4034
        %v4037 = vmul.f32 %v3574, %v217
        %v4039 = vrot.slane %v4037, 2
        %4040 = vrot.lane.b32.xlu0 %v4039, 126
        %v4041 = vpop.permute.xlu0 %4040
        %v4043 = vadd.f32 %v4036, %v4041
        %v4044 = vmul.f32 %v3583, %v218
        %v4046 = vrot.slane %v4044, 2
        %4047 = vrot.lane.b32.xlu0 %v4046, 126
        %v4048 = vpop.permute.xlu0 %4047
        %v4050 = vadd.f32 %v4043, %v4048
        %v4051 = vmul.f32 %v3592, %v220
        %v4053 = vrot.slane %v4051, 2
        %v4055 = vadd.f32 %v4050, %v4053
        %v4056 = vmul.f32 %v3599, %v219
        %v4058 = vrot.slane %v4056, 2
        %4059 = vrot.lane.b32.xlu0 %v4058, 127
        %v4060 = vpop.permute.xlu0 %4059
        %v4062 = vadd.f32 %v4055, %v4060
        %v4063 = vmul.f32 %v3606, %v220
        %v4065 = vrot.slane %v4063, 2
        %4066 = vrot.lane.b32.xlu0 %v4065, 127
        %v4067 = vpop.permute.xlu0 %4066
        %v4069 = vadd.f32 %v4062, %v4067
        %v4070 = vmul.f32 %v3615, %v219
        %v4072 = vrot.slane %v4070, 2
        %4073 = vrot.lane.b32.xlu0 %v4072, 126
        %v4074 = vpop.permute.xlu0 %4073
        %v4076 = vadd.f32 %v4069, %v4074
        %v4077 = vmul.f32 %v3624, %v220
        %v4079 = vrot.slane %v4077, 2
        %4080 = vrot.lane.b32.xlu0 %v4079, 126
        %v4081 = vpop.permute.xlu0 %4080
        %v4083 = vadd.f32 %v4076, %v4081
        %v4084 = vmax.f32 %v3631, %v3781
        %v4085 = vmax.f32 %v3926, %v4083
        %v4086 = vmax.f32 %v4084, %v4085
        %s4087 = sld [smem:[#allocation6 + $0x5]]
        %v4088 = vstv %s4087
        %v4089 = vadd.f32 %v4086, %v4088
        %v4090 = vmax.f32 %v4089, 0.0
        %vm4091 = vcmask 46080
        %4092 = vst.msk [vmem:[%s216] sm:$0x3f] %vm4091, %v865
        %4093 = vst.msk [vmem:[%s216 + $0x8] sm:$0x3f] %vm4091, %v1510
        %4094 = vst.msk [vmem:[%s216 + $0x10] sm:$0x3f] %vm4091, %v2155
        %4095 = vst.msk [vmem:[%s216 + $0x18] sm:$0x3f] %vm4091, %v2800
        %4096 = vst.msk [vmem:[%s216 + $0x20] sm:$0x3f] %vm4091, %v3445
        %4097 = vst.msk [vmem:[%s216 + $0x28] sm:$0x3f] %vm4091, %v4090
        %p4098 = scmp.lt.s32.totalorder %s19, 1
        %s4099 = scalar_select %p4098, %s19, 1
        %s4100 = smul.addr %s4099, 6
        %s4101 = smul.addr %s4100, 8
        %s4102 = scalar_lea.vmem %s3, %s4101
        // Predicated region
        $region45: #{tpu_custom_call.1} parent=31 // pred_check
          %p4103 = pneg %p105
        $region46: #{tpu_custom_call.1} parent=31 // pred_check_branch
          %4105 = sbr.rel (%p4103) target = $region48
        $region47: #{tpu_custom_call.1} parent=31 // pred_region
          _
        $region48: #{tpu_custom_call.1} parent=31 // pred_fallthru
          _
      $region32: #{tpu_custom_call.1} parent=5 // pred_fallthru
        _
      %p4106 = scmp.le.s32.totalorder 2, %s14
      // Predicated region
      $region49: #{tpu_custom_call.1} parent=5 // pred_check
        %p4107 = pneg %p4106
      $region50: #{tpu_custom_call.1} parent=5 // pred_check_branch
        %4109 = sbr.rel (%p4107) target = $region52
      $region51: #{tpu_custom_call.1} parent=5 // pred_region
        %s4110 = ssub.s32 %s14, 2
        // Predicated region
        $region53: #{tpu_custom_call.1} parent=51 // pred_check
          %p4111 = pneg %p111
        $region54: #{tpu_custom_call.1} parent=51 // pred_check_branch
          %4113 = sbr.rel (%p4111) target = $region56
        $region55: #{tpu_custom_call.1} parent=51 // pred_region
          %p4114 = scmp.lt.s32.totalorder %s20, 1
          %s4115 = scalar_select %p4114, %s20, 1
          %s4116 = smul.addr %s4115, 6
          %s4117 = smul.addr %s4116, 8
          %s4118 = scalar_lea.vmem %s3, %s4117
        $region56: #{tpu_custom_call.1} parent=51 // pred_fallthru
          _
      $region52: #{tpu_custom_call.1} parent=5 // pred_fallthru
        _
    $region6: #{tpu_custom_call.1} parent=1 // loop_footer
      %s18 = sadd.s32 1, %s14
    $region7: #{tpu_custom_call.1} parent=1 // loop_footer_branch
      %13 = sbr.rel target = $region3
    $region8: #{tpu_custom_call.1} parent=1 // loop_exit
      _
    %4119 = vsyncpa [#allocation3], 1
    %s4120 = scalar_lea.sflag [#allocation3], 1
    %4121 = vsyncpa %s4120, 1
    %4122 = vsyncpa [#allocation4], 1
    %s4123 = scalar_lea.sflag [#allocation4], 1
    %4124 = vsyncpa %s4123, 1
    %4125 = vsyncpa [#allocation7], 1

</llo_original>
